<compile_context>
chip_gen: v5e
topology: v5e:2x2
jax: 0.10.0
libtpu: 0.0.40
codegen_flags: <defaults>
</compile_context>

<pallas_src>
import functools

import jax
import jax.numpy as jnp
from jax.experimental import pallas as pl
from jax.experimental.pallas import tpu as pltpu


def _round_up(x, m):
    return (x + m - 1) // m * m


# ----------------------------------------------------------------------------
# Kernel 1: fused conv1 -> ReLU -> pool -> conv2 -> ... -> conv3 -> ReLU -> pool
# One batch tile per grid step; B_TILE batch segments are stacked along the
# sublane axis so each MXU contraction sees M = B_TILE * L_pad rows.  The
# output is compacted to l3_pad rows per segment (valid L3 rows + zero pad).
# ----------------------------------------------------------------------------
def _fused_conv_kernel(x_ref, w1_ref, b1_ref, w2_ref, b2_ref, w3_ref, b3_ref,
                       o_ref, *, taps, l_pad, l3, l3_pad):
    rows = x_ref.shape[0]                       # B_TILE * l_pad
    b_tile = rows // l_pad

    def shift_up(v, k):
        # result row i = v[i + k] (circular over the stacked segments).  Valid
        # output rows never read wrapped rows: the valid length shrinks by
        # (k_taps + 1) per stage (asserted in conv_stack), so wrapped data only
        # ever lands in -- and stays in -- the junk tail of each segment.
        if k == 0:
            return v
        return pltpu.roll(v, shift=rows - k, axis=0)   # == jnp.roll(v, -k, 0)

    def conv_relu_pool(x_f32, w_ref, b_ref, k_taps):
        # Per-tap contraction: acc += (roll(x, k) -> bf16) @ w[k].  No im2col
        # slab is materialized; bf16 MXU operands, f32 accumulation.
        acc = jnp.dot(x_f32.astype(jnp.bfloat16), w_ref[0],
                      preferred_element_type=jnp.float32)
        for k in range(1, k_taps):
            acc += jnp.dot(shift_up(x_f32, k).astype(jnp.bfloat16), w_ref[k],
                           preferred_element_type=jnp.float32)
        y = jnp.maximum(acc + b_ref[...], 0.0)          # bias + ReLU (f32 VPU)
        # MaxPool1d(kernel_size=3, stride=1) via two more sublane rotations.
        p = jnp.maximum(y, shift_up(y, 1))
        return jnp.maximum(p, shift_up(y, 2))

    p = x_ref[...]                                      # f32 (rows, Cin_pad)
    p = conv_relu_pool(p, w1_ref, b1_ref, taps[0])
    p = conv_relu_pool(p, w2_ref, b2_ref, taps[1])
    p = conv_relu_pool(p, w3_ref, b3_ref, taps[2])

    # Zero the junk rows, then compact each l_pad segment down to its first
    # l3_pad rows (all dims involved are sublane/lane aligned) so fc1 only
    # sees -- and streams weights for -- the valid length.
    c = p.shape[-1]
    row = jax.lax.broadcasted_iota(jnp.int32, (rows, 1), 0)
    p = jnp.where((row % l_pad) < l3, p, 0.0)
    p = p.reshape(b_tile, l_pad, c)[:, :l3_pad, :].reshape(b_tile * l3_pad, c)
    o_ref[...] = p.astype(o_ref.dtype)


def conv_stack(x_nlc, prep, cfg):
    n, l, cin = x_nlc.shape
    l_pad, l3, l3_pad = cfg["l_pad"], cfg["l3"], cfg["l3_pad"]
    cin_pad, c_mid = cfg["cin_pad"], cfg["c_mid"]
    b_tile = cfg["conv_b_tile"]

    # ---- static invariants (correctness of tiling + circular rolls) --------
    assert n % b_tile == 0, (n, b_tile)
    assert l <= l_pad and l_pad % 8 == 0 and l3_pad % 8 == 0
    assert l3 <= l3_pad <= l_pad
    v = l
    for k in cfg["kernels"]:                   # conv(k) + pool(3,1): len -= k+1
        v = v - k - 1
        assert v >= 1, "sequence too short for the conv/pool stack"
    assert v == l3, (v, l3)
    assert (b_tile * l3_pad) % 16 == 0         # bf16 output block sublane rule
    assert cin_pad % 128 == 0 and c_mid % 128 == 0

    # Zero-pad channels to the 128-lane width and length to l_pad, then stack
    # batch onto the sublane axis (free row-major reshape in XLA).
    x = jnp.pad(x_nlc.astype(jnp.float32),
                ((0, 0), (0, l_pad - l), (0, cin_pad - cin)))
    x = x.reshape(n * l_pad, cin_pad)

    kernel = functools.partial(_fused_conv_kernel, taps=cfg["kernels"],
                               l_pad=l_pad, l3=l3, l3_pad=l3_pad)
    blk_in = b_tile * l_pad
    blk_out = b_tile * l3_pad
    full = lambda a: pl.BlockSpec(a.shape, lambda i: (0,) * a.ndim)

    out = pl.pallas_call(
        kernel,
        out_shape=jax.ShapeDtypeStruct((n * l3_pad, c_mid), jnp.bfloat16),
        grid=(n // b_tile,),
        in_specs=[
            pl.BlockSpec((blk_in, cin_pad), lambda i: (i, 0)),
            full(prep["w_c1"]), full(prep["b_c1"]),
            full(prep["w_c2"]), full(prep["b_c2"]),
            full(prep["w_c3"]), full(prep["b_c3"]),
        ],
        out_specs=pl.BlockSpec((blk_out, c_mid), lambda i: (i, 0)),
        compiler_params=pltpu.CompilerParams(
            dimension_semantics=("parallel",),
            # ~2x conv weights (double-buffered) + activation temporaries at
            # production scale (~31 MB) + headroom; fits v7x's 64 MiB VMEM.
            vmem_limit_bytes=cfg["conv_vmem_bytes"],
        ),
    )(x, prep["w_c1"], prep["b_c1"], prep["w_c2"], prep["b_c2"],
      prep["w_c3"], prep["b_c3"])
    return out   # (N * l3_pad, C_mid) bf16, junk rows zeroed


# ----------------------------------------------------------------------------
# Kernel 2: MLP head.  fc1 streams its weight over the flat (K) dimension into
# an f32 VMEM accumulator; fc2 -> fc3 -> sigmoid run on the last K step.  The
# batch tile covers the whole padded batch, so w_f1 is streamed exactly once.
# ----------------------------------------------------------------------------
def _mlp_head_kernel(x_ref, w1_ref, b1_ref, w2_ref, b2_ref, w3_ref, b3_ref,
                     o_ref, acc_ref):
    k = pl.program_id(1)

    @pl.when(k == 0)
    def _init():
        acc_ref[...] = jnp.zeros_like(acc_ref)

    # fc1 partial product (bf16 operands, f32 accumulation).
    acc_ref[...] += jnp.dot(x_ref[...], w1_ref[...],
                            preferred_element_type=jnp.float32)

    @pl.when(k == pl.num_programs(1) - 1)
    def _finalize():
        h = jnp.maximum(acc_ref[...] + b1_ref[...], 0.0)
        # TODO(synk): Dropout(p=0.5) omitted -- identity in eval/inference mode.
        h = jnp.dot(h.astype(jnp.bfloat16), w2_ref[...],
                    preferred_element_type=jnp.float32)
        h = jnp.maximum(h + b2_ref[...], 0.0)
        z = jnp.dot(h.astype(jnp.bfloat16), w3_ref[...],
                    preferred_element_type=jnp.float32) + b3_ref[...]
        # exact sigmoid (one (N,128) tile; negligible cost, closer torch parity)
        o_ref[...] = (1.0 / (1.0 + jnp.exp(-z))).astype(o_ref.dtype)


def mlp_head(x_flat, prep, cfg):
    n_pad, flat = x_flat.shape
    hidden, out_pad = cfg["hidden"], cfg["out_pad"]
    bn, tk = cfg["mlp_n_tile"], cfg["mlp_k_tile"]

    assert n_pad % bn == 0, (n_pad, bn)
    assert bn % 16 == 0, bn                       # bf16 (16,128) min-tile rule
    assert flat % tk == 0, (flat, tk)
    assert hidden % 128 == 0 and out_pad % 128 == 0

    const = lambda a: pl.BlockSpec(a.shape, lambda i, k: (0,) * a.ndim)

    return pl.pallas_call(
        _mlp_head_kernel,
        out_shape=jax.ShapeDtypeStruct((n_pad, out_pad), jnp.float32),
        grid=(n_pad // bn, flat // tk),
        in_specs=[
            pl.BlockSpec((bn, tk), lambda i, k: (i, k)),
            pl.BlockSpec((tk, hidden), lambda i, k: (k, 0)),
            const(prep["b_f1"]),
            const(prep["w_f2"]), const(prep["b_f2"]),
            const(prep["w_f3"]), const(prep["b_f3"]),
        ],
        out_specs=pl.BlockSpec((bn, out_pad), lambda i, k: (i, 0)),
        scratch_shapes=[pltpu.VMEM((bn, hidden), jnp.float32)],
        compiler_params=pltpu.CompilerParams(
            dimension_semantics=("parallel", "arbitrary"),
            vmem_limit_bytes=cfg["mlp_vmem_bytes"],
        ),
    )(x_flat, prep["w_f1"], prep["b_f1"], prep["w_f2"], prep["b_f2"],
      prep["w_f3"], prep["b_f3"])


# ----------------------------------------------------------------------------
# One-time parameter preparation (bf16 cast, channel padding, flatten folding).
# ----------------------------------------------------------------------------
def prepare_params(params, cfg):
    cin_pad, c_mid = cfg["cin_pad"], cfg["c_mid"]
    l3, l3_pad = cfg["l3"], cfg["l3_pad"]
    out_pad, hidden = cfg["out_pad"], cfg["hidden"]

    def conv_w3d(w, cin_to):
        # Per-tap weights: (K, Cin_pad, Cout) bf16; the kernel indexes w_ref[k].
        k, cin, cout = w.shape
        w = jnp.pad(w, ((0, 0), (0, cin_to - cin), (0, 0)))
        return w.astype(jnp.bfloat16)

    # Fold torch's channel-major flatten (flat index = c*L3 + l) into w_f1 so
    # fc1 consumes the kernel's compacted (l, c) layout directly; rows for the
    # l3..l3_pad padding are zero.
    w_f1 = params["w_f1"].reshape(c_mid, l3, hidden)
    w_f1 = jnp.transpose(w_f1, (1, 0, 2))                     # (L3, C_mid, H)
    w_f1 = jnp.pad(w_f1, ((0, l3_pad - l3), (0, 0), (0, 0)))
    w_f1 = w_f1.reshape(l3_pad * c_mid, hidden).astype(jnp.bfloat16)

    # Lane-dense fc3: pad the 1-wide output column to 128 lanes.
    w_f3 = jnp.pad(params["w_f3"], ((0, 0), (0, out_pad - 1))).astype(jnp.bfloat16)
    b_f3 = jnp.pad(params["b_f3"], ((0, 0), (0, out_pad - 1))).astype(jnp.float32)

    return {
        "w_c1": conv_w3d(params["w_c1"], cin_pad),
        "b_c1": params["b_c1"].astype(jnp.float32),
        "w_c2": conv_w3d(params["w_c2"], c_mid),
        "b_c2": params["b_c2"].astype(jnp.float32),
        "w_c3": conv_w3d(params["w_c3"], c_mid),
        "b_c3": params["b_c3"].astype(jnp.float32),
        "w_f1": w_f1,
        "b_f1": params["b_f1"].astype(jnp.float32),
        "w_f2": params["w_f2"].astype(jnp.bfloat16),
        "b_f2": params["b_f2"].astype(jnp.float32),
        "w_f3": w_f3,
        "b_f3": b_f3,
    }


def text_cnn_forward(x_ncl, prep, cfg):
    n = x_ncl.shape[0]
    x_nlc = jnp.transpose(x_ncl, (0, 2, 1))                    # NCL -> NLC
    conv_out = conv_stack(x_nlc, prep, cfg)                    # (N*l3_pad, C_mid)
    flat = conv_out.reshape(n, cfg["l3_pad"] * cfg["c_mid"])   # free reshape
    n_pad = _round_up(n, cfg["mlp_n_tile"])
    if n_pad != n:
        flat = jnp.pad(flat, ((0, n_pad - n), (0, 0)))
    logits_pad = mlp_head(flat, prep, cfg)                     # (n_pad, out_pad)
    return logits_pad[:n, :1]                                  # (N, 1)


# ----------------------------------------------------------------------------
# Pure-JAX reference with the same bf16-operand / f32-accumulate numerics.
# ----------------------------------------------------------------------------
def text_cnn_reference(x_ncl, params, kernels):
    x = jnp.transpose(x_ncl, (0, 2, 1)).astype(jnp.float32)    # (N, L, Cin)
    for name, kk in zip(("c1", "c2", "c3"), kernels):
        w = params[f"w_{name}"].astype(jnp.bfloat16)           # (K, Cin, Cout)
        b = params[f"b_{name}"][0]
        lc = x.shape[1] - kk + 1
        xb = x.astype(jnp.bfloat16)
        slab = jnp.concatenate([xb[:, k:k + lc, :] for k in range(kk)], axis=-1)
        w2d = w.reshape(kk * w.shape[1], w.shape[2])
        y = jax.lax.dot_general(slab, w2d, (((2,), (0,)), ((), ())),
                                preferred_element_type=jnp.float32)
        y = jnp.maximum(y + b[None, None, :], 0.0)
        x = jnp.maximum(jnp.maximum(y[:, :-2], y[:, 1:-1]), y[:, 2:])
    n = x.shape[0]
    flat = jnp.transpose(x, (0, 2, 1)).reshape(n, -1).astype(jnp.bfloat16)
    h = jnp.dot(flat, params["w_f1"].astype(jnp.bfloat16),
                preferred_element_type=jnp.float32)
    h = jnp.maximum(h + params["b_f1"], 0.0)
    h = jnp.dot(h.astype(jnp.bfloat16), params["w_f2"].astype(jnp.bfloat16),
                preferred_element_type=jnp.float32)
    h = jnp.maximum(h + params["b_f2"], 0.0)
    z = jnp.dot(h.astype(jnp.bfloat16), params["w_f3"].astype(jnp.bfloat16),
                preferred_element_type=jnp.float32) + params["b_f3"]
    return jax.nn.sigmoid(z)


def init_params(key, c_in, c_mid, hidden, kernels, l3):
    ks = jax.random.split(key, 12)

    def dense(k, shape, fan_in):
        return jax.random.normal(k, shape, jnp.float32) / jnp.sqrt(fan_in)

    k1, k2, k3 = kernels
    return {
        "w_c1": dense(ks[0], (k1, c_in, c_mid), c_in * k1),
        "b_c1": dense(ks[1], (1, c_mid), c_in * k1),
        "w_c2": dense(ks[2], (k2, c_mid, c_mid), c_mid * k2),
        "b_c2": dense(ks[3], (1, c_mid), c_mid * k2),
        "w_c3": dense(ks[4], (k3, c_mid, c_mid), c_mid * k3),
        "b_c3": dense(ks[5], (1, c_mid), c_mid * k3),
        "w_f1": dense(ks[6], (c_mid * l3, hidden), c_mid * l3),
        "b_f1": dense(ks[7], (1, hidden), c_mid * l3),
        "w_f2": dense(ks[8], (hidden, hidden), hidden),
        "b_f2": dense(ks[9], (1, hidden), hidden),
        "w_f3": dense(ks[10], (hidden, 1), hidden),
        "b_f3": dense(ks[11], (1, 1), hidden),
    }


if __name__ == "__main__":
    # Scaled-down config (production: c_in=127, c_mid=512, L=200, hidden=1024,
    # flat = 512*170 -> compacted to 512*176).  Same kernel sizes / pooling so
    # the length arithmetic matches the module; c_in=127 keeps the 127->128
    # lane padding.  Note: c_mid=128 fills only half of the 256-wide MXU on
    # v6e/v7x; benchmark at production c_mid=512 for representative numbers.
    N, C_IN, L = 8, 127, 64
    C_MID, HIDDEN = 128, 256
    KERNELS = (6, 9, 12)
    # Length after each conv(k) + maxpool(3, stride 1): L -> L - k - 1.
    L1 = L - KERNELS[0] - 1          # 57
    L2 = L1 - KERNELS[1] - 1         # 47
    L3 = L2 - KERNELS[2] - 1         # 34
    L_PAD = _round_up(L, 8)          # 64
    L3_PAD = _round_up(L3, 8)        # 40 (compacted conv-output length)
    OUT_PAD = 128

    cfg = dict(
        kernels=KERNELS, l_pad=L_PAD, l3=L3, l3_pad=L3_PAD,
        cin_pad=_round_up(C_IN, 128), c_mid=C_MID, hidden=HIDDEN,
        out_pad=OUT_PAD,
        conv_b_tile=4,                 # batch segments folded into the MXU M dim
        mlp_n_tile=_round_up(N, 16),   # whole padded batch: w_f1 streamed once
        mlp_k_tile=2560,               # fc1 weight-stream tile over the flat dim
        conv_vmem_bytes=40 * 1024 * 1024,
        mlp_vmem_bytes=32 * 1024 * 1024,
    )
    assert C_MID % 128 == 0
    assert (L3_PAD * C_MID) % cfg["mlp_k_tile"] == 0
    assert N % cfg["conv_b_tile"] == 0

    key = jax.random.PRNGKey(0)
    k_x, k_p = jax.random.split(key)
    x = jax.random.normal(k_x, (N, C_IN, L), jnp.float32)     # NCL, like torch
    params = init_params(k_p, C_IN, C_MID, HIDDEN, KERNELS, L3)
    prep = prepare_params(params, cfg)

    fwd = jax.jit(lambda xx, pp: text_cnn_forward(xx, pp, cfg))
    out = jax.block_until_ready(fwd(x, prep))
    assert out.shape == (N, 1), out.shape
    assert bool(jnp.all((out >= 0.0) & (out <= 1.0)))

    # Correctness check against a pure-JAX reference with matching numerics.
    ref = jax.jit(lambda xx, pp: text_cnn_reference(xx, pp, KERNELS))(x, params)
    err = float(jnp.max(jnp.abs(out - ref)))
    assert err < 2e-2, f"max |pallas - reference| = {err}"

    print("KERNEL_OK")
</pallas_src>

<mosaic_0001>
module attributes {stable_mosaic.version = 11 : i64} {
  func.func @_mlp_head_kernel(%arg0: i32, %arg1: i32, %arg2: memref<16x2560xbf16, #tpu.memory_space<vmem>>, %arg3: memref<2560x256xbf16, #tpu.memory_space<vmem>>, %arg4: memref<1x256xf32, #tpu.memory_space<vmem>>, %arg5: memref<256x256xbf16, #tpu.memory_space<vmem>>, %arg6: memref<1x256xf32, #tpu.memory_space<vmem>>, %arg7: memref<256x128xbf16, #tpu.memory_space<vmem>>, %arg8: memref<1x128xf32, #tpu.memory_space<vmem>>, %arg9: memref<16x128xf32, #tpu.memory_space<vmem>>, %arg10: memref<16x256xf32, #tpu.memory_space<vmem>>) attributes {dimension_semantics = [#tpu.dimension_semantics<parallel>, #tpu.dimension_semantics<arbitrary>], iteration_bounds = array<i64: 1, 2>, scalar_prefetch = 0 : i64, scratch_operands = 1 : i64, tpu.core_type = #tpu.core_type<tc>, window_params = [{transform_indices = @transform_0, window_bounds = array<i64: 16, 2560>}, {transform_indices = @transform_1, window_bounds = array<i64: 2560, 256>}, {pipeline_mode = #tpu.pipeline_mode<synchronous>, transform_indices = @transform_2, window_bounds = array<i64: 1, 256>}, {pipeline_mode = #tpu.pipeline_mode<synchronous>, transform_indices = @transform_3, window_bounds = array<i64: 256, 256>}, {pipeline_mode = #tpu.pipeline_mode<synchronous>, transform_indices = @transform_4, window_bounds = array<i64: 1, 256>}, {pipeline_mode = #tpu.pipeline_mode<synchronous>, transform_indices = @transform_5, window_bounds = array<i64: 256, 128>}, {pipeline_mode = #tpu.pipeline_mode<synchronous>, transform_indices = @transform_6, window_bounds = array<i64: 1, 128>}, {transform_indices = @transform_7, window_bounds = array<i64: 16, 128>}]} {
    %c0_i32 = arith.constant 0 : i32
    %0 = arith.cmpi eq, %arg1, %c0_i32 : i32
    %1 = arith.extui %0 : i1 to i32
    %c0_i32_0 = arith.constant 0 : i32
    %2 = arith.cmpi ne, %1, %c0_i32_0 : i32
    scf.if %2 {
      %cst_9 = arith.constant 0.000000e+00 : f32
      %12 = vector.broadcast %cst_9 : f32 to vector<16x256xf32>
      %c0_10 = arith.constant 0 : index
      %c0_11 = arith.constant 0 : index
      %13 = vector.load %arg10[%c0_10, %c0_11] : memref<16x256xf32, #tpu.memory_space<vmem>>, vector<16x256xf32>
      tpu.vector_store %arg10[%c0_10, %c0_11], %12 {strides = array<i32>} : memref<16x256xf32, #tpu.memory_space<vmem>>, vector<16x256xf32>,
    } else {
    }
    %c0 = arith.constant 0 : index
    %c0_1 = arith.constant 0 : index
    %3 = vector.load %arg10[%c0, %c0_1] : memref<16x256xf32, #tpu.memory_space<vmem>>, vector<16x256xf32>
    %c0_2 = arith.constant 0 : index
    %c0_3 = arith.constant 0 : index
    %4 = vector.load %arg2[%c0_2, %c0_3] : memref<16x2560xbf16, #tpu.memory_space<vmem>>, vector<16x2560xbf16>
    %c0_4 = arith.constant 0 : index
    %c0_5 = arith.constant 0 : index
    %5 = vector.load %arg3[%c0_4, %c0_5] : memref<2560x256xbf16, #tpu.memory_space<vmem>>, vector<2560x256xbf16>
    %cst = arith.constant dense<0.000000e+00> : vector<16x256xf32>
    %6 = tpu.matmul %4, %5, %cst {dimension_numbers = #tpu.dot_dimension_numbers<[1], [0], [0], [1], [0, 0, 1, 1], [], []>} : vector<16x2560xbf16>, vector<2560x256xbf16>, vector<16x256xf32> -> vector<16x256xf32>
    %7 = arith.addf %3, %6 : vector<16x256xf32>
    %c0_6 = arith.constant 0 : index
    %c0_7 = arith.constant 0 : index
    %8 = vector.load %arg10[%c0_6, %c0_7] : memref<16x256xf32, #tpu.memory_space<vmem>>, vector<16x256xf32>
    tpu.vector_store %arg10[%c0_6, %c0_7], %7 {strides = array<i32>} : memref<16x256xf32, #tpu.memory_space<vmem>>, vector<16x256xf32>,
    %c1_i32 = arith.constant 1 : i32
    %9 = arith.cmpi eq, %arg1, %c1_i32 : i32
    %10 = arith.extui %9 : i1 to i32
    %c0_i32_8 = arith.constant 0 : i32
    %11 = arith.cmpi ne, %10, %c0_i32_8 : i32
    scf.if %11 {
      %c0_9 = arith.constant 0 : index
      %c0_10 = arith.constant 0 : index
      %12 = vector.load %arg10[%c0_9, %c0_10] : memref<16x256xf32, #tpu.memory_space<vmem>>, vector<16x256xf32>
      %c0_11 = arith.constant 0 : index
      %c0_12 = arith.constant 0 : index
      %13 = vector.load %arg4[%c0_11, %c0_12] : memref<1x256xf32, #tpu.memory_space<vmem>>, vector<1x256xf32>
      %14 = vector.broadcast %13 : vector<1x256xf32> to vector<16x256xf32>
      %15 = arith.addf %12, %14 : vector<16x256xf32>
      %cst_13 = arith.constant 0.000000e+00 : f32
      %16 = vector.broadcast %cst_13 : f32 to vector<16x256xf32>
      %17 = arith.maximumf %15, %16 : vector<16x256xf32>
      %18 = arith.truncf %17 : vector<16x256xf32> to vector<16x256xbf16>
      %c0_14 = arith.constant 0 : index
      %c0_15 = arith.constant 0 : index
      %19 = vector.load %arg5[%c0_14, %c0_15] : memref<256x256xbf16, #tpu.memory_space<vmem>>, vector<256x256xbf16>
      %cst_16 = arith.constant dense<0.000000e+00> : vector<16x256xf32>
      %20 = tpu.matmul %18, %19, %cst_16 {dimension_numbers = #tpu.dot_dimension_numbers<[1], [0], [0], [1], [0, 0, 1, 1], [], []>} : vector<16x256xbf16>, vector<256x256xbf16>, vector<16x256xf32> -> vector<16x256xf32>
      %c0_17 = arith.constant 0 : index
      %c0_18 = arith.constant 0 : index
      %21 = vector.load %arg6[%c0_17, %c0_18] : memref<1x256xf32, #tpu.memory_space<vmem>>, vector<1x256xf32>
      %22 = vector.broadcast %21 : vector<1x256xf32> to vector<16x256xf32>
      %23 = arith.addf %20, %22 : vector<16x256xf32>
      %cst_19 = arith.constant 0.000000e+00 : f32
      %24 = vector.broadcast %cst_19 : f32 to vector<16x256xf32>
      %25 = arith.maximumf %23, %24 : vector<16x256xf32>
      %26 = arith.truncf %25 : vector<16x256xf32> to vector<16x256xbf16>
      %c0_20 = arith.constant 0 : index
      %c0_21 = arith.constant 0 : index
      %27 = vector.load %arg7[%c0_20, %c0_21] : memref<256x128xbf16, #tpu.memory_space<vmem>>, vector<256x128xbf16>
      %cst_22 = arith.constant dense<0.000000e+00> : vector<16x128xf32>
      %28 = tpu.matmul %26, %27, %cst_22 {dimension_numbers = #tpu.dot_dimension_numbers<[1], [0], [0], [1], [0, 0, 1, 1], [], []>} : vector<16x256xbf16>, vector<256x128xbf16>, vector<16x128xf32> -> vector<16x128xf32>
      %c0_23 = arith.constant 0 : index
      %c0_24 = arith.constant 0 : index
      %29 = vector.load %arg8[%c0_23, %c0_24] : memref<1x128xf32, #tpu.memory_space<vmem>>, vector<1x128xf32>
      %30 = vector.broadcast %29 : vector<1x128xf32> to vector<16x128xf32>
      %31 = arith.addf %28, %30 : vector<16x128xf32>
      %cst_25 = arith.constant 0.000000e+00 : f32
      %32 = vector.broadcast %cst_25 : f32 to vector<16x128xf32>
      %33 = arith.subf %32, %31 : vector<16x128xf32>
      %34 = math.exp %33 : vector<16x128xf32>
      %cst_26 = arith.constant 1.000000e+00 : f32
      %35 = vector.broadcast %cst_26 : f32 to vector<16x128xf32>
      %36 = arith.addf %35, %34 : vector<16x128xf32>
      %cst_27 = arith.constant 1.000000e+00 : f32
      %37 = vector.broadcast %cst_27 : f32 to vector<16x128xf32>
      %38 = arith.divf %37, %36 : vector<16x128xf32>
      %c0_28 = arith.constant 0 : index
      %c0_29 = arith.constant 0 : index
      %39 = vector.load %arg9[%c0_28, %c0_29] : memref<16x128xf32, #tpu.memory_space<vmem>>, vector<16x128xf32>
      tpu.vector_store %arg9[%c0_28, %c0_29], %38 {strides = array<i32>} : memref<16x128xf32, #tpu.memory_space<vmem>>, vector<16x128xf32>,
    } else {
    }
    return
  }
  func.func @transform_0(%arg0: i32, %arg1: i32) -> (i32, i32) {
    %c0_i32 = arith.constant 0 : i32
    return %arg0, %arg1 : i32, i32
  }
  func.func @transform_1(%arg0: i32, %arg1: i32) -> (i32, i32) {
    %c0_i32 = arith.constant 0 : i32
    %c0_i32_0 = arith.constant 0 : i32
    return %arg1, %c0_i32 : i32, i32
  }
  func.func @transform_2(%arg0: i32, %arg1: i32) -> (i32, i32) {
    %c0_i32 = arith.constant 0 : i32
    %c0_i32_0 = arith.constant 0 : i32
    %c0_i32_1 = arith.constant 0 : i32
    return %c0_i32, %c0_i32_0 : i32, i32
  }
  func.func @transform_3(%arg0: i32, %arg1: i32) -> (i32, i32) {
    %c0_i32 = arith.constant 0 : i32
    %c0_i32_0 = arith.constant 0 : i32
    %c0_i32_1 = arith.constant 0 : i32
    return %c0_i32, %c0_i32_0 : i32, i32
  }
  func.func @transform_4(%arg0: i32, %arg1: i32) -> (i32, i32) {
    %c0_i32 = arith.constant 0 : i32
    %c0_i32_0 = arith.constant 0 : i32
    %c0_i32_1 = arith.constant 0 : i32
    return %c0_i32, %c0_i32_0 : i32, i32
  }
  func.func @transform_5(%arg0: i32, %arg1: i32) -> (i32, i32) {
    %c0_i32 = arith.constant 0 : i32
    %c0_i32_0 = arith.constant 0 : i32
    %c0_i32_1 = arith.constant 0 : i32
    return %c0_i32, %c0_i32_0 : i32, i32
  }
  func.func @transform_6(%arg0: i32, %arg1: i32) -> (i32, i32) {
    %c0_i32 = arith.constant 0 : i32
    %c0_i32_0 = arith.constant 0 : i32
    %c0_i32_1 = arith.constant 0 : i32
    return %c0_i32, %c0_i32_0 : i32, i32
  }
  func.func @transform_7(%arg0: i32, %arg1: i32) -> (i32, i32) {
    %c0_i32 = arith.constant 0 : i32
    %c0_i32_0 = arith.constant 0 : i32
    return %arg0, %c0_i32 : i32, i32
  }
}

module attributes {stable_mosaic.version = 11 : i64} {
  func.func @_fused_conv_kernel(%arg0: i32, %arg1: memref<256x128xf32, #tpu.memory_space<vmem>>, %arg2: memref<6x128x128xbf16, #tpu.memory_space<vmem>>, %arg3: memref<1x128xf32, #tpu.memory_space<vmem>>, %arg4: memref<9x128x128xbf16, #tpu.memory_space<vmem>>, %arg5: memref<1x128xf32, #tpu.memory_space<vmem>>, %arg6: memref<12x128x128xbf16, #tpu.memory_space<vmem>>, %arg7: memref<1x128xf32, #tpu.memory_space<vmem>>, %arg8: memref<160x128xbf16, #tpu.memory_space<vmem>>) attributes {dimension_semantics = [#tpu.dimension_semantics<parallel>], iteration_bounds = array<i64: 2>, scalar_prefetch = 0 : i64, scratch_operands = 0 : i64, tpu.core_type = #tpu.core_type<tc>, window_params = [{transform_indices = @transform_0, window_bounds = array<i64: 256, 128>}, {pipeline_mode = #tpu.pipeline_mode<synchronous>, transform_indices = @transform_1, window_bounds = array<i64: 6, 128, 128>}, {pipeline_mode = #tpu.pipeline_mode<synchronous>, transform_indices = @transform_2, window_bounds = array<i64: 1, 128>}, {pipeline_mode = #tpu.pipeline_mode<synchronous>, transform_indices = @transform_3, window_bounds = array<i64: 9, 128, 128>}, {pipeline_mode = #tpu.pipeline_mode<synchronous>, transform_indices = @transform_4, window_bounds = array<i64: 1, 128>}, {pipeline_mode = #tpu.pipeline_mode<synchronous>, transform_indices = @transform_5, window_bounds = array<i64: 12, 128, 128>}, {pipeline_mode = #tpu.pipeline_mode<synchronous>, transform_indices = @transform_6, window_bounds = array<i64: 1, 128>}, {transform_indices = @transform_7, window_bounds = array<i64: 160, 128>}]} {
    %c0 = arith.constant 0 : index
    %c0_0 = arith.constant 0 : index
    %0 = vector.load %arg1[%c0, %c0_0] : memref<256x128xf32, #tpu.memory_space<vmem>>, vector<256x128xf32>
    %1 = arith.truncf %0 : vector<256x128xf32> to vector<256x128xbf16>
    %c0_1 = arith.constant 0 : index
    %c0_2 = arith.constant 0 : index
    %c0_3 = arith.constant 0 : index
    %2 = vector.load %arg2[%c0_1, %c0_2, %c0_3] : memref<6x128x128xbf16, #tpu.memory_space<vmem>>, vector<1x128x128xbf16>
    %3 = vector.shape_cast %2 : vector<1x128x128xbf16> to vector<128x128xbf16>
    %cst = arith.constant dense<0.000000e+00> : vector<256x128xf32>
    %4 = tpu.matmul %1, %3, %cst {dimension_numbers = #tpu.dot_dimension_numbers<[1], [0], [0], [1], [0, 0, 1, 1], [], []>} : vector<256x128xbf16>, vector<128x128xbf16>, vector<256x128xf32> -> vector<256x128xf32>
    %c255_i32 = arith.constant 255 : i32
    %5 = tpu.dynamic_rotate %0 by %c255_i32 dim 0 : vector<256x128xf32>, i32 -> vector<256x128xf32>
    %6 = arith.truncf %5 : vector<256x128xf32> to vector<256x128xbf16>
    %c1 = arith.constant 1 : index
    %c0_4 = arith.constant 0 : index
    %c0_5 = arith.constant 0 : index
    %7 = vector.load %arg2[%c1, %c0_4, %c0_5] : memref<6x128x128xbf16, #tpu.memory_space<vmem>>, vector<1x128x128xbf16>
    %8 = vector.shape_cast %7 : vector<1x128x128xbf16> to vector<128x128xbf16>
    %cst_6 = arith.constant dense<0.000000e+00> : vector<256x128xf32>
    %9 = tpu.matmul %6, %8, %cst_6 {dimension_numbers = #tpu.dot_dimension_numbers<[1], [0], [0], [1], [0, 0, 1, 1], [], []>} : vector<256x128xbf16>, vector<128x128xbf16>, vector<256x128xf32> -> vector<256x128xf32>
    %10 = arith.addf %4, %9 : vector<256x128xf32>
    %c254_i32 = arith.constant 254 : i32
    %11 = tpu.dynamic_rotate %0 by %c254_i32 dim 0 : vector<256x128xf32>, i32 -> vector<256x128xf32>
    %12 = arith.truncf %11 : vector<256x128xf32> to vector<256x128xbf16>
    %c2 = arith.constant 2 : index
    %c0_7 = arith.constant 0 : index
    %c0_8 = arith.constant 0 : index
    %13 = vector.load %arg2[%c2, %c0_7, %c0_8] : memref<6x128x128xbf16, #tpu.memory_space<vmem>>, vector<1x128x128xbf16>
    %14 = vector.shape_cast %13 : vector<1x128x128xbf16> to vector<128x128xbf16>
    %cst_9 = arith.constant dense<0.000000e+00> : vector<256x128xf32>
    %15 = tpu.matmul %12, %14, %cst_9 {dimension_numbers = #tpu.dot_dimension_numbers<[1], [0], [0], [1], [0, 0, 1, 1], [], []>} : vector<256x128xbf16>, vector<128x128xbf16>, vector<256x128xf32> -> vector<256x128xf32>
    %16 = arith.addf %10, %15 : vector<256x128xf32>
    %c253_i32 = arith.constant 253 : i32
    %17 = tpu.dynamic_rotate %0 by %c253_i32 dim 0 : vector<256x128xf32>, i32 -> vector<256x128xf32>
    %18 = arith.truncf %17 : vector<256x128xf32> to vector<256x128xbf16>
    %c3 = arith.constant 3 : index
    %c0_10 = arith.constant 0 : index
    %c0_11 = arith.constant 0 : index
    %19 = vector.load %arg2[%c3, %c0_10, %c0_11] : memref<6x128x128xbf16, #tpu.memory_space<vmem>>, vector<1x128x128xbf16>
    %20 = vector.shape_cast %19 : vector<1x128x128xbf16> to vector<128x128xbf16>
    %cst_12 = arith.constant dense<0.000000e+00> : vector<256x128xf32>
    %21 = tpu.matmul %18, %20, %cst_12 {dimension_numbers = #tpu.dot_dimension_numbers<[1], [0], [0], [1], [0, 0, 1, 1], [], []>} : vector<256x128xbf16>, vector<128x128xbf16>, vector<256x128xf32> -> vector<256x128xf32>
    %22 = arith.addf %16, %21 : vector<256x128xf32>
    %c252_i32 = arith.constant 252 : i32
    %23 = tpu.dynamic_rotate %0 by %c252_i32 dim 0 : vector<256x128xf32>, i32 -> vector<256x128xf32>
    %24 = arith.truncf %23 : vector<256x128xf32> to vector<256x128xbf16>
    %c4 = arith.constant 4 : index
    %c0_13 = arith.constant 0 : index
    %c0_14 = arith.constant 0 : index
    %25 = vector.load %arg2[%c4, %c0_13, %c0_14] : memref<6x128x128xbf16, #tpu.memory_space<vmem>>, vector<1x128x128xbf16>
    %26 = vector.shape_cast %25 : vector<1x128x128xbf16> to vector<128x128xbf16>
    %cst_15 = arith.constant dense<0.000000e+00> : vector<256x128xf32>
    %27 = tpu.matmul %24, %26, %cst_15 {dimension_numbers = #tpu.dot_dimension_numbers<[1], [0], [0], [1], [0, 0, 1, 1], [], []>} : vector<256x128xbf16>, vector<128x128xbf16>, vector<256x128xf32> -> vector<256x128xf32>
    %28 = arith.addf %22, %27 : vector<256x128xf32>
    %c251_i32 = arith.constant 251 : i32
    %29 = tpu.dynamic_rotate %0 by %c251_i32 dim 0 : vector<256x128xf32>, i32 -> vector<256x128xf32>
    %30 = arith.truncf %29 : vector<256x128xf32> to vector<256x128xbf16>
    %c5 = arith.constant 5 : index
    %c0_16 = arith.constant 0 : index
    %c0_17 = arith.constant 0 : index
    %31 = vector.load %arg2[%c5, %c0_16, %c0_17] : memref<6x128x128xbf16, #tpu.memory_space<vmem>>, vector<1x128x128xbf16>
    %32 = vector.shape_cast %31 : vector<1x128x128xbf16> to vector<128x128xbf16>
    %cst_18 = arith.constant dense<0.000000e+00> : vector<256x128xf32>
    %33 = tpu.matmul %30, %32, %cst_18 {dimension_numbers = #tpu.dot_dimension_numbers<[1], [0], [0], [1], [0, 0, 1, 1], [], []>} : vector<256x128xbf16>, vector<128x128xbf16>, vector<256x128xf32> -> vector<256x128xf32>
    %34 = arith.addf %28, %33 : vector<256x128xf32>
    %c0_19 = arith.constant 0 : index
    %c0_20 = arith.constant 0 : index
    %35 = vector.load %arg3[%c0_19, %c0_20] : memref<1x128xf32, #tpu.memory_space<vmem>>, vector<1x128xf32>
    %36 = vector.broadcast %35 : vector<1x128xf32> to vector<256x128xf32>
    %37 = arith.addf %34, %36 : vector<256x128xf32>
    %cst_21 = arith.constant 0.000000e+00 : f32
    %38 = vector.broadcast %cst_21 : f32 to vector<256x128xf32>
    %39 = arith.maximumf %37, %38 : vector<256x128xf32>
    %c255_i32_22 = arith.constant 255 : i32
    %40 = tpu.dynamic_rotate %39 by %c255_i32_22 dim 0 : vector<256x128xf32>, i32 -> vector<256x128xf32>
    %41 = arith.maximumf %39, %40 : vector<256x128xf32>
    %c254_i32_23 = arith.constant 254 : i32
    %42 = tpu.dynamic_rotate %39 by %c254_i32_23 dim 0 : vector<256x128xf32>, i32 -> vector<256x128xf32>
    %43 = arith.maximumf %41, %42 : vector<256x128xf32>
    %44 = arith.truncf %43 : vector<256x128xf32> to vector<256x128xbf16>
    %c0_24 = arith.constant 0 : index
    %c0_25 = arith.constant 0 : index
    %c0_26 = arith.constant 0 : index
    %45 = vector.load %arg4[%c0_24, %c0_25, %c0_26] : memref<9x128x128xbf16, #tpu.memory_space<vmem>>, vector<1x128x128xbf16>
    %46 = vector.shape_cast %45 : vector<1x128x128xbf16> to vector<128x128xbf16>
    %cst_27 = arith.constant dense<0.000000e+00> : vector<256x128xf32>
    %47 = tpu.matmul %44, %46, %cst_27 {dimension_numbers = #tpu.dot_dimension_numbers<[1], [0], [0], [1], [0, 0, 1, 1], [], []>} : vector<256x128xbf16>, vector<128x128xbf16>, vector<256x128xf32> -> vector<256x128xf32>
    %c255_i32_28 = arith.constant 255 : i32
    %48 = tpu.dynamic_rotate %43 by %c255_i32_28 dim 0 : vector<256x128xf32>, i32 -> vector<256x128xf32>
    %49 = arith.truncf %48 : vector<256x128xf32> to vector<256x128xbf16>
    %c1_29 = arith.constant 1 : index
    %c0_30 = arith.constant 0 : index
    %c0_31 = arith.constant 0 : index
    %50 = vector.load %arg4[%c1_29, %c0_30, %c0_31] : memref<9x128x128xbf16, #tpu.memory_space<vmem>>, vector<1x128x128xbf16>
    %51 = vector.shape_cast %50 : vector<1x128x128xbf16> to vector<128x128xbf16>
    %cst_32 = arith.constant dense<0.000000e+00> : vector<256x128xf32>
    %52 = tpu.matmul %49, %51, %cst_32 {dimension_numbers = #tpu.dot_dimension_numbers<[1], [0], [0], [1], [0, 0, 1, 1], [], []>} : vector<256x128xbf16>, vector<128x128xbf16>, vector<256x128xf32> -> vector<256x128xf32>
    %53 = arith.addf %47, %52 : vector<256x128xf32>
    %c254_i32_33 = arith.constant 254 : i32
    %54 = tpu.dynamic_rotate %43 by %c254_i32_33 dim 0 : vector<256x128xf32>, i32 -> vector<256x128xf32>
    %55 = arith.truncf %54 : vector<256x128xf32> to vector<256x128xbf16>
    %c2_34 = arith.constant 2 : index
    %c0_35 = arith.constant 0 : index
    %c0_36 = arith.constant 0 : index
    %56 = vector.load %arg4[%c2_34, %c0_35, %c0_36] : memref<9x128x128xbf16, #tpu.memory_space<vmem>>, vector<1x128x128xbf16>
    %57 = vector.shape_cast %56 : vector<1x128x128xbf16> to vector<128x128xbf16>
    %cst_37 = arith.constant dense<0.000000e+00> : vector<256x128xf32>
    %58 = tpu.matmul %55, %57, %cst_37 {dimension_numbers = #tpu.dot_dimension_numbers<[1], [0], [0], [1], [0, 0, 1, 1], [], []>} : vector<256x128xbf16>, vector<128x128xbf16>, vector<256x128xf32> -> vector<256x128xf32>
    %59 = arith.addf %53, %58 : vector<256x128xf32>
    %c253_i32_38 = arith.constant 253 : i32
    %60 = tpu.dynamic_rotate %43 by %c253_i32_38 dim 0 : vector<256x128xf32>, i32 -> vector<256x128xf32>
    %61 = arith.truncf %60 : vector<256x128xf32> to vector<256x128xbf16>
    %c3_39 = arith.constant 3 : index
    %c0_40 = arith.constant 0 : index
    %c0_41 = arith.constant 0 : index
    %62 = vector.load %arg4[%c3_39, %c0_40, %c0_41] : memref<9x128x128xbf16, #tpu.memory_space<vmem>>, vector<1x128x128xbf16>
    %63 = vector.shape_cast %62 : vector<1x128x128xbf16> to vector<128x128xbf16>
    %cst_42 = arith.constant dense<0.000000e+00> : vector<256x128xf32>
    %64 = tpu.matmul %61, %63, %cst_42 {dimension_numbers = #tpu.dot_dimension_numbers<[1], [0], [0], [1], [0, 0, 1, 1], [], []>} : vector<256x128xbf16>, vector<128x128xbf16>, vector<256x128xf32> -> vector<256x128xf32>
    %65 = arith.addf %59, %64 : vector<256x128xf32>
    %c252_i32_43 = arith.constant 252 : i32
    %66 = tpu.dynamic_rotate %43 by %c252_i32_43 dim 0 : vector<256x128xf32>, i32 -> vector<256x128xf32>
    %67 = arith.truncf %66 : vector<256x128xf32> to vector<256x128xbf16>
    %c4_44 = arith.constant 4 : index
    %c0_45 = arith.constant 0 : index
    %c0_46 = arith.constant 0 : index
    %68 = vector.load %arg4[%c4_44, %c0_45, %c0_46] : memref<9x128x128xbf16, #tpu.memory_space<vmem>>, vector<1x128x128xbf16>
    %69 = vector.shape_cast %68 : vector<1x128x128xbf16> to vector<128x128xbf16>
    %cst_47 = arith.constant dense<0.000000e+00> : vector<256x128xf32>
    %70 = tpu.matmul %67, %69, %cst_47 {dimension_numbers = #tpu.dot_dimension_numbers<[1], [0], [0], [1], [0, 0, 1, 1], [], []>} : vector<256x128xbf16>, vector<128x128xbf16>, vector<256x128xf32> -> vector<256x128xf32>
    %71 = arith.addf %65, %70 : vector<256x128xf32>
    %c251_i32_48 = arith.constant 251 : i32
    %72 = tpu.dynamic_rotate %43 by %c251_i32_48 dim 0 : vector<256x128xf32>, i32 -> vector<256x128xf32>
    %73 = arith.truncf %72 : vector<256x128xf32> to vector<256x128xbf16>
    %c5_49 = arith.constant 5 : index
    %c0_50 = arith.constant 0 : index
    %c0_51 = arith.constant 0 : index
    %74 = vector.load %arg4[%c5_49, %c0_50, %c0_51] : memref<9x128x128xbf16, #tpu.memory_space<vmem>>, vector<1x128x128xbf16>
    %75 = vector.shape_cast %74 : vector<1x128x128xbf16> to vector<128x128xbf16>
    %cst_52 = arith.constant dense<0.000000e+00> : vector<256x128xf32>
    %76 = tpu.matmul %73, %75, %cst_52 {dimension_numbers = #tpu.dot_dimension_numbers<[1], [0], [0], [1], [0, 0, 1, 1], [], []>} : vector<256x128xbf16>, vector<128x128xbf16>, vector<256x128xf32> -> vector<256x128xf32>
    %77 = arith.addf %71, %76 : vector<256x128xf32>
    %c250_i32 = arith.constant 250 : i32
    %78 = tpu.dynamic_rotate %43 by %c250_i32 dim 0 : vector<256x128xf32>, i32 -> vector<256x128xf32>
    %79 = arith.truncf %78 : vector<256x128xf32> to vector<256x128xbf16>
    %c6 = arith.constant 6 : index
    %c0_53 = arith.constant 0 : index
    %c0_54 = arith.constant 0 : index
    %80 = vector.load %arg4[%c6, %c0_53, %c0_54] : memref<9x128x128xbf16, #tpu.memory_space<vmem>>, vector<1x128x128xbf16>
    %81 = vector.shape_cast %80 : vector<1x128x128xbf16> to vector<128x128xbf16>
    %cst_55 = arith.constant dense<0.000000e+00> : vector<256x128xf32>
    %82 = tpu.matmul %79, %81, %cst_55 {dimension_numbers = #tpu.dot_dimension_numbers<[1], [0], [0], [1], [0, 0, 1, 1], [], []>} : vector<256x128xbf16>, vector<128x128xbf16>, vector<256x128xf32> -> vector<256x128xf32>
    %83 = arith.addf %77, %82 : vector<256x128xf32>
    %c249_i32 = arith.constant 249 : i32
    %84 = tpu.dynamic_rotate %43 by %c249_i32 dim 0 : vector<256x128xf32>, i32 -> vector<256x128xf32>
    %85 = arith.truncf %84 : vector<256x128xf32> to vector<256x128xbf16>
    %c7 = arith.constant 7 : index
    %c0_56 = arith.constant 0 : index
    %c0_57 = arith.constant 0 : index
    %86 = vector.load %arg4[%c7, %c0_56, %c0_57] : memref<9x128x128xbf16, #tpu.memory_space<vmem>>, vector<1x128x128xbf16>
    %87 = vector.shape_cast %86 : vector<1x128x128xbf16> to vector<128x128xbf16>
    %cst_58 = arith.constant dense<0.000000e+00> : vector<256x128xf32>
    %88 = tpu.matmul %85, %87, %cst_58 {dimension_numbers = #tpu.dot_dimension_numbers<[1], [0], [0], [1], [0, 0, 1, 1], [], []>} : vector<256x128xbf16>, vector<128x128xbf16>, vector<256x128xf32> -> vector<256x128xf32>
    %89 = arith.addf %83, %88 : vector<256x128xf32>
    %c248_i32 = arith.constant 248 : i32
    %90 = tpu.dynamic_rotate %43 by %c248_i32 dim 0 : vector<256x128xf32>, i32 -> vector<256x128xf32>
    %91 = arith.truncf %90 : vector<256x128xf32> to vector<256x128xbf16>
    %c8 = arith.constant 8 : index
    %c0_59 = arith.constant 0 : index
    %c0_60 = arith.constant 0 : index
    %92 = vector.load %arg4[%c8, %c0_59, %c0_60] : memref<9x128x128xbf16, #tpu.memory_space<vmem>>, vector<1x128x128xbf16>
    %93 = vector.shape_cast %92 : vector<1x128x128xbf16> to vector<128x128xbf16>
    %cst_61 = arith.constant dense<0.000000e+00> : vector<256x128xf32>
    %94 = tpu.matmul %91, %93, %cst_61 {dimension_numbers = #tpu.dot_dimension_numbers<[1], [0], [0], [1], [0, 0, 1, 1], [], []>} : vector<256x128xbf16>, vector<128x128xbf16>, vector<256x128xf32> -> vector<256x128xf32>
    %95 = arith.addf %89, %94 : vector<256x128xf32>
    %c0_62 = arith.constant 0 : index
    %c0_63 = arith.constant 0 : index
    %96 = vector.load %arg5[%c0_62, %c0_63] : memref<1x128xf32, #tpu.memory_space<vmem>>, vector<1x128xf32>
    %97 = vector.broadcast %96 : vector<1x128xf32> to vector<256x128xf32>
    %98 = arith.addf %95, %97 : vector<256x128xf32>
    %cst_64 = arith.constant 0.000000e+00 : f32
    %99 = vector.broadcast %cst_64 : f32 to vector<256x128xf32>
    %100 = arith.maximumf %98, %99 : vector<256x128xf32>
    %c255_i32_65 = arith.constant 255 : i32
    %101 = tpu.dynamic_rotate %100 by %c255_i32_65 dim 0 : vector<256x128xf32>, i32 -> vector<256x128xf32>
    %102 = arith.maximumf %100, %101 : vector<256x128xf32>
    %c254_i32_66 = arith.constant 254 : i32
    %103 = tpu.dynamic_rotate %100 by %c254_i32_66 dim 0 : vector<256x128xf32>, i32 -> vector<256x128xf32>
    %104 = arith.maximumf %102, %103 : vector<256x128xf32>
    %105 = arith.truncf %104 : vector<256x128xf32> to vector<256x128xbf16>
    %c0_67 = arith.constant 0 : index
    %c0_68 = arith.constant 0 : index
    %c0_69 = arith.constant 0 : index
    %106 = vector.load %arg6[%c0_67, %c0_68, %c0_69] : memref<12x128x128xbf16, #tpu.memory_space<vmem>>, vector<1x128x128xbf16>
    %107 = vector.shape_cast %106 : vector<1x128x128xbf16> to vector<128x128xbf16>
    %cst_70 = arith.constant dense<0.000000e+00> : vector<256x128xf32>
    %108 = tpu.matmul %105, %107, %cst_70 {dimension_numbers = #tpu.dot_dimension_numbers<[1], [0], [0], [1], [0, 0, 1, 1], [], []>} : vector<256x128xbf16>, vector<128x128xbf16>, vector<256x128xf32> -> vector<256x128xf32>
    %c255_i32_71 = arith.constant 255 : i32
    %109 = tpu.dynamic_rotate %104 by %c255_i32_71 dim 0 : vector<256x128xf32>, i32 -> vector<256x128xf32>
    %110 = arith.truncf %109 : vector<256x128xf32> to vector<256x128xbf16>
    %c1_72 = arith.constant 1 : index
    %c0_73 = arith.constant 0 : index
    %c0_74 = arith.constant 0 : index
    %111 = vector.load %arg6[%c1_72, %c0_73, %c0_74] : memref<12x128x128xbf16, #tpu.memory_space<vmem>>, vector<1x128x128xbf16>
    %112 = vector.shape_cast %111 : vector<1x128x128xbf16> to vector<128x128xbf16>
    %cst_75 = arith.constant dense<0.000000e+00> : vector<256x128xf32>
    %113 = tpu.matmul %110, %112, %cst_75 {dimension_numbers = #tpu.dot_dimension_numbers<[1], [0], [0], [1], [0, 0, 1, 1], [], []>} : vector<256x128xbf16>, vector<128x128xbf16>, vector<256x128xf32> -> vector<256x128xf32>
    %114 = arith.addf %108, %113 : vector<256x128xf32>
    %c254_i32_76 = arith.constant 254 : i32
    %115 = tpu.dynamic_rotate %104 by %c254_i32_76 dim 0 : vector<256x128xf32>, i32 -> vector<256x128xf32>
    %116 = arith.truncf %115 : vector<256x128xf32> to vector<256x128xbf16>
    %c2_77 = arith.constant 2 : index
    %c0_78 = arith.constant 0 : index
    %c0_79 = arith.constant 0 : index
    %117 = vector.load %arg6[%c2_77, %c0_78, %c0_79] : memref<12x128x128xbf16, #tpu.memory_space<vmem>>, vector<1x128x128xbf16>
    %118 = vector.shape_cast %117 : vector<1x128x128xbf16> to vector<128x128xbf16>
    %cst_80 = arith.constant dense<0.000000e+00> : vector<256x128xf32>
    %119 = tpu.matmul %116, %118, %cst_80 {dimension_numbers = #tpu.dot_dimension_numbers<[1], [0], [0], [1], [0, 0, 1, 1], [], []>} : vector<256x128xbf16>, vector<128x128xbf16>, vector<256x128xf32> -> vector<256x128xf32>
    %120 = arith.addf %114, %119 : vector<256x128xf32>
    %c253_i32_81 = arith.constant 253 : i32
    %121 = tpu.dynamic_rotate %104 by %c253_i32_81 dim 0 : vector<256x128xf32>, i32 -> vector<256x128xf32>
    %122 = arith.truncf %121 : vector<256x128xf32> to vector<256x128xbf16>
    %c3_82 = arith.constant 3 : index
    %c0_83 = arith.constant 0 : index
    %c0_84 = arith.constant 0 : index
    %123 = vector.load %arg6[%c3_82, %c0_83, %c0_84] : memref<12x128x128xbf16, #tpu.memory_space<vmem>>, vector<1x128x128xbf16>
    %124 = vector.shape_cast %123 : vector<1x128x128xbf16> to vector<128x128xbf16>
    %cst_85 = arith.constant dense<0.000000e+00> : vector<256x128xf32>
    %125 = tpu.matmul %122, %124, %cst_85 {dimension_numbers = #tpu.dot_dimension_numbers<[1], [0], [0], [1], [0, 0, 1, 1], [], []>} : vector<256x128xbf16>, vector<128x128xbf16>, vector<256x128xf32> -> vector<256x128xf32>
    %126 = arith.addf %120, %125 : vector<256x128xf32>
    %c252_i32_86 = arith.constant 252 : i32
    %127 = tpu.dynamic_rotate %104 by %c252_i32_86 dim 0 : vector<256x128xf32>, i32 -> vector<256x128xf32>
    %128 = arith.truncf %127 : vector<256x128xf32> to vector<256x128xbf16>
    %c4_87 = arith.constant 4 : index
    %c0_88 = arith.constant 0 : index
    %c0_89 = arith.constant 0 : index
    %129 = vector.load %arg6[%c4_87, %c0_88, %c0_89] : memref<12x128x128xbf16, #tpu.memory_space<vmem>>, vector<1x128x128xbf16>
    %130 = vector.shape_cast %129 : vector<1x128x128xbf16> to vector<128x128xbf16>
    %cst_90 = arith.constant dense<0.000000e+00> : vector<256x128xf32>
    %131 = tpu.matmul %128, %130, %cst_90 {dimension_numbers = #tpu.dot_dimension_numbers<[1], [0], [0], [1], [0, 0, 1, 1], [], []>} : vector<256x128xbf16>, vector<128x128xbf16>, vector<256x128xf32> -> vector<256x128xf32>
    %132 = arith.addf %126, %131 : vector<256x128xf32>
    %c251_i32_91 = arith.constant 251 : i32
    %133 = tpu.dynamic_rotate %104 by %c251_i32_91 dim 0 : vector<256x128xf32>, i32 -> vector<256x128xf32>
    %134 = arith.truncf %133 : vector<256x128xf32> to vector<256x128xbf16>
    %c5_92 = arith.constant 5 : index
    %c0_93 = arith.constant 0 : index
    %c0_94 = arith.constant 0 : index
    %135 = vector.load %arg6[%c5_92, %c0_93, %c0_94] : memref<12x128x128xbf16, #tpu.memory_space<vmem>>, vector<1x128x128xbf16>
    %136 = vector.shape_cast %135 : vector<1x128x128xbf16> to vector<128x128xbf16>
    %cst_95 = arith.constant dense<0.000000e+00> : vector<256x128xf32>
    %137 = tpu.matmul %134, %136, %cst_95 {dimension_numbers = #tpu.dot_dimension_numbers<[1], [0], [0], [1], [0, 0, 1, 1], [], []>} : vector<256x128xbf16>, vector<128x128xbf16>, vector<256x128xf32> -> vector<256x128xf32>
    %138 = arith.addf %132, %137 : vector<256x128xf32>
    %c250_i32_96 = arith.constant 250 : i32
    %139 = tpu.dynamic_rotate %104 by %c250_i32_96 dim 0 : vector<256x128xf32>, i32 -> vector<256x128xf32>
    %140 = arith.truncf %139 : vector<256x128xf32> to vector<256x128xbf16>
    %c6_97 = arith.constant 6 : index
    %c0_98 = arith.constant 0 : index
    %c0_99 = arith.constant 0 : index
    %141 = vector.load %arg6[%c6_97, %c0_98, %c0_99] : memref<12x128x128xbf16, #tpu.memory_space<vmem>>, vector<1x128x128xbf16>
    %142 = vector.shape_cast %141 : vector<1x128x128xbf16> to vector<128x128xbf16>
    %cst_100 = arith.constant dense<0.000000e+00> : vector<256x128xf32>
    %143 = tpu.matmul %140, %142, %cst_100 {dimension_numbers = #tpu.dot_dimension_numbers<[1], [0], [0], [1], [0, 0, 1, 1], [], []>} : vector<256x128xbf16>, vector<128x128xbf16>, vector<256x128xf32> -> vector<256x128xf32>
    %144 = arith.addf %138, %143 : vector<256x128xf32>
    %c249_i32_101 = arith.constant 249 : i32
    %145 = tpu.dynamic_rotate %104 by %c249_i32_101 dim 0 : vector<256x128xf32>, i32 -> vector<256x128xf32>
    %146 = arith.truncf %145 : vector<256x128xf32> to vector<256x128xbf16>
    %c7_102 = arith.constant 7 : index
    %c0_103 = arith.constant 0 : index
    %c0_104 = arith.constant 0 : index
    %147 = vector.load %arg6[%c7_102, %c0_103, %c0_104] : memref<12x128x128xbf16, #tpu.memory_space<vmem>>, vector<1x128x128xbf16>
    %148 = vector.shape_cast %147 : vector<1x128x128xbf16> to vector<128x128xbf16>
    %cst_105 = arith.constant dense<0.000000e+00> : vector<256x128xf32>
    %149 = tpu.matmul %146, %148, %cst_105 {dimension_numbers = #tpu.dot_dimension_numbers<[1], [0], [0], [1], [0, 0, 1, 1], [], []>} : vector<256x128xbf16>, vector<128x128xbf16>, vector<256x128xf32> -> vector<256x128xf32>
    %150 = arith.addf %144, %149 : vector<256x128xf32>
    %c248_i32_106 = arith.constant 248 : i32
    %151 = tpu.dynamic_rotate %104 by %c248_i32_106 dim 0 : vector<256x128xf32>, i32 -> vector<256x128xf32>
    %152 = arith.truncf %151 : vector<256x128xf32> to vector<256x128xbf16>
    %c8_107 = arith.constant 8 : index
    %c0_108 = arith.constant 0 : index
    %c0_109 = arith.constant 0 : index
    %153 = vector.load %arg6[%c8_107, %c0_108, %c0_109] : memref<12x128x128xbf16, #tpu.memory_space<vmem>>, vector<1x128x128xbf16>
    %154 = vector.shape_cast %153 : vector<1x128x128xbf16> to vector<128x128xbf16>
    %cst_110 = arith.constant dense<0.000000e+00> : vector<256x128xf32>
    %155 = tpu.matmul %152, %154, %cst_110 {dimension_numbers = #tpu.dot_dimension_numbers<[1], [0], [0], [1], [0, 0, 1, 1], [], []>} : vector<256x128xbf16>, vector<128x128xbf16>, vector<256x128xf32> -> vector<256x128xf32>
    %156 = arith.addf %150, %155 : vector<256x128xf32>
    %c247_i32 = arith.constant 247 : i32
    %157 = tpu.dynamic_rotate %104 by %c247_i32 dim 0 : vector<256x128xf32>, i32 -> vector<256x128xf32>
    %158 = arith.truncf %157 : vector<256x128xf32> to vector<256x128xbf16>
    %c9 = arith.constant 9 : index
    %c0_111 = arith.constant 0 : index
    %c0_112 = arith.constant 0 : index
    %159 = vector.load %arg6[%c9, %c0_111, %c0_112] : memref<12x128x128xbf16, #tpu.memory_space<vmem>>, vector<1x128x128xbf16>
    %160 = vector.shape_cast %159 : vector<1x128x128xbf16> to vector<128x128xbf16>
    %cst_113 = arith.constant dense<0.000000e+00> : vector<256x128xf32>
    %161 = tpu.matmul %158, %160, %cst_113 {dimension_numbers = #tpu.dot_dimension_numbers<[1], [0], [0], [1], [0, 0, 1, 1], [], []>} : vector<256x128xbf16>, vector<128x128xbf16>, vector<256x128xf32> -> vector<256x128xf32>
    %162 = arith.addf %156, %161 : vector<256x128xf32>
    %c246_i32 = arith.constant 246 : i32
    %163 = tpu.dynamic_rotate %104 by %c246_i32 dim 0 : vector<256x128xf32>, i32 -> vector<256x128xf32>
    %164 = arith.truncf %163 : vector<256x128xf32> to vector<256x128xbf16>
    %c10 = arith.constant 10 : index
    %c0_114 = arith.constant 0 : index
    %c0_115 = arith.constant 0 : index
    %165 = vector.load %arg6[%c10, %c0_114, %c0_115] : memref<12x128x128xbf16, #tpu.memory_space<vmem>>, vector<1x128x128xbf16>
    %166 = vector.shape_cast %165 : vector<1x128x128xbf16> to vector<128x128xbf16>
    %cst_116 = arith.constant dense<0.000000e+00> : vector<256x128xf32>
    %167 = tpu.matmul %164, %166, %cst_116 {dimension_numbers = #tpu.dot_dimension_numbers<[1], [0], [0], [1], [0, 0, 1, 1], [], []>} : vector<256x128xbf16>, vector<128x128xbf16>, vector<256x128xf32> -> vector<256x128xf32>
    %168 = arith.addf %162, %167 : vector<256x128xf32>
    %c245_i32 = arith.constant 245 : i32
    %169 = tpu.dynamic_rotate %104 by %c245_i32 dim 0 : vector<256x128xf32>, i32 -> vector<256x128xf32>
    %170 = arith.truncf %169 : vector<256x128xf32> to vector<256x128xbf16>
    %c11 = arith.constant 11 : index
    %c0_117 = arith.constant 0 : index
    %c0_118 = arith.constant 0 : index
    %171 = vector.load %arg6[%c11, %c0_117, %c0_118] : memref<12x128x128xbf16, #tpu.memory_space<vmem>>, vector<1x128x128xbf16>
    %172 = vector.shape_cast %171 : vector<1x128x128xbf16> to vector<128x128xbf16>
    %cst_119 = arith.constant dense<0.000000e+00> : vector<256x128xf32>
    %173 = tpu.matmul %170, %172, %cst_119 {dimension_numbers = #tpu.dot_dimension_numbers<[1], [0], [0], [1], [0, 0, 1, 1], [], []>} : vector<256x128xbf16>, vector<128x128xbf16>, vector<256x128xf32> -> vector<256x128xf32>
    %174 = arith.addf %168, %173 : vector<256x128xf32>
    %c0_120 = arith.constant 0 : index
    %c0_121 = arith.constant 0 : index
    %175 = vector.load %arg7[%c0_120, %c0_121] : memref<1x128xf32, #tpu.memory_space<vmem>>, vector<1x128xf32>
    %176 = vector.broadcast %175 : vector<1x128xf32> to vector<256x128xf32>
    %177 = arith.addf %174, %176 : vector<256x128xf32>
    %cst_122 = arith.constant 0.000000e+00 : f32
    %178 = vector.broadcast %cst_122 : f32 to vector<256x128xf32>
    %179 = arith.maximumf %177, %178 : vector<256x128xf32>
    %c255_i32_123 = arith.constant 255 : i32
    %180 = tpu.dynamic_rotate %179 by %c255_i32_123 dim 0 : vector<256x128xf32>, i32 -> vector<256x128xf32>
    %181 = arith.maximumf %179, %180 : vector<256x128xf32>
    %c254_i32_124 = arith.constant 254 : i32
    %182 = tpu.dynamic_rotate %179 by %c254_i32_124 dim 0 : vector<256x128xf32>, i32 -> vector<256x128xf32>
    %183 = arith.maximumf %181, %182 : vector<256x128xf32>
    %184 = tpu.iota {dimensions = array<i32: 0>} : vector<256x1xi32>
    %c64_i32 = arith.constant 64 : i32
    %c0_i32 = arith.constant 0 : i32
    %185 = arith.cmpi eq, %c64_i32, %c0_i32 : i32
    %c1_i32 = arith.constant 1 : i32
    %186 = arith.select %185, %c1_i32, %c64_i32 : i32
    %187 = vector.broadcast %186 : i32 to vector<256x1xi32>
    %188 = arith.remsi %184, %187 : vector<256x1xi32>
    %c0_i32_125 = arith.constant 0 : i32
    %189 = vector.broadcast %c0_i32_125 : i32 to vector<256x1xi32>
    %190 = arith.cmpi ne, %188, %189 : vector<256x1xi32>
    %c0_i32_126 = arith.constant 0 : i32
    %191 = vector.broadcast %c0_i32_126 : i32 to vector<256x1xi32>
    %192 = arith.cmpi slt, %188, %191 : vector<256x1xi32>
    %c0_i32_127 = arith.constant 0 : i32
    %193 = arith.cmpi slt, %186, %c0_i32_127 : i32
    %194 = vector.broadcast %193 : i1 to vector<256x1xi1>
    %195 = vector.broadcast %194 : vector<256x1xi1> to vector<256x1xi1>
    %196 = arith.xori %192, %195 : vector<256x1xi1>
    %197 = arith.andi %196, %190 : vector<256x1xi1>
    %198 = vector.broadcast %186 : i32 to vector<256x1xi32>
    %199 = arith.addi %188, %198 : vector<256x1xi32>
    %200 = arith.select %197, %199, %188 : vector<256x1xi1>, vector<256x1xi32>
    %c34_i32 = arith.constant 34 : i32
    %201 = vector.broadcast %c34_i32 : i32 to vector<256x1xi32>
    %202 = arith.cmpi slt, %200, %201 : vector<256x1xi32>
    %cst_128 = arith.constant 0.000000e+00 : f32
    %203 = vector.shape_cast %202 : vector<256x1xi1> to vector<256x1xi1>
    %204 = vector.broadcast %203 : vector<256x1xi1> to vector<256x128xi1>
    %205 = vector.broadcast %cst_128 : f32 to vector<256x128xf32>
    %206 = arith.select %204, %183, %205 : vector<256x128xi1>, vector<256x128xf32>
    %207 = vector.shape_cast %206 : vector<256x128xf32> to vector<4x64x128xf32>
    %208 = vector.extract_strided_slice %207 {offsets = [0, 0, 0], sizes = [4, 40, 128], strides = [1, 1, 1]} : vector<4x64x128xf32> to vector<4x40x128xf32>
    %209 = vector.shape_cast %208 : vector<4x40x128xf32> to vector<160x128xf32>
    %210 = arith.truncf %209 : vector<160x128xf32> to vector<160x128xbf16>
    %c0_129 = arith.constant 0 : index
    %c0_130 = arith.constant 0 : index
    %211 = vector.load %arg8[%c0_129, %c0_130] : memref<160x128xbf16, #tpu.memory_space<vmem>>, vector<160x128xbf16>
    tpu.vector_store %arg8[%c0_129, %c0_130], %210 {strides = array<i32>} : memref<160x128xbf16, #tpu.memory_space<vmem>>, vector<160x128xbf16>,
    return
  }
  func.func @transform_0(%arg0: i32) -> (i32, i32) {
    %c0_i32 = arith.constant 0 : i32
    %c0_i32_0 = arith.constant 0 : i32
    return %arg0, %c0_i32 : i32, i32
  }
  func.func @transform_1(%arg0: i32) -> (i32, i32, i32) {
    %c0_i32 = arith.constant 0 : i32
    %c0_i32_0 = arith.constant 0 : i32
    %c0_i32_1 = arith.constant 0 : i32
    %c0_i32_2 = arith.constant 0 : i32
    return %c0_i32, %c0_i32_0, %c0_i32_1 : i32, i32, i32
  }
  func.func @transform_2(%arg0: i32) -> (i32, i32) {
    %c0_i32 = arith.constant 0 : i32
    %c0_i32_0 = arith.constant 0 : i32
    %c0_i32_1 = arith.constant 0 : i32
    return %c0_i32, %c0_i32_0 : i32, i32
  }
  func.func @transform_3(%arg0: i32) -> (i32, i32, i32) {
    %c0_i32 = arith.constant 0 : i32
    %c0_i32_0 = arith.constant 0 : i32
    %c0_i32_1 = arith.constant 0 : i32
    %c0_i32_2 = arith.constant 0 : i32
    return %c0_i32, %c0_i32_0, %c0_i32_1 : i32, i32, i32
  }
  func.func @transform_4(%arg0: i32) -> (i32, i32) {
    %c0_i32 = arith.constant 0 : i32
    %c0_i32_0 = arith.constant 0 : i32
    %c0_i32_1 = arith.constant 0 : i32
    return %c0_i32, %c0_i32_0 : i32, i32
  }
  func.func @transform_5(%arg0: i32) -> (i32, i32, i32) {
    %c0_i32 = arith.constant 0 : i32
    %c0_i32_0 = arith.constant 0 : i32
    %c0_i32_1 = arith.constant 0 : i32
    %c0_i32_2 = arith.constant 0 : i32
    return %c0_i32, %c0_i32_0, %c0_i32_1 : i32, i32, i32
  }
  func.func @transform_6(%arg0: i32) -> (i32, i32) {
    %c0_i32 = arith.constant 0 : i32
    %c0_i32_0 = arith.constant 0 : i32
    %c0_i32_1 = arith.constant 0 : i32
    return %c0_i32, %c0_i32_0 : i32, i32
  }
  func.func @transform_7(%arg0: i32) -> (i32, i32) {
    %c0_i32 = arith.constant 0 : i32
    %c0_i32_0 = arith.constant 0 : i32
    return %arg0, %c0_i32 : i32, i32
  }
}

</mosaic_0001>

<llo_original>
// kernel: _lambda_.3
$region0: #{_lambda_.3}
  #allocation0 [shape = 'u32[]', space=smem, size = 0x4, offset = 0x4, fixed_abs, tag = 'smem constant byte address 0x4 - core index']
  #allocation1 [shape = 'u32[72,128]{1,0:T(1,128)}', space=vmem, size = 0x9000, scoped, tag = 'internal scratch']
  #allocation2 [shape = 'f32[16,256]{1,0:T(8,128)}', space=vmem, size = 0x4000, scoped, tag = 'scratch operand']
  %s0 = inlined_call_operand.vmem [shape: bf16[16,5120], index: 0, kind: input, shape index: {}]
  %s1 = inlined_call_operand.hbm [shape: bf16[5120,256], index: 1, kind: input, shape index: {}]
  %s2 = inlined_call_operand.hbm [shape: f32[1,256], index: 2, kind: input, shape index: {}]
  %s3 = inlined_call_operand.hbm [shape: bf16[256,256], index: 3, kind: input, shape index: {}]
  %s4 = inlined_call_operand.hbm [shape: f32[1,256], index: 4, kind: input, shape index: {}]
  %s5 = inlined_call_operand.hbm [shape: bf16[256,128], index: 5, kind: input, shape index: {}]
  %s6 = inlined_call_operand.hbm [shape: f32[1,128], index: 6, kind: input, shape index: {}]
  %s7 = inlined_call_operand.vmem [shape: f32[16,128], index: 7, kind: output, shape index: {}]
  %s8 = sld [smem:[#allocation0]]
  $region116: #{_lambda_.3} parent=0
    _
  %s10 = ssub.s32 1, %s8
  %s11 = scalar_select 0, %s10, %s8
  $region1: #{_lambda_.3} parent=0
    #allocation3 [shape = 'u8[163840]{0}', space=vmem, size = 0x28000, scoped, tag = 'input window, operand 0']
    #allocation4 [shape = 'u8[2621440]{0}', space=vmem, size = 0x280000, scoped, tag = 'input window, operand 1']
    #allocation5 [shape = 's32[2]{0}', space=sflag, size = 0x8, scoped, tag = 'scoped memory for _lambda_.3']
    #allocation6 [shape = 'u8[1024]{0}', space=vmem, size = 0x400, scoped, tag = 'input window, operand 2, single buffered']
    #allocation7 [shape = 's32[1]{0}', space=sflag, size = 0x4, scoped, tag = 'scoped memory for _lambda_.3']
    #allocation8 [shape = 'u8[131072]{0}', space=vmem, size = 0x20000, scoped, tag = 'input window, operand 3, single buffered']
    #allocation9 [shape = 'u8[1024]{0}', space=vmem, size = 0x400, scoped, tag = 'input window, operand 4, single buffered']
    #allocation10 [shape = 's32[1]{0}', space=sflag, size = 0x4, scoped, tag = 'scoped memory for _lambda_.3']
    #allocation11 [shape = 'u8[65536]{0}', space=vmem, size = 0x10000, scoped, tag = 'input window, operand 5, single buffered']
    #allocation12 [shape = 'u8[512]{0}', space=vmem, size = 0x400, scoped, tag = 'input window, operand 6, single buffered']
    #allocation13 [shape = 's32[1]{0}', space=sflag, size = 0x4, scoped, tag = 'scoped memory for _lambda_.3']
    %12 = vsyncpa [#allocation5], 0
    %s13 = scalar_lea.sflag [#allocation5], 1
    %14 = vsyncpa %s13, 0
    %15 = vsyncpa [#allocation7], 0
    %16 = vsyncpa [#allocation10], 0
    %17 = vsyncpa [#allocation13], 0
    loop: start=0, step=1, limit=4
    $region2: #{_lambda_.3} parent=1 // loop_pre_header
      _
    $region3: #{_lambda_.3} parent=1 // loop_header
      %s19 = sphi 0, %s23
      %p20 = scmp.ge.s32.totalorder %s19, 4
      %s26 = sphi 0, %s38
      %s27 = sphi 0, %s34
      %s28 = sphi 0, %s26
      %s29 = sphi 0, %s27
      %s30 = sphi 0, %s28
      %s31 = sphi 0, %s29
      %s43 = sphi 0, %s45
      %s46 = sphi 0, %s43
      %s47 = sphi 0, %s46
      %s63 = sphi 0, %s47
      %s69 = sphi 0, %s71
      %s72 = sphi 0, %s69
      %s73 = sphi 0, %s72
      %s89 = sphi 0, %s73
      %s93 = sphi 0, %s93
      %s95 = sphi 0, %s93
      %s96 = sphi 0, %s95
      %s110 = sphi 0, %s96
      %s114 = sphi 0, %s114
      %s116 = sphi 0, %s114
      %s117 = sphi 0, %s116
      %s131 = sphi 0, %s117
      %s135 = sphi 0, %s135
      %s137 = sphi 0, %s135
      %s138 = sphi 0, %s137
      %s152 = sphi 0, %s138
      %s156 = sphi 0, %s156
      %s158 = sphi 0, %s156
      %s159 = sphi 0, %s158
      %s173 = sphi 0, %s159
      %s177 = sphi 0, %s177
      %s179 = sphi 0, %s177
      %s180 = sphi 0, %s179
      %s194 = sphi 0, %s180
      %s200 = sphi 0, %s202
      %s203 = sphi 0, %s200
      %s204 = sphi 0, %s203
      %s220 = sphi 0, %s204
    $region4: #{_lambda_.3} parent=1 // loop_header_branch
      %22 = sbr.rel (%p20) target = $region8
    $region5: #{_lambda_.3} parent=1 // loop_body
      %s24 = ssub.s32 %s19, 1
      %s25 = ssub.s32 %s19, 2
      %s32 = sadd.s32 1, %s27
      %p33 = scmp.ge.s32.totalorder %s32, 2
      %s34 = scalar_select %p33, 0, %s32
      %s35 = sadd.s32 1, %s26
      %s36 = scalar_select %p33, %s35, %s26
      %p37 = scmp.ge.s32.totalorder %s36, 1
      %s38 = scalar_select %p37, 0, %s36
      %s39 = ssub.s32 %s26, %s38
      %s40 = ssub.s32 %s27, %s34
      %s41 = sor.u32 %s39, %s40
      %p42 = scmp.eq.s32.totalorder %s41, 0
      %s44 = sadd.s32 %s43, 1
      %s45 = scalar_select %p42, %s43, %s44
      %p48 = pneg %p42
      %p49 = scmp.eq.s32.totalorder %s19, 1
      %p50 = por %p48, %p49
      %p51 = scmp.ne.s32.totalorder %s43, %s46
      %p52 = scmp.eq.s32.totalorder %s19, 0
      %p53 = por %p51, %p52
      %p54 = scmp.ne.s32.totalorder %s43, %s46
      %p55 = scmp.eq.s32.totalorder %s24, 1
      %p56 = por %p54, %p55
      %p57 = scmp.ne.s32.totalorder %s46, %s47
      %p58 = scmp.eq.s32.totalorder %s24, 0
      %p59 = por %p57, %p58
      %p60 = scmp.ne.s32.totalorder %s46, %s47
      %p61 = scmp.eq.s32.totalorder %s25, 1
      %p62 = por %p60, %p61
      %p64 = scmp.ne.s32.totalorder %s47, %s63
      %p65 = scmp.eq.s32.totalorder %s25, 0
      %p66 = por %p64, %p65
      %s67 = ssub.s32 %s27, %s34
      %p68 = scmp.eq.s32.totalorder %s67, 0
      %s70 = sadd.s32 %s69, 1
      %s71 = scalar_select %p68, %s69, %s70
      %p74 = pneg %p68
      %p75 = scmp.eq.s32.totalorder %s19, 1
      %p76 = por %p74, %p75
      %p77 = scmp.ne.s32.totalorder %s69, %s72
      %p78 = scmp.eq.s32.totalorder %s19, 0
      %p79 = por %p77, %p78
      %p80 = scmp.ne.s32.totalorder %s69, %s72
      %p81 = scmp.eq.s32.totalorder %s24, 1
      %p82 = por %p80, %p81
      %p83 = scmp.ne.s32.totalorder %s72, %s73
      %p84 = scmp.eq.s32.totalorder %s24, 0
      %p85 = por %p83, %p84
      %p86 = scmp.ne.s32.totalorder %s72, %s73
      %p87 = scmp.eq.s32.totalorder %s25, 1
      %p88 = por %p86, %p87
      %p90 = scmp.ne.s32.totalorder %s73, %s89
      %p91 = scmp.eq.s32.totalorder %s25, 0
      %p92 = por %p90, %p91
      %s94 = sadd.s32 %s93, 1
      %p97 = scmp.eq.s32.totalorder %s19, 1
      %p98 = scmp.ne.s32.totalorder %s93, %s95
      %p99 = scmp.eq.s32.totalorder %s19, 0
      %p100 = por %p98, %p99
      %p101 = scmp.ne.s32.totalorder %s93, %s95
      %p102 = scmp.eq.s32.totalorder %s24, 1
      %p103 = por %p101, %p102
      %p104 = scmp.ne.s32.totalorder %s95, %s96
      %p105 = scmp.eq.s32.totalorder %s24, 0
      %p106 = por %p104, %p105
      %p107 = scmp.ne.s32.totalorder %s95, %s96
      %p108 = scmp.eq.s32.totalorder %s25, 1
      %p109 = por %p107, %p108
      %p111 = scmp.ne.s32.totalorder %s96, %s110
      %p112 = scmp.eq.s32.totalorder %s25, 0
      %p113 = por %p111, %p112
      %s115 = sadd.s32 %s114, 1
      %p118 = scmp.eq.s32.totalorder %s19, 1
      %p119 = scmp.ne.s32.totalorder %s114, %s116
      %p120 = scmp.eq.s32.totalorder %s19, 0
      %p121 = por %p119, %p120
      %p122 = scmp.ne.s32.totalorder %s114, %s116
      %p123 = scmp.eq.s32.totalorder %s24, 1
      %p124 = por %p122, %p123
      %p125 = scmp.ne.s32.totalorder %s116, %s117
      %p126 = scmp.eq.s32.totalorder %s24, 0
      %p127 = por %p125, %p126
      %p128 = scmp.ne.s32.totalorder %s116, %s117
      %p129 = scmp.eq.s32.totalorder %s25, 1
      %p130 = por %p128, %p129
      %p132 = scmp.ne.s32.totalorder %s117, %s131
      %p133 = scmp.eq.s32.totalorder %s25, 0
      %p134 = por %p132, %p133
      %s136 = sadd.s32 %s135, 1
      %p139 = scmp.eq.s32.totalorder %s19, 1
      %p140 = scmp.ne.s32.totalorder %s135, %s137
      %p141 = scmp.eq.s32.totalorder %s19, 0
      %p142 = por %p140, %p141
      %p143 = scmp.ne.s32.totalorder %s135, %s137
      %p144 = scmp.eq.s32.totalorder %s24, 1
      %p145 = por %p143, %p144
      %p146 = scmp.ne.s32.totalorder %s137, %s138
      %p147 = scmp.eq.s32.totalorder %s24, 0
      %p148 = por %p146, %p147
      %p149 = scmp.ne.s32.totalorder %s137, %s138
      %p150 = scmp.eq.s32.totalorder %s25, 1
      %p151 = por %p149, %p150
      %p153 = scmp.ne.s32.totalorder %s138, %s152
      %p154 = scmp.eq.s32.totalorder %s25, 0
      %p155 = por %p153, %p154
      %s157 = sadd.s32 %s156, 1
      %p160 = scmp.eq.s32.totalorder %s19, 1
      %p161 = scmp.ne.s32.totalorder %s156, %s158
      %p162 = scmp.eq.s32.totalorder %s19, 0
      %p163 = por %p161, %p162
      %p164 = scmp.ne.s32.totalorder %s156, %s158
      %p165 = scmp.eq.s32.totalorder %s24, 1
      %p166 = por %p164, %p165
      %p167 = scmp.ne.s32.totalorder %s158, %s159
      %p168 = scmp.eq.s32.totalorder %s24, 0
      %p169 = por %p167, %p168
      %p170 = scmp.ne.s32.totalorder %s158, %s159
      %p171 = scmp.eq.s32.totalorder %s25, 1
      %p172 = por %p170, %p171
      %p174 = scmp.ne.s32.totalorder %s159, %s173
      %p175 = scmp.eq.s32.totalorder %s25, 0
      %p176 = por %p174, %p175
      %s178 = sadd.s32 %s177, 1
      %p181 = scmp.eq.s32.totalorder %s19, 1
      %p182 = scmp.ne.s32.totalorder %s177, %s179
      %p183 = scmp.eq.s32.totalorder %s19, 0
      %p184 = por %p182, %p183
      %p185 = scmp.ne.s32.totalorder %s177, %s179
      %p186 = scmp.eq.s32.totalorder %s24, 1
      %p187 = por %p185, %p186
      %p188 = scmp.ne.s32.totalorder %s179, %s180
      %p189 = scmp.eq.s32.totalorder %s24, 0
      %p190 = por %p188, %p189
      %p191 = scmp.ne.s32.totalorder %s179, %s180
      %p192 = scmp.eq.s32.totalorder %s25, 1
      %p193 = por %p191, %p192
      %p195 = scmp.ne.s32.totalorder %s180, %s194
      %p196 = scmp.eq.s32.totalorder %s25, 0
      %p197 = por %p195, %p196
      %s198 = ssub.s32 %s26, %s38
      %p199 = scmp.eq.s32.totalorder %s198, 0
      %s201 = sadd.s32 %s200, 1
      %s202 = scalar_select %p199, %s200, %s201
      %p205 = pneg %p199
      %p206 = scmp.eq.s32.totalorder %s19, 1
      %p207 = por %p205, %p206
      %p208 = scmp.ne.s32.totalorder %s200, %s203
      %p209 = scmp.eq.s32.totalorder %s19, 0
      %p210 = por %p208, %p209
      %p211 = scmp.ne.s32.totalorder %s200, %s203
      %p212 = scmp.eq.s32.totalorder %s24, 1
      %p213 = por %p211, %p212
      %p214 = scmp.ne.s32.totalorder %s203, %s204
      %p215 = scmp.eq.s32.totalorder %s24, 0
      %p216 = por %p214, %p215
      %p217 = scmp.ne.s32.totalorder %s203, %s204
      %p218 = scmp.eq.s32.totalorder %s25, 1
      %p219 = por %p217, %p218
      %p221 = scmp.ne.s32.totalorder %s204, %s220
      %p222 = scmp.eq.s32.totalorder %s25, 0
      %p223 = por %p221, %p222
      %p224 = scmp.le.s32.totalorder 1, %s19
      %p225 = scmp.lt.s32.totalorder %s19, 3
      %p226 = pnand %p224, %p225
      %p227 = pneg %p226
      // Predicated region
      $region9: #{_lambda_.3} parent=5 // pred_check
        _
      $region10: #{_lambda_.3} parent=5 // pred_check_branch
        %229 = sbr.rel (%p226) target = $region12
      $region11: #{_lambda_.3} parent=5 // pred_region
        %s230 = ssub.s32 %s19, 1
        // Predicated region
        $region13: #{_lambda_.3} parent=11 // pred_check
          %p231 = pneg %p106
        $region14: #{_lambda_.3} parent=11 // pred_check_branch
          %233 = sbr.rel (%p231) target = $region16
        $region15: #{_lambda_.3} parent=11 // pred_region
          %235 = vsyncadd [#allocation7], 0
          %s237 = sshll.u32 %s2, 4
          %s238 = int_to_ptr.hbm [resolvable:$true] %s237
          %s239 = sshll.u32 [#allocation6], 4
          %s240 = int_to_ptr.vmem [resolvable:$true] %s239
          %242 = dma.hbm_to_vmem [thread:$0]  %s238, 32, %s240, [#allocation7]
        $region16: #{_lambda_.3} parent=11 // pred_fallthru
          _
        // Predicated region
        $region17: #{_lambda_.3} parent=11 // pred_check
          %p243 = pneg %p127
        $region18: #{_lambda_.3} parent=11 // pred_check_branch
          %245 = sbr.rel (%p243) target = $region20
        $region19: #{_lambda_.3} parent=11 // pred_region
          %247 = vsyncadd [#allocation7], 0
          %s248 = sshll.u32 %s3, 4
          %s249 = int_to_ptr.hbm [resolvable:$true] %s248
          %s250 = sshll.u32 [#allocation8], 4
          %s251 = int_to_ptr.vmem [resolvable:$true] %s250
          %256 = dma.hbm_to_vmem [thread:$0]  %s249, 4096, %s251, [#allocation7], 128, 128, 8
        $region20: #{_lambda_.3} parent=11 // pred_fallthru
          _
        // Predicated region
        $region21: #{_lambda_.3} parent=11 // pred_check
          %p257 = pneg %p148
        $region22: #{_lambda_.3} parent=11 // pred_check_branch
          %259 = sbr.rel (%p257) target = $region24
        $region23: #{_lambda_.3} parent=11 // pred_region
          %261 = vsyncadd [#allocation10], 0
          %s263 = sshll.u32 %s4, 4
          %s264 = int_to_ptr.hbm [resolvable:$true] %s263
          %s265 = sshll.u32 [#allocation9], 4
          %s266 = int_to_ptr.vmem [resolvable:$true] %s265
          %268 = dma.hbm_to_vmem [thread:$0]  %s264, 32, %s266, [#allocation10]
        $region24: #{_lambda_.3} parent=11 // pred_fallthru
          _
        // Predicated region
        $region25: #{_lambda_.3} parent=11 // pred_check
          %p269 = pneg %p169
        $region26: #{_lambda_.3} parent=11 // pred_check_branch
          %271 = sbr.rel (%p269) target = $region28
        $region27: #{_lambda_.3} parent=11 // pred_region
          %273 = vsyncadd [#allocation10], 0
          %s274 = sshll.u32 %s5, 4
          %s275 = int_to_ptr.hbm [resolvable:$true] %s274
          %s276 = sshll.u32 [#allocation11], 4
          %s277 = int_to_ptr.vmem [resolvable:$true] %s276
          %282 = dma.hbm_to_vmem [thread:$0]  %s275, 2048, %s277, [#allocation10], 64, 64, 4
        $region28: #{_lambda_.3} parent=11 // pred_fallthru
          _
        // Predicated region
        $region29: #{_lambda_.3} parent=11 // pred_check
          %p283 = pneg %p190
        $region30: #{_lambda_.3} parent=11 // pred_check_branch
          %285 = sbr.rel (%p283) target = $region32
        $region31: #{_lambda_.3} parent=11 // pred_region
          %287 = vsyncadd [#allocation13], 0
          %s289 = sshll.u32 %s6, 4
          %s290 = int_to_ptr.hbm [resolvable:$true] %s289
          %s291 = sshll.u32 [#allocation12], 4
          %s292 = int_to_ptr.vmem [resolvable:$true] %s291
          %294 = dma.hbm_to_vmem [thread:$0]  %s290, 16, %s292, [#allocation13]
        $region32: #{_lambda_.3} parent=11 // pred_fallthru
          _
      $region12: #{_lambda_.3} parent=5 // pred_fallthru
        _
      %p295 = scmp.lt.s32.totalorder %s19, 2
      // Predicated region
      $region33: #{_lambda_.3} parent=5 // pred_check
        %p296 = pneg %p295
      $region34: #{_lambda_.3} parent=5 // pred_check_branch
        %298 = sbr.rel (%p296) target = $region36
      $region35: #{_lambda_.3} parent=5 // pred_region
        // Predicated region
        $region37: #{_lambda_.3} parent=35 // pred_check
          %p299 = pneg %p53
        $region38: #{_lambda_.3} parent=35 // pred_check_branch
          %301 = sbr.rel (%p299) target = $region40
        $region39: #{_lambda_.3} parent=35 // pred_region
          %s302 = sand.u32 %s43, 1
          %s303 = sand.u32 %s43, 1
          %s304 = smul.addr %s303, 160
          %s305 = scalar_lea.vmem [#allocation3], %s304
          %s306 = smul.u32 2, %s26
          %s307 = smul.u32 20, %s27
          %s308 = smul.addr %s306, 40
          %s309 = sadd.s32 %s307, %s308
          %s310 = smul.addr %s309, 4
          %s311 = scalar_lea.vmem %s0, %s310
          // Predicated region
          $region41: #{_lambda_.3} parent=39 // pred_check
            _
          $region42: #{_lambda_.3} parent=39 // pred_check_branch
            %313 = sbr.rel (0) target = $region44
          $region43: #{_lambda_.3} parent=39 // pred_region
            // Predicated region
            $region45: #{_lambda_.3} parent=43 // pred_check
              _
            $region46: #{_lambda_.3} parent=43 // pred_check_branch
              %315 = sbr.rel (0) target = $region48
            $region47: #{_lambda_.3} parent=43 // pred_region
              loop: start=0, step=1, limit=1
              $region49: #{_lambda_.3} parent=47 // loop_pre_header
                _
              $region50: #{_lambda_.3} parent=47 // loop_header
                %s317 = sphi 0, %s321
                %p318 = scmp.ge.s32.totalorder %s317, 1
                %s322 = sphi %s311, %s311
                %s323 = sphi %s305, %s305
              $region51: #{_lambda_.3} parent=47 // loop_header_branch
                %320 = sbr.rel (%p318) target = $region55
              $region52: #{_lambda_.3} parent=47 // loop_body
                %v324 = vld [vmem:[%s322] sm:$0xff]
                %325 = vst [vmem:[%s323] sm:$0xff] %v324
                %v326 = vld [vmem:[%s322 + $0x8] sm:$0xff]
                %327 = vst [vmem:[%s323 + $0x8] sm:$0xff] %v326
                %v328 = vld [vmem:[%s322 + $0x10] sm:$0xff]
                %329 = vst [vmem:[%s323 + $0x10] sm:$0xff] %v328
                %v330 = vld [vmem:[%s322 + $0x18] sm:$0xff]
                %331 = vst [vmem:[%s323 + $0x18] sm:$0xff] %v330
                %v332 = vld [vmem:[%s322 + $0x20] sm:$0xff]
                %333 = vst [vmem:[%s323 + $0x20] sm:$0xff] %v332
                %v334 = vld [vmem:[%s322 + $0x28] sm:$0xff]
                %335 = vst [vmem:[%s323 + $0x28] sm:$0xff] %v334
                %v336 = vld [vmem:[%s322 + $0x30] sm:$0xff]
                %337 = vst [vmem:[%s323 + $0x30] sm:$0xff] %v336
                %v338 = vld [vmem:[%s322 + $0x38] sm:$0xff]
                %339 = vst [vmem:[%s323 + $0x38] sm:$0xff] %v338
                %v340 = vld [vmem:[%s322 + $0x40] sm:$0xff]
                %341 = vst [vmem:[%s323 + $0x40] sm:$0xff] %v340
                %v342 = vld [vmem:[%s322 + $0x48] sm:$0xff]
                %343 = vst [vmem:[%s323 + $0x48] sm:$0xff] %v342
                %v344 = vld [vmem:[%s322 + $0xa0] sm:$0xff]
                %345 = vst [vmem:[%s323 + $0x50] sm:$0xff] %v344
                %v346 = vld [vmem:[%s322 + $0xa8] sm:$0xff]
                %347 = vst [vmem:[%s323 + $0x58] sm:$0xff] %v346
                %v348 = vld [vmem:[%s322 + $0xb0] sm:$0xff]
                %349 = vst [vmem:[%s323 + $0x60] sm:$0xff] %v348
                %v350 = vld [vmem:[%s322 + $0xb8] sm:$0xff]
                %351 = vst [vmem:[%s323 + $0x68] sm:$0xff] %v350
                %v352 = vld [vmem:[%s322 + $0xc0] sm:$0xff]
                %353 = vst [vmem:[%s323 + $0x70] sm:$0xff] %v352
                %v354 = vld [vmem:[%s322 + $0xc8] sm:$0xff]
                %355 = vst [vmem:[%s323 + $0x78] sm:$0xff] %v354
                %v356 = vld [vmem:[%s322 + $0xd0] sm:$0xff]
                %357 = vst [vmem:[%s323 + $0x80] sm:$0xff] %v356
                %v358 = vld [vmem:[%s322 + $0xd8] sm:$0xff]
                %359 = vst [vmem:[%s323 + $0x88] sm:$0xff] %v358
                %v360 = vld [vmem:[%s322 + $0xe0] sm:$0xff]
                %361 = vst [vmem:[%s323 + $0x90] sm:$0xff] %v360
                %v362 = vld [vmem:[%s322 + $0xe8] sm:$0xff]
                %363 = vst [vmem:[%s323 + $0x98] sm:$0xff] %v362
              $region53: #{_lambda_.3} parent=47 // loop_footer
                %s321 = sadd.s32 1, %s317
              $region54: #{_lambda_.3} parent=47 // loop_footer_branch
                %316 = sbr.rel target = $region50
              $region55: #{_lambda_.3} parent=47 // loop_exit
                _
            $region48: #{_lambda_.3} parent=43 // pred_fallthru
              _
            // Predicated region
            $region56: #{_lambda_.3} parent=43 // pred_check
              _
            $region57: #{_lambda_.3} parent=43 // pred_check_branch
              %365 = sbr.rel target = $region59
            $region58: #{_lambda_.3} parent=43 // pred_region
              _
            $region59: #{_lambda_.3} parent=43 // pred_fallthru
              _
          $region44: #{_lambda_.3} parent=39 // pred_fallthru
            _
          %366 = vnop
        $region40: #{_lambda_.3} parent=35 // pred_fallthru
          _
        // Predicated region
        $region60: #{_lambda_.3} parent=35 // pred_check
          %p367 = pneg %p79
        $region61: #{_lambda_.3} parent=35 // pred_check_branch
          %369 = sbr.rel (%p367) target = $region63
        $region62: #{_lambda_.3} parent=35 // pred_region
          %s370 = sand.u32 %s69, 1
          %s371 = scalar_lea.sflag [#allocation5], %s370
          %s372 = sand.u32 %s69, 1
          %s373 = smul.addr %s372, 2560
          %s374 = scalar_lea.vmem [#allocation4], %s373
          %s375 = smul.u32 320, %s27
          %377 = vsyncadd %s371, 0
          %s378 = smul.addr %s375, 2
          %s379 = smul.addr %s378, 4
          %s380 = scalar_lea.hbm %s1, %s379
          %s381 = sshll.u32 %s380, 4
          %s382 = int_to_ptr.hbm [resolvable:$true] %s381
          %s383 = sshll.u32 %s374, 4
          %s384 = int_to_ptr.vmem [resolvable:$true] %s383
          %389 = dma.hbm_to_vmem [thread:$0]  %s382, 40960, %s384, %s371, 128, 128, 8
        $region63: #{_lambda_.3} parent=35 // pred_fallthru
          _
      $region36: #{_lambda_.3} parent=5 // pred_fallthru
        _
      %p390 = scmp.le.s32.totalorder 1, %s19
      %p391 = scmp.lt.s32.totalorder %s19, 3
      %p392 = pnand %p390, %p391
      %p393 = pneg %p392
      // Predicated region
      $region64: #{_lambda_.3} parent=5 // pred_check
        _
      $region65: #{_lambda_.3} parent=5 // pred_check_branch
        %395 = sbr.rel (%p392) target = $region67
      $region66: #{_lambda_.3} parent=5 // pred_region
        %s396 = ssub.s32 %s19, 1
        %s397 = sand.u32 %s46, 1
        %s398 = sand.u32 %s46, 1
        %s399 = smul.addr %s398, 160
        %s400 = scalar_lea.vmem [#allocation3], %s399
        // Predicated region
        $region68: #{_lambda_.3} parent=66 // pred_check
          %p401 = pneg %p59
        $region69: #{_lambda_.3} parent=66 // pred_check_branch
          %403 = sbr.rel (%p401) target = $region71
        $region70: #{_lambda_.3} parent=66 // pred_region
          _
        $region71: #{_lambda_.3} parent=66 // pred_fallthru
          _
        %s404 = sand.u32 %s72, 1
        %s405 = scalar_lea.sflag [#allocation5], %s404
        %s406 = sand.u32 %s72, 1
        %s407 = smul.addr %s406, 2560
        %s408 = scalar_lea.vmem [#allocation4], %s407
        // Predicated region
        $region72: #{_lambda_.3} parent=66 // pred_check
          %p409 = pneg %p85
        $region73: #{_lambda_.3} parent=66 // pred_check_branch
          %411 = sbr.rel (%p409) target = $region75
        $region74: #{_lambda_.3} parent=66 // pred_region
          %413 = dma.done %s405, 40960
        $region75: #{_lambda_.3} parent=66 // pred_fallthru
          _
        // Predicated region
        $region76: #{_lambda_.3} parent=66 // pred_check
          %p414 = pneg %p106
        $region77: #{_lambda_.3} parent=66 // pred_check_branch
          %416 = sbr.rel (%p414) target = $region79
        $region78: #{_lambda_.3} parent=66 // pred_region
          %418 = dma.done [#allocation7], 32
        $region79: #{_lambda_.3} parent=66 // pred_fallthru
          _
        // Predicated region
        $region80: #{_lambda_.3} parent=66 // pred_check
          %p419 = pneg %p127
        $region81: #{_lambda_.3} parent=66 // pred_check_branch
          %421 = sbr.rel (%p419) target = $region83
        $region82: #{_lambda_.3} parent=66 // pred_region
          %423 = dma.done [#allocation7], 4096
        $region83: #{_lambda_.3} parent=66 // pred_fallthru
          _
        // Predicated region
        $region84: #{_lambda_.3} parent=66 // pred_check
          %p424 = pneg %p148
        $region85: #{_lambda_.3} parent=66 // pred_check_branch
          %426 = sbr.rel (%p424) target = $region87
        $region86: #{_lambda_.3} parent=66 // pred_region
          %428 = dma.done [#allocation10], 32
        $region87: #{_lambda_.3} parent=66 // pred_fallthru
          _
        // Predicated region
        $region88: #{_lambda_.3} parent=66 // pred_check
          %p429 = pneg %p169
        $region89: #{_lambda_.3} parent=66 // pred_check_branch
          %431 = sbr.rel (%p429) target = $region91
        $region90: #{_lambda_.3} parent=66 // pred_region
          %433 = dma.done [#allocation10], 2048
        $region91: #{_lambda_.3} parent=66 // pred_fallthru
          _
        // Predicated region
        $region92: #{_lambda_.3} parent=66 // pred_check
          %p434 = pneg %p190
        $region93: #{_lambda_.3} parent=66 // pred_check_branch
          %436 = sbr.rel (%p434) target = $region95
        $region94: #{_lambda_.3} parent=66 // pred_region
          %438 = dma.done [#allocation13], 16
        $region95: #{_lambda_.3} parent=66 // pred_fallthru
          _
        %s439 = sand.u32 %s46, 1
        %s440 = sand.u32 %s46, 1
        %s441 = smul.addr %s440, 160
        %s442 = scalar_lea.vmem [#allocation3], %s441
        %p443 = pneg %p59
        %p444 = pneg %p56
        %s445 = sand.u32 %s72, 1
        %s446 = scalar_lea.sflag [#allocation5], %s445
        %s447 = sand.u32 %s72, 1
        %s448 = smul.addr %s447, 2560
        %s449 = scalar_lea.vmem [#allocation4], %s448
        %p450 = pneg %p85
        %p451 = pneg %p82
        %p452 = pneg %p106
        %p453 = pneg %p103
        %p454 = pneg %p127
        %p455 = pneg %p124
        %p456 = pneg %p148
        %p457 = pneg %p145
        %p458 = pneg %p169
        %p459 = pneg %p166
        %p460 = pneg %p190
        %p461 = pneg %p187
        %p462 = pneg %p216
        %p463 = pneg %p213
        %s464 = smul.u32 2, %s28
        %p465 = scmp.lt.s32.totalorder %s464, 1
        %s466 = scalar_select %p465, %s464, 1
        %s467 = smul.addr %s466, 8
        %s468 = scalar_lea.vmem %s7, %s467
        %s469 = smul.u32 2, %s28
        %s470 = smul.u32 20, %s29
        %s471 = smul.u32 320, %s29
        %s472 = smul.u32 2, %s28
        %p473 = scmp.lt.s32.totalorder %s472, 1
        %s474 = scalar_select %p473, %s472, 1
        %s475 = smul.addr %s474, 8
        %s476 = scalar_lea.vmem %s7, %s475
        %s477 = smul.u32 2, %s28
        %p478 = scmp.eq.s32.totalorder %s29, 0
        // Predicated region
        $region96: #{_lambda_.3} parent=66 // pred_check
          %p479 = pneg %p478
        $region97: #{_lambda_.3} parent=66 // pred_check_branch
          %481 = sbr.rel (%p479) target = $region99
        $region98: #{_lambda_.3} parent=66 // pred_region
          %482 = vst [vmem:[#allocation2] sm:$0xff] 0.0
          %483 = vst [vmem:[#allocation2 + $0x8] sm:$0xff] 0.0
          %484 = vst [vmem:[#allocation2 + $0x10] sm:$0xff] 0.0
          %485 = vst [vmem:[#allocation2 + $0x18] sm:$0xff] 0.0
        $region99: #{_lambda_.3} parent=66 // pred_fallthru
          _
        %v486 = vld [vmem:[#allocation2] sm:$0xff]
        %v487 = vld [vmem:[#allocation2 + $0x8] sm:$0xff]
        %v488 = vld [vmem:[#allocation2 + $0x10] sm:$0xff]
        %v489 = vld [vmem:[#allocation2 + $0x18] sm:$0xff]
        %v490 = vld [vmem:[%s400] sm:$0xff]
        %v491 = vld [vmem:[%s400 + $0x8] sm:$0xff]
        %v492 = vld [vmem:[%s400 + $0x10] sm:$0xff]
        %v493 = vld [vmem:[%s400 + $0x18] sm:$0xff]
        %v494 = vld [vmem:[%s400 + $0x20] sm:$0xff]
        %v495 = vld [vmem:[%s400 + $0x28] sm:$0xff]
        %v496 = vld [vmem:[%s400 + $0x30] sm:$0xff]
        %v497 = vld [vmem:[%s400 + $0x38] sm:$0xff]
        %v498 = vld [vmem:[%s400 + $0x40] sm:$0xff]
        %v499 = vld [vmem:[%s400 + $0x48] sm:$0xff]
        %v500 = vld [vmem:[%s400 + $0x50] sm:$0xff]
        %v501 = vld [vmem:[%s400 + $0x58] sm:$0xff]
        %v502 = vld [vmem:[%s400 + $0x60] sm:$0xff]
        %v503 = vld [vmem:[%s400 + $0x68] sm:$0xff]
        %v504 = vld [vmem:[%s400 + $0x70] sm:$0xff]
        %v505 = vld [vmem:[%s400 + $0x78] sm:$0xff]
        %v506 = vld [vmem:[%s400 + $0x80] sm:$0xff]
        %v507 = vld [vmem:[%s400 + $0x88] sm:$0xff]
        %v508 = vld [vmem:[%s400 + $0x90] sm:$0xff]
        %v509 = vld [vmem:[%s400 + $0x98] sm:$0xff]
        %v510 = vld [vmem:[%s408] sm:$0xff]
        %v511 = vld [vmem:[%s408 + $0x8] sm:$0xff]
        %v512 = vld [vmem:[%s408 + $0x10] sm:$0xff]
        %v513 = vld [vmem:[%s408 + $0x18] sm:$0xff]
        %v514 = vld [vmem:[%s408 + $0x20] sm:$0xff]
        %v515 = vld [vmem:[%s408 + $0x28] sm:$0xff]
        %v516 = vld [vmem:[%s408 + $0x30] sm:$0xff]
        %v517 = vld [vmem:[%s408 + $0x38] sm:$0xff]
        %v518 = vld [vmem:[%s408 + $0x40] sm:$0xff]
        %v519 = vld [vmem:[%s408 + $0x48] sm:$0xff]
        %v520 = vld [vmem:[%s408 + $0x50] sm:$0xff]
        %v521 = vld [vmem:[%s408 + $0x58] sm:$0xff]
        %v522 = vld [vmem:[%s408 + $0x60] sm:$0xff]
        %v523 = vld [vmem:[%s408 + $0x68] sm:$0xff]
        %v524 = vld [vmem:[%s408 + $0x70] sm:$0xff]
        %v525 = vld [vmem:[%s408 + $0x78] sm:$0xff]
        %v526 = vld [vmem:[%s408 + $0x80] sm:$0xff]
        %v527 = vld [vmem:[%s408 + $0x88] sm:$0xff]
        %v528 = vld [vmem:[%s408 + $0x90] sm:$0xff]
        %v529 = vld [vmem:[%s408 + $0x98] sm:$0xff]
        %v530 = vld [vmem:[%s408 + $0xa0] sm:$0xff]
        %v531 = vld [vmem:[%s408 + $0xa8] sm:$0xff]
        %v532 = vld [vmem:[%s408 + $0xb0] sm:$0xff]
        %v533 = vld [vmem:[%s408 + $0xb8] sm:$0xff]
        %v534 = vld [vmem:[%s408 + $0xc0] sm:$0xff]
        %v535 = vld [vmem:[%s408 + $0xc8] sm:$0xff]
        %v536 = vld [vmem:[%s408 + $0xd0] sm:$0xff]
        %v537 = vld [vmem:[%s408 + $0xd8] sm:$0xff]
        %v538 = vld [vmem:[%s408 + $0xe0] sm:$0xff]
        %v539 = vld [vmem:[%s408 + $0xe8] sm:$0xff]
        %v540 = vld [vmem:[%s408 + $0xf0] sm:$0xff]
        %v541 = vld [vmem:[%s408 + $0xf8] sm:$0xff]
        %v542 = vld [vmem:[%s408 + $0x100] sm:$0xff]
        %v543 = vld [vmem:[%s408 + $0x108] sm:$0xff]
        %v544 = vld [vmem:[%s408 + $0x110] sm:$0xff]
        %v545 = vld [vmem:[%s408 + $0x118] sm:$0xff]
        %v546 = vld [vmem:[%s408 + $0x120] sm:$0xff]
        %v547 = vld [vmem:[%s408 + $0x128] sm:$0xff]
        %v548 = vld [vmem:[%s408 + $0x130] sm:$0xff]
        %v549 = vld [vmem:[%s408 + $0x138] sm:$0xff]
        %v550 = vld [vmem:[%s408 + $0x140] sm:$0xff]
        %v551 = vld [vmem:[%s408 + $0x148] sm:$0xff]
        %v552 = vld [vmem:[%s408 + $0x150] sm:$0xff]
        %v553 = vld [vmem:[%s408 + $0x158] sm:$0xff]
        %v554 = vld [vmem:[%s408 + $0x160] sm:$0xff]
        %v555 = vld [vmem:[%s408 + $0x168] sm:$0xff]
        %v556 = vld [vmem:[%s408 + $0x170] sm:$0xff]
        %v557 = vld [vmem:[%s408 + $0x178] sm:$0xff]
        %v558 = vld [vmem:[%s408 + $0x180] sm:$0xff]
        %v559 = vld [vmem:[%s408 + $0x188] sm:$0xff]
        %v560 = vld [vmem:[%s408 + $0x190] sm:$0xff]
        %v561 = vld [vmem:[%s408 + $0x198] sm:$0xff]
        %v562 = vld [vmem:[%s408 + $0x1a0] sm:$0xff]
        %v563 = vld [vmem:[%s408 + $0x1a8] sm:$0xff]
        %v564 = vld [vmem:[%s408 + $0x1b0] sm:$0xff]
        %v565 = vld [vmem:[%s408 + $0x1b8] sm:$0xff]
        %v566 = vld [vmem:[%s408 + $0x1c0] sm:$0xff]
        %v567 = vld [vmem:[%s408 + $0x1c8] sm:$0xff]
        %v568 = vld [vmem:[%s408 + $0x1d0] sm:$0xff]
        %v569 = vld [vmem:[%s408 + $0x1d8] sm:$0xff]
        %v570 = vld [vmem:[%s408 + $0x1e0] sm:$0xff]
        %v571 = vld [vmem:[%s408 + $0x1e8] sm:$0xff]
        %v572 = vld [vmem:[%s408 + $0x1f0] sm:$0xff]
        %v573 = vld [vmem:[%s408 + $0x1f8] sm:$0xff]
        %v574 = vld [vmem:[%s408 + $0x200] sm:$0xff]
        %v575 = vld [vmem:[%s408 + $0x208] sm:$0xff]
        %v576 = vld [vmem:[%s408 + $0x210] sm:$0xff]
        %v577 = vld [vmem:[%s408 + $0x218] sm:$0xff]
        %v578 = vld [vmem:[%s408 + $0x220] sm:$0xff]
        %v579 = vld [vmem:[%s408 + $0x228] sm:$0xff]
        %v580 = vld [vmem:[%s408 + $0x230] sm:$0xff]
        %v581 = vld [vmem:[%s408 + $0x238] sm:$0xff]
        %v582 = vld [vmem:[%s408 + $0x240] sm:$0xff]
        %v583 = vld [vmem:[%s408 + $0x248] sm:$0xff]
        %v584 = vld [vmem:[%s408 + $0x250] sm:$0xff]
        %v585 = vld [vmem:[%s408 + $0x258] sm:$0xff]
        %v586 = vld [vmem:[%s408 + $0x260] sm:$0xff]
        %v587 = vld [vmem:[%s408 + $0x268] sm:$0xff]
        %v588 = vld [vmem:[%s408 + $0x270] sm:$0xff]
        %v589 = vld [vmem:[%s408 + $0x278] sm:$0xff]
        %v590 = vld [vmem:[%s408 + $0x280] sm:$0xff]
        %v591 = vld [vmem:[%s408 + $0x288] sm:$0xff]
        %v592 = vld [vmem:[%s408 + $0x290] sm:$0xff]
        %v593 = vld [vmem:[%s408 + $0x298] sm:$0xff]
        %v594 = vld [vmem:[%s408 + $0x2a0] sm:$0xff]
        %v595 = vld [vmem:[%s408 + $0x2a8] sm:$0xff]
        %v596 = vld [vmem:[%s408 + $0x2b0] sm:$0xff]
        %v597 = vld [vmem:[%s408 + $0x2b8] sm:$0xff]
        %v598 = vld [vmem:[%s408 + $0x2c0] sm:$0xff]
        %v599 = vld [vmem:[%s408 + $0x2c8] sm:$0xff]
        %v600 = vld [vmem:[%s408 + $0x2d0] sm:$0xff]
        %v601 = vld [vmem:[%s408 + $0x2d8] sm:$0xff]
        %v602 = vld [vmem:[%s408 + $0x2e0] sm:$0xff]
        %v603 = vld [vmem:[%s408 + $0x2e8] sm:$0xff]
        %v604 = vld [vmem:[%s408 + $0x2f0] sm:$0xff]
        %v605 = vld [vmem:[%s408 + $0x2f8] sm:$0xff]
        %v606 = vld [vmem:[%s408 + $0x300] sm:$0xff]
        %v607 = vld [vmem:[%s408 + $0x308] sm:$0xff]
        %v608 = vld [vmem:[%s408 + $0x310] sm:$0xff]
        %v609 = vld [vmem:[%s408 + $0x318] sm:$0xff]
        %v610 = vld [vmem:[%s408 + $0x320] sm:$0xff]
        %v611 = vld [vmem:[%s408 + $0x328] sm:$0xff]
        %v612 = vld [vmem:[%s408 + $0x330] sm:$0xff]
        %v613 = vld [vmem:[%s408 + $0x338] sm:$0xff]
        %v614 = vld [vmem:[%s408 + $0x340] sm:$0xff]
        %v615 = vld [vmem:[%s408 + $0x348] sm:$0xff]
        %v616 = vld [vmem:[%s408 + $0x350] sm:$0xff]
        %v617 = vld [vmem:[%s408 + $0x358] sm:$0xff]
        %v618 = vld [vmem:[%s408 + $0x360] sm:$0xff]
        %v619 = vld [vmem:[%s408 + $0x368] sm:$0xff]
        %v620 = vld [vmem:[%s408 + $0x370] sm:$0xff]
        %v621 = vld [vmem:[%s408 + $0x378] sm:$0xff]
        %v622 = vld [vmem:[%s408 + $0x380] sm:$0xff]
        %v623 = vld [vmem:[%s408 + $0x388] sm:$0xff]
        %v624 = vld [vmem:[%s408 + $0x390] sm:$0xff]
        %v625 = vld [vmem:[%s408 + $0x398] sm:$0xff]
        %v626 = vld [vmem:[%s408 + $0x3a0] sm:$0xff]
        %v627 = vld [vmem:[%s408 + $0x3a8] sm:$0xff]
        %v628 = vld [vmem:[%s408 + $0x3b0] sm:$0xff]
        %v629 = vld [vmem:[%s408 + $0x3b8] sm:$0xff]
        %v630 = vld [vmem:[%s408 + $0x3c0] sm:$0xff]
        %v631 = vld [vmem:[%s408 + $0x3c8] sm:$0xff]
        %v632 = vld [vmem:[%s408 + $0x3d0] sm:$0xff]
        %v633 = vld [vmem:[%s408 + $0x3d8] sm:$0xff]
        %v634 = vld [vmem:[%s408 + $0x3e0] sm:$0xff]
        %v635 = vld [vmem:[%s408 + $0x3e8] sm:$0xff]
        %v636 = vld [vmem:[%s408 + $0x3f0] sm:$0xff]
        %v637 = vld [vmem:[%s408 + $0x3f8] sm:$0xff]
        %v638 = vld [vmem:[%s408 + $0x400] sm:$0xff]
        %v639 = vld [vmem:[%s408 + $0x408] sm:$0xff]
        %v640 = vld [vmem:[%s408 + $0x410] sm:$0xff]
        %v641 = vld [vmem:[%s408 + $0x418] sm:$0xff]
        %v642 = vld [vmem:[%s408 + $0x420] sm:$0xff]
        %v643 = vld [vmem:[%s408 + $0x428] sm:$0xff]
        %v644 = vld [vmem:[%s408 + $0x430] sm:$0xff]
        %v645 = vld [vmem:[%s408 + $0x438] sm:$0xff]
        %v646 = vld [vmem:[%s408 + $0x440] sm:$0xff]
        %v647 = vld [vmem:[%s408 + $0x448] sm:$0xff]
        %v648 = vld [vmem:[%s408 + $0x450] sm:$0xff]
        %v649 = vld [vmem:[%s408 + $0x458] sm:$0xff]
        %v650 = vld [vmem:[%s408 + $0x460] sm:$0xff]
        %v651 = vld [vmem:[%s408 + $0x468] sm:$0xff]
        %v652 = vld [vmem:[%s408 + $0x470] sm:$0xff]
        %v653 = vld [vmem:[%s408 + $0x478] sm:$0xff]
        %v654 = vld [vmem:[%s408 + $0x480] sm:$0xff]
        %v655 = vld [vmem:[%s408 + $0x488] sm:$0xff]
        %v656 = vld [vmem:[%s408 + $0x490] sm:$0xff]
        %v657 = vld [vmem:[%s408 + $0x498] sm:$0xff]
        %v658 = vld [vmem:[%s408 + $0x4a0] sm:$0xff]
        %v659 = vld [vmem:[%s408 + $0x4a8] sm:$0xff]
        %v660 = vld [vmem:[%s408 + $0x4b0] sm:$0xff]
        %v661 = vld [vmem:[%s408 + $0x4b8] sm:$0xff]
        %v662 = vld [vmem:[%s408 + $0x4c0] sm:$0xff]
        %v663 = vld [vmem:[%s408 + $0x4c8] sm:$0xff]
        %v664 = vld [vmem:[%s408 + $0x4d0] sm:$0xff]
        %v665 = vld [vmem:[%s408 + $0x4d8] sm:$0xff]
        %v666 = vld [vmem:[%s408 + $0x4e0] sm:$0xff]
        %v667 = vld [vmem:[%s408 + $0x4e8] sm:$0xff]
        %v668 = vld [vmem:[%s408 + $0x4f0] sm:$0xff]
        %v669 = vld [vmem:[%s408 + $0x4f8] sm:$0xff]
        %v670 = vld [vmem:[%s408 + $0x500] sm:$0xff]
        %v671 = vld [vmem:[%s408 + $0x508] sm:$0xff]
        %v672 = vld [vmem:[%s408 + $0x510] sm:$0xff]
        %v673 = vld [vmem:[%s408 + $0x518] sm:$0xff]
        %v674 = vld [vmem:[%s408 + $0x520] sm:$0xff]
        %v675 = vld [vmem:[%s408 + $0x528] sm:$0xff]
        %v676 = vld [vmem:[%s408 + $0x530] sm:$0xff]
        %v677 = vld [vmem:[%s408 + $0x538] sm:$0xff]
        %v678 = vld [vmem:[%s408 + $0x540] sm:$0xff]
        %v679 = vld [vmem:[%s408 + $0x548] sm:$0xff]
        %v680 = vld [vmem:[%s408 + $0x550] sm:$0xff]
        %v681 = vld [vmem:[%s408 + $0x558] sm:$0xff]
        %v682 = vld [vmem:[%s408 + $0x560] sm:$0xff]
        %v683 = vld [vmem:[%s408 + $0x568] sm:$0xff]
        %v684 = vld [vmem:[%s408 + $0x570] sm:$0xff]
        %v685 = vld [vmem:[%s408 + $0x578] sm:$0xff]
        %v686 = vld [vmem:[%s408 + $0x580] sm:$0xff]
        %v687 = vld [vmem:[%s408 + $0x588] sm:$0xff]
        %v688 = vld [vmem:[%s408 + $0x590] sm:$0xff]
        %v689 = vld [vmem:[%s408 + $0x598] sm:$0xff]
        %v690 = vld [vmem:[%s408 + $0x5a0] sm:$0xff]
        %v691 = vld [vmem:[%s408 + $0x5a8] sm:$0xff]
        %v692 = vld [vmem:[%s408 + $0x5b0] sm:$0xff]
        %v693 = vld [vmem:[%s408 + $0x5b8] sm:$0xff]
        %v694 = vld [vmem:[%s408 + $0x5c0] sm:$0xff]
        %v695 = vld [vmem:[%s408 + $0x5c8] sm:$0xff]
        %v696 = vld [vmem:[%s408 + $0x5d0] sm:$0xff]
        %v697 = vld [vmem:[%s408 + $0x5d8] sm:$0xff]
        %v698 = vld [vmem:[%s408 + $0x5e0] sm:$0xff]
        %v699 = vld [vmem:[%s408 + $0x5e8] sm:$0xff]
        %v700 = vld [vmem:[%s408 + $0x5f0] sm:$0xff]
        %v701 = vld [vmem:[%s408 + $0x5f8] sm:$0xff]
        %v702 = vld [vmem:[%s408 + $0x600] sm:$0xff]
        %v703 = vld [vmem:[%s408 + $0x608] sm:$0xff]
        %v704 = vld [vmem:[%s408 + $0x610] sm:$0xff]
        %v705 = vld [vmem:[%s408 + $0x618] sm:$0xff]
        %v706 = vld [vmem:[%s408 + $0x620] sm:$0xff]
        %v707 = vld [vmem:[%s408 + $0x628] sm:$0xff]
        %v708 = vld [vmem:[%s408 + $0x630] sm:$0xff]
        %v709 = vld [vmem:[%s408 + $0x638] sm:$0xff]
        %v710 = vld [vmem:[%s408 + $0x640] sm:$0xff]
        %v711 = vld [vmem:[%s408 + $0x648] sm:$0xff]
        %v712 = vld [vmem:[%s408 + $0x650] sm:$0xff]
        %v713 = vld [vmem:[%s408 + $0x658] sm:$0xff]
        %v714 = vld [vmem:[%s408 + $0x660] sm:$0xff]
        %v715 = vld [vmem:[%s408 + $0x668] sm:$0xff]
        %v716 = vld [vmem:[%s408 + $0x670] sm:$0xff]
        %v717 = vld [vmem:[%s408 + $0x678] sm:$0xff]
        %v718 = vld [vmem:[%s408 + $0x680] sm:$0xff]
        %v719 = vld [vmem:[%s408 + $0x688] sm:$0xff]
        %v720 = vld [vmem:[%s408 + $0x690] sm:$0xff]
        %v721 = vld [vmem:[%s408 + $0x698] sm:$0xff]
        %v722 = vld [vmem:[%s408 + $0x6a0] sm:$0xff]
        %v723 = vld [vmem:[%s408 + $0x6a8] sm:$0xff]
        %v724 = vld [vmem:[%s408 + $0x6b0] sm:$0xff]
        %v725 = vld [vmem:[%s408 + $0x6b8] sm:$0xff]
        %v726 = vld [vmem:[%s408 + $0x6c0] sm:$0xff]
        %v727 = vld [vmem:[%s408 + $0x6c8] sm:$0xff]
        %v728 = vld [vmem:[%s408 + $0x6d0] sm:$0xff]
        %v729 = vld [vmem:[%s408 + $0x6d8] sm:$0xff]
        %v730 = vld [vmem:[%s408 + $0x6e0] sm:$0xff]
        %v731 = vld [vmem:[%s408 + $0x6e8] sm:$0xff]
        %v732 = vld [vmem:[%s408 + $0x6f0] sm:$0xff]
        %v733 = vld [vmem:[%s408 + $0x6f8] sm:$0xff]
        %v734 = vld [vmem:[%s408 + $0x700] sm:$0xff]
        %v735 = vld [vmem:[%s408 + $0x708] sm:$0xff]
        %v736 = vld [vmem:[%s408 + $0x710] sm:$0xff]
        %v737 = vld [vmem:[%s408 + $0x718] sm:$0xff]
        %v738 = vld [vmem:[%s408 + $0x720] sm:$0xff]
        %v739 = vld [vmem:[%s408 + $0x728] sm:$0xff]
        %v740 = vld [vmem:[%s408 + $0x730] sm:$0xff]
        %v741 = vld [vmem:[%s408 + $0x738] sm:$0xff]
        %v742 = vld [vmem:[%s408 + $0x740] sm:$0xff]
        %v743 = vld [vmem:[%s408 + $0x748] sm:$0xff]
        %v744 = vld [vmem:[%s408 + $0x750] sm:$0xff]
        %v745 = vld [vmem:[%s408 + $0x758] sm:$0xff]
        %v746 = vld [vmem:[%s408 + $0x760] sm:$0xff]
        %v747 = vld [vmem:[%s408 + $0x768] sm:$0xff]
        %v748 = vld [vmem:[%s408 + $0x770] sm:$0xff]
        %v749 = vld [vmem:[%s408 + $0x778] sm:$0xff]
        %v750 = vld [vmem:[%s408 + $0x780] sm:$0xff]
        %v751 = vld [vmem:[%s408 + $0x788] sm:$0xff]
        %v752 = vld [vmem:[%s408 + $0x790] sm:$0xff]
        %v753 = vld [vmem:[%s408 + $0x798] sm:$0xff]
        %v754 = vld [vmem:[%s408 + $0x7a0] sm:$0xff]
        %v755 = vld [vmem:[%s408 + $0x7a8] sm:$0xff]
        %v756 = vld [vmem:[%s408 + $0x7b0] sm:$0xff]
        %v757 = vld [vmem:[%s408 + $0x7b8] sm:$0xff]
        %v758 = vld [vmem:[%s408 + $0x7c0] sm:$0xff]
        %v759 = vld [vmem:[%s408 + $0x7c8] sm:$0xff]
        %v760 = vld [vmem:[%s408 + $0x7d0] sm:$0xff]
        %v761 = vld [vmem:[%s408 + $0x7d8] sm:$0xff]
        %v762 = vld [vmem:[%s408 + $0x7e0] sm:$0xff]
        %v763 = vld [vmem:[%s408 + $0x7e8] sm:$0xff]
        %v764 = vld [vmem:[%s408 + $0x7f0] sm:$0xff]
        %v765 = vld [vmem:[%s408 + $0x7f8] sm:$0xff]
        %v766 = vld [vmem:[%s408 + $0x800] sm:$0xff]
        %v767 = vld [vmem:[%s408 + $0x808] sm:$0xff]
        %v768 = vld [vmem:[%s408 + $0x810] sm:$0xff]
        %v769 = vld [vmem:[%s408 + $0x818] sm:$0xff]
        %v770 = vld [vmem:[%s408 + $0x820] sm:$0xff]
        %v771 = vld [vmem:[%s408 + $0x828] sm:$0xff]
        %v772 = vld [vmem:[%s408 + $0x830] sm:$0xff]
        %v773 = vld [vmem:[%s408 + $0x838] sm:$0xff]
        %v774 = vld [vmem:[%s408 + $0x840] sm:$0xff]
        %v775 = vld [vmem:[%s408 + $0x848] sm:$0xff]
        %v776 = vld [vmem:[%s408 + $0x850] sm:$0xff]
        %v777 = vld [vmem:[%s408 + $0x858] sm:$0xff]
        %v778 = vld [vmem:[%s408 + $0x860] sm:$0xff]
        %v779 = vld [vmem:[%s408 + $0x868] sm:$0xff]
        %v780 = vld [vmem:[%s408 + $0x870] sm:$0xff]
        %v781 = vld [vmem:[%s408 + $0x878] sm:$0xff]
        %v782 = vld [vmem:[%s408 + $0x880] sm:$0xff]
        %v783 = vld [vmem:[%s408 + $0x888] sm:$0xff]
        %v784 = vld [vmem:[%s408 + $0x890] sm:$0xff]
        %v785 = vld [vmem:[%s408 + $0x898] sm:$0xff]
        %v786 = vld [vmem:[%s408 + $0x8a0] sm:$0xff]
        %v787 = vld [vmem:[%s408 + $0x8a8] sm:$0xff]
        %v788 = vld [vmem:[%s408 + $0x8b0] sm:$0xff]
        %v789 = vld [vmem:[%s408 + $0x8b8] sm:$0xff]
        %v790 = vld [vmem:[%s408 + $0x8c0] sm:$0xff]
        %v791 = vld [vmem:[%s408 + $0x8c8] sm:$0xff]
        %v792 = vld [vmem:[%s408 + $0x8d0] sm:$0xff]
        %v793 = vld [vmem:[%s408 + $0x8d8] sm:$0xff]
        %v794 = vld [vmem:[%s408 + $0x8e0] sm:$0xff]
        %v795 = vld [vmem:[%s408 + $0x8e8] sm:$0xff]
        %v796 = vld [vmem:[%s408 + $0x8f0] sm:$0xff]
        %v797 = vld [vmem:[%s408 + $0x8f8] sm:$0xff]
        %v798 = vld [vmem:[%s408 + $0x900] sm:$0xff]
        %v799 = vld [vmem:[%s408 + $0x908] sm:$0xff]
        %v800 = vld [vmem:[%s408 + $0x910] sm:$0xff]
        %v801 = vld [vmem:[%s408 + $0x918] sm:$0xff]
        %v802 = vld [vmem:[%s408 + $0x920] sm:$0xff]
        %v803 = vld [vmem:[%s408 + $0x928] sm:$0xff]
        %v804 = vld [vmem:[%s408 + $0x930] sm:$0xff]
        %v805 = vld [vmem:[%s408 + $0x938] sm:$0xff]
        %v806 = vld [vmem:[%s408 + $0x940] sm:$0xff]
        %v807 = vld [vmem:[%s408 + $0x948] sm:$0xff]
        %v808 = vld [vmem:[%s408 + $0x950] sm:$0xff]
        %v809 = vld [vmem:[%s408 + $0x958] sm:$0xff]
        %v810 = vld [vmem:[%s408 + $0x960] sm:$0xff]
        %v811 = vld [vmem:[%s408 + $0x968] sm:$0xff]
        %v812 = vld [vmem:[%s408 + $0x970] sm:$0xff]
        %v813 = vld [vmem:[%s408 + $0x978] sm:$0xff]
        %v814 = vld [vmem:[%s408 + $0x980] sm:$0xff]
        %v815 = vld [vmem:[%s408 + $0x988] sm:$0xff]
        %v816 = vld [vmem:[%s408 + $0x990] sm:$0xff]
        %v817 = vld [vmem:[%s408 + $0x998] sm:$0xff]
        %v818 = vld [vmem:[%s408 + $0x9a0] sm:$0xff]
        %v819 = vld [vmem:[%s408 + $0x9a8] sm:$0xff]
        %v820 = vld [vmem:[%s408 + $0x9b0] sm:$0xff]
        %v821 = vld [vmem:[%s408 + $0x9b8] sm:$0xff]
        %v822 = vld [vmem:[%s408 + $0x9c0] sm:$0xff]
        %v823 = vld [vmem:[%s408 + $0x9c8] sm:$0xff]
        %v824 = vld [vmem:[%s408 + $0x9d0] sm:$0xff]
        %v825 = vld [vmem:[%s408 + $0x9d8] sm:$0xff]
        %v826 = vld [vmem:[%s408 + $0x9e0] sm:$0xff]
        %v827 = vld [vmem:[%s408 + $0x9e8] sm:$0xff]
        %v828 = vld [vmem:[%s408 + $0x9f0] sm:$0xff]
        %v829 = vld [vmem:[%s408 + $0x9f8] sm:$0xff]
        %v850 = vunpack.c.l.b16 %v490
        %v851 = vunpack.c.h.b16 %v490
        %v852 = vunpack.c.l.b16 %v491
        %v853 = vunpack.c.h.b16 %v491
        %v854 = vunpack.c.l.b16 %v492
        %v855 = vunpack.c.h.b16 %v492
        %v856 = vunpack.c.l.b16 %v493
        %v857 = vunpack.c.h.b16 %v493
        %v858 = vunpack.c.l.b16 %v494
        %v859 = vunpack.c.h.b16 %v494
        %v860 = vunpack.c.l.b16 %v495
        %v861 = vunpack.c.h.b16 %v495
        %v862 = vunpack.c.l.b16 %v496
        %v863 = vunpack.c.h.b16 %v496
        %v864 = vunpack.c.l.b16 %v497
        %v865 = vunpack.c.h.b16 %v497
        %v866 = vunpack.c.l.b16 %v498
        %v867 = vunpack.c.h.b16 %v498
        %v868 = vunpack.c.l.b16 %v499
        %v869 = vunpack.c.h.b16 %v499
        %v870 = vunpack.c.l.b16 %v500
        %v871 = vunpack.c.h.b16 %v500
        %v872 = vunpack.c.l.b16 %v501
        %v873 = vunpack.c.h.b16 %v501
        %v874 = vunpack.c.l.b16 %v502
        %v875 = vunpack.c.h.b16 %v502
        %v876 = vunpack.c.l.b16 %v503
        %v877 = vunpack.c.h.b16 %v503
        %v878 = vunpack.c.l.b16 %v504
        %v879 = vunpack.c.h.b16 %v504
        %v880 = vunpack.c.l.b16 %v505
        %v881 = vunpack.c.h.b16 %v505
        %v882 = vunpack.c.l.b16 %v506
        %v883 = vunpack.c.h.b16 %v506
        %v884 = vunpack.c.l.b16 %v507
        %v885 = vunpack.c.h.b16 %v507
        %v886 = vunpack.c.l.b16 %v508
        %v887 = vunpack.c.h.b16 %v508
        %v888 = vunpack.c.l.b16 %v509
        %v889 = vunpack.c.h.b16 %v509
        %v890 = vpack.c.b16 %v870, %v850
        %v891 = vpack.c.b16 %v871, %v851
        %v892 = vpack.c.b16 %v872, %v852
        %v893 = vpack.c.b16 %v873, %v853
        %v894 = vpack.c.b16 %v874, %v854
        %v895 = vpack.c.b16 %v875, %v855
        %v896 = vpack.c.b16 %v876, %v856
        %v897 = vpack.c.b16 %v877, %v857
        %v898 = vpack.c.b16 %v878, %v858
        %v899 = vpack.c.b16 %v879, %v859
        %v900 = vpack.c.b16 %v880, %v860
        %v901 = vpack.c.b16 %v881, %v861
        %v902 = vpack.c.b16 %v882, %v862
        %v903 = vpack.c.b16 %v883, %v863
        %v904 = vpack.c.b16 %v884, %v864
        %v905 = vpack.c.b16 %v885, %v865
        %v906 = vpack.c.b16 %v886, %v866
        %v907 = vpack.c.b16 %v887, %v867
        %v908 = vpack.c.b16 %v888, %v868
        %v909 = vpack.c.b16 %v889, %v869
        %v1250 = vunpack.c.l.b16 %v510
        %v1251 = vunpack.c.h.b16 %v510
        %v1252 = vunpack.c.l.b16 %v511
        %v1253 = vunpack.c.h.b16 %v511
        %v1254 = vunpack.c.l.b16 %v512
        %v1255 = vunpack.c.h.b16 %v512
        %v1256 = vunpack.c.l.b16 %v513
        %v1257 = vunpack.c.h.b16 %v513
        %v1258 = vunpack.c.l.b16 %v514
        %v1259 = vunpack.c.h.b16 %v514
        %v1260 = vunpack.c.l.b16 %v515
        %v1261 = vunpack.c.h.b16 %v515
        %v1262 = vunpack.c.l.b16 %v516
        %v1263 = vunpack.c.h.b16 %v516
        %v1264 = vunpack.c.l.b16 %v517
        %v1265 = vunpack.c.h.b16 %v517
        %v1266 = vunpack.c.l.b16 %v518
        %v1267 = vunpack.c.h.b16 %v518
        %v1268 = vunpack.c.l.b16 %v519
        %v1269 = vunpack.c.h.b16 %v519
        %v1270 = vunpack.c.l.b16 %v520
        %v1271 = vunpack.c.h.b16 %v520
        %v1272 = vunpack.c.l.b16 %v521
        %v1273 = vunpack.c.h.b16 %v521
        %v1274 = vunpack.c.l.b16 %v522
        %v1275 = vunpack.c.h.b16 %v522
        %v1276 = vunpack.c.l.b16 %v523
        %v1277 = vunpack.c.h.b16 %v523
        %v1278 = vunpack.c.l.b16 %v524
        %v1279 = vunpack.c.h.b16 %v524
        %v1280 = vunpack.c.l.b16 %v525
        %v1281 = vunpack.c.h.b16 %v525
        %v1282 = vunpack.c.l.b16 %v526
        %v1283 = vunpack.c.h.b16 %v526
        %v1284 = vunpack.c.l.b16 %v527
        %v1285 = vunpack.c.h.b16 %v527
        %v1286 = vunpack.c.l.b16 %v528
        %v1287 = vunpack.c.h.b16 %v528
        %v1288 = vunpack.c.l.b16 %v529
        %v1289 = vunpack.c.h.b16 %v529
        %v1290 = vunpack.c.l.b16 %v530
        %v1291 = vunpack.c.h.b16 %v530
        %v1292 = vunpack.c.l.b16 %v531
        %v1293 = vunpack.c.h.b16 %v531
        %v1294 = vunpack.c.l.b16 %v532
        %v1295 = vunpack.c.h.b16 %v532
        %v1296 = vunpack.c.l.b16 %v533
        %v1297 = vunpack.c.h.b16 %v533
        %v1298 = vunpack.c.l.b16 %v534
        %v1299 = vunpack.c.h.b16 %v534
        %v1300 = vunpack.c.l.b16 %v535
        %v1301 = vunpack.c.h.b16 %v535
        %v1302 = vunpack.c.l.b16 %v536
        %v1303 = vunpack.c.h.b16 %v536
        %v1304 = vunpack.c.l.b16 %v537
        %v1305 = vunpack.c.h.b16 %v537
        %v1306 = vunpack.c.l.b16 %v538
        %v1307 = vunpack.c.h.b16 %v538
        %v1308 = vunpack.c.l.b16 %v539
        %v1309 = vunpack.c.h.b16 %v539
        %v1310 = vunpack.c.l.b16 %v540
        %v1311 = vunpack.c.h.b16 %v540
        %v1312 = vunpack.c.l.b16 %v541
        %v1313 = vunpack.c.h.b16 %v541
        %v1314 = vunpack.c.l.b16 %v542
        %v1315 = vunpack.c.h.b16 %v542
        %v1316 = vunpack.c.l.b16 %v543
        %v1317 = vunpack.c.h.b16 %v543
        %v1318 = vunpack.c.l.b16 %v544
        %v1319 = vunpack.c.h.b16 %v544
        %v1320 = vunpack.c.l.b16 %v545
        %v1321 = vunpack.c.h.b16 %v545
        %v1322 = vunpack.c.l.b16 %v546
        %v1323 = vunpack.c.h.b16 %v546
        %v1324 = vunpack.c.l.b16 %v547
        %v1325 = vunpack.c.h.b16 %v547
        %v1326 = vunpack.c.l.b16 %v548
        %v1327 = vunpack.c.h.b16 %v548
        %v1328 = vunpack.c.l.b16 %v549
        %v1329 = vunpack.c.h.b16 %v549
        %v1330 = vunpack.c.l.b16 %v550
        %v1331 = vunpack.c.h.b16 %v550
        %v1332 = vunpack.c.l.b16 %v551
        %v1333 = vunpack.c.h.b16 %v551
        %v1334 = vunpack.c.l.b16 %v552
        %v1335 = vunpack.c.h.b16 %v552
        %v1336 = vunpack.c.l.b16 %v553
        %v1337 = vunpack.c.h.b16 %v553
        %v1338 = vunpack.c.l.b16 %v554
        %v1339 = vunpack.c.h.b16 %v554
        %v1340 = vunpack.c.l.b16 %v555
        %v1341 = vunpack.c.h.b16 %v555
        %v1342 = vunpack.c.l.b16 %v556
        %v1343 = vunpack.c.h.b16 %v556
        %v1344 = vunpack.c.l.b16 %v557
        %v1345 = vunpack.c.h.b16 %v557
        %v1346 = vunpack.c.l.b16 %v558
        %v1347 = vunpack.c.h.b16 %v558
        %v1348 = vunpack.c.l.b16 %v559
        %v1349 = vunpack.c.h.b16 %v559
        %v1350 = vunpack.c.l.b16 %v560
        %v1351 = vunpack.c.h.b16 %v560
        %v1352 = vunpack.c.l.b16 %v561
        %v1353 = vunpack.c.h.b16 %v561
        %v1354 = vunpack.c.l.b16 %v562
        %v1355 = vunpack.c.h.b16 %v562
        %v1356 = vunpack.c.l.b16 %v563
        %v1357 = vunpack.c.h.b16 %v563
        %v1358 = vunpack.c.l.b16 %v564
        %v1359 = vunpack.c.h.b16 %v564
        %v1360 = vunpack.c.l.b16 %v565
        %v1361 = vunpack.c.h.b16 %v565
        %v1362 = vunpack.c.l.b16 %v566
        %v1363 = vunpack.c.h.b16 %v566
        %v1364 = vunpack.c.l.b16 %v567
        %v1365 = vunpack.c.h.b16 %v567
        %v1366 = vunpack.c.l.b16 %v568
        %v1367 = vunpack.c.h.b16 %v568
        %v1368 = vunpack.c.l.b16 %v569
        %v1369 = vunpack.c.h.b16 %v569
        %v1370 = vunpack.c.l.b16 %v570
        %v1371 = vunpack.c.h.b16 %v570
        %v1372 = vunpack.c.l.b16 %v571
        %v1373 = vunpack.c.h.b16 %v571
        %v1374 = vunpack.c.l.b16 %v572
        %v1375 = vunpack.c.h.b16 %v572
        %v1376 = vunpack.c.l.b16 %v573
        %v1377 = vunpack.c.h.b16 %v573
        %v1378 = vunpack.c.l.b16 %v574
        %v1379 = vunpack.c.h.b16 %v574
        %v1380 = vunpack.c.l.b16 %v575
        %v1381 = vunpack.c.h.b16 %v575
        %v1382 = vunpack.c.l.b16 %v576
        %v1383 = vunpack.c.h.b16 %v576
        %v1384 = vunpack.c.l.b16 %v577
        %v1385 = vunpack.c.h.b16 %v577
        %v1386 = vunpack.c.l.b16 %v578
        %v1387 = vunpack.c.h.b16 %v578
        %v1388 = vunpack.c.l.b16 %v579
        %v1389 = vunpack.c.h.b16 %v579
        %v1390 = vunpack.c.l.b16 %v580
        %v1391 = vunpack.c.h.b16 %v580
        %v1392 = vunpack.c.l.b16 %v581
        %v1393 = vunpack.c.h.b16 %v581
        %v1394 = vunpack.c.l.b16 %v582
        %v1395 = vunpack.c.h.b16 %v582
        %v1396 = vunpack.c.l.b16 %v583
        %v1397 = vunpack.c.h.b16 %v583
        %v1398 = vunpack.c.l.b16 %v584
        %v1399 = vunpack.c.h.b16 %v584
        %v1400 = vunpack.c.l.b16 %v585
        %v1401 = vunpack.c.h.b16 %v585
        %v1402 = vunpack.c.l.b16 %v586
        %v1403 = vunpack.c.h.b16 %v586
        %v1404 = vunpack.c.l.b16 %v587
        %v1405 = vunpack.c.h.b16 %v587
        %v1406 = vunpack.c.l.b16 %v588
        %v1407 = vunpack.c.h.b16 %v588
        %v1408 = vunpack.c.l.b16 %v589
        %v1409 = vunpack.c.h.b16 %v589
        %v1410 = vunpack.c.l.b16 %v590
        %v1411 = vunpack.c.h.b16 %v590
        %v1412 = vunpack.c.l.b16 %v591
        %v1413 = vunpack.c.h.b16 %v591
        %v1414 = vunpack.c.l.b16 %v592
        %v1415 = vunpack.c.h.b16 %v592
        %v1416 = vunpack.c.l.b16 %v593
        %v1417 = vunpack.c.h.b16 %v593
        %v1418 = vunpack.c.l.b16 %v594
        %v1419 = vunpack.c.h.b16 %v594
        %v1420 = vunpack.c.l.b16 %v595
        %v1421 = vunpack.c.h.b16 %v595
        %v1422 = vunpack.c.l.b16 %v596
        %v1423 = vunpack.c.h.b16 %v596
        %v1424 = vunpack.c.l.b16 %v597
        %v1425 = vunpack.c.h.b16 %v597
        %v1426 = vunpack.c.l.b16 %v598
        %v1427 = vunpack.c.h.b16 %v598
        %v1428 = vunpack.c.l.b16 %v599
        %v1429 = vunpack.c.h.b16 %v599
        %v1430 = vunpack.c.l.b16 %v600
        %v1431 = vunpack.c.h.b16 %v600
        %v1432 = vunpack.c.l.b16 %v601
        %v1433 = vunpack.c.h.b16 %v601
        %v1434 = vunpack.c.l.b16 %v602
        %v1435 = vunpack.c.h.b16 %v602
        %v1436 = vunpack.c.l.b16 %v603
        %v1437 = vunpack.c.h.b16 %v603
        %v1438 = vunpack.c.l.b16 %v604
        %v1439 = vunpack.c.h.b16 %v604
        %v1440 = vunpack.c.l.b16 %v605
        %v1441 = vunpack.c.h.b16 %v605
        %v1442 = vunpack.c.l.b16 %v606
        %v1443 = vunpack.c.h.b16 %v606
        %v1444 = vunpack.c.l.b16 %v607
        %v1445 = vunpack.c.h.b16 %v607
        %v1446 = vunpack.c.l.b16 %v608
        %v1447 = vunpack.c.h.b16 %v608
        %v1448 = vunpack.c.l.b16 %v609
        %v1449 = vunpack.c.h.b16 %v609
        %v1450 = vunpack.c.l.b16 %v610
        %v1451 = vunpack.c.h.b16 %v610
        %v1452 = vunpack.c.l.b16 %v611
        %v1453 = vunpack.c.h.b16 %v611
        %v1454 = vunpack.c.l.b16 %v612
        %v1455 = vunpack.c.h.b16 %v612
        %v1456 = vunpack.c.l.b16 %v613
        %v1457 = vunpack.c.h.b16 %v613
        %v1458 = vunpack.c.l.b16 %v614
        %v1459 = vunpack.c.h.b16 %v614
        %v1460 = vunpack.c.l.b16 %v615
        %v1461 = vunpack.c.h.b16 %v615
        %v1462 = vunpack.c.l.b16 %v616
        %v1463 = vunpack.c.h.b16 %v616
        %v1464 = vunpack.c.l.b16 %v617
        %v1465 = vunpack.c.h.b16 %v617
        %v1466 = vunpack.c.l.b16 %v618
        %v1467 = vunpack.c.h.b16 %v618
        %v1468 = vunpack.c.l.b16 %v619
        %v1469 = vunpack.c.h.b16 %v619
        %v1470 = vunpack.c.l.b16 %v620
        %v1471 = vunpack.c.h.b16 %v620
        %v1472 = vunpack.c.l.b16 %v621
        %v1473 = vunpack.c.h.b16 %v621
        %v1474 = vunpack.c.l.b16 %v622
        %v1475 = vunpack.c.h.b16 %v622
        %v1476 = vunpack.c.l.b16 %v623
        %v1477 = vunpack.c.h.b16 %v623
        %v1478 = vunpack.c.l.b16 %v624
        %v1479 = vunpack.c.h.b16 %v624
        %v1480 = vunpack.c.l.b16 %v625
        %v1481 = vunpack.c.h.b16 %v625
        %v1482 = vunpack.c.l.b16 %v626
        %v1483 = vunpack.c.h.b16 %v626
        %v1484 = vunpack.c.l.b16 %v627
        %v1485 = vunpack.c.h.b16 %v627
        %v1486 = vunpack.c.l.b16 %v628
        %v1487 = vunpack.c.h.b16 %v628
        %v1488 = vunpack.c.l.b16 %v629
        %v1489 = vunpack.c.h.b16 %v629
        %v1490 = vunpack.c.l.b16 %v630
        %v1491 = vunpack.c.h.b16 %v630
        %v1492 = vunpack.c.l.b16 %v631
        %v1493 = vunpack.c.h.b16 %v631
        %v1494 = vunpack.c.l.b16 %v632
        %v1495 = vunpack.c.h.b16 %v632
        %v1496 = vunpack.c.l.b16 %v633
        %v1497 = vunpack.c.h.b16 %v633
        %v1498 = vunpack.c.l.b16 %v634
        %v1499 = vunpack.c.h.b16 %v634
        %v1500 = vunpack.c.l.b16 %v635
        %v1501 = vunpack.c.h.b16 %v635
        %v1502 = vunpack.c.l.b16 %v636
        %v1503 = vunpack.c.h.b16 %v636
        %v1504 = vunpack.c.l.b16 %v637
        %v1505 = vunpack.c.h.b16 %v637
        %v1506 = vunpack.c.l.b16 %v638
        %v1507 = vunpack.c.h.b16 %v638
        %v1508 = vunpack.c.l.b16 %v639
        %v1509 = vunpack.c.h.b16 %v639
        %v1510 = vunpack.c.l.b16 %v640
        %v1511 = vunpack.c.h.b16 %v640
        %v1512 = vunpack.c.l.b16 %v641
        %v1513 = vunpack.c.h.b16 %v641
        %v1514 = vunpack.c.l.b16 %v642
        %v1515 = vunpack.c.h.b16 %v642
        %v1516 = vunpack.c.l.b16 %v643
        %v1517 = vunpack.c.h.b16 %v643
        %v1518 = vunpack.c.l.b16 %v644
        %v1519 = vunpack.c.h.b16 %v644
        %v1520 = vunpack.c.l.b16 %v645
        %v1521 = vunpack.c.h.b16 %v645
        %v1522 = vunpack.c.l.b16 %v646
        %v1523 = vunpack.c.h.b16 %v646
        %v1524 = vunpack.c.l.b16 %v647
        %v1525 = vunpack.c.h.b16 %v647
        %v1526 = vunpack.c.l.b16 %v648
        %v1527 = vunpack.c.h.b16 %v648
        %v1528 = vunpack.c.l.b16 %v649
        %v1529 = vunpack.c.h.b16 %v649
        %v1530 = vunpack.c.l.b16 %v650
        %v1531 = vunpack.c.h.b16 %v650
        %v1532 = vunpack.c.l.b16 %v651
        %v1533 = vunpack.c.h.b16 %v651
        %v1534 = vunpack.c.l.b16 %v652
        %v1535 = vunpack.c.h.b16 %v652
        %v1536 = vunpack.c.l.b16 %v653
        %v1537 = vunpack.c.h.b16 %v653
        %v1538 = vunpack.c.l.b16 %v654
        %v1539 = vunpack.c.h.b16 %v654
        %v1540 = vunpack.c.l.b16 %v655
        %v1541 = vunpack.c.h.b16 %v655
        %v1542 = vunpack.c.l.b16 %v656
        %v1543 = vunpack.c.h.b16 %v656
        %v1544 = vunpack.c.l.b16 %v657
        %v1545 = vunpack.c.h.b16 %v657
        %v1546 = vunpack.c.l.b16 %v658
        %v1547 = vunpack.c.h.b16 %v658
        %v1548 = vunpack.c.l.b16 %v659
        %v1549 = vunpack.c.h.b16 %v659
        %v1550 = vunpack.c.l.b16 %v660
        %v1551 = vunpack.c.h.b16 %v660
        %v1552 = vunpack.c.l.b16 %v661
        %v1553 = vunpack.c.h.b16 %v661
        %v1554 = vunpack.c.l.b16 %v662
        %v1555 = vunpack.c.h.b16 %v662
        %v1556 = vunpack.c.l.b16 %v663
        %v1557 = vunpack.c.h.b16 %v663
        %v1558 = vunpack.c.l.b16 %v664
        %v1559 = vunpack.c.h.b16 %v664
        %v1560 = vunpack.c.l.b16 %v665
        %v1561 = vunpack.c.h.b16 %v665
        %v1562 = vunpack.c.l.b16 %v666
        %v1563 = vunpack.c.h.b16 %v666
        %v1564 = vunpack.c.l.b16 %v667
        %v1565 = vunpack.c.h.b16 %v667
        %v1566 = vunpack.c.l.b16 %v668
        %v1567 = vunpack.c.h.b16 %v668
        %v1568 = vunpack.c.l.b16 %v669
        %v1569 = vunpack.c.h.b16 %v669
        %v1570 = vunpack.c.l.b16 %v670
        %v1571 = vunpack.c.h.b16 %v670
        %v1572 = vunpack.c.l.b16 %v671
        %v1573 = vunpack.c.h.b16 %v671
        %v1574 = vunpack.c.l.b16 %v672
        %v1575 = vunpack.c.h.b16 %v672
        %v1576 = vunpack.c.l.b16 %v673
        %v1577 = vunpack.c.h.b16 %v673
        %v1578 = vunpack.c.l.b16 %v674
        %v1579 = vunpack.c.h.b16 %v674
        %v1580 = vunpack.c.l.b16 %v675
        %v1581 = vunpack.c.h.b16 %v675
        %v1582 = vunpack.c.l.b16 %v676
        %v1583 = vunpack.c.h.b16 %v676
        %v1584 = vunpack.c.l.b16 %v677
        %v1585 = vunpack.c.h.b16 %v677
        %v1586 = vunpack.c.l.b16 %v678
        %v1587 = vunpack.c.h.b16 %v678
        %v1588 = vunpack.c.l.b16 %v679
        %v1589 = vunpack.c.h.b16 %v679
        %v1590 = vunpack.c.l.b16 %v680
        %v1591 = vunpack.c.h.b16 %v680
        %v1592 = vunpack.c.l.b16 %v681
        %v1593 = vunpack.c.h.b16 %v681
        %v1594 = vunpack.c.l.b16 %v682
        %v1595 = vunpack.c.h.b16 %v682
        %v1596 = vunpack.c.l.b16 %v683
        %v1597 = vunpack.c.h.b16 %v683
        %v1598 = vunpack.c.l.b16 %v684
        %v1599 = vunpack.c.h.b16 %v684
        %v1600 = vunpack.c.l.b16 %v685
        %v1601 = vunpack.c.h.b16 %v685
        %v1602 = vunpack.c.l.b16 %v686
        %v1603 = vunpack.c.h.b16 %v686
        %v1604 = vunpack.c.l.b16 %v687
        %v1605 = vunpack.c.h.b16 %v687
        %v1606 = vunpack.c.l.b16 %v688
        %v1607 = vunpack.c.h.b16 %v688
        %v1608 = vunpack.c.l.b16 %v689
        %v1609 = vunpack.c.h.b16 %v689
        %v1610 = vunpack.c.l.b16 %v690
        %v1611 = vunpack.c.h.b16 %v690
        %v1612 = vunpack.c.l.b16 %v691
        %v1613 = vunpack.c.h.b16 %v691
        %v1614 = vunpack.c.l.b16 %v692
        %v1615 = vunpack.c.h.b16 %v692
        %v1616 = vunpack.c.l.b16 %v693
        %v1617 = vunpack.c.h.b16 %v693
        %v1618 = vunpack.c.l.b16 %v694
        %v1619 = vunpack.c.h.b16 %v694
        %v1620 = vunpack.c.l.b16 %v695
        %v1621 = vunpack.c.h.b16 %v695
        %v1622 = vunpack.c.l.b16 %v696
        %v1623 = vunpack.c.h.b16 %v696
        %v1624 = vunpack.c.l.b16 %v697
        %v1625 = vunpack.c.h.b16 %v697
        %v1626 = vunpack.c.l.b16 %v698
        %v1627 = vunpack.c.h.b16 %v698
        %v1628 = vunpack.c.l.b16 %v699
        %v1629 = vunpack.c.h.b16 %v699
        %v1630 = vunpack.c.l.b16 %v700
        %v1631 = vunpack.c.h.b16 %v700
        %v1632 = vunpack.c.l.b16 %v701
        %v1633 = vunpack.c.h.b16 %v701
        %v1634 = vunpack.c.l.b16 %v702
        %v1635 = vunpack.c.h.b16 %v702
        %v1636 = vunpack.c.l.b16 %v703
        %v1637 = vunpack.c.h.b16 %v703
        %v1638 = vunpack.c.l.b16 %v704
        %v1639 = vunpack.c.h.b16 %v704
        %v1640 = vunpack.c.l.b16 %v705
        %v1641 = vunpack.c.h.b16 %v705
        %v1642 = vunpack.c.l.b16 %v706
        %v1643 = vunpack.c.h.b16 %v706
        %v1644 = vunpack.c.l.b16 %v707
        %v1645 = vunpack.c.h.b16 %v707
        %v1646 = vunpack.c.l.b16 %v708
        %v1647 = vunpack.c.h.b16 %v708
        %v1648 = vunpack.c.l.b16 %v709
        %v1649 = vunpack.c.h.b16 %v709
        %v1650 = vunpack.c.l.b16 %v710
        %v1651 = vunpack.c.h.b16 %v710
        %v1652 = vunpack.c.l.b16 %v711
        %v1653 = vunpack.c.h.b16 %v711
        %v1654 = vunpack.c.l.b16 %v712
        %v1655 = vunpack.c.h.b16 %v712
        %v1656 = vunpack.c.l.b16 %v713
        %v1657 = vunpack.c.h.b16 %v713
        %v1658 = vunpack.c.l.b16 %v714
        %v1659 = vunpack.c.h.b16 %v714
        %v1660 = vunpack.c.l.b16 %v715
        %v1661 = vunpack.c.h.b16 %v715
        %v1662 = vunpack.c.l.b16 %v716
        %v1663 = vunpack.c.h.b16 %v716
        %v1664 = vunpack.c.l.b16 %v717
        %v1665 = vunpack.c.h.b16 %v717
        %v1666 = vunpack.c.l.b16 %v718
        %v1667 = vunpack.c.h.b16 %v718
        %v1668 = vunpack.c.l.b16 %v719
        %v1669 = vunpack.c.h.b16 %v719
        %v1670 = vunpack.c.l.b16 %v720
        %v1671 = vunpack.c.h.b16 %v720
        %v1672 = vunpack.c.l.b16 %v721
        %v1673 = vunpack.c.h.b16 %v721
        %v1674 = vunpack.c.l.b16 %v722
        %v1675 = vunpack.c.h.b16 %v722
        %v1676 = vunpack.c.l.b16 %v723
        %v1677 = vunpack.c.h.b16 %v723
        %v1678 = vunpack.c.l.b16 %v724
        %v1679 = vunpack.c.h.b16 %v724
        %v1680 = vunpack.c.l.b16 %v725
        %v1681 = vunpack.c.h.b16 %v725
        %v1682 = vunpack.c.l.b16 %v726
        %v1683 = vunpack.c.h.b16 %v726
        %v1684 = vunpack.c.l.b16 %v727
        %v1685 = vunpack.c.h.b16 %v727
        %v1686 = vunpack.c.l.b16 %v728
        %v1687 = vunpack.c.h.b16 %v728
        %v1688 = vunpack.c.l.b16 %v729
        %v1689 = vunpack.c.h.b16 %v729
        %v1690 = vunpack.c.l.b16 %v730
        %v1691 = vunpack.c.h.b16 %v730
        %v1692 = vunpack.c.l.b16 %v731
        %v1693 = vunpack.c.h.b16 %v731
        %v1694 = vunpack.c.l.b16 %v732
        %v1695 = vunpack.c.h.b16 %v732
        %v1696 = vunpack.c.l.b16 %v733
        %v1697 = vunpack.c.h.b16 %v733
        %v1698 = vunpack.c.l.b16 %v734
        %v1699 = vunpack.c.h.b16 %v734
        %v1700 = vunpack.c.l.b16 %v735
        %v1701 = vunpack.c.h.b16 %v735
        %v1702 = vunpack.c.l.b16 %v736
        %v1703 = vunpack.c.h.b16 %v736
        %v1704 = vunpack.c.l.b16 %v737
        %v1705 = vunpack.c.h.b16 %v737
        %v1706 = vunpack.c.l.b16 %v738
        %v1707 = vunpack.c.h.b16 %v738
        %v1708 = vunpack.c.l.b16 %v739
        %v1709 = vunpack.c.h.b16 %v739
        %v1710 = vunpack.c.l.b16 %v740
        %v1711 = vunpack.c.h.b16 %v740
        %v1712 = vunpack.c.l.b16 %v741
        %v1713 = vunpack.c.h.b16 %v741
        %v1714 = vunpack.c.l.b16 %v742
        %v1715 = vunpack.c.h.b16 %v742
        %v1716 = vunpack.c.l.b16 %v743
        %v1717 = vunpack.c.h.b16 %v743
        %v1718 = vunpack.c.l.b16 %v744
        %v1719 = vunpack.c.h.b16 %v744
        %v1720 = vunpack.c.l.b16 %v745
        %v1721 = vunpack.c.h.b16 %v745
        %v1722 = vunpack.c.l.b16 %v746
        %v1723 = vunpack.c.h.b16 %v746
        %v1724 = vunpack.c.l.b16 %v747
        %v1725 = vunpack.c.h.b16 %v747
        %v1726 = vunpack.c.l.b16 %v748
        %v1727 = vunpack.c.h.b16 %v748
        %v1728 = vunpack.c.l.b16 %v749
        %v1729 = vunpack.c.h.b16 %v749
        %v1730 = vunpack.c.l.b16 %v750
        %v1731 = vunpack.c.h.b16 %v750
        %v1732 = vunpack.c.l.b16 %v751
        %v1733 = vunpack.c.h.b16 %v751
        %v1734 = vunpack.c.l.b16 %v752
        %v1735 = vunpack.c.h.b16 %v752
        %v1736 = vunpack.c.l.b16 %v753
        %v1737 = vunpack.c.h.b16 %v753
        %v1738 = vunpack.c.l.b16 %v754
        %v1739 = vunpack.c.h.b16 %v754
        %v1740 = vunpack.c.l.b16 %v755
        %v1741 = vunpack.c.h.b16 %v755
        %v1742 = vunpack.c.l.b16 %v756
        %v1743 = vunpack.c.h.b16 %v756
        %v1744 = vunpack.c.l.b16 %v757
        %v1745 = vunpack.c.h.b16 %v757
        %v1746 = vunpack.c.l.b16 %v758
        %v1747 = vunpack.c.h.b16 %v758
        %v1748 = vunpack.c.l.b16 %v759
        %v1749 = vunpack.c.h.b16 %v759
        %v1750 = vunpack.c.l.b16 %v760
        %v1751 = vunpack.c.h.b16 %v760
        %v1752 = vunpack.c.l.b16 %v761
        %v1753 = vunpack.c.h.b16 %v761
        %v1754 = vunpack.c.l.b16 %v762
        %v1755 = vunpack.c.h.b16 %v762
        %v1756 = vunpack.c.l.b16 %v763
        %v1757 = vunpack.c.h.b16 %v763
        %v1758 = vunpack.c.l.b16 %v764
        %v1759 = vunpack.c.h.b16 %v764
        %v1760 = vunpack.c.l.b16 %v765
        %v1761 = vunpack.c.h.b16 %v765
        %v1762 = vunpack.c.l.b16 %v766
        %v1763 = vunpack.c.h.b16 %v766
        %v1764 = vunpack.c.l.b16 %v767
        %v1765 = vunpack.c.h.b16 %v767
        %v1766 = vunpack.c.l.b16 %v768
        %v1767 = vunpack.c.h.b16 %v768
        %v1768 = vunpack.c.l.b16 %v769
        %v1769 = vunpack.c.h.b16 %v769
        %v1770 = vunpack.c.l.b16 %v770
        %v1771 = vunpack.c.h.b16 %v770
        %v1772 = vunpack.c.l.b16 %v771
        %v1773 = vunpack.c.h.b16 %v771
        %v1774 = vunpack.c.l.b16 %v772
        %v1775 = vunpack.c.h.b16 %v772
        %v1776 = vunpack.c.l.b16 %v773
        %v1777 = vunpack.c.h.b16 %v773
        %v1778 = vunpack.c.l.b16 %v774
        %v1779 = vunpack.c.h.b16 %v774
        %v1780 = vunpack.c.l.b16 %v775
        %v1781 = vunpack.c.h.b16 %v775
        %v1782 = vunpack.c.l.b16 %v776
        %v1783 = vunpack.c.h.b16 %v776
        %v1784 = vunpack.c.l.b16 %v777
        %v1785 = vunpack.c.h.b16 %v777
        %v1786 = vunpack.c.l.b16 %v778
        %v1787 = vunpack.c.h.b16 %v778
        %v1788 = vunpack.c.l.b16 %v779
        %v1789 = vunpack.c.h.b16 %v779
        %v1790 = vunpack.c.l.b16 %v780
        %v1791 = vunpack.c.h.b16 %v780
        %v1792 = vunpack.c.l.b16 %v781
        %v1793 = vunpack.c.h.b16 %v781
        %v1794 = vunpack.c.l.b16 %v782
        %v1795 = vunpack.c.h.b16 %v782
        %v1796 = vunpack.c.l.b16 %v783
        %v1797 = vunpack.c.h.b16 %v783
        %v1798 = vunpack.c.l.b16 %v784
        %v1799 = vunpack.c.h.b16 %v784
        %v1800 = vunpack.c.l.b16 %v785
        %v1801 = vunpack.c.h.b16 %v785
        %v1802 = vunpack.c.l.b16 %v786
        %v1803 = vunpack.c.h.b16 %v786
        %v1804 = vunpack.c.l.b16 %v787
        %v1805 = vunpack.c.h.b16 %v787
        %v1806 = vunpack.c.l.b16 %v788
        %v1807 = vunpack.c.h.b16 %v788
        %v1808 = vunpack.c.l.b16 %v789
        %v1809 = vunpack.c.h.b16 %v789
        %v1810 = vunpack.c.l.b16 %v790
        %v1811 = vunpack.c.h.b16 %v790
        %v1812 = vunpack.c.l.b16 %v791
        %v1813 = vunpack.c.h.b16 %v791
        %v1814 = vunpack.c.l.b16 %v792
        %v1815 = vunpack.c.h.b16 %v792
        %v1816 = vunpack.c.l.b16 %v793
        %v1817 = vunpack.c.h.b16 %v793
        %v1818 = vunpack.c.l.b16 %v794
        %v1819 = vunpack.c.h.b16 %v794
        %v1820 = vunpack.c.l.b16 %v795
        %v1821 = vunpack.c.h.b16 %v795
        %v1822 = vunpack.c.l.b16 %v796
        %v1823 = vunpack.c.h.b16 %v796
        %v1824 = vunpack.c.l.b16 %v797
        %v1825 = vunpack.c.h.b16 %v797
        %v1826 = vunpack.c.l.b16 %v798
        %v1827 = vunpack.c.h.b16 %v798
        %v1828 = vunpack.c.l.b16 %v799
        %v1829 = vunpack.c.h.b16 %v799
        %v1830 = vunpack.c.l.b16 %v800
        %v1831 = vunpack.c.h.b16 %v800
        %v1832 = vunpack.c.l.b16 %v801
        %v1833 = vunpack.c.h.b16 %v801
        %v1834 = vunpack.c.l.b16 %v802
        %v1835 = vunpack.c.h.b16 %v802
        %v1836 = vunpack.c.l.b16 %v803
        %v1837 = vunpack.c.h.b16 %v803
        %v1838 = vunpack.c.l.b16 %v804
        %v1839 = vunpack.c.h.b16 %v804
        %v1840 = vunpack.c.l.b16 %v805
        %v1841 = vunpack.c.h.b16 %v805
        %v1842 = vunpack.c.l.b16 %v806
        %v1843 = vunpack.c.h.b16 %v806
        %v1844 = vunpack.c.l.b16 %v807
        %v1845 = vunpack.c.h.b16 %v807
        %v1846 = vunpack.c.l.b16 %v808
        %v1847 = vunpack.c.h.b16 %v808
        %v1848 = vunpack.c.l.b16 %v809
        %v1849 = vunpack.c.h.b16 %v809
        %v1850 = vunpack.c.l.b16 %v810
        %v1851 = vunpack.c.h.b16 %v810
        %v1852 = vunpack.c.l.b16 %v811
        %v1853 = vunpack.c.h.b16 %v811
        %v1854 = vunpack.c.l.b16 %v812
        %v1855 = vunpack.c.h.b16 %v812
        %v1856 = vunpack.c.l.b16 %v813
        %v1857 = vunpack.c.h.b16 %v813
        %v1858 = vunpack.c.l.b16 %v814
        %v1859 = vunpack.c.h.b16 %v814
        %v1860 = vunpack.c.l.b16 %v815
        %v1861 = vunpack.c.h.b16 %v815
        %v1862 = vunpack.c.l.b16 %v816
        %v1863 = vunpack.c.h.b16 %v816
        %v1864 = vunpack.c.l.b16 %v817
        %v1865 = vunpack.c.h.b16 %v817
        %v1866 = vunpack.c.l.b16 %v818
        %v1867 = vunpack.c.h.b16 %v818
        %v1868 = vunpack.c.l.b16 %v819
        %v1869 = vunpack.c.h.b16 %v819
        %v1870 = vunpack.c.l.b16 %v820
        %v1871 = vunpack.c.h.b16 %v820
        %v1872 = vunpack.c.l.b16 %v821
        %v1873 = vunpack.c.h.b16 %v821
        %v1874 = vunpack.c.l.b16 %v822
        %v1875 = vunpack.c.h.b16 %v822
        %v1876 = vunpack.c.l.b16 %v823
        %v1877 = vunpack.c.h.b16 %v823
        %v1878 = vunpack.c.l.b16 %v824
        %v1879 = vunpack.c.h.b16 %v824
        %v1880 = vunpack.c.l.b16 %v825
        %v1881 = vunpack.c.h.b16 %v825
        %v1882 = vunpack.c.l.b16 %v826
        %v1883 = vunpack.c.h.b16 %v826
        %v1884 = vunpack.c.l.b16 %v827
        %v1885 = vunpack.c.h.b16 %v827
        %v1886 = vunpack.c.l.b16 %v828
        %v1887 = vunpack.c.h.b16 %v828
        %v1888 = vunpack.c.l.b16 %v829
        %v1889 = vunpack.c.h.b16 %v829
        %v1890 = vpack.c.b16 %v1252, %v1250
        %v1891 = vpack.c.b16 %v1253, %v1251
        %v1892 = vpack.c.b16 %v1256, %v1254
        %v1893 = vpack.c.b16 %v1257, %v1255
        %v1894 = vpack.c.b16 %v1260, %v1258
        %v1895 = vpack.c.b16 %v1261, %v1259
        %v1896 = vpack.c.b16 %v1264, %v1262
        %v1897 = vpack.c.b16 %v1265, %v1263
        %v1898 = vpack.c.b16 %v1268, %v1266
        %v1899 = vpack.c.b16 %v1269, %v1267
        %v1900 = vpack.c.b16 %v1272, %v1270
        %v1901 = vpack.c.b16 %v1273, %v1271
        %v1902 = vpack.c.b16 %v1276, %v1274
        %v1903 = vpack.c.b16 %v1277, %v1275
        %v1904 = vpack.c.b16 %v1280, %v1278
        %v1905 = vpack.c.b16 %v1281, %v1279
        %v1906 = vpack.c.b16 %v1284, %v1282
        %v1907 = vpack.c.b16 %v1285, %v1283
        %v1908 = vpack.c.b16 %v1288, %v1286
        %v1909 = vpack.c.b16 %v1289, %v1287
        %v1910 = vpack.c.b16 %v1292, %v1290
        %v1911 = vpack.c.b16 %v1293, %v1291
        %v1912 = vpack.c.b16 %v1296, %v1294
        %v1913 = vpack.c.b16 %v1297, %v1295
        %v1914 = vpack.c.b16 %v1300, %v1298
        %v1915 = vpack.c.b16 %v1301, %v1299
        %v1916 = vpack.c.b16 %v1304, %v1302
        %v1917 = vpack.c.b16 %v1305, %v1303
        %v1918 = vpack.c.b16 %v1308, %v1306
        %v1919 = vpack.c.b16 %v1309, %v1307
        %v1920 = vpack.c.b16 %v1312, %v1310
        %v1921 = vpack.c.b16 %v1313, %v1311
        %v1922 = vpack.c.b16 %v1316, %v1314
        %v1923 = vpack.c.b16 %v1317, %v1315
        %v1924 = vpack.c.b16 %v1320, %v1318
        %v1925 = vpack.c.b16 %v1321, %v1319
        %v1926 = vpack.c.b16 %v1324, %v1322
        %v1927 = vpack.c.b16 %v1325, %v1323
        %v1928 = vpack.c.b16 %v1328, %v1326
        %v1929 = vpack.c.b16 %v1329, %v1327
        %v1930 = vpack.c.b16 %v1332, %v1330
        %v1931 = vpack.c.b16 %v1333, %v1331
        %v1932 = vpack.c.b16 %v1336, %v1334
        %v1933 = vpack.c.b16 %v1337, %v1335
        %v1934 = vpack.c.b16 %v1340, %v1338
        %v1935 = vpack.c.b16 %v1341, %v1339
        %v1936 = vpack.c.b16 %v1344, %v1342
        %v1937 = vpack.c.b16 %v1345, %v1343
        %v1938 = vpack.c.b16 %v1348, %v1346
        %v1939 = vpack.c.b16 %v1349, %v1347
        %v1940 = vpack.c.b16 %v1352, %v1350
        %v1941 = vpack.c.b16 %v1353, %v1351
        %v1942 = vpack.c.b16 %v1356, %v1354
        %v1943 = vpack.c.b16 %v1357, %v1355
        %v1944 = vpack.c.b16 %v1360, %v1358
        %v1945 = vpack.c.b16 %v1361, %v1359
        %v1946 = vpack.c.b16 %v1364, %v1362
        %v1947 = vpack.c.b16 %v1365, %v1363
        %v1948 = vpack.c.b16 %v1368, %v1366
        %v1949 = vpack.c.b16 %v1369, %v1367
        %v1950 = vpack.c.b16 %v1372, %v1370
        %v1951 = vpack.c.b16 %v1373, %v1371
        %v1952 = vpack.c.b16 %v1376, %v1374
        %v1953 = vpack.c.b16 %v1377, %v1375
        %v1954 = vpack.c.b16 %v1380, %v1378
        %v1955 = vpack.c.b16 %v1381, %v1379
        %v1956 = vpack.c.b16 %v1384, %v1382
        %v1957 = vpack.c.b16 %v1385, %v1383
        %v1958 = vpack.c.b16 %v1388, %v1386
        %v1959 = vpack.c.b16 %v1389, %v1387
        %v1960 = vpack.c.b16 %v1392, %v1390
        %v1961 = vpack.c.b16 %v1393, %v1391
        %v1962 = vpack.c.b16 %v1396, %v1394
        %v1963 = vpack.c.b16 %v1397, %v1395
        %v1964 = vpack.c.b16 %v1400, %v1398
        %v1965 = vpack.c.b16 %v1401, %v1399
        %v1966 = vpack.c.b16 %v1404, %v1402
        %v1967 = vpack.c.b16 %v1405, %v1403
        %v1968 = vpack.c.b16 %v1408, %v1406
        %v1969 = vpack.c.b16 %v1409, %v1407
        %v1970 = vpack.c.b16 %v1412, %v1410
        %v1971 = vpack.c.b16 %v1413, %v1411
        %v1972 = vpack.c.b16 %v1416, %v1414
        %v1973 = vpack.c.b16 %v1417, %v1415
        %v1974 = vpack.c.b16 %v1420, %v1418
        %v1975 = vpack.c.b16 %v1421, %v1419
        %v1976 = vpack.c.b16 %v1424, %v1422
        %v1977 = vpack.c.b16 %v1425, %v1423
        %v1978 = vpack.c.b16 %v1428, %v1426
        %v1979 = vpack.c.b16 %v1429, %v1427
        %v1980 = vpack.c.b16 %v1432, %v1430
        %v1981 = vpack.c.b16 %v1433, %v1431
        %v1982 = vpack.c.b16 %v1436, %v1434
        %v1983 = vpack.c.b16 %v1437, %v1435
        %v1984 = vpack.c.b16 %v1440, %v1438
        %v1985 = vpack.c.b16 %v1441, %v1439
        %v1986 = vpack.c.b16 %v1444, %v1442
        %v1987 = vpack.c.b16 %v1445, %v1443
        %v1988 = vpack.c.b16 %v1448, %v1446
        %v1989 = vpack.c.b16 %v1449, %v1447
        %v1990 = vpack.c.b16 %v1452, %v1450
        %v1991 = vpack.c.b16 %v1453, %v1451
        %v1992 = vpack.c.b16 %v1456, %v1454
        %v1993 = vpack.c.b16 %v1457, %v1455
        %v1994 = vpack.c.b16 %v1460, %v1458
        %v1995 = vpack.c.b16 %v1461, %v1459
        %v1996 = vpack.c.b16 %v1464, %v1462
        %v1997 = vpack.c.b16 %v1465, %v1463
        %v1998 = vpack.c.b16 %v1468, %v1466
        %v1999 = vpack.c.b16 %v1469, %v1467
        %v2000 = vpack.c.b16 %v1472, %v1470
        %v2001 = vpack.c.b16 %v1473, %v1471
        %v2002 = vpack.c.b16 %v1476, %v1474
        %v2003 = vpack.c.b16 %v1477, %v1475
        %v2004 = vpack.c.b16 %v1480, %v1478
        %v2005 = vpack.c.b16 %v1481, %v1479
        %v2006 = vpack.c.b16 %v1484, %v1482
        %v2007 = vpack.c.b16 %v1485, %v1483
        %v2008 = vpack.c.b16 %v1488, %v1486
        %v2009 = vpack.c.b16 %v1489, %v1487
        %v2010 = vpack.c.b16 %v1492, %v1490
        %v2011 = vpack.c.b16 %v1493, %v1491
        %v2012 = vpack.c.b16 %v1496, %v1494
        %v2013 = vpack.c.b16 %v1497, %v1495
        %v2014 = vpack.c.b16 %v1500, %v1498
        %v2015 = vpack.c.b16 %v1501, %v1499
        %v2016 = vpack.c.b16 %v1504, %v1502
        %v2017 = vpack.c.b16 %v1505, %v1503
        %v2018 = vpack.c.b16 %v1508, %v1506
        %v2019 = vpack.c.b16 %v1509, %v1507
        %v2020 = vpack.c.b16 %v1512, %v1510
        %v2021 = vpack.c.b16 %v1513, %v1511
        %v2022 = vpack.c.b16 %v1516, %v1514
        %v2023 = vpack.c.b16 %v1517, %v1515
        %v2024 = vpack.c.b16 %v1520, %v1518
        %v2025 = vpack.c.b16 %v1521, %v1519
        %v2026 = vpack.c.b16 %v1524, %v1522
        %v2027 = vpack.c.b16 %v1525, %v1523
        %v2028 = vpack.c.b16 %v1528, %v1526
        %v2029 = vpack.c.b16 %v1529, %v1527
        %v2030 = vpack.c.b16 %v1532, %v1530
        %v2031 = vpack.c.b16 %v1533, %v1531
        %v2032 = vpack.c.b16 %v1536, %v1534
        %v2033 = vpack.c.b16 %v1537, %v1535
        %v2034 = vpack.c.b16 %v1540, %v1538
        %v2035 = vpack.c.b16 %v1541, %v1539
        %v2036 = vpack.c.b16 %v1544, %v1542
        %v2037 = vpack.c.b16 %v1545, %v1543
        %v2038 = vpack.c.b16 %v1548, %v1546
        %v2039 = vpack.c.b16 %v1549, %v1547
        %v2040 = vpack.c.b16 %v1552, %v1550
        %v2041 = vpack.c.b16 %v1553, %v1551
        %v2042 = vpack.c.b16 %v1556, %v1554
        %v2043 = vpack.c.b16 %v1557, %v1555
        %v2044 = vpack.c.b16 %v1560, %v1558
        %v2045 = vpack.c.b16 %v1561, %v1559
        %v2046 = vpack.c.b16 %v1564, %v1562
        %v2047 = vpack.c.b16 %v1565, %v1563
        %v2048 = vpack.c.b16 %v1568, %v1566
        %v2049 = vpack.c.b16 %v1569, %v1567
        %v2050 = vpack.c.b16 %v1572, %v1570
        %v2051 = vpack.c.b16 %v1573, %v1571
        %v2052 = vpack.c.b16 %v1576, %v1574
        %v2053 = vpack.c.b16 %v1577, %v1575
        %v2054 = vpack.c.b16 %v1580, %v1578
        %v2055 = vpack.c.b16 %v1581, %v1579
        %v2056 = vpack.c.b16 %v1584, %v1582
        %v2057 = vpack.c.b16 %v1585, %v1583
        %v2058 = vpack.c.b16 %v1588, %v1586
        %v2059 = vpack.c.b16 %v1589, %v1587
        %v2060 = vpack.c.b16 %v1592, %v1590
        %v2061 = vpack.c.b16 %v1593, %v1591
        %v2062 = vpack.c.b16 %v1596, %v1594
        %v2063 = vpack.c.b16 %v1597, %v1595
        %v2064 = vpack.c.b16 %v1600, %v1598
        %v2065 = vpack.c.b16 %v1601, %v1599
        %v2066 = vpack.c.b16 %v1604, %v1602
        %v2067 = vpack.c.b16 %v1605, %v1603
        %v2068 = vpack.c.b16 %v1608, %v1606
        %v2069 = vpack.c.b16 %v1609, %v1607
        %v2070 = vpack.c.b16 %v1612, %v1610
        %v2071 = vpack.c.b16 %v1613, %v1611
        %v2072 = vpack.c.b16 %v1616, %v1614
        %v2073 = vpack.c.b16 %v1617, %v1615
        %v2074 = vpack.c.b16 %v1620, %v1618
        %v2075 = vpack.c.b16 %v1621, %v1619
        %v2076 = vpack.c.b16 %v1624, %v1622
        %v2077 = vpack.c.b16 %v1625, %v1623
        %v2078 = vpack.c.b16 %v1628, %v1626
        %v2079 = vpack.c.b16 %v1629, %v1627
        %v2080 = vpack.c.b16 %v1632, %v1630
        %v2081 = vpack.c.b16 %v1633, %v1631
        %v2082 = vpack.c.b16 %v1636, %v1634
        %v2083 = vpack.c.b16 %v1637, %v1635
        %v2084 = vpack.c.b16 %v1640, %v1638
        %v2085 = vpack.c.b16 %v1641, %v1639
        %v2086 = vpack.c.b16 %v1644, %v1642
        %v2087 = vpack.c.b16 %v1645, %v1643
        %v2088 = vpack.c.b16 %v1648, %v1646
        %v2089 = vpack.c.b16 %v1649, %v1647
        %v2090 = vpack.c.b16 %v1652, %v1650
        %v2091 = vpack.c.b16 %v1653, %v1651
        %v2092 = vpack.c.b16 %v1656, %v1654
        %v2093 = vpack.c.b16 %v1657, %v1655
        %v2094 = vpack.c.b16 %v1660, %v1658
        %v2095 = vpack.c.b16 %v1661, %v1659
        %v2096 = vpack.c.b16 %v1664, %v1662
        %v2097 = vpack.c.b16 %v1665, %v1663
        %v2098 = vpack.c.b16 %v1668, %v1666
        %v2099 = vpack.c.b16 %v1669, %v1667
        %v2100 = vpack.c.b16 %v1672, %v1670
        %v2101 = vpack.c.b16 %v1673, %v1671
        %v2102 = vpack.c.b16 %v1676, %v1674
        %v2103 = vpack.c.b16 %v1677, %v1675
        %v2104 = vpack.c.b16 %v1680, %v1678
        %v2105 = vpack.c.b16 %v1681, %v1679
        %v2106 = vpack.c.b16 %v1684, %v1682
        %v2107 = vpack.c.b16 %v1685, %v1683
        %v2108 = vpack.c.b16 %v1688, %v1686
        %v2109 = vpack.c.b16 %v1689, %v1687
        %v2110 = vpack.c.b16 %v1692, %v1690
        %v2111 = vpack.c.b16 %v1693, %v1691
        %v2112 = vpack.c.b16 %v1696, %v1694
        %v2113 = vpack.c.b16 %v1697, %v1695
        %v2114 = vpack.c.b16 %v1700, %v1698
        %v2115 = vpack.c.b16 %v1701, %v1699
        %v2116 = vpack.c.b16 %v1704, %v1702
        %v2117 = vpack.c.b16 %v1705, %v1703
        %v2118 = vpack.c.b16 %v1708, %v1706
        %v2119 = vpack.c.b16 %v1709, %v1707
        %v2120 = vpack.c.b16 %v1712, %v1710
        %v2121 = vpack.c.b16 %v1713, %v1711
        %v2122 = vpack.c.b16 %v1716, %v1714
        %v2123 = vpack.c.b16 %v1717, %v1715
        %v2124 = vpack.c.b16 %v1720, %v1718
        %v2125 = vpack.c.b16 %v1721, %v1719
        %v2126 = vpack.c.b16 %v1724, %v1722
        %v2127 = vpack.c.b16 %v1725, %v1723
        %v2128 = vpack.c.b16 %v1728, %v1726
        %v2129 = vpack.c.b16 %v1729, %v1727
        %v2130 = vpack.c.b16 %v1732, %v1730
        %v2131 = vpack.c.b16 %v1733, %v1731
        %v2132 = vpack.c.b16 %v1736, %v1734
        %v2133 = vpack.c.b16 %v1737, %v1735
        %v2134 = vpack.c.b16 %v1740, %v1738
        %v2135 = vpack.c.b16 %v1741, %v1739
        %v2136 = vpack.c.b16 %v1744, %v1742
        %v2137 = vpack.c.b16 %v1745, %v1743
        %v2138 = vpack.c.b16 %v1748, %v1746
        %v2139 = vpack.c.b16 %v1749, %v1747
        %v2140 = vpack.c.b16 %v1752, %v1750
        %v2141 = vpack.c.b16 %v1753, %v1751
        %v2142 = vpack.c.b16 %v1756, %v1754
        %v2143 = vpack.c.b16 %v1757, %v1755
        %v2144 = vpack.c.b16 %v1760, %v1758
        %v2145 = vpack.c.b16 %v1761, %v1759
        %v2146 = vpack.c.b16 %v1764, %v1762
        %v2147 = vpack.c.b16 %v1765, %v1763
        %v2148 = vpack.c.b16 %v1768, %v1766
        %v2149 = vpack.c.b16 %v1769, %v1767
        %v2150 = vpack.c.b16 %v1772, %v1770
        %v2151 = vpack.c.b16 %v1773, %v1771
        %v2152 = vpack.c.b16 %v1776, %v1774
        %v2153 = vpack.c.b16 %v1777, %v1775
        %v2154 = vpack.c.b16 %v1780, %v1778
        %v2155 = vpack.c.b16 %v1781, %v1779
        %v2156 = vpack.c.b16 %v1784, %v1782
        %v2157 = vpack.c.b16 %v1785, %v1783
        %v2158 = vpack.c.b16 %v1788, %v1786
        %v2159 = vpack.c.b16 %v1789, %v1787
        %v2160 = vpack.c.b16 %v1792, %v1790
        %v2161 = vpack.c.b16 %v1793, %v1791
        %v2162 = vpack.c.b16 %v1796, %v1794
        %v2163 = vpack.c.b16 %v1797, %v1795
        %v2164 = vpack.c.b16 %v1800, %v1798
        %v2165 = vpack.c.b16 %v1801, %v1799
        %v2166 = vpack.c.b16 %v1804, %v1802
        %v2167 = vpack.c.b16 %v1805, %v1803
        %v2168 = vpack.c.b16 %v1808, %v1806
        %v2169 = vpack.c.b16 %v1809, %v1807
        %v2170 = vpack.c.b16 %v1812, %v1810
        %v2171 = vpack.c.b16 %v1813, %v1811
        %v2172 = vpack.c.b16 %v1816, %v1814
        %v2173 = vpack.c.b16 %v1817, %v1815
        %v2174 = vpack.c.b16 %v1820, %v1818
        %v2175 = vpack.c.b16 %v1821, %v1819
        %v2176 = vpack.c.b16 %v1824, %v1822
        %v2177 = vpack.c.b16 %v1825, %v1823
        %v2178 = vpack.c.b16 %v1828, %v1826
        %v2179 = vpack.c.b16 %v1829, %v1827
        %v2180 = vpack.c.b16 %v1832, %v1830
        %v2181 = vpack.c.b16 %v1833, %v1831
        %v2182 = vpack.c.b16 %v1836, %v1834
        %v2183 = vpack.c.b16 %v1837, %v1835
        %v2184 = vpack.c.b16 %v1840, %v1838
        %v2185 = vpack.c.b16 %v1841, %v1839
        %v2186 = vpack.c.b16 %v1844, %v1842
        %v2187 = vpack.c.b16 %v1845, %v1843
        %v2188 = vpack.c.b16 %v1848, %v1846
        %v2189 = vpack.c.b16 %v1849, %v1847
        %v2190 = vpack.c.b16 %v1852, %v1850
        %v2191 = vpack.c.b16 %v1853, %v1851
        %v2192 = vpack.c.b16 %v1856, %v1854
        %v2193 = vpack.c.b16 %v1857, %v1855
        %v2194 = vpack.c.b16 %v1860, %v1858
        %v2195 = vpack.c.b16 %v1861, %v1859
        %v2196 = vpack.c.b16 %v1864, %v1862
        %v2197 = vpack.c.b16 %v1865, %v1863
        %v2198 = vpack.c.b16 %v1868, %v1866
        %v2199 = vpack.c.b16 %v1869, %v1867
        %v2200 = vpack.c.b16 %v1872, %v1870
        %v2201 = vpack.c.b16 %v1873, %v1871
        %v2202 = vpack.c.b16 %v1876, %v1874
        %v2203 = vpack.c.b16 %v1877, %v1875
        %v2204 = vpack.c.b16 %v1880, %v1878
        %v2205 = vpack.c.b16 %v1881, %v1879
        %v2206 = vpack.c.b16 %v1884, %v1882
        %v2207 = vpack.c.b16 %v1885, %v1883
        %v2208 = vpack.c.b16 %v1888, %v1886
        %v2209 = vpack.c.b16 %v1889, %v1887
        %2530 = vmatpush.bf16.msra.mxu0 %v1904
        %2531 = vmatpush.bf16.msra.mxu0 %v1902
        %2532 = vmatpush.bf16.msra.mxu0 %v1900
        %2533 = vmatpush.bf16.msra.mxu0 %v1898
        %2534 = vmatpush.bf16.msra.mxu0 %v1896
        %2535 = vmatpush.bf16.msra.mxu0 %v1894
        %2536 = vmatpush.bf16.msra.mxu0 %v1892
        %2537 = vmatpush.bf16.msra.mxu0 %v1890
        %2538 = vmatmul.bf16.gmra.mxu0 %v890
        %v2539 = vpop.f32.mrf.mxu0
        %v2540 = vadd.f32 0.0, %v2539
        %v2541 = vpop.f32.mrf.mxu0
        %v2542 = vadd.f32 0.0, %v2541
        %2543 = vdwg.mxu0
        %2544 = vmatpush.bf16.msra.mxu0 %v1920
        %2545 = vmatpush.bf16.msra.mxu0 %v1918
        %2546 = vmatpush.bf16.msra.mxu0 %v1916
        %2547 = vmatpush.bf16.msra.mxu0 %v1914
        %2548 = vmatpush.bf16.msra.mxu0 %v1912
        %2549 = vmatpush.bf16.msra.mxu0 %v1910
        %2550 = vmatpush.bf16.msra.mxu0 %v1908
        %2551 = vmatpush.bf16.msra.mxu0 %v1906
        %2552 = vmatmul.bf16.gmra.mxu0 %v891
        %v2553 = vpop.f32.mrf.mxu0
        %v2554 = vadd.f32 %v2540, %v2553
        %v2555 = vpop.f32.mrf.mxu0
        %v2556 = vadd.f32 %v2542, %v2555
        %2557 = vdwg.mxu0
        %2558 = vmatpush.bf16.msra.mxu0 %v1936
        %2559 = vmatpush.bf16.msra.mxu0 %v1934
        %2560 = vmatpush.bf16.msra.mxu0 %v1932
        %2561 = vmatpush.bf16.msra.mxu0 %v1930
        %2562 = vmatpush.bf16.msra.mxu0 %v1928
        %2563 = vmatpush.bf16.msra.mxu0 %v1926
        %2564 = vmatpush.bf16.msra.mxu0 %v1924
        %2565 = vmatpush.bf16.msra.mxu0 %v1922
        %2566 = vmatmul.bf16.gmra.mxu0 %v892
        %v2567 = vpop.f32.mrf.mxu0
        %v2568 = vadd.f32 %v2554, %v2567
        %v2569 = vpop.f32.mrf.mxu0
        %v2570 = vadd.f32 %v2556, %v2569
        %2571 = vdwg.mxu0
        %2572 = vmatpush.bf16.msra.mxu0 %v1952
        %2573 = vmatpush.bf16.msra.mxu0 %v1950
        %2574 = vmatpush.bf16.msra.mxu0 %v1948
        %2575 = vmatpush.bf16.msra.mxu0 %v1946
        %2576 = vmatpush.bf16.msra.mxu0 %v1944
        %2577 = vmatpush.bf16.msra.mxu0 %v1942
        %2578 = vmatpush.bf16.msra.mxu0 %v1940
        %2579 = vmatpush.bf16.msra.mxu0 %v1938
        %2580 = vmatmul.bf16.gmra.mxu0 %v893
        %v2581 = vpop.f32.mrf.mxu0
        %v2582 = vadd.f32 %v2568, %v2581
        %v2583 = vpop.f32.mrf.mxu0
        %v2584 = vadd.f32 %v2570, %v2583
        %2585 = vdwg.mxu0
        %2586 = vmatpush.bf16.msra.mxu0 %v1968
        %2587 = vmatpush.bf16.msra.mxu0 %v1966
        %2588 = vmatpush.bf16.msra.mxu0 %v1964
        %2589 = vmatpush.bf16.msra.mxu0 %v1962
        %2590 = vmatpush.bf16.msra.mxu0 %v1960
        %2591 = vmatpush.bf16.msra.mxu0 %v1958
        %2592 = vmatpush.bf16.msra.mxu0 %v1956
        %2593 = vmatpush.bf16.msra.mxu0 %v1954
        %2594 = vmatmul.bf16.gmra.mxu0 %v894
        %v2595 = vpop.f32.mrf.mxu0
        %v2596 = vadd.f32 %v2582, %v2595
        %v2597 = vpop.f32.mrf.mxu0
        %v2598 = vadd.f32 %v2584, %v2597
        %2599 = vdwg.mxu0
        %2600 = vmatpush.bf16.msra.mxu0 %v1984
        %2601 = vmatpush.bf16.msra.mxu0 %v1982
        %2602 = vmatpush.bf16.msra.mxu0 %v1980
        %2603 = vmatpush.bf16.msra.mxu0 %v1978
        %2604 = vmatpush.bf16.msra.mxu0 %v1976
        %2605 = vmatpush.bf16.msra.mxu0 %v1974
        %2606 = vmatpush.bf16.msra.mxu0 %v1972
        %2607 = vmatpush.bf16.msra.mxu0 %v1970
        %2608 = vmatmul.bf16.gmra.mxu0 %v895
        %v2609 = vpop.f32.mrf.mxu0
        %v2610 = vadd.f32 %v2596, %v2609
        %v2611 = vpop.f32.mrf.mxu0
        %v2612 = vadd.f32 %v2598, %v2611
        %2613 = vdwg.mxu0
        %2614 = vmatpush.bf16.msra.mxu0 %v2000
        %2615 = vmatpush.bf16.msra.mxu0 %v1998
        %2616 = vmatpush.bf16.msra.mxu0 %v1996
        %2617 = vmatpush.bf16.msra.mxu0 %v1994
        %2618 = vmatpush.bf16.msra.mxu0 %v1992
        %2619 = vmatpush.bf16.msra.mxu0 %v1990
        %2620 = vmatpush.bf16.msra.mxu0 %v1988
        %2621 = vmatpush.bf16.msra.mxu0 %v1986
        %2622 = vmatmul.bf16.gmra.mxu0 %v896
        %v2623 = vpop.f32.mrf.mxu0
        %v2624 = vadd.f32 %v2610, %v2623
        %v2625 = vpop.f32.mrf.mxu0
        %v2626 = vadd.f32 %v2612, %v2625
        %2627 = vdwg.mxu0
        %2628 = vmatpush.bf16.msra.mxu0 %v2016
        %2629 = vmatpush.bf16.msra.mxu0 %v2014
        %2630 = vmatpush.bf16.msra.mxu0 %v2012
        %2631 = vmatpush.bf16.msra.mxu0 %v2010
        %2632 = vmatpush.bf16.msra.mxu0 %v2008
        %2633 = vmatpush.bf16.msra.mxu0 %v2006
        %2634 = vmatpush.bf16.msra.mxu0 %v2004
        %2635 = vmatpush.bf16.msra.mxu0 %v2002
        %2636 = vmatmul.bf16.gmra.mxu0 %v897
        %v2637 = vpop.f32.mrf.mxu0
        %v2638 = vadd.f32 %v2624, %v2637
        %v2639 = vpop.f32.mrf.mxu0
        %v2640 = vadd.f32 %v2626, %v2639
        %2641 = vdwg.mxu0
        %2642 = vmatpush.bf16.msra.mxu0 %v2032
        %2643 = vmatpush.bf16.msra.mxu0 %v2030
        %2644 = vmatpush.bf16.msra.mxu0 %v2028
        %2645 = vmatpush.bf16.msra.mxu0 %v2026
        %2646 = vmatpush.bf16.msra.mxu0 %v2024
        %2647 = vmatpush.bf16.msra.mxu0 %v2022
        %2648 = vmatpush.bf16.msra.mxu0 %v2020
        %2649 = vmatpush.bf16.msra.mxu0 %v2018
        %2650 = vmatmul.bf16.gmra.mxu0 %v898
        %v2651 = vpop.f32.mrf.mxu0
        %v2652 = vadd.f32 %v2638, %v2651
        %v2653 = vpop.f32.mrf.mxu0
        %v2654 = vadd.f32 %v2640, %v2653
        %2655 = vdwg.mxu0
        %2656 = vmatpush.bf16.msra.mxu0 %v2048
        %2657 = vmatpush.bf16.msra.mxu0 %v2046
        %2658 = vmatpush.bf16.msra.mxu0 %v2044
        %2659 = vmatpush.bf16.msra.mxu0 %v2042
        %2660 = vmatpush.bf16.msra.mxu0 %v2040
        %2661 = vmatpush.bf16.msra.mxu0 %v2038
        %2662 = vmatpush.bf16.msra.mxu0 %v2036
        %2663 = vmatpush.bf16.msra.mxu0 %v2034
        %2664 = vmatmul.bf16.gmra.mxu0 %v899
        %v2665 = vpop.f32.mrf.mxu0
        %v2666 = vadd.f32 %v2652, %v2665
        %v2667 = vpop.f32.mrf.mxu0
        %v2668 = vadd.f32 %v2654, %v2667
        %2669 = vdwg.mxu0
        %2670 = vmatpush.bf16.msra.mxu0 %v2064
        %2671 = vmatpush.bf16.msra.mxu0 %v2062
        %2672 = vmatpush.bf16.msra.mxu0 %v2060
        %2673 = vmatpush.bf16.msra.mxu0 %v2058
        %2674 = vmatpush.bf16.msra.mxu0 %v2056
        %2675 = vmatpush.bf16.msra.mxu0 %v2054
        %2676 = vmatpush.bf16.msra.mxu0 %v2052
        %2677 = vmatpush.bf16.msra.mxu0 %v2050
        %2678 = vmatmul.bf16.gmra.mxu0 %v900
        %v2679 = vpop.f32.mrf.mxu0
        %v2680 = vadd.f32 %v2666, %v2679
        %v2681 = vpop.f32.mrf.mxu0
        %v2682 = vadd.f32 %v2668, %v2681
        %2683 = vdwg.mxu0
        %2684 = vmatpush.bf16.msra.mxu0 %v2080
        %2685 = vmatpush.bf16.msra.mxu0 %v2078
        %2686 = vmatpush.bf16.msra.mxu0 %v2076
        %2687 = vmatpush.bf16.msra.mxu0 %v2074
        %2688 = vmatpush.bf16.msra.mxu0 %v2072
        %2689 = vmatpush.bf16.msra.mxu0 %v2070
        %2690 = vmatpush.bf16.msra.mxu0 %v2068
        %2691 = vmatpush.bf16.msra.mxu0 %v2066
        %2692 = vmatmul.bf16.gmra.mxu0 %v901
        %v2693 = vpop.f32.mrf.mxu0
        %v2694 = vadd.f32 %v2680, %v2693
        %v2695 = vpop.f32.mrf.mxu0
        %v2696 = vadd.f32 %v2682, %v2695
        %2697 = vdwg.mxu0
        %2698 = vmatpush.bf16.msra.mxu0 %v2096
        %2699 = vmatpush.bf16.msra.mxu0 %v2094
        %2700 = vmatpush.bf16.msra.mxu0 %v2092
        %2701 = vmatpush.bf16.msra.mxu0 %v2090
        %2702 = vmatpush.bf16.msra.mxu0 %v2088
        %2703 = vmatpush.bf16.msra.mxu0 %v2086
        %2704 = vmatpush.bf16.msra.mxu0 %v2084
        %2705 = vmatpush.bf16.msra.mxu0 %v2082
        %2706 = vmatmul.bf16.gmra.mxu0 %v902
        %v2707 = vpop.f32.mrf.mxu0
        %v2708 = vadd.f32 %v2694, %v2707
        %v2709 = vpop.f32.mrf.mxu0
        %v2710 = vadd.f32 %v2696, %v2709
        %2711 = vdwg.mxu0
        %2712 = vmatpush.bf16.msra.mxu0 %v2112
        %2713 = vmatpush.bf16.msra.mxu0 %v2110
        %2714 = vmatpush.bf16.msra.mxu0 %v2108
        %2715 = vmatpush.bf16.msra.mxu0 %v2106
        %2716 = vmatpush.bf16.msra.mxu0 %v2104
        %2717 = vmatpush.bf16.msra.mxu0 %v2102
        %2718 = vmatpush.bf16.msra.mxu0 %v2100
        %2719 = vmatpush.bf16.msra.mxu0 %v2098
        %2720 = vmatmul.bf16.gmra.mxu0 %v903
        %v2721 = vpop.f32.mrf.mxu0
        %v2722 = vadd.f32 %v2708, %v2721
        %v2723 = vpop.f32.mrf.mxu0
        %v2724 = vadd.f32 %v2710, %v2723
        %2725 = vdwg.mxu0
        %2726 = vmatpush.bf16.msra.mxu0 %v2128
        %2727 = vmatpush.bf16.msra.mxu0 %v2126
        %2728 = vmatpush.bf16.msra.mxu0 %v2124
        %2729 = vmatpush.bf16.msra.mxu0 %v2122
        %2730 = vmatpush.bf16.msra.mxu0 %v2120
        %2731 = vmatpush.bf16.msra.mxu0 %v2118
        %2732 = vmatpush.bf16.msra.mxu0 %v2116
        %2733 = vmatpush.bf16.msra.mxu0 %v2114
        %2734 = vmatmul.bf16.gmra.mxu0 %v904
        %v2735 = vpop.f32.mrf.mxu0
        %v2736 = vadd.f32 %v2722, %v2735
        %v2737 = vpop.f32.mrf.mxu0
        %v2738 = vadd.f32 %v2724, %v2737
        %2739 = vdwg.mxu0
        %2740 = vmatpush.bf16.msra.mxu0 %v2144
        %2741 = vmatpush.bf16.msra.mxu0 %v2142
        %2742 = vmatpush.bf16.msra.mxu0 %v2140
        %2743 = vmatpush.bf16.msra.mxu0 %v2138
        %2744 = vmatpush.bf16.msra.mxu0 %v2136
        %2745 = vmatpush.bf16.msra.mxu0 %v2134
        %2746 = vmatpush.bf16.msra.mxu0 %v2132
        %2747 = vmatpush.bf16.msra.mxu0 %v2130
        %2748 = vmatmul.bf16.gmra.mxu0 %v905
        %v2749 = vpop.f32.mrf.mxu0
        %v2750 = vadd.f32 %v2736, %v2749
        %v2751 = vpop.f32.mrf.mxu0
        %v2752 = vadd.f32 %v2738, %v2751
        %2753 = vdwg.mxu0
        %2754 = vmatpush.bf16.msra.mxu0 %v2160
        %2755 = vmatpush.bf16.msra.mxu0 %v2158
        %2756 = vmatpush.bf16.msra.mxu0 %v2156
        %2757 = vmatpush.bf16.msra.mxu0 %v2154
        %2758 = vmatpush.bf16.msra.mxu0 %v2152
        %2759 = vmatpush.bf16.msra.mxu0 %v2150
        %2760 = vmatpush.bf16.msra.mxu0 %v2148
        %2761 = vmatpush.bf16.msra.mxu0 %v2146
        %2762 = vmatmul.bf16.gmra.mxu0 %v906
        %v2763 = vpop.f32.mrf.mxu0
        %v2764 = vadd.f32 %v2750, %v2763
        %v2765 = vpop.f32.mrf.mxu0
        %v2766 = vadd.f32 %v2752, %v2765
        %2767 = vdwg.mxu0
        %2768 = vmatpush.bf16.msra.mxu0 %v2176
        %2769 = vmatpush.bf16.msra.mxu0 %v2174
        %2770 = vmatpush.bf16.msra.mxu0 %v2172
        %2771 = vmatpush.bf16.msra.mxu0 %v2170
        %2772 = vmatpush.bf16.msra.mxu0 %v2168
        %2773 = vmatpush.bf16.msra.mxu0 %v2166
        %2774 = vmatpush.bf16.msra.mxu0 %v2164
        %2775 = vmatpush.bf16.msra.mxu0 %v2162
        %2776 = vmatmul.bf16.gmra.mxu0 %v907
        %v2777 = vpop.f32.mrf.mxu0
        %v2778 = vadd.f32 %v2764, %v2777
        %v2779 = vpop.f32.mrf.mxu0
        %v2780 = vadd.f32 %v2766, %v2779
        %2781 = vdwg.mxu0
        %2782 = vmatpush.bf16.msra.mxu0 %v2192
        %2783 = vmatpush.bf16.msra.mxu0 %v2190
        %2784 = vmatpush.bf16.msra.mxu0 %v2188
        %2785 = vmatpush.bf16.msra.mxu0 %v2186
        %2786 = vmatpush.bf16.msra.mxu0 %v2184
        %2787 = vmatpush.bf16.msra.mxu0 %v2182
        %2788 = vmatpush.bf16.msra.mxu0 %v2180
        %2789 = vmatpush.bf16.msra.mxu0 %v2178
        %2790 = vmatmul.bf16.gmra.mxu0 %v908
        %v2791 = vpop.f32.mrf.mxu0
        %v2792 = vadd.f32 %v2778, %v2791
        %v2793 = vpop.f32.mrf.mxu0
        %v2794 = vadd.f32 %v2780, %v2793
        %2795 = vdwg.mxu0
        %2796 = vmatpush.bf16.msra.mxu0 %v2208
        %2797 = vmatpush.bf16.msra.mxu0 %v2206
        %2798 = vmatpush.bf16.msra.mxu0 %v2204
        %2799 = vmatpush.bf16.msra.mxu0 %v2202
        %2800 = vmatpush.bf16.msra.mxu0 %v2200
        %2801 = vmatpush.bf16.msra.mxu0 %v2198
        %2802 = vmatpush.bf16.msra.mxu0 %v2196
        %2803 = vmatpush.bf16.msra.mxu0 %v2194
        %2804 = vmatmul.bf16.gmra.mxu0 %v909
        %v2805 = vpop.f32.mrf.mxu0
        %v2806 = vadd.f32 %v2792, %v2805
        %v2807 = vpop.f32.mrf.mxu0
        %v2808 = vadd.f32 %v2794, %v2807
        %2809 = vdwg.mxu0
        %2810 = vmatpush.bf16.msra.mxu0 %v1905
        %2811 = vmatpush.bf16.msra.mxu0 %v1903
        %2812 = vmatpush.bf16.msra.mxu0 %v1901
        %2813 = vmatpush.bf16.msra.mxu0 %v1899
        %2814 = vmatpush.bf16.msra.mxu0 %v1897
        %2815 = vmatpush.bf16.msra.mxu0 %v1895
        %2816 = vmatpush.bf16.msra.mxu0 %v1893
        %2817 = vmatpush.bf16.msra.mxu0 %v1891
        %2818 = vmatmul.bf16.gmra.mxu0 %v890
        %v2819 = vpop.f32.mrf.mxu0
        %v2820 = vadd.f32 0.0, %v2819
        %v2821 = vpop.f32.mrf.mxu0
        %v2822 = vadd.f32 0.0, %v2821
        %2823 = vdwg.mxu0
        %2824 = vmatpush.bf16.msra.mxu0 %v1921
        %2825 = vmatpush.bf16.msra.mxu0 %v1919
        %2826 = vmatpush.bf16.msra.mxu0 %v1917
        %2827 = vmatpush.bf16.msra.mxu0 %v1915
        %2828 = vmatpush.bf16.msra.mxu0 %v1913
        %2829 = vmatpush.bf16.msra.mxu0 %v1911
        %2830 = vmatpush.bf16.msra.mxu0 %v1909
        %2831 = vmatpush.bf16.msra.mxu0 %v1907
        %2832 = vmatmul.bf16.gmra.mxu0 %v891
        %v2833 = vpop.f32.mrf.mxu0
        %v2834 = vadd.f32 %v2820, %v2833
        %v2835 = vpop.f32.mrf.mxu0
        %v2836 = vadd.f32 %v2822, %v2835
        %2837 = vdwg.mxu0
        %2838 = vmatpush.bf16.msra.mxu0 %v1937
        %2839 = vmatpush.bf16.msra.mxu0 %v1935
        %2840 = vmatpush.bf16.msra.mxu0 %v1933
        %2841 = vmatpush.bf16.msra.mxu0 %v1931
        %2842 = vmatpush.bf16.msra.mxu0 %v1929
        %2843 = vmatpush.bf16.msra.mxu0 %v1927
        %2844 = vmatpush.bf16.msra.mxu0 %v1925
        %2845 = vmatpush.bf16.msra.mxu0 %v1923
        %2846 = vmatmul.bf16.gmra.mxu0 %v892
        %v2847 = vpop.f32.mrf.mxu0
        %v2848 = vadd.f32 %v2834, %v2847
        %v2849 = vpop.f32.mrf.mxu0
        %v2850 = vadd.f32 %v2836, %v2849
        %2851 = vdwg.mxu0
        %2852 = vmatpush.bf16.msra.mxu0 %v1953
        %2853 = vmatpush.bf16.msra.mxu0 %v1951
        %2854 = vmatpush.bf16.msra.mxu0 %v1949
        %2855 = vmatpush.bf16.msra.mxu0 %v1947
        %2856 = vmatpush.bf16.msra.mxu0 %v1945
        %2857 = vmatpush.bf16.msra.mxu0 %v1943
        %2858 = vmatpush.bf16.msra.mxu0 %v1941
        %2859 = vmatpush.bf16.msra.mxu0 %v1939
        %2860 = vmatmul.bf16.gmra.mxu0 %v893
        %v2861 = vpop.f32.mrf.mxu0
        %v2862 = vadd.f32 %v2848, %v2861
        %v2863 = vpop.f32.mrf.mxu0
        %v2864 = vadd.f32 %v2850, %v2863
        %2865 = vdwg.mxu0
        %2866 = vmatpush.bf16.msra.mxu0 %v1969
        %2867 = vmatpush.bf16.msra.mxu0 %v1967
        %2868 = vmatpush.bf16.msra.mxu0 %v1965
        %2869 = vmatpush.bf16.msra.mxu0 %v1963
        %2870 = vmatpush.bf16.msra.mxu0 %v1961
        %2871 = vmatpush.bf16.msra.mxu0 %v1959
        %2872 = vmatpush.bf16.msra.mxu0 %v1957
        %2873 = vmatpush.bf16.msra.mxu0 %v1955
        %2874 = vmatmul.bf16.gmra.mxu0 %v894
        %v2875 = vpop.f32.mrf.mxu0
        %v2876 = vadd.f32 %v2862, %v2875
        %v2877 = vpop.f32.mrf.mxu0
        %v2878 = vadd.f32 %v2864, %v2877
        %2879 = vdwg.mxu0
        %2880 = vmatpush.bf16.msra.mxu0 %v1985
        %2881 = vmatpush.bf16.msra.mxu0 %v1983
        %2882 = vmatpush.bf16.msra.mxu0 %v1981
        %2883 = vmatpush.bf16.msra.mxu0 %v1979
        %2884 = vmatpush.bf16.msra.mxu0 %v1977
        %2885 = vmatpush.bf16.msra.mxu0 %v1975
        %2886 = vmatpush.bf16.msra.mxu0 %v1973
        %2887 = vmatpush.bf16.msra.mxu0 %v1971
        %2888 = vmatmul.bf16.gmra.mxu0 %v895
        %v2889 = vpop.f32.mrf.mxu0
        %v2890 = vadd.f32 %v2876, %v2889
        %v2891 = vpop.f32.mrf.mxu0
        %v2892 = vadd.f32 %v2878, %v2891
        %2893 = vdwg.mxu0
        %2894 = vmatpush.bf16.msra.mxu0 %v2001
        %2895 = vmatpush.bf16.msra.mxu0 %v1999
        %2896 = vmatpush.bf16.msra.mxu0 %v1997
        %2897 = vmatpush.bf16.msra.mxu0 %v1995
        %2898 = vmatpush.bf16.msra.mxu0 %v1993
        %2899 = vmatpush.bf16.msra.mxu0 %v1991
        %2900 = vmatpush.bf16.msra.mxu0 %v1989
        %2901 = vmatpush.bf16.msra.mxu0 %v1987
        %2902 = vmatmul.bf16.gmra.mxu0 %v896
        %v2903 = vpop.f32.mrf.mxu0
        %v2904 = vadd.f32 %v2890, %v2903
        %v2905 = vpop.f32.mrf.mxu0
        %v2906 = vadd.f32 %v2892, %v2905
        %2907 = vdwg.mxu0
        %2908 = vmatpush.bf16.msra.mxu0 %v2017
        %2909 = vmatpush.bf16.msra.mxu0 %v2015
        %2910 = vmatpush.bf16.msra.mxu0 %v2013
        %2911 = vmatpush.bf16.msra.mxu0 %v2011
        %2912 = vmatpush.bf16.msra.mxu0 %v2009
        %2913 = vmatpush.bf16.msra.mxu0 %v2007
        %2914 = vmatpush.bf16.msra.mxu0 %v2005
        %2915 = vmatpush.bf16.msra.mxu0 %v2003
        %2916 = vmatmul.bf16.gmra.mxu0 %v897
        %v2917 = vpop.f32.mrf.mxu0
        %v2918 = vadd.f32 %v2904, %v2917
        %v2919 = vpop.f32.mrf.mxu0
        %v2920 = vadd.f32 %v2906, %v2919
        %2921 = vdwg.mxu0
        %2922 = vmatpush.bf16.msra.mxu0 %v2033
        %2923 = vmatpush.bf16.msra.mxu0 %v2031
        %2924 = vmatpush.bf16.msra.mxu0 %v2029
        %2925 = vmatpush.bf16.msra.mxu0 %v2027
        %2926 = vmatpush.bf16.msra.mxu0 %v2025
        %2927 = vmatpush.bf16.msra.mxu0 %v2023
        %2928 = vmatpush.bf16.msra.mxu0 %v2021
        %2929 = vmatpush.bf16.msra.mxu0 %v2019
        %2930 = vmatmul.bf16.gmra.mxu0 %v898
        %v2931 = vpop.f32.mrf.mxu0
        %v2932 = vadd.f32 %v2918, %v2931
        %v2933 = vpop.f32.mrf.mxu0
        %v2934 = vadd.f32 %v2920, %v2933
        %2935 = vdwg.mxu0
        %2936 = vmatpush.bf16.msra.mxu0 %v2049
        %2937 = vmatpush.bf16.msra.mxu0 %v2047
        %2938 = vmatpush.bf16.msra.mxu0 %v2045
        %2939 = vmatpush.bf16.msra.mxu0 %v2043
        %2940 = vmatpush.bf16.msra.mxu0 %v2041
        %2941 = vmatpush.bf16.msra.mxu0 %v2039
        %2942 = vmatpush.bf16.msra.mxu0 %v2037
        %2943 = vmatpush.bf16.msra.mxu0 %v2035
        %2944 = vmatmul.bf16.gmra.mxu0 %v899
        %v2945 = vpop.f32.mrf.mxu0
        %v2946 = vadd.f32 %v2932, %v2945
        %v2947 = vpop.f32.mrf.mxu0
        %v2948 = vadd.f32 %v2934, %v2947
        %2949 = vdwg.mxu0
        %2950 = vmatpush.bf16.msra.mxu0 %v2065
        %2951 = vmatpush.bf16.msra.mxu0 %v2063
        %2952 = vmatpush.bf16.msra.mxu0 %v2061
        %2953 = vmatpush.bf16.msra.mxu0 %v2059
        %2954 = vmatpush.bf16.msra.mxu0 %v2057
        %2955 = vmatpush.bf16.msra.mxu0 %v2055
        %2956 = vmatpush.bf16.msra.mxu0 %v2053
        %2957 = vmatpush.bf16.msra.mxu0 %v2051
        %2958 = vmatmul.bf16.gmra.mxu0 %v900
        %v2959 = vpop.f32.mrf.mxu0
        %v2960 = vadd.f32 %v2946, %v2959
        %v2961 = vpop.f32.mrf.mxu0
        %v2962 = vadd.f32 %v2948, %v2961
        %2963 = vdwg.mxu0
        %2964 = vmatpush.bf16.msra.mxu0 %v2081
        %2965 = vmatpush.bf16.msra.mxu0 %v2079
        %2966 = vmatpush.bf16.msra.mxu0 %v2077
        %2967 = vmatpush.bf16.msra.mxu0 %v2075
        %2968 = vmatpush.bf16.msra.mxu0 %v2073
        %2969 = vmatpush.bf16.msra.mxu0 %v2071
        %2970 = vmatpush.bf16.msra.mxu0 %v2069
        %2971 = vmatpush.bf16.msra.mxu0 %v2067
        %2972 = vmatmul.bf16.gmra.mxu0 %v901
        %v2973 = vpop.f32.mrf.mxu0
        %v2974 = vadd.f32 %v2960, %v2973
        %v2975 = vpop.f32.mrf.mxu0
        %v2976 = vadd.f32 %v2962, %v2975
        %2977 = vdwg.mxu0
        %2978 = vmatpush.bf16.msra.mxu0 %v2097
        %2979 = vmatpush.bf16.msra.mxu0 %v2095
        %2980 = vmatpush.bf16.msra.mxu0 %v2093
        %2981 = vmatpush.bf16.msra.mxu0 %v2091
        %2982 = vmatpush.bf16.msra.mxu0 %v2089
        %2983 = vmatpush.bf16.msra.mxu0 %v2087
        %2984 = vmatpush.bf16.msra.mxu0 %v2085
        %2985 = vmatpush.bf16.msra.mxu0 %v2083
        %2986 = vmatmul.bf16.gmra.mxu0 %v902
        %v2987 = vpop.f32.mrf.mxu0
        %v2988 = vadd.f32 %v2974, %v2987
        %v2989 = vpop.f32.mrf.mxu0
        %v2990 = vadd.f32 %v2976, %v2989
        %2991 = vdwg.mxu0
        %2992 = vmatpush.bf16.msra.mxu0 %v2113
        %2993 = vmatpush.bf16.msra.mxu0 %v2111
        %2994 = vmatpush.bf16.msra.mxu0 %v2109
        %2995 = vmatpush.bf16.msra.mxu0 %v2107
        %2996 = vmatpush.bf16.msra.mxu0 %v2105
        %2997 = vmatpush.bf16.msra.mxu0 %v2103
        %2998 = vmatpush.bf16.msra.mxu0 %v2101
        %2999 = vmatpush.bf16.msra.mxu0 %v2099
        %3000 = vmatmul.bf16.gmra.mxu0 %v903
        %v3001 = vpop.f32.mrf.mxu0
        %v3002 = vadd.f32 %v2988, %v3001
        %v3003 = vpop.f32.mrf.mxu0
        %v3004 = vadd.f32 %v2990, %v3003
        %3005 = vdwg.mxu0
        %3006 = vmatpush.bf16.msra.mxu0 %v2129
        %3007 = vmatpush.bf16.msra.mxu0 %v2127
        %3008 = vmatpush.bf16.msra.mxu0 %v2125
        %3009 = vmatpush.bf16.msra.mxu0 %v2123
        %3010 = vmatpush.bf16.msra.mxu0 %v2121
        %3011 = vmatpush.bf16.msra.mxu0 %v2119
        %3012 = vmatpush.bf16.msra.mxu0 %v2117
        %3013 = vmatpush.bf16.msra.mxu0 %v2115
        %3014 = vmatmul.bf16.gmra.mxu0 %v904
        %v3015 = vpop.f32.mrf.mxu0
        %v3016 = vadd.f32 %v3002, %v3015
        %v3017 = vpop.f32.mrf.mxu0
        %v3018 = vadd.f32 %v3004, %v3017
        %3019 = vdwg.mxu0
        %3020 = vmatpush.bf16.msra.mxu0 %v2145
        %3021 = vmatpush.bf16.msra.mxu0 %v2143
        %3022 = vmatpush.bf16.msra.mxu0 %v2141
        %3023 = vmatpush.bf16.msra.mxu0 %v2139
        %3024 = vmatpush.bf16.msra.mxu0 %v2137
        %3025 = vmatpush.bf16.msra.mxu0 %v2135
        %3026 = vmatpush.bf16.msra.mxu0 %v2133
        %3027 = vmatpush.bf16.msra.mxu0 %v2131
        %3028 = vmatmul.bf16.gmra.mxu0 %v905
        %v3029 = vpop.f32.mrf.mxu0
        %v3030 = vadd.f32 %v3016, %v3029
        %v3031 = vpop.f32.mrf.mxu0
        %v3032 = vadd.f32 %v3018, %v3031
        %3033 = vdwg.mxu0
        %3034 = vmatpush.bf16.msra.mxu0 %v2161
        %3035 = vmatpush.bf16.msra.mxu0 %v2159
        %3036 = vmatpush.bf16.msra.mxu0 %v2157
        %3037 = vmatpush.bf16.msra.mxu0 %v2155
        %3038 = vmatpush.bf16.msra.mxu0 %v2153
        %3039 = vmatpush.bf16.msra.mxu0 %v2151
        %3040 = vmatpush.bf16.msra.mxu0 %v2149
        %3041 = vmatpush.bf16.msra.mxu0 %v2147
        %3042 = vmatmul.bf16.gmra.mxu0 %v906
        %v3043 = vpop.f32.mrf.mxu0
        %v3044 = vadd.f32 %v3030, %v3043
        %v3045 = vpop.f32.mrf.mxu0
        %v3046 = vadd.f32 %v3032, %v3045
        %3047 = vdwg.mxu0
        %3048 = vmatpush.bf16.msra.mxu0 %v2177
        %3049 = vmatpush.bf16.msra.mxu0 %v2175
        %3050 = vmatpush.bf16.msra.mxu0 %v2173
        %3051 = vmatpush.bf16.msra.mxu0 %v2171
        %3052 = vmatpush.bf16.msra.mxu0 %v2169
        %3053 = vmatpush.bf16.msra.mxu0 %v2167
        %3054 = vmatpush.bf16.msra.mxu0 %v2165
        %3055 = vmatpush.bf16.msra.mxu0 %v2163
        %3056 = vmatmul.bf16.gmra.mxu0 %v907
        %v3057 = vpop.f32.mrf.mxu0
        %v3058 = vadd.f32 %v3044, %v3057
        %v3059 = vpop.f32.mrf.mxu0
        %v3060 = vadd.f32 %v3046, %v3059
        %3061 = vdwg.mxu0
        %3062 = vmatpush.bf16.msra.mxu0 %v2193
        %3063 = vmatpush.bf16.msra.mxu0 %v2191
        %3064 = vmatpush.bf16.msra.mxu0 %v2189
        %3065 = vmatpush.bf16.msra.mxu0 %v2187
        %3066 = vmatpush.bf16.msra.mxu0 %v2185
        %3067 = vmatpush.bf16.msra.mxu0 %v2183
        %3068 = vmatpush.bf16.msra.mxu0 %v2181
        %3069 = vmatpush.bf16.msra.mxu0 %v2179
        %3070 = vmatmul.bf16.gmra.mxu0 %v908
        %v3071 = vpop.f32.mrf.mxu0
        %v3072 = vadd.f32 %v3058, %v3071
        %v3073 = vpop.f32.mrf.mxu0
        %v3074 = vadd.f32 %v3060, %v3073
        %3075 = vdwg.mxu0
        %3076 = vmatpush.bf16.msra.mxu0 %v2209
        %3077 = vmatpush.bf16.msra.mxu0 %v2207
        %3078 = vmatpush.bf16.msra.mxu0 %v2205
        %3079 = vmatpush.bf16.msra.mxu0 %v2203
        %3080 = vmatpush.bf16.msra.mxu0 %v2201
        %3081 = vmatpush.bf16.msra.mxu0 %v2199
        %3082 = vmatpush.bf16.msra.mxu0 %v2197
        %3083 = vmatpush.bf16.msra.mxu0 %v2195
        %3084 = vmatmul.bf16.gmra.mxu0 %v909
        %v3085 = vpop.f32.mrf.mxu0
        %v3086 = vadd.f32 %v3072, %v3085
        %v3087 = vpop.f32.mrf.mxu0
        %v3088 = vadd.f32 %v3074, %v3087
        %3089 = vdwg.mxu0
        %v3090 = vadd.f32 %v486, %v2806
        %v3091 = vadd.f32 %v487, %v3086
        %v3092 = vadd.f32 %v488, %v2808
        %v3093 = vadd.f32 %v489, %v3088
        %3094 = vst [vmem:[#allocation2] sm:$0xff] %v3090
        %3095 = vst [vmem:[#allocation2 + $0x8] sm:$0xff] %v3091
        %3096 = vst [vmem:[#allocation2 + $0x10] sm:$0xff] %v3092
        %3097 = vst [vmem:[#allocation2 + $0x18] sm:$0xff] %v3093
        %p3098 = scmp.eq.s32.totalorder %s29, 1
        // Predicated region
        $region100: #{_lambda_.3} parent=66 // pred_check
          %p3099 = pneg %p3098
        $region101: #{_lambda_.3} parent=66 // pred_check_branch
          %3101 = sbr.rel (%p3099) target = $region103
        $region102: #{_lambda_.3} parent=66 // pred_region
          %v3102 = vld [vmem:[#allocation2] sm:$0xff]
          %v3103 = vld [vmem:[#allocation2 + $0x8] sm:$0xff]
          %v3104 = vld [vmem:[#allocation2 + $0x10] sm:$0xff]
          %v3105 = vld [vmem:[#allocation2 + $0x18] sm:$0xff]
          %v3106 = vld [vmem:[#allocation6] sm:$0x3]
          %v3108 = vperm.slane %v3106, 0
          %v3109 = vperm.slane %v3106, 1
          %v3112 = vadd.f32 %v3102, %v3108
          %v3113 = vadd.f32 %v3103, %v3109
          %v3114 = vadd.f32 %v3104, %v3108
          %v3115 = vadd.f32 %v3105, %v3109
          %v3116 = vmax.f32 %v3112, 0.0
          %v3117 = vmax.f32 %v3113, 0.0
          %v3118 = vmax.f32 %v3114, 0.0
          %v3119 = vmax.f32 %v3115, 0.0
          %v3120 = vpack.c.bf16 %v3118, %v3116
          %v3121 = vpack.c.bf16 %v3119, %v3117
          %v3122 = vld [vmem:[#allocation8] sm:$0xff]
          %v3123 = vld [vmem:[#allocation8 + $0x8] sm:$0xff]
          %v3124 = vld [vmem:[#allocation8 + $0x10] sm:$0xff]
          %v3125 = vld [vmem:[#allocation8 + $0x18] sm:$0xff]
          %v3126 = vld [vmem:[#allocation8 + $0x20] sm:$0xff]
          %v3127 = vld [vmem:[#allocation8 + $0x28] sm:$0xff]
          %v3128 = vld [vmem:[#allocation8 + $0x30] sm:$0xff]
          %v3129 = vld [vmem:[#allocation8 + $0x38] sm:$0xff]
          %v3130 = vld [vmem:[#allocation8 + $0x40] sm:$0xff]
          %v3131 = vld [vmem:[#allocation8 + $0x48] sm:$0xff]
          %v3132 = vld [vmem:[#allocation8 + $0x50] sm:$0xff]
          %v3133 = vld [vmem:[#allocation8 + $0x58] sm:$0xff]
          %v3134 = vld [vmem:[#allocation8 + $0x60] sm:$0xff]
          %v3135 = vld [vmem:[#allocation8 + $0x68] sm:$0xff]
          %v3136 = vld [vmem:[#allocation8 + $0x70] sm:$0xff]
          %v3137 = vld [vmem:[#allocation8 + $0x78] sm:$0xff]
          %v3138 = vld [vmem:[#allocation8 + $0x80] sm:$0xff]
          %v3139 = vld [vmem:[#allocation8 + $0x88] sm:$0xff]
          %v3140 = vld [vmem:[#allocation8 + $0x90] sm:$0xff]
          %v3141 = vld [vmem:[#allocation8 + $0x98] sm:$0xff]
          %v3142 = vld [vmem:[#allocation8 + $0xa0] sm:$0xff]
          %v3143 = vld [vmem:[#allocation8 + $0xa8] sm:$0xff]
          %v3144 = vld [vmem:[#allocation8 + $0xb0] sm:$0xff]
          %v3145 = vld [vmem:[#allocation8 + $0xb8] sm:$0xff]
          %v3146 = vld [vmem:[#allocation8 + $0xc0] sm:$0xff]
          %v3147 = vld [vmem:[#allocation8 + $0xc8] sm:$0xff]
          %v3148 = vld [vmem:[#allocation8 + $0xd0] sm:$0xff]
          %v3149 = vld [vmem:[#allocation8 + $0xd8] sm:$0xff]
          %v3150 = vld [vmem:[#allocation8 + $0xe0] sm:$0xff]
          %v3151 = vld [vmem:[#allocation8 + $0xe8] sm:$0xff]
          %v3152 = vld [vmem:[#allocation8 + $0xf0] sm:$0xff]
          %v3153 = vld [vmem:[#allocation8 + $0xf8] sm:$0xff]
          %v3154 = vld [vmem:[#allocation9] sm:$0x3]
          %v3156 = vperm.slane %v3154, 0
          %v3157 = vperm.slane %v3154, 1
          %v3192 = vunpack.c.l.b16 %v3122
          %v3193 = vunpack.c.h.b16 %v3122
          %v3194 = vunpack.c.l.b16 %v3123
          %v3195 = vunpack.c.h.b16 %v3123
          %v3196 = vunpack.c.l.b16 %v3124
          %v3197 = vunpack.c.h.b16 %v3124
          %v3198 = vunpack.c.l.b16 %v3125
          %v3199 = vunpack.c.h.b16 %v3125
          %v3200 = vunpack.c.l.b16 %v3126
          %v3201 = vunpack.c.h.b16 %v3126
          %v3202 = vunpack.c.l.b16 %v3127
          %v3203 = vunpack.c.h.b16 %v3127
          %v3204 = vunpack.c.l.b16 %v3128
          %v3205 = vunpack.c.h.b16 %v3128
          %v3206 = vunpack.c.l.b16 %v3129
          %v3207 = vunpack.c.h.b16 %v3129
          %v3208 = vunpack.c.l.b16 %v3130
          %v3209 = vunpack.c.h.b16 %v3130
          %v3210 = vunpack.c.l.b16 %v3131
          %v3211 = vunpack.c.h.b16 %v3131
          %v3212 = vunpack.c.l.b16 %v3132
          %v3213 = vunpack.c.h.b16 %v3132
          %v3214 = vunpack.c.l.b16 %v3133
          %v3215 = vunpack.c.h.b16 %v3133
          %v3216 = vunpack.c.l.b16 %v3134
          %v3217 = vunpack.c.h.b16 %v3134
          %v3218 = vunpack.c.l.b16 %v3135
          %v3219 = vunpack.c.h.b16 %v3135
          %v3220 = vunpack.c.l.b16 %v3136
          %v3221 = vunpack.c.h.b16 %v3136
          %v3222 = vunpack.c.l.b16 %v3137
          %v3223 = vunpack.c.h.b16 %v3137
          %v3224 = vunpack.c.l.b16 %v3138
          %v3225 = vunpack.c.h.b16 %v3138
          %v3226 = vunpack.c.l.b16 %v3139
          %v3227 = vunpack.c.h.b16 %v3139
          %v3228 = vunpack.c.l.b16 %v3140
          %v3229 = vunpack.c.h.b16 %v3140
          %v3230 = vunpack.c.l.b16 %v3141
          %v3231 = vunpack.c.h.b16 %v3141
          %v3232 = vunpack.c.l.b16 %v3142
          %v3233 = vunpack.c.h.b16 %v3142
          %v3234 = vunpack.c.l.b16 %v3143
          %v3235 = vunpack.c.h.b16 %v3143
          %v3236 = vunpack.c.l.b16 %v3144
          %v3237 = vunpack.c.h.b16 %v3144
          %v3238 = vunpack.c.l.b16 %v3145
          %v3239 = vunpack.c.h.b16 %v3145
          %v3240 = vunpack.c.l.b16 %v3146
          %v3241 = vunpack.c.h.b16 %v3146
          %v3242 = vunpack.c.l.b16 %v3147
          %v3243 = vunpack.c.h.b16 %v3147
          %v3244 = vunpack.c.l.b16 %v3148
          %v3245 = vunpack.c.h.b16 %v3148
          %v3246 = vunpack.c.l.b16 %v3149
          %v3247 = vunpack.c.h.b16 %v3149
          %v3248 = vunpack.c.l.b16 %v3150
          %v3249 = vunpack.c.h.b16 %v3150
          %v3250 = vunpack.c.l.b16 %v3151
          %v3251 = vunpack.c.h.b16 %v3151
          %v3252 = vunpack.c.l.b16 %v3152
          %v3253 = vunpack.c.h.b16 %v3152
          %v3254 = vunpack.c.l.b16 %v3153
          %v3255 = vunpack.c.h.b16 %v3153
          %v3256 = vpack.c.b16 %v3194, %v3192
          %v3257 = vpack.c.b16 %v3195, %v3193
          %v3258 = vpack.c.b16 %v3198, %v3196
          %v3259 = vpack.c.b16 %v3199, %v3197
          %v3260 = vpack.c.b16 %v3202, %v3200
          %v3261 = vpack.c.b16 %v3203, %v3201
          %v3262 = vpack.c.b16 %v3206, %v3204
          %v3263 = vpack.c.b16 %v3207, %v3205
          %v3264 = vpack.c.b16 %v3210, %v3208
          %v3265 = vpack.c.b16 %v3211, %v3209
          %v3266 = vpack.c.b16 %v3214, %v3212
          %v3267 = vpack.c.b16 %v3215, %v3213
          %v3268 = vpack.c.b16 %v3218, %v3216
          %v3269 = vpack.c.b16 %v3219, %v3217
          %v3270 = vpack.c.b16 %v3222, %v3220
          %v3271 = vpack.c.b16 %v3223, %v3221
          %v3272 = vpack.c.b16 %v3226, %v3224
          %v3273 = vpack.c.b16 %v3227, %v3225
          %v3274 = vpack.c.b16 %v3230, %v3228
          %v3275 = vpack.c.b16 %v3231, %v3229
          %v3276 = vpack.c.b16 %v3234, %v3232
          %v3277 = vpack.c.b16 %v3235, %v3233
          %v3278 = vpack.c.b16 %v3238, %v3236
          %v3279 = vpack.c.b16 %v3239, %v3237
          %v3280 = vpack.c.b16 %v3242, %v3240
          %v3281 = vpack.c.b16 %v3243, %v3241
          %v3282 = vpack.c.b16 %v3246, %v3244
          %v3283 = vpack.c.b16 %v3247, %v3245
          %v3284 = vpack.c.b16 %v3250, %v3248
          %v3285 = vpack.c.b16 %v3251, %v3249
          %v3286 = vpack.c.b16 %v3254, %v3252
          %v3287 = vpack.c.b16 %v3255, %v3253
          %3320 = vmatpush.bf16.msra.mxu0 %v3270
          %3321 = vmatpush.bf16.msra.mxu0 %v3268
          %3322 = vmatpush.bf16.msra.mxu0 %v3266
          %3323 = vmatpush.bf16.msra.mxu0 %v3264
          %3324 = vmatpush.bf16.msra.mxu0 %v3262
          %3325 = vmatpush.bf16.msra.mxu0 %v3260
          %3326 = vmatpush.bf16.msra.mxu0 %v3258
          %3327 = vmatpush.bf16.msra.mxu0 %v3256
          %3328 = vmatmul.bf16.gmra.mxu0 %v3120
          %v3329 = vpop.f32.mrf.mxu0
          %v3330 = vadd.f32 %v3156, %v3329
          %v3331 = vpop.f32.mrf.mxu0
          %v3332 = vadd.f32 %v3156, %v3331
          %3333 = vdwg.mxu0
          %3334 = vmatpush.bf16.msra.mxu0 %v3286
          %3335 = vmatpush.bf16.msra.mxu0 %v3284
          %3336 = vmatpush.bf16.msra.mxu0 %v3282
          %3337 = vmatpush.bf16.msra.mxu0 %v3280
          %3338 = vmatpush.bf16.msra.mxu0 %v3278
          %3339 = vmatpush.bf16.msra.mxu0 %v3276
          %3340 = vmatpush.bf16.msra.mxu0 %v3274
          %3341 = vmatpush.bf16.msra.mxu0 %v3272
          %3342 = vmatmul.bf16.gmra.mxu0 %v3121
          %v3343 = vpop.f32.mrf.mxu0
          %v3344 = vadd.f32 %v3330, %v3343
          %v3345 = vpop.f32.mrf.mxu0
          %v3346 = vadd.f32 %v3332, %v3345
          %3347 = vdwg.mxu0
          %3348 = vmatpush.bf16.msra.mxu0 %v3271
          %3349 = vmatpush.bf16.msra.mxu0 %v3269
          %3350 = vmatpush.bf16.msra.mxu0 %v3267
          %3351 = vmatpush.bf16.msra.mxu0 %v3265
          %3352 = vmatpush.bf16.msra.mxu0 %v3263
          %3353 = vmatpush.bf16.msra.mxu0 %v3261
          %3354 = vmatpush.bf16.msra.mxu0 %v3259
          %3355 = vmatpush.bf16.msra.mxu0 %v3257
          %3356 = vmatmul.bf16.gmra.mxu0 %v3120
          %v3357 = vpop.f32.mrf.mxu0
          %v3358 = vadd.f32 %v3157, %v3357
          %v3359 = vpop.f32.mrf.mxu0
          %v3360 = vadd.f32 %v3157, %v3359
          %3361 = vdwg.mxu0
          %3362 = vmatpush.bf16.msra.mxu0 %v3287
          %3363 = vmatpush.bf16.msra.mxu0 %v3285
          %3364 = vmatpush.bf16.msra.mxu0 %v3283
          %3365 = vmatpush.bf16.msra.mxu0 %v3281
          %3366 = vmatpush.bf16.msra.mxu0 %v3279
          %3367 = vmatpush.bf16.msra.mxu0 %v3277
          %3368 = vmatpush.bf16.msra.mxu0 %v3275
          %3369 = vmatpush.bf16.msra.mxu0 %v3273
          %3370 = vmatmul.bf16.gmra.mxu0 %v3121
          %v3371 = vpop.f32.mrf.mxu0
          %v3372 = vadd.f32 %v3358, %v3371
          %v3373 = vpop.f32.mrf.mxu0
          %v3374 = vadd.f32 %v3360, %v3373
          %3375 = vdwg.mxu0
          %v3376 = vmax.f32 %v3344, 0.0
          %v3377 = vmax.f32 %v3372, 0.0
          %v3378 = vmax.f32 %v3346, 0.0
          %v3379 = vmax.f32 %v3374, 0.0
          %v3380 = vpack.c.bf16 %v3378, %v3376
          %v3381 = vpack.c.bf16 %v3379, %v3377
          %v3382 = vld [vmem:[#allocation11] sm:$0xf]
          %v3383 = vld [vmem:[#allocation11 + $0x4] sm:$0xf]
          %v3384 = vld [vmem:[#allocation11 + $0x8] sm:$0xf]
          %v3385 = vld [vmem:[#allocation11 + $0xc] sm:$0xf]
          %v3386 = vld [vmem:[#allocation11 + $0x10] sm:$0xf]
          %v3387 = vld [vmem:[#allocation11 + $0x14] sm:$0xf]
          %v3388 = vld [vmem:[#allocation11 + $0x18] sm:$0xf]
          %v3389 = vld [vmem:[#allocation11 + $0x1c] sm:$0xf]
          %v3390 = vld [vmem:[#allocation11 + $0x20] sm:$0xf]
          %v3391 = vld [vmem:[#allocation11 + $0x24] sm:$0xf]
          %v3392 = vld [vmem:[#allocation11 + $0x28] sm:$0xf]
          %v3393 = vld [vmem:[#allocation11 + $0x2c] sm:$0xf]
          %v3394 = vld [vmem:[#allocation11 + $0x30] sm:$0xf]
          %v3395 = vld [vmem:[#allocation11 + $0x34] sm:$0xf]
          %v3396 = vld [vmem:[#allocation11 + $0x38] sm:$0xf]
          %v3397 = vld [vmem:[#allocation11 + $0x3c] sm:$0xf]
          %v3398 = vld [vmem:[#allocation11 + $0x40] sm:$0xf]
          %v3399 = vld [vmem:[#allocation11 + $0x44] sm:$0xf]
          %v3400 = vld [vmem:[#allocation11 + $0x48] sm:$0xf]
          %v3401 = vld [vmem:[#allocation11 + $0x4c] sm:$0xf]
          %v3402 = vld [vmem:[#allocation11 + $0x50] sm:$0xf]
          %v3403 = vld [vmem:[#allocation11 + $0x54] sm:$0xf]
          %v3404 = vld [vmem:[#allocation11 + $0x58] sm:$0xf]
          %v3405 = vld [vmem:[#allocation11 + $0x5c] sm:$0xf]
          %v3406 = vld [vmem:[#allocation11 + $0x60] sm:$0xf]
          %v3407 = vld [vmem:[#allocation11 + $0x64] sm:$0xf]
          %v3408 = vld [vmem:[#allocation11 + $0x68] sm:$0xf]
          %v3409 = vld [vmem:[#allocation11 + $0x6c] sm:$0xf]
          %v3410 = vld [vmem:[#allocation11 + $0x70] sm:$0xf]
          %v3411 = vld [vmem:[#allocation11 + $0x74] sm:$0xf]
          %v3412 = vld [vmem:[#allocation11 + $0x78] sm:$0xf]
          %v3413 = vld [vmem:[#allocation11 + $0x7c] sm:$0xf]
          %v3414 = vld [vmem:[#allocation12] sm:$0x1]
          %v3416 = vperm.slane %v3414, 0
          %v3450 = vunpack.c.l.b16 %v3382
          %v3451 = vunpack.c.l.b16 %v3383
          %v3452 = vunpack.c.l.b16 %v3384
          %v3453 = vunpack.c.l.b16 %v3385
          %v3454 = vunpack.c.l.b16 %v3386
          %v3455 = vunpack.c.l.b16 %v3387
          %v3456 = vunpack.c.l.b16 %v3388
          %v3457 = vunpack.c.l.b16 %v3389
          %v3458 = vunpack.c.l.b16 %v3390
          %v3459 = vunpack.c.l.b16 %v3391
          %v3460 = vunpack.c.l.b16 %v3392
          %v3461 = vunpack.c.l.b16 %v3393
          %v3462 = vunpack.c.l.b16 %v3394
          %v3463 = vunpack.c.l.b16 %v3395
          %v3464 = vunpack.c.l.b16 %v3396
          %v3465 = vunpack.c.l.b16 %v3397
          %v3466 = vunpack.c.l.b16 %v3398
          %v3467 = vunpack.c.l.b16 %v3399
          %v3468 = vunpack.c.l.b16 %v3400
          %v3469 = vunpack.c.l.b16 %v3401
          %v3470 = vunpack.c.l.b16 %v3402
          %v3471 = vunpack.c.l.b16 %v3403
          %v3472 = vunpack.c.l.b16 %v3404
          %v3473 = vunpack.c.l.b16 %v3405
          %v3474 = vunpack.c.l.b16 %v3406
          %v3475 = vunpack.c.l.b16 %v3407
          %v3476 = vunpack.c.l.b16 %v3408
          %v3477 = vunpack.c.l.b16 %v3409
          %v3478 = vunpack.c.l.b16 %v3410
          %v3479 = vunpack.c.l.b16 %v3411
          %v3480 = vunpack.c.l.b16 %v3412
          %v3481 = vunpack.c.l.b16 %v3413
          %v3482 = vpack.c.b16 %v3451, %v3450
          %v3483 = vpack.c.b16 %v3453, %v3452
          %v3484 = vpack.c.b16 %v3455, %v3454
          %v3485 = vpack.c.b16 %v3457, %v3456
          %v3486 = vpack.c.b16 %v3459, %v3458
          %v3487 = vpack.c.b16 %v3461, %v3460
          %v3488 = vpack.c.b16 %v3463, %v3462
          %v3489 = vpack.c.b16 %v3465, %v3464
          %v3490 = vpack.c.b16 %v3467, %v3466
          %v3491 = vpack.c.b16 %v3469, %v3468
          %v3492 = vpack.c.b16 %v3471, %v3470
          %v3493 = vpack.c.b16 %v3473, %v3472
          %v3494 = vpack.c.b16 %v3475, %v3474
          %v3495 = vpack.c.b16 %v3477, %v3476
          %v3496 = vpack.c.b16 %v3479, %v3478
          %v3497 = vpack.c.b16 %v3481, %v3480
          %3514 = vmatpush.bf16.msra.mxu0 %v3489
          %3515 = vmatpush.bf16.msra.mxu0 %v3488
          %3516 = vmatpush.bf16.msra.mxu0 %v3487
          %3517 = vmatpush.bf16.msra.mxu0 %v3486
          %3518 = vmatpush.bf16.msra.mxu0 %v3485
          %3519 = vmatpush.bf16.msra.mxu0 %v3484
          %3520 = vmatpush.bf16.msra.mxu0 %v3483
          %3521 = vmatpush.bf16.msra.mxu0 %v3482
          %3522 = vmatmul.bf16.gmra.mxu0 %v3380
          %v3523 = vpop.f32.mrf.mxu0
          %v3524 = vadd.f32 %v3416, %v3523
          %v3525 = vpop.f32.mrf.mxu0
          %v3526 = vadd.f32 %v3416, %v3525
          %3527 = vdwg.mxu0
          %3528 = vmatpush.bf16.msra.mxu0 %v3497
          %3529 = vmatpush.bf16.msra.mxu0 %v3496
          %3530 = vmatpush.bf16.msra.mxu0 %v3495
          %3531 = vmatpush.bf16.msra.mxu0 %v3494
          %3532 = vmatpush.bf16.msra.mxu0 %v3493
          %3533 = vmatpush.bf16.msra.mxu0 %v3492
          %3534 = vmatpush.bf16.msra.mxu0 %v3491
          %3535 = vmatpush.bf16.msra.mxu0 %v3490
          %3536 = vmatmul.bf16.gmra.mxu0 %v3381
          %v3537 = vpop.f32.mrf.mxu0
          %v3538 = vadd.f32 %v3524, %v3537
          %v3539 = vpop.f32.mrf.mxu0
          %v3540 = vadd.f32 %v3526, %v3539
          %3541 = vdwg.mxu0
          %v3542 = vsub.f32 0.0, %v3538
          %v3543 = vsub.f32 0.0, %v3540
          %v3544 = vmul.f32 %v3542, 1.442695
          %v3545 = vpow.pop %v3544
          %v3546 = vmul.f32 %v3543, 1.442695
          %v3547 = vpow.pop %v3546
          %v3548 = vadd.f32 %v3545, 1.0
          %v3549 = vadd.f32 %v3547, 1.0
          %v3550 = vrcp.pop %v3548
          %v3551 = vmul.f32 %v3548, %v3550
          %v3552 = vsub.f32 1.0, %v3551
          %v3553 = vmul.f32 %v3550, %v3552
          %v3554 = vadd.f32 %v3550, %v3553
          %vm3555 = vweird.f32 %v3548
          %vm3556 = vweird.f32 %v3550
          %vm3557 = vmor %vm3555, %vm3556
          %v3558 = vsel %vm3557, %v3550, %v3554
          %v3559 = vand.u32 2147483647, %v3548
          %vm3560 = vcmp.eq.f32.partialorder %v3559, 8.507059e+37
          %v3561 = vand.u32 %v3548, 2147483648
          %v3562 = vor.u32 1.1754944e-38, %v3561
          %v3563 = vsel %vm3560, %v3562, %v3558
          %v3564 = vmul.f32 1.0, %v3563
          %v3565 = vrcp.pop %v3549
          %v3566 = vmul.f32 %v3549, %v3565
          %v3567 = vsub.f32 1.0, %v3566
          %v3568 = vmul.f32 %v3565, %v3567
          %v3569 = vadd.f32 %v3565, %v3568
          %vm3570 = vweird.f32 %v3549
          %vm3571 = vweird.f32 %v3565
          %vm3572 = vmor %vm3570, %vm3571
          %v3573 = vsel %vm3572, %v3565, %v3569
          %v3574 = vand.u32 2147483647, %v3549
          %vm3575 = vcmp.eq.f32.partialorder %v3574, 8.507059e+37
          %v3576 = vand.u32 %v3549, 2147483648
          %v3577 = vor.u32 1.1754944e-38, %v3576
          %v3578 = vsel %vm3575, %v3577, %v3573
          %v3579 = vmul.f32 1.0, %v3578
          %3580 = vst [vmem:[%s476] sm:$0xff] %v3564
          %3581 = vst [vmem:[%s476 + $0x8] sm:$0xff] %v3579
        $region103: #{_lambda_.3} parent=66 // pred_fallthru
          _
        %s3582 = smul.u32 2, %s28
        %p3583 = scmp.lt.s32.totalorder %s3582, 1
        %s3584 = scalar_select %p3583, %s3582, 1
        %s3585 = smul.addr %s3584, 8
        %s3586 = scalar_lea.vmem %s7, %s3585
        // Predicated region
        $region104: #{_lambda_.3} parent=66 // pred_check
          %p3587 = pneg %p213
        $region105: #{_lambda_.3} parent=66 // pred_check_branch
          %3589 = sbr.rel (%p3587) target = $region107
        $region106: #{_lambda_.3} parent=66 // pred_region
          %s3590 = smul.u32 2, %s28
        $region107: #{_lambda_.3} parent=66 // pred_fallthru
          _
        // Predicated region
        $region108: #{_lambda_.3} parent=66 // pred_check
          %p3591 = pneg %p213
        $region109: #{_lambda_.3} parent=66 // pred_check_branch
          %3593 = sbr.rel (%p3591) target = $region111
        $region110: #{_lambda_.3} parent=66 // pred_region
          %s3594 = smul.u32 2, %s28
          %p3595 = scmp.lt.s32.totalorder %s3594, 1
          %s3596 = scalar_select %p3595, %s3594, 1
          %s3597 = smul.addr %s3596, 8
          %s3598 = scalar_lea.vmem %s7, %s3597
        $region111: #{_lambda_.3} parent=66 // pred_fallthru
          _
      $region67: #{_lambda_.3} parent=5 // pred_fallthru
        _
      %p3599 = scmp.le.s32.totalorder 2, %s19
      // Predicated region
      $region112: #{_lambda_.3} parent=5 // pred_check
        %p3600 = pneg %p3599
      $region113: #{_lambda_.3} parent=5 // pred_check_branch
        %3602 = sbr.rel (%p3600) target = $region115
      $region114: #{_lambda_.3} parent=5 // pred_region
        %s3603 = ssub.s32 %s19, 2
      $region115: #{_lambda_.3} parent=5 // pred_fallthru
        _
    $region6: #{_lambda_.3} parent=1 // loop_footer
      %s23 = sadd.s32 1, %s19
    $region7: #{_lambda_.3} parent=1 // loop_footer_branch
      %18 = sbr.rel target = $region3
    $region8: #{_lambda_.3} parent=1 // loop_exit
      _
    %3604 = vsyncpa [#allocation5], 1
    %s3605 = scalar_lea.sflag [#allocation5], 1
    %3606 = vsyncpa %s3605, 1
    %3607 = vsyncpa [#allocation7], 1
    %3608 = vsyncpa [#allocation10], 1
    %3609 = vsyncpa [#allocation13], 1

// kernel: _lambda_.2
$region0: #{_lambda_.2}
  #allocation0 [shape = 'u32[]', space=smem, size = 0x4, offset = 0x4, fixed_abs, tag = 'smem constant byte address 0x4 - core index']
  #allocation1 [shape = 'u32[72,128]{1,0:T(1,128)}', space=vmem, size = 0x9000, scoped, tag = 'internal scratch']
  %s0 = inlined_call_operand.vmem [shape: f32[512,128], index: 0, kind: input, shape index: {}]
  %s1 = inlined_call_operand.hbm [shape: bf16[6,128,128], index: 1, kind: input, shape index: {}]
  %s2 = inlined_call_operand.hbm [shape: f32[1,128], index: 2, kind: input, shape index: {}]
  %s3 = inlined_call_operand.hbm [shape: bf16[9,128,128], index: 3, kind: input, shape index: {}]
  %s4 = inlined_call_operand.hbm [shape: f32[1,128], index: 4, kind: input, shape index: {}]
  %s5 = inlined_call_operand.hbm [shape: bf16[12,128,128], index: 5, kind: input, shape index: {}]
  %s6 = inlined_call_operand.hbm [shape: f32[1,128], index: 6, kind: input, shape index: {}]
  %s7 = inlined_call_operand.vmem [shape: bf16[320,128], index: 7, kind: output, shape index: {}]
  %s8 = sld [smem:[#allocation0]]
  $region85: #{_lambda_.2} parent=0
    _
  %s10 = ssub.s32 1, %s8
  %s11 = scalar_select 0, %s10, %s8
  $region1: #{_lambda_.2} parent=0
    #allocation2 [shape = 'u8[196608]{0}', space=vmem, size = 0x30000, scoped, tag = 'input window, operand 1, single buffered']
    #allocation3 [shape = 's32[2]{0}', space=sflag, size = 0x8, scoped, tag = 'scoped memory for _lambda_.2']
    #allocation4 [shape = 'u8[512]{0}', space=vmem, size = 0x400, scoped, tag = 'input window, operand 2, single buffered']
    #allocation5 [shape = 's32[1]{0}', space=sflag, size = 0x4, scoped, tag = 'scoped memory for _lambda_.2']
    #allocation6 [shape = 'u8[294912]{0}', space=vmem, size = 0x48000, scoped, tag = 'input window, operand 3, single buffered']
    #allocation7 [shape = 'u8[512]{0}', space=vmem, size = 0x400, scoped, tag = 'input window, operand 4, single buffered']
    #allocation8 [shape = 's32[1]{0}', space=sflag, size = 0x4, scoped, tag = 'scoped memory for _lambda_.2']
    #allocation9 [shape = 'u8[393216]{0}', space=vmem, size = 0x60000, scoped, tag = 'input window, operand 5, single buffered']
    #allocation10 [shape = 'u8[512]{0}', space=vmem, size = 0x400, scoped, tag = 'input window, operand 6, single buffered']
    #allocation11 [shape = 's32[1]{0}', space=sflag, size = 0x4, scoped, tag = 'scoped memory for _lambda_.2']
    %12 = vsyncpa [#allocation3], 0
    %13 = vsyncpa [#allocation5], 0
    %14 = vsyncpa [#allocation8], 0
    %15 = vsyncpa [#allocation11], 0
    loop: start=0, step=1, limit=4
    $region2: #{_lambda_.2} parent=1 // loop_pre_header
      _
    $region3: #{_lambda_.2} parent=1 // loop_header
      %s17 = sphi 0, %s21
      %p18 = scmp.ge.s32.totalorder %s17, 4
      %s27 = sphi 0, %s29
      %s30 = sphi 0, %s27
      %s31 = sphi 0, %s30
      %s47 = sphi 0, %s31
      %s51 = sphi 0, %s51
      %s53 = sphi 0, %s51
      %s54 = sphi 0, %s53
      %s68 = sphi 0, %s54
      %s72 = sphi 0, %s72
      %s74 = sphi 0, %s72
      %s75 = sphi 0, %s74
      %s89 = sphi 0, %s75
      %s93 = sphi 0, %s93
      %s95 = sphi 0, %s93
      %s96 = sphi 0, %s95
      %s110 = sphi 0, %s96
      %s114 = sphi 0, %s114
      %s116 = sphi 0, %s114
      %s117 = sphi 0, %s116
      %s131 = sphi 0, %s117
      %s135 = sphi 0, %s135
      %s137 = sphi 0, %s135
      %s138 = sphi 0, %s137
      %s152 = sphi 0, %s138
      %s156 = sphi 0, %s156
      %s158 = sphi 0, %s156
      %s159 = sphi 0, %s158
      %s173 = sphi 0, %s159
      %s179 = sphi 0, %s181
      %s182 = sphi 0, %s179
      %s183 = sphi 0, %s182
      %s199 = sphi 0, %s183
    $region4: #{_lambda_.2} parent=1 // loop_header_branch
      %20 = sbr.rel (%p18) target = $region8
    $region5: #{_lambda_.2} parent=1 // loop_body
      %s22 = ssub.s32 %s17, 1
      %s23 = ssub.s32 %s17, 2
      %s24 = sadd.s32 %s17, 1
      %s25 = ssub.s32 %s17, %s24
      %p26 = scmp.eq.s32.totalorder %s25, 0
      %s28 = sadd.s32 %s27, 1
      %s29 = scalar_select %p26, %s27, %s28
      %p32 = pneg %p26
      %p33 = scmp.eq.s32.totalorder %s17, 1
      %p34 = por %p32, %p33
      %p35 = scmp.ne.s32.totalorder %s27, %s30
      %p36 = scmp.eq.s32.totalorder %s17, 0
      %p37 = por %p35, %p36
      %p38 = scmp.ne.s32.totalorder %s27, %s30
      %p39 = scmp.eq.s32.totalorder %s22, 1
      %p40 = por %p38, %p39
      %p41 = scmp.ne.s32.totalorder %s30, %s31
      %p42 = scmp.eq.s32.totalorder %s22, 0
      %p43 = por %p41, %p42
      %p44 = scmp.ne.s32.totalorder %s30, %s31
      %p45 = scmp.eq.s32.totalorder %s23, 1
      %p46 = por %p44, %p45
      %p48 = scmp.ne.s32.totalorder %s31, %s47
      %p49 = scmp.eq.s32.totalorder %s23, 0
      %p50 = por %p48, %p49
      %s52 = sadd.s32 %s51, 1
      %p55 = scmp.eq.s32.totalorder %s17, 1
      %p56 = scmp.ne.s32.totalorder %s51, %s53
      %p57 = scmp.eq.s32.totalorder %s17, 0
      %p58 = por %p56, %p57
      %p59 = scmp.ne.s32.totalorder %s51, %s53
      %p60 = scmp.eq.s32.totalorder %s22, 1
      %p61 = por %p59, %p60
      %p62 = scmp.ne.s32.totalorder %s53, %s54
      %p63 = scmp.eq.s32.totalorder %s22, 0
      %p64 = por %p62, %p63
      %p65 = scmp.ne.s32.totalorder %s53, %s54
      %p66 = scmp.eq.s32.totalorder %s23, 1
      %p67 = por %p65, %p66
      %p69 = scmp.ne.s32.totalorder %s54, %s68
      %p70 = scmp.eq.s32.totalorder %s23, 0
      %p71 = por %p69, %p70
      %s73 = sadd.s32 %s72, 1
      %p76 = scmp.eq.s32.totalorder %s17, 1
      %p77 = scmp.ne.s32.totalorder %s72, %s74
      %p78 = scmp.eq.s32.totalorder %s17, 0
      %p79 = por %p77, %p78
      %p80 = scmp.ne.s32.totalorder %s72, %s74
      %p81 = scmp.eq.s32.totalorder %s22, 1
      %p82 = por %p80, %p81
      %p83 = scmp.ne.s32.totalorder %s74, %s75
      %p84 = scmp.eq.s32.totalorder %s22, 0
      %p85 = por %p83, %p84
      %p86 = scmp.ne.s32.totalorder %s74, %s75
      %p87 = scmp.eq.s32.totalorder %s23, 1
      %p88 = por %p86, %p87
      %p90 = scmp.ne.s32.totalorder %s75, %s89
      %p91 = scmp.eq.s32.totalorder %s23, 0
      %p92 = por %p90, %p91
      %s94 = sadd.s32 %s93, 1
      %p97 = scmp.eq.s32.totalorder %s17, 1
      %p98 = scmp.ne.s32.totalorder %s93, %s95
      %p99 = scmp.eq.s32.totalorder %s17, 0
      %p100 = por %p98, %p99
      %p101 = scmp.ne.s32.totalorder %s93, %s95
      %p102 = scmp.eq.s32.totalorder %s22, 1
      %p103 = por %p101, %p102
      %p104 = scmp.ne.s32.totalorder %s95, %s96
      %p105 = scmp.eq.s32.totalorder %s22, 0
      %p106 = por %p104, %p105
      %p107 = scmp.ne.s32.totalorder %s95, %s96
      %p108 = scmp.eq.s32.totalorder %s23, 1
      %p109 = por %p107, %p108
      %p111 = scmp.ne.s32.totalorder %s96, %s110
      %p112 = scmp.eq.s32.totalorder %s23, 0
      %p113 = por %p111, %p112
      %s115 = sadd.s32 %s114, 1
      %p118 = scmp.eq.s32.totalorder %s17, 1
      %p119 = scmp.ne.s32.totalorder %s114, %s116
      %p120 = scmp.eq.s32.totalorder %s17, 0
      %p121 = por %p119, %p120
      %p122 = scmp.ne.s32.totalorder %s114, %s116
      %p123 = scmp.eq.s32.totalorder %s22, 1
      %p124 = por %p122, %p123
      %p125 = scmp.ne.s32.totalorder %s116, %s117
      %p126 = scmp.eq.s32.totalorder %s22, 0
      %p127 = por %p125, %p126
      %p128 = scmp.ne.s32.totalorder %s116, %s117
      %p129 = scmp.eq.s32.totalorder %s23, 1
      %p130 = por %p128, %p129
      %p132 = scmp.ne.s32.totalorder %s117, %s131
      %p133 = scmp.eq.s32.totalorder %s23, 0
      %p134 = por %p132, %p133
      %s136 = sadd.s32 %s135, 1
      %p139 = scmp.eq.s32.totalorder %s17, 1
      %p140 = scmp.ne.s32.totalorder %s135, %s137
      %p141 = scmp.eq.s32.totalorder %s17, 0
      %p142 = por %p140, %p141
      %p143 = scmp.ne.s32.totalorder %s135, %s137
      %p144 = scmp.eq.s32.totalorder %s22, 1
      %p145 = por %p143, %p144
      %p146 = scmp.ne.s32.totalorder %s137, %s138
      %p147 = scmp.eq.s32.totalorder %s22, 0
      %p148 = por %p146, %p147
      %p149 = scmp.ne.s32.totalorder %s137, %s138
      %p150 = scmp.eq.s32.totalorder %s23, 1
      %p151 = por %p149, %p150
      %p153 = scmp.ne.s32.totalorder %s138, %s152
      %p154 = scmp.eq.s32.totalorder %s23, 0
      %p155 = por %p153, %p154
      %s157 = sadd.s32 %s156, 1
      %p160 = scmp.eq.s32.totalorder %s17, 1
      %p161 = scmp.ne.s32.totalorder %s156, %s158
      %p162 = scmp.eq.s32.totalorder %s17, 0
      %p163 = por %p161, %p162
      %p164 = scmp.ne.s32.totalorder %s156, %s158
      %p165 = scmp.eq.s32.totalorder %s22, 1
      %p166 = por %p164, %p165
      %p167 = scmp.ne.s32.totalorder %s158, %s159
      %p168 = scmp.eq.s32.totalorder %s22, 0
      %p169 = por %p167, %p168
      %p170 = scmp.ne.s32.totalorder %s158, %s159
      %p171 = scmp.eq.s32.totalorder %s23, 1
      %p172 = por %p170, %p171
      %p174 = scmp.ne.s32.totalorder %s159, %s173
      %p175 = scmp.eq.s32.totalorder %s23, 0
      %p176 = por %p174, %p175
      %s177 = ssub.s32 %s17, %s24
      %p178 = scmp.eq.s32.totalorder %s177, 0
      %s180 = sadd.s32 %s179, 1
      %s181 = scalar_select %p178, %s179, %s180
      %p184 = pneg %p178
      %p185 = scmp.eq.s32.totalorder %s17, 1
      %p186 = por %p184, %p185
      %p187 = scmp.ne.s32.totalorder %s179, %s182
      %p188 = scmp.eq.s32.totalorder %s17, 0
      %p189 = por %p187, %p188
      %p190 = scmp.ne.s32.totalorder %s179, %s182
      %p191 = scmp.eq.s32.totalorder %s22, 1
      %p192 = por %p190, %p191
      %p193 = scmp.ne.s32.totalorder %s182, %s183
      %p194 = scmp.eq.s32.totalorder %s22, 0
      %p195 = por %p193, %p194
      %p196 = scmp.ne.s32.totalorder %s182, %s183
      %p197 = scmp.eq.s32.totalorder %s23, 1
      %p198 = por %p196, %p197
      %p200 = scmp.ne.s32.totalorder %s183, %s199
      %p201 = scmp.eq.s32.totalorder %s23, 0
      %p202 = por %p200, %p201
      %p203 = scmp.le.s32.totalorder 1, %s17
      %p204 = scmp.lt.s32.totalorder %s17, 3
      %p205 = pnand %p203, %p204
      %p206 = pneg %p205
      // Predicated region
      $region9: #{_lambda_.2} parent=5 // pred_check
        _
      $region10: #{_lambda_.2} parent=5 // pred_check_branch
        %208 = sbr.rel (%p205) target = $region12
      $region11: #{_lambda_.2} parent=5 // pred_region
        %s209 = ssub.s32 %s17, 1
        // Predicated region
        $region13: #{_lambda_.2} parent=11 // pred_check
          %p210 = pneg %p64
        $region14: #{_lambda_.2} parent=11 // pred_check_branch
          %212 = sbr.rel (%p210) target = $region16
        $region15: #{_lambda_.2} parent=11 // pred_region
          %214 = vsyncadd [#allocation3], 0
          %s215 = sshll.u32 %s1, 4
          %s216 = int_to_ptr.hbm [resolvable:$true] %s215
          %s217 = sshll.u32 [#allocation2], 4
          %s218 = int_to_ptr.vmem [resolvable:$true] %s217
          %223 = dma.hbm_to_vmem [thread:$0]  %s216, 6144, %s218, [#allocation3], 64, 64, 4
        $region16: #{_lambda_.2} parent=11 // pred_fallthru
          _
        // Predicated region
        $region17: #{_lambda_.2} parent=11 // pred_check
          %p224 = pneg %p85
        $region18: #{_lambda_.2} parent=11 // pred_check_branch
          %226 = sbr.rel (%p224) target = $region20
        $region19: #{_lambda_.2} parent=11 // pred_region
          %228 = vsyncadd [#allocation5], 0
          %s230 = sshll.u32 %s2, 4
          %s231 = int_to_ptr.hbm [resolvable:$true] %s230
          %s232 = sshll.u32 [#allocation4], 4
          %s233 = int_to_ptr.vmem [resolvable:$true] %s232
          %235 = dma.hbm_to_vmem [thread:$0]  %s231, 16, %s233, [#allocation5]
        $region20: #{_lambda_.2} parent=11 // pred_fallthru
          _
        // Predicated region
        $region21: #{_lambda_.2} parent=11 // pred_check
          %p236 = pneg %p106
        $region22: #{_lambda_.2} parent=11 // pred_check_branch
          %238 = sbr.rel (%p236) target = $region24
        $region23: #{_lambda_.2} parent=11 // pred_region
          %240 = vsyncadd [#allocation5], 0
          %s241 = sshll.u32 %s3, 4
          %s242 = int_to_ptr.hbm [resolvable:$true] %s241
          %s243 = sshll.u32 [#allocation6], 4
          %s244 = int_to_ptr.vmem [resolvable:$true] %s243
          %249 = dma.hbm_to_vmem [thread:$0]  %s242, 9216, %s244, [#allocation5], 64, 64, 4
        $region24: #{_lambda_.2} parent=11 // pred_fallthru
          _
        // Predicated region
        $region25: #{_lambda_.2} parent=11 // pred_check
          %p250 = pneg %p127
        $region26: #{_lambda_.2} parent=11 // pred_check_branch
          %252 = sbr.rel (%p250) target = $region28
        $region27: #{_lambda_.2} parent=11 // pred_region
          %254 = vsyncadd [#allocation8], 0
          %s256 = sshll.u32 %s4, 4
          %s257 = int_to_ptr.hbm [resolvable:$true] %s256
          %s258 = sshll.u32 [#allocation7], 4
          %s259 = int_to_ptr.vmem [resolvable:$true] %s258
          %261 = dma.hbm_to_vmem [thread:$0]  %s257, 16, %s259, [#allocation8]
        $region28: #{_lambda_.2} parent=11 // pred_fallthru
          _
        // Predicated region
        $region29: #{_lambda_.2} parent=11 // pred_check
          %p262 = pneg %p148
        $region30: #{_lambda_.2} parent=11 // pred_check_branch
          %264 = sbr.rel (%p262) target = $region32
        $region31: #{_lambda_.2} parent=11 // pred_region
          %266 = vsyncadd [#allocation8], 0
          %s267 = sshll.u32 %s5, 4
          %s268 = int_to_ptr.hbm [resolvable:$true] %s267
          %s269 = sshll.u32 [#allocation9], 4
          %s270 = int_to_ptr.vmem [resolvable:$true] %s269
          %275 = dma.hbm_to_vmem [thread:$0]  %s268, 12288, %s270, [#allocation8], 64, 64, 4
        $region32: #{_lambda_.2} parent=11 // pred_fallthru
          _
        // Predicated region
        $region33: #{_lambda_.2} parent=11 // pred_check
          %p276 = pneg %p169
        $region34: #{_lambda_.2} parent=11 // pred_check_branch
          %278 = sbr.rel (%p276) target = $region36
        $region35: #{_lambda_.2} parent=11 // pred_region
          %280 = vsyncadd [#allocation11], 0
          %s282 = sshll.u32 %s6, 4
          %s283 = int_to_ptr.hbm [resolvable:$true] %s282
          %s284 = sshll.u32 [#allocation10], 4
          %s285 = int_to_ptr.vmem [resolvable:$true] %s284
          %287 = dma.hbm_to_vmem [thread:$0]  %s283, 16, %s285, [#allocation11]
        $region36: #{_lambda_.2} parent=11 // pred_fallthru
          _
      $region12: #{_lambda_.2} parent=5 // pred_fallthru
        _
      %p288 = scmp.lt.s32.totalorder %s17, 2
      // Predicated region
      $region37: #{_lambda_.2} parent=5 // pred_check
        %p289 = pneg %p288
      $region38: #{_lambda_.2} parent=5 // pred_check_branch
        %291 = sbr.rel (%p289) target = $region40
      $region39: #{_lambda_.2} parent=5 // pred_region
        // Predicated region
        $region41: #{_lambda_.2} parent=39 // pred_check
          %p292 = pneg %p37
        $region42: #{_lambda_.2} parent=39 // pred_check_branch
          %294 = sbr.rel (%p292) target = $region44
        $region43: #{_lambda_.2} parent=39 // pred_region
          %s295 = smul.u32 32, %s17
          %p296 = scmp.lt.s32.totalorder %s295, 63
          %s297 = scalar_select %p296, %s295, 63
          %s298 = smul.addr %s297, 8
          %s299 = scalar_lea.vmem %s0, %s298
          %s300 = smul.u32 32, %s17
        $region44: #{_lambda_.2} parent=39 // pred_fallthru
          _
      $region40: #{_lambda_.2} parent=5 // pred_fallthru
        _
      %p301 = scmp.le.s32.totalorder 1, %s17
      %p302 = scmp.lt.s32.totalorder %s17, 3
      %p303 = pnand %p301, %p302
      %p304 = pneg %p303
      // Predicated region
      $region45: #{_lambda_.2} parent=5 // pred_check
        _
      $region46: #{_lambda_.2} parent=5 // pred_check_branch
        %306 = sbr.rel (%p303) target = $region48
      $region47: #{_lambda_.2} parent=5 // pred_region
        %s307 = ssub.s32 %s17, 1
        // Predicated region
        $region49: #{_lambda_.2} parent=47 // pred_check
          %p308 = pneg %p64
        $region50: #{_lambda_.2} parent=47 // pred_check_branch
          %310 = sbr.rel (%p308) target = $region52
        $region51: #{_lambda_.2} parent=47 // pred_region
          %312 = dma.done [#allocation3], 6144
        $region52: #{_lambda_.2} parent=47 // pred_fallthru
          _
        // Predicated region
        $region53: #{_lambda_.2} parent=47 // pred_check
          %p313 = pneg %p85
        $region54: #{_lambda_.2} parent=47 // pred_check_branch
          %315 = sbr.rel (%p313) target = $region56
        $region55: #{_lambda_.2} parent=47 // pred_region
          %317 = dma.done [#allocation5], 16
        $region56: #{_lambda_.2} parent=47 // pred_fallthru
          _
        // Predicated region
        $region57: #{_lambda_.2} parent=47 // pred_check
          %p318 = pneg %p106
        $region58: #{_lambda_.2} parent=47 // pred_check_branch
          %320 = sbr.rel (%p318) target = $region60
        $region59: #{_lambda_.2} parent=47 // pred_region
          %322 = dma.done [#allocation5], 9216
        $region60: #{_lambda_.2} parent=47 // pred_fallthru
          _
        // Predicated region
        $region61: #{_lambda_.2} parent=47 // pred_check
          %p323 = pneg %p127
        $region62: #{_lambda_.2} parent=47 // pred_check_branch
          %325 = sbr.rel (%p323) target = $region64
        $region63: #{_lambda_.2} parent=47 // pred_region
          %327 = dma.done [#allocation8], 16
        $region64: #{_lambda_.2} parent=47 // pred_fallthru
          _
        // Predicated region
        $region65: #{_lambda_.2} parent=47 // pred_check
          %p328 = pneg %p148
        $region66: #{_lambda_.2} parent=47 // pred_check_branch
          %330 = sbr.rel (%p328) target = $region68
        $region67: #{_lambda_.2} parent=47 // pred_region
          %332 = dma.done [#allocation8], 12288
        $region68: #{_lambda_.2} parent=47 // pred_fallthru
          _
        // Predicated region
        $region69: #{_lambda_.2} parent=47 // pred_check
          %p333 = pneg %p169
        $region70: #{_lambda_.2} parent=47 // pred_check_branch
          %335 = sbr.rel (%p333) target = $region72
        $region71: #{_lambda_.2} parent=47 // pred_region
          %337 = dma.done [#allocation11], 16
        $region72: #{_lambda_.2} parent=47 // pred_fallthru
          _
        %s338 = smul.u32 32, %s22
        %p339 = scmp.lt.s32.totalorder %s338, 63
        %s340 = scalar_select %p339, %s338, 63
        %s341 = smul.addr %s340, 8
        %s342 = scalar_lea.vmem %s0, %s341
        %p343 = pneg %p43
        %p344 = pneg %p40
        %p345 = pneg %p64
        %p346 = pneg %p61
        %p347 = pneg %p85
        %p348 = pneg %p82
        %p349 = pneg %p106
        %p350 = pneg %p103
        %p351 = pneg %p127
        %p352 = pneg %p124
        %p353 = pneg %p148
        %p354 = pneg %p145
        %p355 = pneg %p169
        %p356 = pneg %p166
        %p357 = pneg %p195
        %p358 = pneg %p192
        %s359 = smul.u32 20, %s22
        %p360 = scmp.lt.s32.totalorder %s359, 39
        %s361 = scalar_select %p360, %s359, 39
        %s362 = smul.addr %s361, 4
        %s363 = scalar_lea.vmem %s7, %s362
        %s364 = smul.u32 32, %s22
        %p365 = scmp.lt.s32.totalorder %s364, 63
        %s366 = scalar_select %p365, %s364, 63
        %s367 = smul.addr %s366, 8
        %s368 = scalar_lea.vmem %s0, %s367
        %s369 = smul.u32 32, %s22
        %s370 = smul.u32 20, %s22
        %p371 = scmp.lt.s32.totalorder %s370, 39
        %s372 = scalar_select %p371, %s370, 39
        %s373 = smul.addr %s372, 4
        %s374 = scalar_lea.vmem %s7, %s373
        %s375 = smul.u32 20, %s22
        %v376 = vld [vmem:[%s368] sm:$0xff]
        %v377 = vld [vmem:[%s368 + $0x8] sm:$0xff]
        %v378 = vld [vmem:[%s368 + $0x10] sm:$0xff]
        %v379 = vld [vmem:[%s368 + $0x18] sm:$0xff]
        %v380 = vld [vmem:[%s368 + $0x20] sm:$0xff]
        %v381 = vld [vmem:[%s368 + $0x28] sm:$0xff]
        %v382 = vld [vmem:[%s368 + $0x30] sm:$0xff]
        %v383 = vld [vmem:[%s368 + $0x38] sm:$0xff]
        %v384 = vld [vmem:[%s368 + $0x40] sm:$0xff]
        %v385 = vld [vmem:[%s368 + $0x48] sm:$0xff]
        %v386 = vld [vmem:[%s368 + $0x50] sm:$0xff]
        %v387 = vld [vmem:[%s368 + $0x58] sm:$0xff]
        %v388 = vld [vmem:[%s368 + $0x60] sm:$0xff]
        %v389 = vld [vmem:[%s368 + $0x68] sm:$0xff]
        %v390 = vld [vmem:[%s368 + $0x70] sm:$0xff]
        %v391 = vld [vmem:[%s368 + $0x78] sm:$0xff]
        %v392 = vld [vmem:[%s368 + $0x80] sm:$0xff]
        %v393 = vld [vmem:[%s368 + $0x88] sm:$0xff]
        %v394 = vld [vmem:[%s368 + $0x90] sm:$0xff]
        %v395 = vld [vmem:[%s368 + $0x98] sm:$0xff]
        %v396 = vld [vmem:[%s368 + $0xa0] sm:$0xff]
        %v397 = vld [vmem:[%s368 + $0xa8] sm:$0xff]
        %v398 = vld [vmem:[%s368 + $0xb0] sm:$0xff]
        %v399 = vld [vmem:[%s368 + $0xb8] sm:$0xff]
        %v400 = vld [vmem:[%s368 + $0xc0] sm:$0xff]
        %v401 = vld [vmem:[%s368 + $0xc8] sm:$0xff]
        %v402 = vld [vmem:[%s368 + $0xd0] sm:$0xff]
        %v403 = vld [vmem:[%s368 + $0xd8] sm:$0xff]
        %v404 = vld [vmem:[%s368 + $0xe0] sm:$0xff]
        %v405 = vld [vmem:[%s368 + $0xe8] sm:$0xff]
        %v406 = vld [vmem:[%s368 + $0xf0] sm:$0xff]
        %v407 = vld [vmem:[%s368 + $0xf8] sm:$0xff]
        %v408 = vpack.c.bf16 %v377, %v376
        %v409 = vpack.c.bf16 %v379, %v378
        %v410 = vpack.c.bf16 %v381, %v380
        %v411 = vpack.c.bf16 %v383, %v382
        %v412 = vpack.c.bf16 %v385, %v384
        %v413 = vpack.c.bf16 %v387, %v386
        %v414 = vpack.c.bf16 %v389, %v388
        %v415 = vpack.c.bf16 %v391, %v390
        %v416 = vpack.c.bf16 %v393, %v392
        %v417 = vpack.c.bf16 %v395, %v394
        %v418 = vpack.c.bf16 %v397, %v396
        %v419 = vpack.c.bf16 %v399, %v398
        %v420 = vpack.c.bf16 %v401, %v400
        %v421 = vpack.c.bf16 %v403, %v402
        %v422 = vpack.c.bf16 %v405, %v404
        %v423 = vpack.c.bf16 %v407, %v406
        %v424 = vld [vmem:[#allocation2] sm:$0xf]
        %v425 = vld [vmem:[#allocation2 + $0x4] sm:$0xf]
        %v426 = vld [vmem:[#allocation2 + $0x8] sm:$0xf]
        %v427 = vld [vmem:[#allocation2 + $0xc] sm:$0xf]
        %v428 = vld [vmem:[#allocation2 + $0x10] sm:$0xf]
        %v429 = vld [vmem:[#allocation2 + $0x14] sm:$0xf]
        %v430 = vld [vmem:[#allocation2 + $0x18] sm:$0xf]
        %v431 = vld [vmem:[#allocation2 + $0x1c] sm:$0xf]
        %v432 = vld [vmem:[#allocation2 + $0x20] sm:$0xf]
        %v433 = vld [vmem:[#allocation2 + $0x24] sm:$0xf]
        %v434 = vld [vmem:[#allocation2 + $0x28] sm:$0xf]
        %v435 = vld [vmem:[#allocation2 + $0x2c] sm:$0xf]
        %v436 = vld [vmem:[#allocation2 + $0x30] sm:$0xf]
        %v437 = vld [vmem:[#allocation2 + $0x34] sm:$0xf]
        %v438 = vld [vmem:[#allocation2 + $0x38] sm:$0xf]
        %v439 = vld [vmem:[#allocation2 + $0x3c] sm:$0xf]
        %v440 = vrot.slane %v376, 1
        %v441 = vrot.slane %v377, 1
        %v442 = vrot.slane %v378, 1
        %v443 = vrot.slane %v379, 1
        %v444 = vrot.slane %v380, 1
        %v445 = vrot.slane %v381, 1
        %v446 = vrot.slane %v382, 1
        %v447 = vrot.slane %v383, 1
        %v448 = vrot.slane %v384, 1
        %v449 = vrot.slane %v385, 1
        %v450 = vrot.slane %v386, 1
        %v451 = vrot.slane %v387, 1
        %v452 = vrot.slane %v388, 1
        %v453 = vrot.slane %v389, 1
        %v454 = vrot.slane %v390, 1
        %v455 = vrot.slane %v391, 1
        %v456 = vrot.slane %v392, 1
        %v457 = vrot.slane %v393, 1
        %v458 = vrot.slane %v394, 1
        %v459 = vrot.slane %v395, 1
        %v460 = vrot.slane %v396, 1
        %v461 = vrot.slane %v397, 1
        %v462 = vrot.slane %v398, 1
        %v463 = vrot.slane %v399, 1
        %v464 = vrot.slane %v400, 1
        %v465 = vrot.slane %v401, 1
        %v466 = vrot.slane %v402, 1
        %v467 = vrot.slane %v403, 1
        %v468 = vrot.slane %v404, 1
        %v469 = vrot.slane %v405, 1
        %v470 = vrot.slane %v406, 1
        %v471 = vrot.slane %v407, 1
        %v472 = vlaneseq
        %v473 = vshrl.u32 %v472, 7
        %vm474 = vcmp.lt.s32.totalorder %v473, 7
        %v475 = vsel %vm474, %v470, %v471
        %v476 = vsel %vm474, %v469, %v470
        %v477 = vsel %vm474, %v468, %v469
        %v478 = vsel %vm474, %v467, %v468
        %v479 = vsel %vm474, %v466, %v467
        %v480 = vsel %vm474, %v465, %v466
        %v481 = vsel %vm474, %v464, %v465
        %v482 = vsel %vm474, %v463, %v464
        %v483 = vsel %vm474, %v462, %v463
        %v484 = vsel %vm474, %v461, %v462
        %v485 = vsel %vm474, %v460, %v461
        %v486 = vsel %vm474, %v459, %v460
        %v487 = vsel %vm474, %v458, %v459
        %v488 = vsel %vm474, %v457, %v458
        %v489 = vsel %vm474, %v456, %v457
        %v490 = vsel %vm474, %v455, %v456
        %v491 = vsel %vm474, %v454, %v455
        %v492 = vsel %vm474, %v453, %v454
        %v493 = vsel %vm474, %v452, %v453
        %v494 = vsel %vm474, %v451, %v452
        %v495 = vsel %vm474, %v450, %v451
        %v496 = vsel %vm474, %v449, %v450
        %v497 = vsel %vm474, %v448, %v449
        %v498 = vsel %vm474, %v447, %v448
        %v499 = vsel %vm474, %v446, %v447
        %v500 = vsel %vm474, %v445, %v446
        %v501 = vsel %vm474, %v444, %v445
        %v502 = vsel %vm474, %v443, %v444
        %v503 = vsel %vm474, %v442, %v443
        %v504 = vsel %vm474, %v441, %v442
        %v505 = vsel %vm474, %v440, %v441
        %v506 = vsel %vm474, %v471, %v440
        %v507 = vpack.c.bf16 %v504, %v505
        %v508 = vpack.c.bf16 %v502, %v503
        %v509 = vpack.c.bf16 %v500, %v501
        %v510 = vpack.c.bf16 %v498, %v499
        %v511 = vpack.c.bf16 %v496, %v497
        %v512 = vpack.c.bf16 %v494, %v495
        %v513 = vpack.c.bf16 %v492, %v493
        %v514 = vpack.c.bf16 %v490, %v491
        %v515 = vpack.c.bf16 %v488, %v489
        %v516 = vpack.c.bf16 %v486, %v487
        %v517 = vpack.c.bf16 %v484, %v485
        %v518 = vpack.c.bf16 %v482, %v483
        %v519 = vpack.c.bf16 %v480, %v481
        %v520 = vpack.c.bf16 %v478, %v479
        %v521 = vpack.c.bf16 %v476, %v477
        %v522 = vpack.c.bf16 %v506, %v475
        %s523 = scalar_lea.vmem [#allocation2], 64
        %v524 = vld [vmem:[%s523] sm:$0xf]
        %v525 = vld [vmem:[%s523 + $0x4] sm:$0xf]
        %v526 = vld [vmem:[%s523 + $0x8] sm:$0xf]
        %v527 = vld [vmem:[%s523 + $0xc] sm:$0xf]
        %v528 = vld [vmem:[%s523 + $0x10] sm:$0xf]
        %v529 = vld [vmem:[%s523 + $0x14] sm:$0xf]
        %v530 = vld [vmem:[%s523 + $0x18] sm:$0xf]
        %v531 = vld [vmem:[%s523 + $0x1c] sm:$0xf]
        %v532 = vld [vmem:[%s523 + $0x20] sm:$0xf]
        %v533 = vld [vmem:[%s523 + $0x24] sm:$0xf]
        %v534 = vld [vmem:[%s523 + $0x28] sm:$0xf]
        %v535 = vld [vmem:[%s523 + $0x2c] sm:$0xf]
        %v536 = vld [vmem:[%s523 + $0x30] sm:$0xf]
        %v537 = vld [vmem:[%s523 + $0x34] sm:$0xf]
        %v538 = vld [vmem:[%s523 + $0x38] sm:$0xf]
        %v539 = vld [vmem:[%s523 + $0x3c] sm:$0xf]
        %v556 = vunpack.c.l.b16 %v524
        %v557 = vunpack.c.l.b16 %v525
        %v558 = vunpack.c.l.b16 %v526
        %v559 = vunpack.c.l.b16 %v527
        %v560 = vunpack.c.l.b16 %v528
        %v561 = vunpack.c.l.b16 %v529
        %v562 = vunpack.c.l.b16 %v530
        %v563 = vunpack.c.l.b16 %v531
        %v564 = vunpack.c.l.b16 %v532
        %v565 = vunpack.c.l.b16 %v533
        %v566 = vunpack.c.l.b16 %v534
        %v567 = vunpack.c.l.b16 %v535
        %v568 = vunpack.c.l.b16 %v536
        %v569 = vunpack.c.l.b16 %v537
        %v570 = vunpack.c.l.b16 %v538
        %v571 = vunpack.c.l.b16 %v539
        %v572 = vpack.c.b16 %v557, %v556
        %v573 = vpack.c.b16 %v559, %v558
        %v574 = vpack.c.b16 %v561, %v560
        %v575 = vpack.c.b16 %v563, %v562
        %v576 = vpack.c.b16 %v565, %v564
        %v577 = vpack.c.b16 %v567, %v566
        %v578 = vpack.c.b16 %v569, %v568
        %v579 = vpack.c.b16 %v571, %v570
        %588 = vmatpush.bf16.msra.mxu0 %v579
        %589 = vmatpush.bf16.msra.mxu0 %v578
        %590 = vmatpush.bf16.msra.mxu0 %v577
        %591 = vmatpush.bf16.msra.mxu0 %v576
        %592 = vmatpush.bf16.msra.mxu0 %v575
        %593 = vmatpush.bf16.msra.mxu0 %v574
        %594 = vmatpush.bf16.msra.mxu0 %v573
        %595 = vmatpush.bf16.msra.mxu0 %v572
        %596 = vmatmul.bf16.gmra.mxu0 %v507
        %v597 = vpop.f32.mrf.mxu0
        %v598 = vadd.f32 0.0, %v597
        %v599 = vpop.f32.mrf.mxu0
        %v600 = vadd.f32 0.0, %v599
        %601 = vmatmul.bf16.gmra.mxu0 %v508
        %v602 = vpop.f32.mrf.mxu0
        %v603 = vadd.f32 0.0, %v602
        %v604 = vpop.f32.mrf.mxu0
        %v605 = vadd.f32 0.0, %v604
        %606 = vmatmul.bf16.gmra.mxu0 %v509
        %v607 = vpop.f32.mrf.mxu0
        %v608 = vadd.f32 0.0, %v607
        %v609 = vpop.f32.mrf.mxu0
        %v610 = vadd.f32 0.0, %v609
        %611 = vmatmul.bf16.gmra.mxu0 %v510
        %v612 = vpop.f32.mrf.mxu0
        %v613 = vadd.f32 0.0, %v612
        %v614 = vpop.f32.mrf.mxu0
        %v615 = vadd.f32 0.0, %v614
        %616 = vmatmul.bf16.gmra.mxu0 %v511
        %v617 = vpop.f32.mrf.mxu0
        %v618 = vadd.f32 0.0, %v617
        %v619 = vpop.f32.mrf.mxu0
        %v620 = vadd.f32 0.0, %v619
        %621 = vmatmul.bf16.gmra.mxu0 %v512
        %v622 = vpop.f32.mrf.mxu0
        %v623 = vadd.f32 0.0, %v622
        %v624 = vpop.f32.mrf.mxu0
        %v625 = vadd.f32 0.0, %v624
        %626 = vmatmul.bf16.gmra.mxu0 %v513
        %v627 = vpop.f32.mrf.mxu0
        %v628 = vadd.f32 0.0, %v627
        %v629 = vpop.f32.mrf.mxu0
        %v630 = vadd.f32 0.0, %v629
        %631 = vmatmul.bf16.gmra.mxu0 %v514
        %v632 = vpop.f32.mrf.mxu0
        %v633 = vadd.f32 0.0, %v632
        %v634 = vpop.f32.mrf.mxu0
        %v635 = vadd.f32 0.0, %v634
        %636 = vmatmul.bf16.gmra.mxu0 %v515
        %v637 = vpop.f32.mrf.mxu0
        %v638 = vadd.f32 0.0, %v637
        %v639 = vpop.f32.mrf.mxu0
        %v640 = vadd.f32 0.0, %v639
        %641 = vmatmul.bf16.gmra.mxu0 %v516
        %v642 = vpop.f32.mrf.mxu0
        %v643 = vadd.f32 0.0, %v642
        %v644 = vpop.f32.mrf.mxu0
        %v645 = vadd.f32 0.0, %v644
        %646 = vmatmul.bf16.gmra.mxu0 %v517
        %v647 = vpop.f32.mrf.mxu0
        %v648 = vadd.f32 0.0, %v647
        %v649 = vpop.f32.mrf.mxu0
        %v650 = vadd.f32 0.0, %v649
        %651 = vmatmul.bf16.gmra.mxu0 %v518
        %v652 = vpop.f32.mrf.mxu0
        %v653 = vadd.f32 0.0, %v652
        %v654 = vpop.f32.mrf.mxu0
        %v655 = vadd.f32 0.0, %v654
        %656 = vmatmul.bf16.gmra.mxu0 %v519
        %v657 = vpop.f32.mrf.mxu0
        %v658 = vadd.f32 0.0, %v657
        %v659 = vpop.f32.mrf.mxu0
        %v660 = vadd.f32 0.0, %v659
        %661 = vmatmul.bf16.gmra.mxu0 %v520
        %v662 = vpop.f32.mrf.mxu0
        %v663 = vadd.f32 0.0, %v662
        %v664 = vpop.f32.mrf.mxu0
        %v665 = vadd.f32 0.0, %v664
        %666 = vmatmul.bf16.gmra.mxu0 %v521
        %v667 = vpop.f32.mrf.mxu0
        %v668 = vadd.f32 0.0, %v667
        %v669 = vpop.f32.mrf.mxu0
        %v670 = vadd.f32 0.0, %v669
        %671 = vmatmul.bf16.gmra.mxu0 %v522
        %v672 = vpop.f32.mrf.mxu0
        %v673 = vadd.f32 0.0, %v672
        %v674 = vpop.f32.mrf.mxu0
        %v675 = vadd.f32 0.0, %v674
        %676 = vdwg.mxu0
        %v693 = vunpack.c.l.b16 %v424
        %v694 = vunpack.c.l.b16 %v425
        %v695 = vunpack.c.l.b16 %v426
        %v696 = vunpack.c.l.b16 %v427
        %v697 = vunpack.c.l.b16 %v428
        %v698 = vunpack.c.l.b16 %v429
        %v699 = vunpack.c.l.b16 %v430
        %v700 = vunpack.c.l.b16 %v431
        %v701 = vunpack.c.l.b16 %v432
        %v702 = vunpack.c.l.b16 %v433
        %v703 = vunpack.c.l.b16 %v434
        %v704 = vunpack.c.l.b16 %v435
        %v705 = vunpack.c.l.b16 %v436
        %v706 = vunpack.c.l.b16 %v437
        %v707 = vunpack.c.l.b16 %v438
        %v708 = vunpack.c.l.b16 %v439
        %v709 = vpack.c.b16 %v694, %v693
        %v710 = vpack.c.b16 %v696, %v695
        %v711 = vpack.c.b16 %v698, %v697
        %v712 = vpack.c.b16 %v700, %v699
        %v713 = vpack.c.b16 %v702, %v701
        %v714 = vpack.c.b16 %v704, %v703
        %v715 = vpack.c.b16 %v706, %v705
        %v716 = vpack.c.b16 %v708, %v707
        %725 = vmatpush.bf16.msra.mxu0 %v716
        %726 = vmatpush.bf16.msra.mxu0 %v715
        %727 = vmatpush.bf16.msra.mxu0 %v714
        %728 = vmatpush.bf16.msra.mxu0 %v713
        %729 = vmatpush.bf16.msra.mxu0 %v712
        %730 = vmatpush.bf16.msra.mxu0 %v711
        %731 = vmatpush.bf16.msra.mxu0 %v710
        %732 = vmatpush.bf16.msra.mxu0 %v709
        %733 = vmatmul.bf16.gmra.mxu0 %v408
        %v734 = vpop.f32.mrf.mxu0
        %v735 = vadd.f32 %v598, %v734
        %v736 = vpop.f32.mrf.mxu0
        %v737 = vadd.f32 %v600, %v736
        %738 = vmatmul.bf16.gmra.mxu0 %v409
        %v739 = vpop.f32.mrf.mxu0
        %v740 = vadd.f32 %v603, %v739
        %v741 = vpop.f32.mrf.mxu0
        %v742 = vadd.f32 %v605, %v741
        %743 = vmatmul.bf16.gmra.mxu0 %v410
        %v744 = vpop.f32.mrf.mxu0
        %v745 = vadd.f32 %v608, %v744
        %v746 = vpop.f32.mrf.mxu0
        %v747 = vadd.f32 %v610, %v746
        %748 = vmatmul.bf16.gmra.mxu0 %v411
        %v749 = vpop.f32.mrf.mxu0
        %v750 = vadd.f32 %v613, %v749
        %v751 = vpop.f32.mrf.mxu0
        %v752 = vadd.f32 %v615, %v751
        %753 = vmatmul.bf16.gmra.mxu0 %v412
        %v754 = vpop.f32.mrf.mxu0
        %v755 = vadd.f32 %v618, %v754
        %v756 = vpop.f32.mrf.mxu0
        %v757 = vadd.f32 %v620, %v756
        %758 = vmatmul.bf16.gmra.mxu0 %v413
        %v759 = vpop.f32.mrf.mxu0
        %v760 = vadd.f32 %v623, %v759
        %v761 = vpop.f32.mrf.mxu0
        %v762 = vadd.f32 %v625, %v761
        %763 = vmatmul.bf16.gmra.mxu0 %v414
        %v764 = vpop.f32.mrf.mxu0
        %v765 = vadd.f32 %v628, %v764
        %v766 = vpop.f32.mrf.mxu0
        %v767 = vadd.f32 %v630, %v766
        %768 = vmatmul.bf16.gmra.mxu0 %v415
        %v769 = vpop.f32.mrf.mxu0
        %v770 = vadd.f32 %v633, %v769
        %v771 = vpop.f32.mrf.mxu0
        %v772 = vadd.f32 %v635, %v771
        %773 = vmatmul.bf16.gmra.mxu0 %v416
        %v774 = vpop.f32.mrf.mxu0
        %v775 = vadd.f32 %v638, %v774
        %v776 = vpop.f32.mrf.mxu0
        %v777 = vadd.f32 %v640, %v776
        %778 = vmatmul.bf16.gmra.mxu0 %v417
        %v779 = vpop.f32.mrf.mxu0
        %v780 = vadd.f32 %v643, %v779
        %v781 = vpop.f32.mrf.mxu0
        %v782 = vadd.f32 %v645, %v781
        %783 = vmatmul.bf16.gmra.mxu0 %v418
        %v784 = vpop.f32.mrf.mxu0
        %v785 = vadd.f32 %v648, %v784
        %v786 = vpop.f32.mrf.mxu0
        %v787 = vadd.f32 %v650, %v786
        %788 = vmatmul.bf16.gmra.mxu0 %v419
        %v789 = vpop.f32.mrf.mxu0
        %v790 = vadd.f32 %v653, %v789
        %v791 = vpop.f32.mrf.mxu0
        %v792 = vadd.f32 %v655, %v791
        %793 = vmatmul.bf16.gmra.mxu0 %v420
        %v794 = vpop.f32.mrf.mxu0
        %v795 = vadd.f32 %v658, %v794
        %v796 = vpop.f32.mrf.mxu0
        %v797 = vadd.f32 %v660, %v796
        %798 = vmatmul.bf16.gmra.mxu0 %v421
        %v799 = vpop.f32.mrf.mxu0
        %v800 = vadd.f32 %v663, %v799
        %v801 = vpop.f32.mrf.mxu0
        %v802 = vadd.f32 %v665, %v801
        %803 = vmatmul.bf16.gmra.mxu0 %v422
        %v804 = vpop.f32.mrf.mxu0
        %v805 = vadd.f32 %v668, %v804
        %v806 = vpop.f32.mrf.mxu0
        %v807 = vadd.f32 %v670, %v806
        %808 = vmatmul.bf16.gmra.mxu0 %v423
        %v809 = vpop.f32.mrf.mxu0
        %v810 = vadd.f32 %v673, %v809
        %v811 = vpop.f32.mrf.mxu0
        %v812 = vadd.f32 %v675, %v811
        %813 = vdwg.mxu0
        %v814 = vrot.slane %v376, 2
        %v815 = vrot.slane %v377, 2
        %v816 = vrot.slane %v378, 2
        %v817 = vrot.slane %v379, 2
        %v818 = vrot.slane %v380, 2
        %v819 = vrot.slane %v381, 2
        %v820 = vrot.slane %v382, 2
        %v821 = vrot.slane %v383, 2
        %v822 = vrot.slane %v384, 2
        %v823 = vrot.slane %v385, 2
        %v824 = vrot.slane %v386, 2
        %v825 = vrot.slane %v387, 2
        %v826 = vrot.slane %v388, 2
        %v827 = vrot.slane %v389, 2
        %v828 = vrot.slane %v390, 2
        %v829 = vrot.slane %v391, 2
        %v830 = vrot.slane %v392, 2
        %v831 = vrot.slane %v393, 2
        %v832 = vrot.slane %v394, 2
        %v833 = vrot.slane %v395, 2
        %v834 = vrot.slane %v396, 2
        %v835 = vrot.slane %v397, 2
        %v836 = vrot.slane %v398, 2
        %v837 = vrot.slane %v399, 2
        %v838 = vrot.slane %v400, 2
        %v839 = vrot.slane %v401, 2
        %v840 = vrot.slane %v402, 2
        %v841 = vrot.slane %v403, 2
        %v842 = vrot.slane %v404, 2
        %v843 = vrot.slane %v405, 2
        %v844 = vrot.slane %v406, 2
        %v845 = vrot.slane %v407, 2
        %vm846 = vcmp.lt.s32.totalorder %v473, 6
        %v847 = vsel %vm846, %v844, %v845
        %v848 = vsel %vm846, %v843, %v844
        %v849 = vsel %vm846, %v842, %v843
        %v850 = vsel %vm846, %v841, %v842
        %v851 = vsel %vm846, %v840, %v841
        %v852 = vsel %vm846, %v839, %v840
        %v853 = vsel %vm846, %v838, %v839
        %v854 = vsel %vm846, %v837, %v838
        %v855 = vsel %vm846, %v836, %v837
        %v856 = vsel %vm846, %v835, %v836
        %v857 = vsel %vm846, %v834, %v835
        %v858 = vsel %vm846, %v833, %v834
        %v859 = vsel %vm846, %v832, %v833
        %v860 = vsel %vm846, %v831, %v832
        %v861 = vsel %vm846, %v830, %v831
        %v862 = vsel %vm846, %v829, %v830
        %v863 = vsel %vm846, %v828, %v829
        %v864 = vsel %vm846, %v827, %v828
        %v865 = vsel %vm846, %v826, %v827
        %v866 = vsel %vm846, %v825, %v826
        %v867 = vsel %vm846, %v824, %v825
        %v868 = vsel %vm846, %v823, %v824
        %v869 = vsel %vm846, %v822, %v823
        %v870 = vsel %vm846, %v821, %v822
        %v871 = vsel %vm846, %v820, %v821
        %v872 = vsel %vm846, %v819, %v820
        %v873 = vsel %vm846, %v818, %v819
        %v874 = vsel %vm846, %v817, %v818
        %v875 = vsel %vm846, %v816, %v817
        %v876 = vsel %vm846, %v815, %v816
        %v877 = vsel %vm846, %v814, %v815
        %v878 = vsel %vm846, %v845, %v814
        %v879 = vpack.c.bf16 %v876, %v877
        %v880 = vpack.c.bf16 %v874, %v875
        %v881 = vpack.c.bf16 %v872, %v873
        %v882 = vpack.c.bf16 %v870, %v871
        %v883 = vpack.c.bf16 %v868, %v869
        %v884 = vpack.c.bf16 %v866, %v867
        %v885 = vpack.c.bf16 %v864, %v865
        %v886 = vpack.c.bf16 %v862, %v863
        %v887 = vpack.c.bf16 %v860, %v861
        %v888 = vpack.c.bf16 %v858, %v859
        %v889 = vpack.c.bf16 %v856, %v857
        %v890 = vpack.c.bf16 %v854, %v855
        %v891 = vpack.c.bf16 %v852, %v853
        %v892 = vpack.c.bf16 %v850, %v851
        %v893 = vpack.c.bf16 %v848, %v849
        %v894 = vpack.c.bf16 %v878, %v847
        %s895 = scalar_lea.vmem [#allocation2], 128
        %v896 = vld [vmem:[%s895] sm:$0xf]
        %v897 = vld [vmem:[%s895 + $0x4] sm:$0xf]
        %v898 = vld [vmem:[%s895 + $0x8] sm:$0xf]
        %v899 = vld [vmem:[%s895 + $0xc] sm:$0xf]
        %v900 = vld [vmem:[%s895 + $0x10] sm:$0xf]
        %v901 = vld [vmem:[%s895 + $0x14] sm:$0xf]
        %v902 = vld [vmem:[%s895 + $0x18] sm:$0xf]
        %v903 = vld [vmem:[%s895 + $0x1c] sm:$0xf]
        %v904 = vld [vmem:[%s895 + $0x20] sm:$0xf]
        %v905 = vld [vmem:[%s895 + $0x24] sm:$0xf]
        %v906 = vld [vmem:[%s895 + $0x28] sm:$0xf]
        %v907 = vld [vmem:[%s895 + $0x2c] sm:$0xf]
        %v908 = vld [vmem:[%s895 + $0x30] sm:$0xf]
        %v909 = vld [vmem:[%s895 + $0x34] sm:$0xf]
        %v910 = vld [vmem:[%s895 + $0x38] sm:$0xf]
        %v911 = vld [vmem:[%s895 + $0x3c] sm:$0xf]
        %v928 = vunpack.c.l.b16 %v896
        %v929 = vunpack.c.l.b16 %v897
        %v930 = vunpack.c.l.b16 %v898
        %v931 = vunpack.c.l.b16 %v899
        %v932 = vunpack.c.l.b16 %v900
        %v933 = vunpack.c.l.b16 %v901
        %v934 = vunpack.c.l.b16 %v902
        %v935 = vunpack.c.l.b16 %v903
        %v936 = vunpack.c.l.b16 %v904
        %v937 = vunpack.c.l.b16 %v905
        %v938 = vunpack.c.l.b16 %v906
        %v939 = vunpack.c.l.b16 %v907
        %v940 = vunpack.c.l.b16 %v908
        %v941 = vunpack.c.l.b16 %v909
        %v942 = vunpack.c.l.b16 %v910
        %v943 = vunpack.c.l.b16 %v911
        %v944 = vpack.c.b16 %v929, %v928
        %v945 = vpack.c.b16 %v931, %v930
        %v946 = vpack.c.b16 %v933, %v932
        %v947 = vpack.c.b16 %v935, %v934
        %v948 = vpack.c.b16 %v937, %v936
        %v949 = vpack.c.b16 %v939, %v938
        %v950 = vpack.c.b16 %v941, %v940
        %v951 = vpack.c.b16 %v943, %v942
        %960 = vmatpush.bf16.msra.mxu0 %v951
        %961 = vmatpush.bf16.msra.mxu0 %v950
        %962 = vmatpush.bf16.msra.mxu0 %v949
        %963 = vmatpush.bf16.msra.mxu0 %v948
        %964 = vmatpush.bf16.msra.mxu0 %v947
        %965 = vmatpush.bf16.msra.mxu0 %v946
        %966 = vmatpush.bf16.msra.mxu0 %v945
        %967 = vmatpush.bf16.msra.mxu0 %v944
        %968 = vmatmul.bf16.gmra.mxu0 %v879
        %v969 = vpop.f32.mrf.mxu0
        %v970 = vadd.f32 0.0, %v969
        %v971 = vpop.f32.mrf.mxu0
        %v972 = vadd.f32 0.0, %v971
        %973 = vmatmul.bf16.gmra.mxu0 %v880
        %v974 = vpop.f32.mrf.mxu0
        %v975 = vadd.f32 0.0, %v974
        %v976 = vpop.f32.mrf.mxu0
        %v977 = vadd.f32 0.0, %v976
        %978 = vmatmul.bf16.gmra.mxu0 %v881
        %v979 = vpop.f32.mrf.mxu0
        %v980 = vadd.f32 0.0, %v979
        %v981 = vpop.f32.mrf.mxu0
        %v982 = vadd.f32 0.0, %v981
        %983 = vmatmul.bf16.gmra.mxu0 %v882
        %v984 = vpop.f32.mrf.mxu0
        %v985 = vadd.f32 0.0, %v984
        %v986 = vpop.f32.mrf.mxu0
        %v987 = vadd.f32 0.0, %v986
        %988 = vmatmul.bf16.gmra.mxu0 %v883
        %v989 = vpop.f32.mrf.mxu0
        %v990 = vadd.f32 0.0, %v989
        %v991 = vpop.f32.mrf.mxu0
        %v992 = vadd.f32 0.0, %v991
        %993 = vmatmul.bf16.gmra.mxu0 %v884
        %v994 = vpop.f32.mrf.mxu0
        %v995 = vadd.f32 0.0, %v994
        %v996 = vpop.f32.mrf.mxu0
        %v997 = vadd.f32 0.0, %v996
        %998 = vmatmul.bf16.gmra.mxu0 %v885
        %v999 = vpop.f32.mrf.mxu0
        %v1000 = vadd.f32 0.0, %v999
        %v1001 = vpop.f32.mrf.mxu0
        %v1002 = vadd.f32 0.0, %v1001
        %1003 = vmatmul.bf16.gmra.mxu0 %v886
        %v1004 = vpop.f32.mrf.mxu0
        %v1005 = vadd.f32 0.0, %v1004
        %v1006 = vpop.f32.mrf.mxu0
        %v1007 = vadd.f32 0.0, %v1006
        %1008 = vmatmul.bf16.gmra.mxu0 %v887
        %v1009 = vpop.f32.mrf.mxu0
        %v1010 = vadd.f32 0.0, %v1009
        %v1011 = vpop.f32.mrf.mxu0
        %v1012 = vadd.f32 0.0, %v1011
        %1013 = vmatmul.bf16.gmra.mxu0 %v888
        %v1014 = vpop.f32.mrf.mxu0
        %v1015 = vadd.f32 0.0, %v1014
        %v1016 = vpop.f32.mrf.mxu0
        %v1017 = vadd.f32 0.0, %v1016
        %1018 = vmatmul.bf16.gmra.mxu0 %v889
        %v1019 = vpop.f32.mrf.mxu0
        %v1020 = vadd.f32 0.0, %v1019
        %v1021 = vpop.f32.mrf.mxu0
        %v1022 = vadd.f32 0.0, %v1021
        %1023 = vmatmul.bf16.gmra.mxu0 %v890
        %v1024 = vpop.f32.mrf.mxu0
        %v1025 = vadd.f32 0.0, %v1024
        %v1026 = vpop.f32.mrf.mxu0
        %v1027 = vadd.f32 0.0, %v1026
        %1028 = vmatmul.bf16.gmra.mxu0 %v891
        %v1029 = vpop.f32.mrf.mxu0
        %v1030 = vadd.f32 0.0, %v1029
        %v1031 = vpop.f32.mrf.mxu0
        %v1032 = vadd.f32 0.0, %v1031
        %1033 = vmatmul.bf16.gmra.mxu0 %v892
        %v1034 = vpop.f32.mrf.mxu0
        %v1035 = vadd.f32 0.0, %v1034
        %v1036 = vpop.f32.mrf.mxu0
        %v1037 = vadd.f32 0.0, %v1036
        %1038 = vmatmul.bf16.gmra.mxu0 %v893
        %v1039 = vpop.f32.mrf.mxu0
        %v1040 = vadd.f32 0.0, %v1039
        %v1041 = vpop.f32.mrf.mxu0
        %v1042 = vadd.f32 0.0, %v1041
        %1043 = vmatmul.bf16.gmra.mxu0 %v894
        %v1044 = vpop.f32.mrf.mxu0
        %v1045 = vadd.f32 0.0, %v1044
        %v1046 = vpop.f32.mrf.mxu0
        %v1047 = vadd.f32 0.0, %v1046
        %1048 = vdwg.mxu0
        %v1049 = vadd.f32 %v735, %v970
        %v1050 = vadd.f32 %v737, %v972
        %v1051 = vadd.f32 %v740, %v975
        %v1052 = vadd.f32 %v742, %v977
        %v1053 = vadd.f32 %v745, %v980
        %v1054 = vadd.f32 %v747, %v982
        %v1055 = vadd.f32 %v750, %v985
        %v1056 = vadd.f32 %v752, %v987
        %v1057 = vadd.f32 %v755, %v990
        %v1058 = vadd.f32 %v757, %v992
        %v1059 = vadd.f32 %v760, %v995
        %v1060 = vadd.f32 %v762, %v997
        %v1061 = vadd.f32 %v765, %v1000
        %v1062 = vadd.f32 %v767, %v1002
        %v1063 = vadd.f32 %v770, %v1005
        %v1064 = vadd.f32 %v772, %v1007
        %v1065 = vadd.f32 %v775, %v1010
        %v1066 = vadd.f32 %v777, %v1012
        %v1067 = vadd.f32 %v780, %v1015
        %v1068 = vadd.f32 %v782, %v1017
        %v1069 = vadd.f32 %v785, %v1020
        %v1070 = vadd.f32 %v787, %v1022
        %v1071 = vadd.f32 %v790, %v1025
        %v1072 = vadd.f32 %v792, %v1027
        %v1073 = vadd.f32 %v795, %v1030
        %v1074 = vadd.f32 %v797, %v1032
        %v1075 = vadd.f32 %v800, %v1035
        %v1076 = vadd.f32 %v802, %v1037
        %v1077 = vadd.f32 %v805, %v1040
        %v1078 = vadd.f32 %v807, %v1042
        %v1079 = vadd.f32 %v810, %v1045
        %v1080 = vadd.f32 %v812, %v1047
        %v1081 = vrot.slane %v376, 3
        %v1082 = vrot.slane %v377, 3
        %v1083 = vrot.slane %v378, 3
        %v1084 = vrot.slane %v379, 3
        %v1085 = vrot.slane %v380, 3
        %v1086 = vrot.slane %v381, 3
        %v1087 = vrot.slane %v382, 3
        %v1088 = vrot.slane %v383, 3
        %v1089 = vrot.slane %v384, 3
        %v1090 = vrot.slane %v385, 3
        %v1091 = vrot.slane %v386, 3
        %v1092 = vrot.slane %v387, 3
        %v1093 = vrot.slane %v388, 3
        %v1094 = vrot.slane %v389, 3
        %v1095 = vrot.slane %v390, 3
        %v1096 = vrot.slane %v391, 3
        %v1097 = vrot.slane %v392, 3
        %v1098 = vrot.slane %v393, 3
        %v1099 = vrot.slane %v394, 3
        %v1100 = vrot.slane %v395, 3
        %v1101 = vrot.slane %v396, 3
        %v1102 = vrot.slane %v397, 3
        %v1103 = vrot.slane %v398, 3
        %v1104 = vrot.slane %v399, 3
        %v1105 = vrot.slane %v400, 3
        %v1106 = vrot.slane %v401, 3
        %v1107 = vrot.slane %v402, 3
        %v1108 = vrot.slane %v403, 3
        %v1109 = vrot.slane %v404, 3
        %v1110 = vrot.slane %v405, 3
        %v1111 = vrot.slane %v406, 3
        %v1112 = vrot.slane %v407, 3
        %vm1113 = vcmp.lt.s32.totalorder %v473, 5
        %v1114 = vsel %vm1113, %v1111, %v1112
        %v1115 = vsel %vm1113, %v1110, %v1111
        %v1116 = vsel %vm1113, %v1109, %v1110
        %v1117 = vsel %vm1113, %v1108, %v1109
        %v1118 = vsel %vm1113, %v1107, %v1108
        %v1119 = vsel %vm1113, %v1106, %v1107
        %v1120 = vsel %vm1113, %v1105, %v1106
        %v1121 = vsel %vm1113, %v1104, %v1105
        %v1122 = vsel %vm1113, %v1103, %v1104
        %v1123 = vsel %vm1113, %v1102, %v1103
        %v1124 = vsel %vm1113, %v1101, %v1102
        %v1125 = vsel %vm1113, %v1100, %v1101
        %v1126 = vsel %vm1113, %v1099, %v1100
        %v1127 = vsel %vm1113, %v1098, %v1099
        %v1128 = vsel %vm1113, %v1097, %v1098
        %v1129 = vsel %vm1113, %v1096, %v1097
        %v1130 = vsel %vm1113, %v1095, %v1096
        %v1131 = vsel %vm1113, %v1094, %v1095
        %v1132 = vsel %vm1113, %v1093, %v1094
        %v1133 = vsel %vm1113, %v1092, %v1093
        %v1134 = vsel %vm1113, %v1091, %v1092
        %v1135 = vsel %vm1113, %v1090, %v1091
        %v1136 = vsel %vm1113, %v1089, %v1090
        %v1137 = vsel %vm1113, %v1088, %v1089
        %v1138 = vsel %vm1113, %v1087, %v1088
        %v1139 = vsel %vm1113, %v1086, %v1087
        %v1140 = vsel %vm1113, %v1085, %v1086
        %v1141 = vsel %vm1113, %v1084, %v1085
        %v1142 = vsel %vm1113, %v1083, %v1084
        %v1143 = vsel %vm1113, %v1082, %v1083
        %v1144 = vsel %vm1113, %v1081, %v1082
        %v1145 = vsel %vm1113, %v1112, %v1081
        %v1146 = vpack.c.bf16 %v1143, %v1144
        %v1147 = vpack.c.bf16 %v1141, %v1142
        %v1148 = vpack.c.bf16 %v1139, %v1140
        %v1149 = vpack.c.bf16 %v1137, %v1138
        %v1150 = vpack.c.bf16 %v1135, %v1136
        %v1151 = vpack.c.bf16 %v1133, %v1134
        %v1152 = vpack.c.bf16 %v1131, %v1132
        %v1153 = vpack.c.bf16 %v1129, %v1130
        %v1154 = vpack.c.bf16 %v1127, %v1128
        %v1155 = vpack.c.bf16 %v1125, %v1126
        %v1156 = vpack.c.bf16 %v1123, %v1124
        %v1157 = vpack.c.bf16 %v1121, %v1122
        %v1158 = vpack.c.bf16 %v1119, %v1120
        %v1159 = vpack.c.bf16 %v1117, %v1118
        %v1160 = vpack.c.bf16 %v1115, %v1116
        %v1161 = vpack.c.bf16 %v1145, %v1114
        %s1162 = scalar_lea.vmem [#allocation2], 192
        %v1163 = vld [vmem:[%s1162] sm:$0xf]
        %v1164 = vld [vmem:[%s1162 + $0x4] sm:$0xf]
        %v1165 = vld [vmem:[%s1162 + $0x8] sm:$0xf]
        %v1166 = vld [vmem:[%s1162 + $0xc] sm:$0xf]
        %v1167 = vld [vmem:[%s1162 + $0x10] sm:$0xf]
        %v1168 = vld [vmem:[%s1162 + $0x14] sm:$0xf]
        %v1169 = vld [vmem:[%s1162 + $0x18] sm:$0xf]
        %v1170 = vld [vmem:[%s1162 + $0x1c] sm:$0xf]
        %v1171 = vld [vmem:[%s1162 + $0x20] sm:$0xf]
        %v1172 = vld [vmem:[%s1162 + $0x24] sm:$0xf]
        %v1173 = vld [vmem:[%s1162 + $0x28] sm:$0xf]
        %v1174 = vld [vmem:[%s1162 + $0x2c] sm:$0xf]
        %v1175 = vld [vmem:[%s1162 + $0x30] sm:$0xf]
        %v1176 = vld [vmem:[%s1162 + $0x34] sm:$0xf]
        %v1177 = vld [vmem:[%s1162 + $0x38] sm:$0xf]
        %v1178 = vld [vmem:[%s1162 + $0x3c] sm:$0xf]
        %v1195 = vunpack.c.l.b16 %v1163
        %v1196 = vunpack.c.l.b16 %v1164
        %v1197 = vunpack.c.l.b16 %v1165
        %v1198 = vunpack.c.l.b16 %v1166
        %v1199 = vunpack.c.l.b16 %v1167
        %v1200 = vunpack.c.l.b16 %v1168
        %v1201 = vunpack.c.l.b16 %v1169
        %v1202 = vunpack.c.l.b16 %v1170
        %v1203 = vunpack.c.l.b16 %v1171
        %v1204 = vunpack.c.l.b16 %v1172
        %v1205 = vunpack.c.l.b16 %v1173
        %v1206 = vunpack.c.l.b16 %v1174
        %v1207 = vunpack.c.l.b16 %v1175
        %v1208 = vunpack.c.l.b16 %v1176
        %v1209 = vunpack.c.l.b16 %v1177
        %v1210 = vunpack.c.l.b16 %v1178
        %v1211 = vpack.c.b16 %v1196, %v1195
        %v1212 = vpack.c.b16 %v1198, %v1197
        %v1213 = vpack.c.b16 %v1200, %v1199
        %v1214 = vpack.c.b16 %v1202, %v1201
        %v1215 = vpack.c.b16 %v1204, %v1203
        %v1216 = vpack.c.b16 %v1206, %v1205
        %v1217 = vpack.c.b16 %v1208, %v1207
        %v1218 = vpack.c.b16 %v1210, %v1209
        %1227 = vmatpush.bf16.msra.mxu0 %v1218
        %1228 = vmatpush.bf16.msra.mxu0 %v1217
        %1229 = vmatpush.bf16.msra.mxu0 %v1216
        %1230 = vmatpush.bf16.msra.mxu0 %v1215
        %1231 = vmatpush.bf16.msra.mxu0 %v1214
        %1232 = vmatpush.bf16.msra.mxu0 %v1213
        %1233 = vmatpush.bf16.msra.mxu0 %v1212
        %1234 = vmatpush.bf16.msra.mxu0 %v1211
        %1235 = vmatmul.bf16.gmra.mxu0 %v1146
        %v1236 = vpop.f32.mrf.mxu0
        %v1237 = vadd.f32 0.0, %v1236
        %v1238 = vpop.f32.mrf.mxu0
        %v1239 = vadd.f32 0.0, %v1238
        %1240 = vmatmul.bf16.gmra.mxu0 %v1147
        %v1241 = vpop.f32.mrf.mxu0
        %v1242 = vadd.f32 0.0, %v1241
        %v1243 = vpop.f32.mrf.mxu0
        %v1244 = vadd.f32 0.0, %v1243
        %1245 = vmatmul.bf16.gmra.mxu0 %v1148
        %v1246 = vpop.f32.mrf.mxu0
        %v1247 = vadd.f32 0.0, %v1246
        %v1248 = vpop.f32.mrf.mxu0
        %v1249 = vadd.f32 0.0, %v1248
        %1250 = vmatmul.bf16.gmra.mxu0 %v1149
        %v1251 = vpop.f32.mrf.mxu0
        %v1252 = vadd.f32 0.0, %v1251
        %v1253 = vpop.f32.mrf.mxu0
        %v1254 = vadd.f32 0.0, %v1253
        %1255 = vmatmul.bf16.gmra.mxu0 %v1150
        %v1256 = vpop.f32.mrf.mxu0
        %v1257 = vadd.f32 0.0, %v1256
        %v1258 = vpop.f32.mrf.mxu0
        %v1259 = vadd.f32 0.0, %v1258
        %1260 = vmatmul.bf16.gmra.mxu0 %v1151
        %v1261 = vpop.f32.mrf.mxu0
        %v1262 = vadd.f32 0.0, %v1261
        %v1263 = vpop.f32.mrf.mxu0
        %v1264 = vadd.f32 0.0, %v1263
        %1265 = vmatmul.bf16.gmra.mxu0 %v1152
        %v1266 = vpop.f32.mrf.mxu0
        %v1267 = vadd.f32 0.0, %v1266
        %v1268 = vpop.f32.mrf.mxu0
        %v1269 = vadd.f32 0.0, %v1268
        %1270 = vmatmul.bf16.gmra.mxu0 %v1153
        %v1271 = vpop.f32.mrf.mxu0
        %v1272 = vadd.f32 0.0, %v1271
        %v1273 = vpop.f32.mrf.mxu0
        %v1274 = vadd.f32 0.0, %v1273
        %1275 = vmatmul.bf16.gmra.mxu0 %v1154
        %v1276 = vpop.f32.mrf.mxu0
        %v1277 = vadd.f32 0.0, %v1276
        %v1278 = vpop.f32.mrf.mxu0
        %v1279 = vadd.f32 0.0, %v1278
        %1280 = vmatmul.bf16.gmra.mxu0 %v1155
        %v1281 = vpop.f32.mrf.mxu0
        %v1282 = vadd.f32 0.0, %v1281
        %v1283 = vpop.f32.mrf.mxu0
        %v1284 = vadd.f32 0.0, %v1283
        %1285 = vmatmul.bf16.gmra.mxu0 %v1156
        %v1286 = vpop.f32.mrf.mxu0
        %v1287 = vadd.f32 0.0, %v1286
        %v1288 = vpop.f32.mrf.mxu0
        %v1289 = vadd.f32 0.0, %v1288
        %1290 = vmatmul.bf16.gmra.mxu0 %v1157
        %v1291 = vpop.f32.mrf.mxu0
        %v1292 = vadd.f32 0.0, %v1291
        %v1293 = vpop.f32.mrf.mxu0
        %v1294 = vadd.f32 0.0, %v1293
        %1295 = vmatmul.bf16.gmra.mxu0 %v1158
        %v1296 = vpop.f32.mrf.mxu0
        %v1297 = vadd.f32 0.0, %v1296
        %v1298 = vpop.f32.mrf.mxu0
        %v1299 = vadd.f32 0.0, %v1298
        %1300 = vmatmul.bf16.gmra.mxu0 %v1159
        %v1301 = vpop.f32.mrf.mxu0
        %v1302 = vadd.f32 0.0, %v1301
        %v1303 = vpop.f32.mrf.mxu0
        %v1304 = vadd.f32 0.0, %v1303
        %1305 = vmatmul.bf16.gmra.mxu0 %v1160
        %v1306 = vpop.f32.mrf.mxu0
        %v1307 = vadd.f32 0.0, %v1306
        %v1308 = vpop.f32.mrf.mxu0
        %v1309 = vadd.f32 0.0, %v1308
        %1310 = vmatmul.bf16.gmra.mxu0 %v1161
        %v1311 = vpop.f32.mrf.mxu0
        %v1312 = vadd.f32 0.0, %v1311
        %v1313 = vpop.f32.mrf.mxu0
        %v1314 = vadd.f32 0.0, %v1313
        %1315 = vdwg.mxu0
        %v1316 = vadd.f32 %v1049, %v1237
        %v1317 = vadd.f32 %v1050, %v1239
        %v1318 = vadd.f32 %v1051, %v1242
        %v1319 = vadd.f32 %v1052, %v1244
        %v1320 = vadd.f32 %v1053, %v1247
        %v1321 = vadd.f32 %v1054, %v1249
        %v1322 = vadd.f32 %v1055, %v1252
        %v1323 = vadd.f32 %v1056, %v1254
        %v1324 = vadd.f32 %v1057, %v1257
        %v1325 = vadd.f32 %v1058, %v1259
        %v1326 = vadd.f32 %v1059, %v1262
        %v1327 = vadd.f32 %v1060, %v1264
        %v1328 = vadd.f32 %v1061, %v1267
        %v1329 = vadd.f32 %v1062, %v1269
        %v1330 = vadd.f32 %v1063, %v1272
        %v1331 = vadd.f32 %v1064, %v1274
        %v1332 = vadd.f32 %v1065, %v1277
        %v1333 = vadd.f32 %v1066, %v1279
        %v1334 = vadd.f32 %v1067, %v1282
        %v1335 = vadd.f32 %v1068, %v1284
        %v1336 = vadd.f32 %v1069, %v1287
        %v1337 = vadd.f32 %v1070, %v1289
        %v1338 = vadd.f32 %v1071, %v1292
        %v1339 = vadd.f32 %v1072, %v1294
        %v1340 = vadd.f32 %v1073, %v1297
        %v1341 = vadd.f32 %v1074, %v1299
        %v1342 = vadd.f32 %v1075, %v1302
        %v1343 = vadd.f32 %v1076, %v1304
        %v1344 = vadd.f32 %v1077, %v1307
        %v1345 = vadd.f32 %v1078, %v1309
        %v1346 = vadd.f32 %v1079, %v1312
        %v1347 = vadd.f32 %v1080, %v1314
        %v1348 = vrot.slane %v376, 4
        %v1349 = vrot.slane %v377, 4
        %v1350 = vrot.slane %v378, 4
        %v1351 = vrot.slane %v379, 4
        %v1352 = vrot.slane %v380, 4
        %v1353 = vrot.slane %v381, 4
        %v1354 = vrot.slane %v382, 4
        %v1355 = vrot.slane %v383, 4
        %v1356 = vrot.slane %v384, 4
        %v1357 = vrot.slane %v385, 4
        %v1358 = vrot.slane %v386, 4
        %v1359 = vrot.slane %v387, 4
        %v1360 = vrot.slane %v388, 4
        %v1361 = vrot.slane %v389, 4
        %v1362 = vrot.slane %v390, 4
        %v1363 = vrot.slane %v391, 4
        %v1364 = vrot.slane %v392, 4
        %v1365 = vrot.slane %v393, 4
        %v1366 = vrot.slane %v394, 4
        %v1367 = vrot.slane %v395, 4
        %v1368 = vrot.slane %v396, 4
        %v1369 = vrot.slane %v397, 4
        %v1370 = vrot.slane %v398, 4
        %v1371 = vrot.slane %v399, 4
        %v1372 = vrot.slane %v400, 4
        %v1373 = vrot.slane %v401, 4
        %v1374 = vrot.slane %v402, 4
        %v1375 = vrot.slane %v403, 4
        %v1376 = vrot.slane %v404, 4
        %v1377 = vrot.slane %v405, 4
        %v1378 = vrot.slane %v406, 4
        %v1379 = vrot.slane %v407, 4
        %vm1380 = vcmp.lt.s32.totalorder %v473, 4
        %v1381 = vsel %vm1380, %v1378, %v1379
        %v1382 = vsel %vm1380, %v1377, %v1378
        %v1383 = vsel %vm1380, %v1376, %v1377
        %v1384 = vsel %vm1380, %v1375, %v1376
        %v1385 = vsel %vm1380, %v1374, %v1375
        %v1386 = vsel %vm1380, %v1373, %v1374
        %v1387 = vsel %vm1380, %v1372, %v1373
        %v1388 = vsel %vm1380, %v1371, %v1372
        %v1389 = vsel %vm1380, %v1370, %v1371
        %v1390 = vsel %vm1380, %v1369, %v1370
        %v1391 = vsel %vm1380, %v1368, %v1369
        %v1392 = vsel %vm1380, %v1367, %v1368
        %v1393 = vsel %vm1380, %v1366, %v1367
        %v1394 = vsel %vm1380, %v1365, %v1366
        %v1395 = vsel %vm1380, %v1364, %v1365
        %v1396 = vsel %vm1380, %v1363, %v1364
        %v1397 = vsel %vm1380, %v1362, %v1363
        %v1398 = vsel %vm1380, %v1361, %v1362
        %v1399 = vsel %vm1380, %v1360, %v1361
        %v1400 = vsel %vm1380, %v1359, %v1360
        %v1401 = vsel %vm1380, %v1358, %v1359
        %v1402 = vsel %vm1380, %v1357, %v1358
        %v1403 = vsel %vm1380, %v1356, %v1357
        %v1404 = vsel %vm1380, %v1355, %v1356
        %v1405 = vsel %vm1380, %v1354, %v1355
        %v1406 = vsel %vm1380, %v1353, %v1354
        %v1407 = vsel %vm1380, %v1352, %v1353
        %v1408 = vsel %vm1380, %v1351, %v1352
        %v1409 = vsel %vm1380, %v1350, %v1351
        %v1410 = vsel %vm1380, %v1349, %v1350
        %v1411 = vsel %vm1380, %v1348, %v1349
        %v1412 = vsel %vm1380, %v1379, %v1348
        %v1413 = vpack.c.bf16 %v1410, %v1411
        %v1414 = vpack.c.bf16 %v1408, %v1409
        %v1415 = vpack.c.bf16 %v1406, %v1407
        %v1416 = vpack.c.bf16 %v1404, %v1405
        %v1417 = vpack.c.bf16 %v1402, %v1403
        %v1418 = vpack.c.bf16 %v1400, %v1401
        %v1419 = vpack.c.bf16 %v1398, %v1399
        %v1420 = vpack.c.bf16 %v1396, %v1397
        %v1421 = vpack.c.bf16 %v1394, %v1395
        %v1422 = vpack.c.bf16 %v1392, %v1393
        %v1423 = vpack.c.bf16 %v1390, %v1391
        %v1424 = vpack.c.bf16 %v1388, %v1389
        %v1425 = vpack.c.bf16 %v1386, %v1387
        %v1426 = vpack.c.bf16 %v1384, %v1385
        %v1427 = vpack.c.bf16 %v1382, %v1383
        %v1428 = vpack.c.bf16 %v1412, %v1381
        %s1429 = scalar_lea.vmem [#allocation2], 256
        %v1430 = vld [vmem:[%s1429] sm:$0xf]
        %v1431 = vld [vmem:[%s1429 + $0x4] sm:$0xf]
        %v1432 = vld [vmem:[%s1429 + $0x8] sm:$0xf]
        %v1433 = vld [vmem:[%s1429 + $0xc] sm:$0xf]
        %v1434 = vld [vmem:[%s1429 + $0x10] sm:$0xf]
        %v1435 = vld [vmem:[%s1429 + $0x14] sm:$0xf]
        %v1436 = vld [vmem:[%s1429 + $0x18] sm:$0xf]
        %v1437 = vld [vmem:[%s1429 + $0x1c] sm:$0xf]
        %v1438 = vld [vmem:[%s1429 + $0x20] sm:$0xf]
        %v1439 = vld [vmem:[%s1429 + $0x24] sm:$0xf]
        %v1440 = vld [vmem:[%s1429 + $0x28] sm:$0xf]
        %v1441 = vld [vmem:[%s1429 + $0x2c] sm:$0xf]
        %v1442 = vld [vmem:[%s1429 + $0x30] sm:$0xf]
        %v1443 = vld [vmem:[%s1429 + $0x34] sm:$0xf]
        %v1444 = vld [vmem:[%s1429 + $0x38] sm:$0xf]
        %v1445 = vld [vmem:[%s1429 + $0x3c] sm:$0xf]
        %v1462 = vunpack.c.l.b16 %v1430
        %v1463 = vunpack.c.l.b16 %v1431
        %v1464 = vunpack.c.l.b16 %v1432
        %v1465 = vunpack.c.l.b16 %v1433
        %v1466 = vunpack.c.l.b16 %v1434
        %v1467 = vunpack.c.l.b16 %v1435
        %v1468 = vunpack.c.l.b16 %v1436
        %v1469 = vunpack.c.l.b16 %v1437
        %v1470 = vunpack.c.l.b16 %v1438
        %v1471 = vunpack.c.l.b16 %v1439
        %v1472 = vunpack.c.l.b16 %v1440
        %v1473 = vunpack.c.l.b16 %v1441
        %v1474 = vunpack.c.l.b16 %v1442
        %v1475 = vunpack.c.l.b16 %v1443
        %v1476 = vunpack.c.l.b16 %v1444
        %v1477 = vunpack.c.l.b16 %v1445
        %v1478 = vpack.c.b16 %v1463, %v1462
        %v1479 = vpack.c.b16 %v1465, %v1464
        %v1480 = vpack.c.b16 %v1467, %v1466
        %v1481 = vpack.c.b16 %v1469, %v1468
        %v1482 = vpack.c.b16 %v1471, %v1470
        %v1483 = vpack.c.b16 %v1473, %v1472
        %v1484 = vpack.c.b16 %v1475, %v1474
        %v1485 = vpack.c.b16 %v1477, %v1476
        %1494 = vmatpush.bf16.msra.mxu0 %v1485
        %1495 = vmatpush.bf16.msra.mxu0 %v1484
        %1496 = vmatpush.bf16.msra.mxu0 %v1483
        %1497 = vmatpush.bf16.msra.mxu0 %v1482
        %1498 = vmatpush.bf16.msra.mxu0 %v1481
        %1499 = vmatpush.bf16.msra.mxu0 %v1480
        %1500 = vmatpush.bf16.msra.mxu0 %v1479
        %1501 = vmatpush.bf16.msra.mxu0 %v1478
        %1502 = vmatmul.bf16.gmra.mxu0 %v1413
        %v1503 = vpop.f32.mrf.mxu0
        %v1504 = vadd.f32 0.0, %v1503
        %v1505 = vpop.f32.mrf.mxu0
        %v1506 = vadd.f32 0.0, %v1505
        %1507 = vmatmul.bf16.gmra.mxu0 %v1414
        %v1508 = vpop.f32.mrf.mxu0
        %v1509 = vadd.f32 0.0, %v1508
        %v1510 = vpop.f32.mrf.mxu0
        %v1511 = vadd.f32 0.0, %v1510
        %1512 = vmatmul.bf16.gmra.mxu0 %v1415
        %v1513 = vpop.f32.mrf.mxu0
        %v1514 = vadd.f32 0.0, %v1513
        %v1515 = vpop.f32.mrf.mxu0
        %v1516 = vadd.f32 0.0, %v1515
        %1517 = vmatmul.bf16.gmra.mxu0 %v1416
        %v1518 = vpop.f32.mrf.mxu0
        %v1519 = vadd.f32 0.0, %v1518
        %v1520 = vpop.f32.mrf.mxu0
        %v1521 = vadd.f32 0.0, %v1520
        %1522 = vmatmul.bf16.gmra.mxu0 %v1417
        %v1523 = vpop.f32.mrf.mxu0
        %v1524 = vadd.f32 0.0, %v1523
        %v1525 = vpop.f32.mrf.mxu0
        %v1526 = vadd.f32 0.0, %v1525
        %1527 = vmatmul.bf16.gmra.mxu0 %v1418
        %v1528 = vpop.f32.mrf.mxu0
        %v1529 = vadd.f32 0.0, %v1528
        %v1530 = vpop.f32.mrf.mxu0
        %v1531 = vadd.f32 0.0, %v1530
        %1532 = vmatmul.bf16.gmra.mxu0 %v1419
        %v1533 = vpop.f32.mrf.mxu0
        %v1534 = vadd.f32 0.0, %v1533
        %v1535 = vpop.f32.mrf.mxu0
        %v1536 = vadd.f32 0.0, %v1535
        %1537 = vmatmul.bf16.gmra.mxu0 %v1420
        %v1538 = vpop.f32.mrf.mxu0
        %v1539 = vadd.f32 0.0, %v1538
        %v1540 = vpop.f32.mrf.mxu0
        %v1541 = vadd.f32 0.0, %v1540
        %1542 = vmatmul.bf16.gmra.mxu0 %v1421
        %v1543 = vpop.f32.mrf.mxu0
        %v1544 = vadd.f32 0.0, %v1543
        %v1545 = vpop.f32.mrf.mxu0
        %v1546 = vadd.f32 0.0, %v1545
        %1547 = vmatmul.bf16.gmra.mxu0 %v1422
        %v1548 = vpop.f32.mrf.mxu0
        %v1549 = vadd.f32 0.0, %v1548
        %v1550 = vpop.f32.mrf.mxu0
        %v1551 = vadd.f32 0.0, %v1550
        %1552 = vmatmul.bf16.gmra.mxu0 %v1423
        %v1553 = vpop.f32.mrf.mxu0
        %v1554 = vadd.f32 0.0, %v1553
        %v1555 = vpop.f32.mrf.mxu0
        %v1556 = vadd.f32 0.0, %v1555
        %1557 = vmatmul.bf16.gmra.mxu0 %v1424
        %v1558 = vpop.f32.mrf.mxu0
        %v1559 = vadd.f32 0.0, %v1558
        %v1560 = vpop.f32.mrf.mxu0
        %v1561 = vadd.f32 0.0, %v1560
        %1562 = vmatmul.bf16.gmra.mxu0 %v1425
        %v1563 = vpop.f32.mrf.mxu0
        %v1564 = vadd.f32 0.0, %v1563
        %v1565 = vpop.f32.mrf.mxu0
        %v1566 = vadd.f32 0.0, %v1565
        %1567 = vmatmul.bf16.gmra.mxu0 %v1426
        %v1568 = vpop.f32.mrf.mxu0
        %v1569 = vadd.f32 0.0, %v1568
        %v1570 = vpop.f32.mrf.mxu0
        %v1571 = vadd.f32 0.0, %v1570
        %1572 = vmatmul.bf16.gmra.mxu0 %v1427
        %v1573 = vpop.f32.mrf.mxu0
        %v1574 = vadd.f32 0.0, %v1573
        %v1575 = vpop.f32.mrf.mxu0
        %v1576 = vadd.f32 0.0, %v1575
        %1577 = vmatmul.bf16.gmra.mxu0 %v1428
        %v1578 = vpop.f32.mrf.mxu0
        %v1579 = vadd.f32 0.0, %v1578
        %v1580 = vpop.f32.mrf.mxu0
        %v1581 = vadd.f32 0.0, %v1580
        %1582 = vdwg.mxu0
        %v1583 = vadd.f32 %v1316, %v1504
        %v1584 = vadd.f32 %v1317, %v1506
        %v1585 = vadd.f32 %v1318, %v1509
        %v1586 = vadd.f32 %v1319, %v1511
        %v1587 = vadd.f32 %v1320, %v1514
        %v1588 = vadd.f32 %v1321, %v1516
        %v1589 = vadd.f32 %v1322, %v1519
        %v1590 = vadd.f32 %v1323, %v1521
        %v1591 = vadd.f32 %v1324, %v1524
        %v1592 = vadd.f32 %v1325, %v1526
        %v1593 = vadd.f32 %v1326, %v1529
        %v1594 = vadd.f32 %v1327, %v1531
        %v1595 = vadd.f32 %v1328, %v1534
        %v1596 = vadd.f32 %v1329, %v1536
        %v1597 = vadd.f32 %v1330, %v1539
        %v1598 = vadd.f32 %v1331, %v1541
        %v1599 = vadd.f32 %v1332, %v1544
        %v1600 = vadd.f32 %v1333, %v1546
        %v1601 = vadd.f32 %v1334, %v1549
        %v1602 = vadd.f32 %v1335, %v1551
        %v1603 = vadd.f32 %v1336, %v1554
        %v1604 = vadd.f32 %v1337, %v1556
        %v1605 = vadd.f32 %v1338, %v1559
        %v1606 = vadd.f32 %v1339, %v1561
        %v1607 = vadd.f32 %v1340, %v1564
        %v1608 = vadd.f32 %v1341, %v1566
        %v1609 = vadd.f32 %v1342, %v1569
        %v1610 = vadd.f32 %v1343, %v1571
        %v1611 = vadd.f32 %v1344, %v1574
        %v1612 = vadd.f32 %v1345, %v1576
        %v1613 = vadd.f32 %v1346, %v1579
        %v1614 = vadd.f32 %v1347, %v1581
        %v1615 = vrot.slane %v376, 5
        %v1616 = vrot.slane %v377, 5
        %v1617 = vrot.slane %v378, 5
        %v1618 = vrot.slane %v379, 5
        %v1619 = vrot.slane %v380, 5
        %v1620 = vrot.slane %v381, 5
        %v1621 = vrot.slane %v382, 5
        %v1622 = vrot.slane %v383, 5
        %v1623 = vrot.slane %v384, 5
        %v1624 = vrot.slane %v385, 5
        %v1625 = vrot.slane %v386, 5
        %v1626 = vrot.slane %v387, 5
        %v1627 = vrot.slane %v388, 5
        %v1628 = vrot.slane %v389, 5
        %v1629 = vrot.slane %v390, 5
        %v1630 = vrot.slane %v391, 5
        %v1631 = vrot.slane %v392, 5
        %v1632 = vrot.slane %v393, 5
        %v1633 = vrot.slane %v394, 5
        %v1634 = vrot.slane %v395, 5
        %v1635 = vrot.slane %v396, 5
        %v1636 = vrot.slane %v397, 5
        %v1637 = vrot.slane %v398, 5
        %v1638 = vrot.slane %v399, 5
        %v1639 = vrot.slane %v400, 5
        %v1640 = vrot.slane %v401, 5
        %v1641 = vrot.slane %v402, 5
        %v1642 = vrot.slane %v403, 5
        %v1643 = vrot.slane %v404, 5
        %v1644 = vrot.slane %v405, 5
        %v1645 = vrot.slane %v406, 5
        %v1646 = vrot.slane %v407, 5
        %vm1647 = vcmp.lt.s32.totalorder %v473, 3
        %v1648 = vsel %vm1647, %v1645, %v1646
        %v1649 = vsel %vm1647, %v1644, %v1645
        %v1650 = vsel %vm1647, %v1643, %v1644
        %v1651 = vsel %vm1647, %v1642, %v1643
        %v1652 = vsel %vm1647, %v1641, %v1642
        %v1653 = vsel %vm1647, %v1640, %v1641
        %v1654 = vsel %vm1647, %v1639, %v1640
        %v1655 = vsel %vm1647, %v1638, %v1639
        %v1656 = vsel %vm1647, %v1637, %v1638
        %v1657 = vsel %vm1647, %v1636, %v1637
        %v1658 = vsel %vm1647, %v1635, %v1636
        %v1659 = vsel %vm1647, %v1634, %v1635
        %v1660 = vsel %vm1647, %v1633, %v1634
        %v1661 = vsel %vm1647, %v1632, %v1633
        %v1662 = vsel %vm1647, %v1631, %v1632
        %v1663 = vsel %vm1647, %v1630, %v1631
        %v1664 = vsel %vm1647, %v1629, %v1630
        %v1665 = vsel %vm1647, %v1628, %v1629
        %v1666 = vsel %vm1647, %v1627, %v1628
        %v1667 = vsel %vm1647, %v1626, %v1627
        %v1668 = vsel %vm1647, %v1625, %v1626
        %v1669 = vsel %vm1647, %v1624, %v1625
        %v1670 = vsel %vm1647, %v1623, %v1624
        %v1671 = vsel %vm1647, %v1622, %v1623
        %v1672 = vsel %vm1647, %v1621, %v1622
        %v1673 = vsel %vm1647, %v1620, %v1621
        %v1674 = vsel %vm1647, %v1619, %v1620
        %v1675 = vsel %vm1647, %v1618, %v1619
        %v1676 = vsel %vm1647, %v1617, %v1618
        %v1677 = vsel %vm1647, %v1616, %v1617
        %v1678 = vsel %vm1647, %v1615, %v1616
        %v1679 = vsel %vm1647, %v1646, %v1615
        %v1680 = vpack.c.bf16 %v1677, %v1678
        %v1681 = vpack.c.bf16 %v1675, %v1676
        %v1682 = vpack.c.bf16 %v1673, %v1674
        %v1683 = vpack.c.bf16 %v1671, %v1672
        %v1684 = vpack.c.bf16 %v1669, %v1670
        %v1685 = vpack.c.bf16 %v1667, %v1668
        %v1686 = vpack.c.bf16 %v1665, %v1666
        %v1687 = vpack.c.bf16 %v1663, %v1664
        %v1688 = vpack.c.bf16 %v1661, %v1662
        %v1689 = vpack.c.bf16 %v1659, %v1660
        %v1690 = vpack.c.bf16 %v1657, %v1658
        %v1691 = vpack.c.bf16 %v1655, %v1656
        %v1692 = vpack.c.bf16 %v1653, %v1654
        %v1693 = vpack.c.bf16 %v1651, %v1652
        %v1694 = vpack.c.bf16 %v1649, %v1650
        %v1695 = vpack.c.bf16 %v1679, %v1648
        %s1696 = scalar_lea.vmem [#allocation2], 320
        %v1697 = vld [vmem:[%s1696] sm:$0xf]
        %v1698 = vld [vmem:[%s1696 + $0x4] sm:$0xf]
        %v1699 = vld [vmem:[%s1696 + $0x8] sm:$0xf]
        %v1700 = vld [vmem:[%s1696 + $0xc] sm:$0xf]
        %v1701 = vld [vmem:[%s1696 + $0x10] sm:$0xf]
        %v1702 = vld [vmem:[%s1696 + $0x14] sm:$0xf]
        %v1703 = vld [vmem:[%s1696 + $0x18] sm:$0xf]
        %v1704 = vld [vmem:[%s1696 + $0x1c] sm:$0xf]
        %v1705 = vld [vmem:[%s1696 + $0x20] sm:$0xf]
        %v1706 = vld [vmem:[%s1696 + $0x24] sm:$0xf]
        %v1707 = vld [vmem:[%s1696 + $0x28] sm:$0xf]
        %v1708 = vld [vmem:[%s1696 + $0x2c] sm:$0xf]
        %v1709 = vld [vmem:[%s1696 + $0x30] sm:$0xf]
        %v1710 = vld [vmem:[%s1696 + $0x34] sm:$0xf]
        %v1711 = vld [vmem:[%s1696 + $0x38] sm:$0xf]
        %v1712 = vld [vmem:[%s1696 + $0x3c] sm:$0xf]
        %v1729 = vunpack.c.l.b16 %v1697
        %v1730 = vunpack.c.l.b16 %v1698
        %v1731 = vunpack.c.l.b16 %v1699
        %v1732 = vunpack.c.l.b16 %v1700
        %v1733 = vunpack.c.l.b16 %v1701
        %v1734 = vunpack.c.l.b16 %v1702
        %v1735 = vunpack.c.l.b16 %v1703
        %v1736 = vunpack.c.l.b16 %v1704
        %v1737 = vunpack.c.l.b16 %v1705
        %v1738 = vunpack.c.l.b16 %v1706
        %v1739 = vunpack.c.l.b16 %v1707
        %v1740 = vunpack.c.l.b16 %v1708
        %v1741 = vunpack.c.l.b16 %v1709
        %v1742 = vunpack.c.l.b16 %v1710
        %v1743 = vunpack.c.l.b16 %v1711
        %v1744 = vunpack.c.l.b16 %v1712
        %v1745 = vpack.c.b16 %v1730, %v1729
        %v1746 = vpack.c.b16 %v1732, %v1731
        %v1747 = vpack.c.b16 %v1734, %v1733
        %v1748 = vpack.c.b16 %v1736, %v1735
        %v1749 = vpack.c.b16 %v1738, %v1737
        %v1750 = vpack.c.b16 %v1740, %v1739
        %v1751 = vpack.c.b16 %v1742, %v1741
        %v1752 = vpack.c.b16 %v1744, %v1743
        %1761 = vmatpush.bf16.msra.mxu0 %v1752
        %1762 = vmatpush.bf16.msra.mxu0 %v1751
        %1763 = vmatpush.bf16.msra.mxu0 %v1750
        %1764 = vmatpush.bf16.msra.mxu0 %v1749
        %1765 = vmatpush.bf16.msra.mxu0 %v1748
        %1766 = vmatpush.bf16.msra.mxu0 %v1747
        %1767 = vmatpush.bf16.msra.mxu0 %v1746
        %1768 = vmatpush.bf16.msra.mxu0 %v1745
        %1769 = vmatmul.bf16.gmra.mxu0 %v1680
        %v1770 = vpop.f32.mrf.mxu0
        %v1771 = vadd.f32 0.0, %v1770
        %v1772 = vpop.f32.mrf.mxu0
        %v1773 = vadd.f32 0.0, %v1772
        %1774 = vmatmul.bf16.gmra.mxu0 %v1681
        %v1775 = vpop.f32.mrf.mxu0
        %v1776 = vadd.f32 0.0, %v1775
        %v1777 = vpop.f32.mrf.mxu0
        %v1778 = vadd.f32 0.0, %v1777
        %1779 = vmatmul.bf16.gmra.mxu0 %v1682
        %v1780 = vpop.f32.mrf.mxu0
        %v1781 = vadd.f32 0.0, %v1780
        %v1782 = vpop.f32.mrf.mxu0
        %v1783 = vadd.f32 0.0, %v1782
        %1784 = vmatmul.bf16.gmra.mxu0 %v1683
        %v1785 = vpop.f32.mrf.mxu0
        %v1786 = vadd.f32 0.0, %v1785
        %v1787 = vpop.f32.mrf.mxu0
        %v1788 = vadd.f32 0.0, %v1787
        %1789 = vmatmul.bf16.gmra.mxu0 %v1684
        %v1790 = vpop.f32.mrf.mxu0
        %v1791 = vadd.f32 0.0, %v1790
        %v1792 = vpop.f32.mrf.mxu0
        %v1793 = vadd.f32 0.0, %v1792
        %1794 = vmatmul.bf16.gmra.mxu0 %v1685
        %v1795 = vpop.f32.mrf.mxu0
        %v1796 = vadd.f32 0.0, %v1795
        %v1797 = vpop.f32.mrf.mxu0
        %v1798 = vadd.f32 0.0, %v1797
        %1799 = vmatmul.bf16.gmra.mxu0 %v1686
        %v1800 = vpop.f32.mrf.mxu0
        %v1801 = vadd.f32 0.0, %v1800
        %v1802 = vpop.f32.mrf.mxu0
        %v1803 = vadd.f32 0.0, %v1802
        %1804 = vmatmul.bf16.gmra.mxu0 %v1687
        %v1805 = vpop.f32.mrf.mxu0
        %v1806 = vadd.f32 0.0, %v1805
        %v1807 = vpop.f32.mrf.mxu0
        %v1808 = vadd.f32 0.0, %v1807
        %1809 = vmatmul.bf16.gmra.mxu0 %v1688
        %v1810 = vpop.f32.mrf.mxu0
        %v1811 = vadd.f32 0.0, %v1810
        %v1812 = vpop.f32.mrf.mxu0
        %v1813 = vadd.f32 0.0, %v1812
        %1814 = vmatmul.bf16.gmra.mxu0 %v1689
        %v1815 = vpop.f32.mrf.mxu0
        %v1816 = vadd.f32 0.0, %v1815
        %v1817 = vpop.f32.mrf.mxu0
        %v1818 = vadd.f32 0.0, %v1817
        %1819 = vmatmul.bf16.gmra.mxu0 %v1690
        %v1820 = vpop.f32.mrf.mxu0
        %v1821 = vadd.f32 0.0, %v1820
        %v1822 = vpop.f32.mrf.mxu0
        %v1823 = vadd.f32 0.0, %v1822
        %1824 = vmatmul.bf16.gmra.mxu0 %v1691
        %v1825 = vpop.f32.mrf.mxu0
        %v1826 = vadd.f32 0.0, %v1825
        %v1827 = vpop.f32.mrf.mxu0
        %v1828 = vadd.f32 0.0, %v1827
        %1829 = vmatmul.bf16.gmra.mxu0 %v1692
        %v1830 = vpop.f32.mrf.mxu0
        %v1831 = vadd.f32 0.0, %v1830
        %v1832 = vpop.f32.mrf.mxu0
        %v1833 = vadd.f32 0.0, %v1832
        %1834 = vmatmul.bf16.gmra.mxu0 %v1693
        %v1835 = vpop.f32.mrf.mxu0
        %v1836 = vadd.f32 0.0, %v1835
        %v1837 = vpop.f32.mrf.mxu0
        %v1838 = vadd.f32 0.0, %v1837
        %1839 = vmatmul.bf16.gmra.mxu0 %v1694
        %v1840 = vpop.f32.mrf.mxu0
        %v1841 = vadd.f32 0.0, %v1840
        %v1842 = vpop.f32.mrf.mxu0
        %v1843 = vadd.f32 0.0, %v1842
        %1844 = vmatmul.bf16.gmra.mxu0 %v1695
        %v1845 = vpop.f32.mrf.mxu0
        %v1846 = vadd.f32 0.0, %v1845
        %v1847 = vpop.f32.mrf.mxu0
        %v1848 = vadd.f32 0.0, %v1847
        %1849 = vdwg.mxu0
        %v1850 = vadd.f32 %v1583, %v1771
        %v1851 = vadd.f32 %v1584, %v1773
        %v1852 = vadd.f32 %v1585, %v1776
        %v1853 = vadd.f32 %v1586, %v1778
        %v1854 = vadd.f32 %v1587, %v1781
        %v1855 = vadd.f32 %v1588, %v1783
        %v1856 = vadd.f32 %v1589, %v1786
        %v1857 = vadd.f32 %v1590, %v1788
        %v1858 = vadd.f32 %v1591, %v1791
        %v1859 = vadd.f32 %v1592, %v1793
        %v1860 = vadd.f32 %v1593, %v1796
        %v1861 = vadd.f32 %v1594, %v1798
        %v1862 = vadd.f32 %v1595, %v1801
        %v1863 = vadd.f32 %v1596, %v1803
        %v1864 = vadd.f32 %v1597, %v1806
        %v1865 = vadd.f32 %v1598, %v1808
        %v1866 = vadd.f32 %v1599, %v1811
        %v1867 = vadd.f32 %v1600, %v1813
        %v1868 = vadd.f32 %v1601, %v1816
        %v1869 = vadd.f32 %v1602, %v1818
        %v1870 = vadd.f32 %v1603, %v1821
        %v1871 = vadd.f32 %v1604, %v1823
        %v1872 = vadd.f32 %v1605, %v1826
        %v1873 = vadd.f32 %v1606, %v1828
        %v1874 = vadd.f32 %v1607, %v1831
        %v1875 = vadd.f32 %v1608, %v1833
        %v1876 = vadd.f32 %v1609, %v1836
        %v1877 = vadd.f32 %v1610, %v1838
        %v1878 = vadd.f32 %v1611, %v1841
        %v1879 = vadd.f32 %v1612, %v1843
        %v1880 = vadd.f32 %v1613, %v1846
        %v1881 = vadd.f32 %v1614, %v1848
        %v1882 = vld [vmem:[#allocation4] sm:$0x1]
        %v1884 = vperm.slane %v1882, 0
        %v1886 = vadd.f32 %v1850, %v1884
        %v1887 = vadd.f32 %v1851, %v1884
        %v1888 = vadd.f32 %v1852, %v1884
        %v1889 = vadd.f32 %v1853, %v1884
        %v1890 = vadd.f32 %v1854, %v1884
        %v1891 = vadd.f32 %v1855, %v1884
        %v1892 = vadd.f32 %v1856, %v1884
        %v1893 = vadd.f32 %v1857, %v1884
        %v1894 = vadd.f32 %v1858, %v1884
        %v1895 = vadd.f32 %v1859, %v1884
        %v1896 = vadd.f32 %v1860, %v1884
        %v1897 = vadd.f32 %v1861, %v1884
        %v1898 = vadd.f32 %v1862, %v1884
        %v1899 = vadd.f32 %v1863, %v1884
        %v1900 = vadd.f32 %v1864, %v1884
        %v1901 = vadd.f32 %v1865, %v1884
        %v1902 = vadd.f32 %v1866, %v1884
        %v1903 = vadd.f32 %v1867, %v1884
        %v1904 = vadd.f32 %v1868, %v1884
        %v1905 = vadd.f32 %v1869, %v1884
        %v1906 = vadd.f32 %v1870, %v1884
        %v1907 = vadd.f32 %v1871, %v1884
        %v1908 = vadd.f32 %v1872, %v1884
        %v1909 = vadd.f32 %v1873, %v1884
        %v1910 = vadd.f32 %v1874, %v1884
        %v1911 = vadd.f32 %v1875, %v1884
        %v1912 = vadd.f32 %v1876, %v1884
        %v1913 = vadd.f32 %v1877, %v1884
        %v1914 = vadd.f32 %v1878, %v1884
        %v1915 = vadd.f32 %v1879, %v1884
        %v1916 = vadd.f32 %v1880, %v1884
        %v1917 = vadd.f32 %v1881, %v1884
        %v1918 = vmax.f32 %v1886, 0.0
        %v1919 = vmax.f32 %v1887, 0.0
        %v1920 = vmax.f32 %v1888, 0.0
        %v1921 = vmax.f32 %v1889, 0.0
        %v1922 = vmax.f32 %v1890, 0.0
        %v1923 = vmax.f32 %v1891, 0.0
        %v1924 = vmax.f32 %v1892, 0.0
        %v1925 = vmax.f32 %v1893, 0.0
        %v1926 = vmax.f32 %v1894, 0.0
        %v1927 = vmax.f32 %v1895, 0.0
        %v1928 = vmax.f32 %v1896, 0.0
        %v1929 = vmax.f32 %v1897, 0.0
        %v1930 = vmax.f32 %v1898, 0.0
        %v1931 = vmax.f32 %v1899, 0.0
        %v1932 = vmax.f32 %v1900, 0.0
        %v1933 = vmax.f32 %v1901, 0.0
        %v1934 = vmax.f32 %v1902, 0.0
        %v1935 = vmax.f32 %v1903, 0.0
        %v1936 = vmax.f32 %v1904, 0.0
        %v1937 = vmax.f32 %v1905, 0.0
        %v1938 = vmax.f32 %v1906, 0.0
        %v1939 = vmax.f32 %v1907, 0.0
        %v1940 = vmax.f32 %v1908, 0.0
        %v1941 = vmax.f32 %v1909, 0.0
        %v1942 = vmax.f32 %v1910, 0.0
        %v1943 = vmax.f32 %v1911, 0.0
        %v1944 = vmax.f32 %v1912, 0.0
        %v1945 = vmax.f32 %v1913, 0.0
        %v1946 = vmax.f32 %v1914, 0.0
        %v1947 = vmax.f32 %v1915, 0.0
        %v1948 = vmax.f32 %v1916, 0.0
        %v1949 = vmax.f32 %v1917, 0.0
        %v1950 = vrot.slane %v1918, 1
        %v1951 = vrot.slane %v1919, 1
        %v1952 = vrot.slane %v1920, 1
        %v1953 = vrot.slane %v1921, 1
        %v1954 = vrot.slane %v1922, 1
        %v1955 = vrot.slane %v1923, 1
        %v1956 = vrot.slane %v1924, 1
        %v1957 = vrot.slane %v1925, 1
        %v1958 = vrot.slane %v1926, 1
        %v1959 = vrot.slane %v1927, 1
        %v1960 = vrot.slane %v1928, 1
        %v1961 = vrot.slane %v1929, 1
        %v1962 = vrot.slane %v1930, 1
        %v1963 = vrot.slane %v1931, 1
        %v1964 = vrot.slane %v1932, 1
        %v1965 = vrot.slane %v1933, 1
        %v1966 = vrot.slane %v1934, 1
        %v1967 = vrot.slane %v1935, 1
        %v1968 = vrot.slane %v1936, 1
        %v1969 = vrot.slane %v1937, 1
        %v1970 = vrot.slane %v1938, 1
        %v1971 = vrot.slane %v1939, 1
        %v1972 = vrot.slane %v1940, 1
        %v1973 = vrot.slane %v1941, 1
        %v1974 = vrot.slane %v1942, 1
        %v1975 = vrot.slane %v1943, 1
        %v1976 = vrot.slane %v1944, 1
        %v1977 = vrot.slane %v1945, 1
        %v1978 = vrot.slane %v1946, 1
        %v1979 = vrot.slane %v1947, 1
        %v1980 = vrot.slane %v1948, 1
        %v1981 = vrot.slane %v1949, 1
        %v1982 = vsel %vm474, %v1980, %v1981
        %v1983 = vsel %vm474, %v1979, %v1980
        %v1984 = vsel %vm474, %v1978, %v1979
        %v1985 = vsel %vm474, %v1977, %v1978
        %v1986 = vsel %vm474, %v1976, %v1977
        %v1987 = vsel %vm474, %v1975, %v1976
        %v1988 = vsel %vm474, %v1974, %v1975
        %v1989 = vsel %vm474, %v1973, %v1974
        %v1990 = vsel %vm474, %v1972, %v1973
        %v1991 = vsel %vm474, %v1971, %v1972
        %v1992 = vsel %vm474, %v1970, %v1971
        %v1993 = vsel %vm474, %v1969, %v1970
        %v1994 = vsel %vm474, %v1968, %v1969
        %v1995 = vsel %vm474, %v1967, %v1968
        %v1996 = vsel %vm474, %v1966, %v1967
        %v1997 = vsel %vm474, %v1965, %v1966
        %v1998 = vsel %vm474, %v1964, %v1965
        %v1999 = vsel %vm474, %v1963, %v1964
        %v2000 = vsel %vm474, %v1962, %v1963
        %v2001 = vsel %vm474, %v1961, %v1962
        %v2002 = vsel %vm474, %v1960, %v1961
        %v2003 = vsel %vm474, %v1959, %v1960
        %v2004 = vsel %vm474, %v1958, %v1959
        %v2005 = vsel %vm474, %v1957, %v1958
        %v2006 = vsel %vm474, %v1956, %v1957
        %v2007 = vsel %vm474, %v1955, %v1956
        %v2008 = vsel %vm474, %v1954, %v1955
        %v2009 = vsel %vm474, %v1953, %v1954
        %v2010 = vsel %vm474, %v1952, %v1953
        %v2011 = vsel %vm474, %v1951, %v1952
        %v2012 = vsel %vm474, %v1950, %v1951
        %v2013 = vsel %vm474, %v1981, %v1950
        %v2014 = vmax.f32 %v1918, %v2012
        %v2015 = vmax.f32 %v1919, %v2011
        %v2016 = vmax.f32 %v1920, %v2010
        %v2017 = vmax.f32 %v1921, %v2009
        %v2018 = vmax.f32 %v1922, %v2008
        %v2019 = vmax.f32 %v1923, %v2007
        %v2020 = vmax.f32 %v1924, %v2006
        %v2021 = vmax.f32 %v1925, %v2005
        %v2022 = vmax.f32 %v1926, %v2004
        %v2023 = vmax.f32 %v1927, %v2003
        %v2024 = vmax.f32 %v1928, %v2002
        %v2025 = vmax.f32 %v1929, %v2001
        %v2026 = vmax.f32 %v1930, %v2000
        %v2027 = vmax.f32 %v1931, %v1999
        %v2028 = vmax.f32 %v1932, %v1998
        %v2029 = vmax.f32 %v1933, %v1997
        %v2030 = vmax.f32 %v1934, %v1996
        %v2031 = vmax.f32 %v1935, %v1995
        %v2032 = vmax.f32 %v1936, %v1994
        %v2033 = vmax.f32 %v1937, %v1993
        %v2034 = vmax.f32 %v1938, %v1992
        %v2035 = vmax.f32 %v1939, %v1991
        %v2036 = vmax.f32 %v1940, %v1990
        %v2037 = vmax.f32 %v1941, %v1989
        %v2038 = vmax.f32 %v1942, %v1988
        %v2039 = vmax.f32 %v1943, %v1987
        %v2040 = vmax.f32 %v1944, %v1986
        %v2041 = vmax.f32 %v1945, %v1985
        %v2042 = vmax.f32 %v1946, %v1984
        %v2043 = vmax.f32 %v1947, %v1983
        %v2044 = vmax.f32 %v1948, %v1982
        %v2045 = vmax.f32 %v1949, %v2013
        %v2046 = vrot.slane %v1918, 2
        %v2047 = vrot.slane %v1919, 2
        %v2048 = vrot.slane %v1920, 2
        %v2049 = vrot.slane %v1921, 2
        %v2050 = vrot.slane %v1922, 2
        %v2051 = vrot.slane %v1923, 2
        %v2052 = vrot.slane %v1924, 2
        %v2053 = vrot.slane %v1925, 2
        %v2054 = vrot.slane %v1926, 2
        %v2055 = vrot.slane %v1927, 2
        %v2056 = vrot.slane %v1928, 2
        %v2057 = vrot.slane %v1929, 2
        %v2058 = vrot.slane %v1930, 2
        %v2059 = vrot.slane %v1931, 2
        %v2060 = vrot.slane %v1932, 2
        %v2061 = vrot.slane %v1933, 2
        %v2062 = vrot.slane %v1934, 2
        %v2063 = vrot.slane %v1935, 2
        %v2064 = vrot.slane %v1936, 2
        %v2065 = vrot.slane %v1937, 2
        %v2066 = vrot.slane %v1938, 2
        %v2067 = vrot.slane %v1939, 2
        %v2068 = vrot.slane %v1940, 2
        %v2069 = vrot.slane %v1941, 2
        %v2070 = vrot.slane %v1942, 2
        %v2071 = vrot.slane %v1943, 2
        %v2072 = vrot.slane %v1944, 2
        %v2073 = vrot.slane %v1945, 2
        %v2074 = vrot.slane %v1946, 2
        %v2075 = vrot.slane %v1947, 2
        %v2076 = vrot.slane %v1948, 2
        %v2077 = vrot.slane %v1949, 2
        %v2078 = vsel %vm846, %v2076, %v2077
        %v2079 = vsel %vm846, %v2075, %v2076
        %v2080 = vsel %vm846, %v2074, %v2075
        %v2081 = vsel %vm846, %v2073, %v2074
        %v2082 = vsel %vm846, %v2072, %v2073
        %v2083 = vsel %vm846, %v2071, %v2072
        %v2084 = vsel %vm846, %v2070, %v2071
        %v2085 = vsel %vm846, %v2069, %v2070
        %v2086 = vsel %vm846, %v2068, %v2069
        %v2087 = vsel %vm846, %v2067, %v2068
        %v2088 = vsel %vm846, %v2066, %v2067
        %v2089 = vsel %vm846, %v2065, %v2066
        %v2090 = vsel %vm846, %v2064, %v2065
        %v2091 = vsel %vm846, %v2063, %v2064
        %v2092 = vsel %vm846, %v2062, %v2063
        %v2093 = vsel %vm846, %v2061, %v2062
        %v2094 = vsel %vm846, %v2060, %v2061
        %v2095 = vsel %vm846, %v2059, %v2060
        %v2096 = vsel %vm846, %v2058, %v2059
        %v2097 = vsel %vm846, %v2057, %v2058
        %v2098 = vsel %vm846, %v2056, %v2057
        %v2099 = vsel %vm846, %v2055, %v2056
        %v2100 = vsel %vm846, %v2054, %v2055
        %v2101 = vsel %vm846, %v2053, %v2054
        %v2102 = vsel %vm846, %v2052, %v2053
        %v2103 = vsel %vm846, %v2051, %v2052
        %v2104 = vsel %vm846, %v2050, %v2051
        %v2105 = vsel %vm846, %v2049, %v2050
        %v2106 = vsel %vm846, %v2048, %v2049
        %v2107 = vsel %vm846, %v2047, %v2048
        %v2108 = vsel %vm846, %v2046, %v2047
        %v2109 = vsel %vm846, %v2077, %v2046
        %v2110 = vmax.f32 %v2014, %v2108
        %v2111 = vmax.f32 %v2015, %v2107
        %v2112 = vmax.f32 %v2016, %v2106
        %v2113 = vmax.f32 %v2017, %v2105
        %v2114 = vmax.f32 %v2018, %v2104
        %v2115 = vmax.f32 %v2019, %v2103
        %v2116 = vmax.f32 %v2020, %v2102
        %v2117 = vmax.f32 %v2021, %v2101
        %v2118 = vmax.f32 %v2022, %v2100
        %v2119 = vmax.f32 %v2023, %v2099
        %v2120 = vmax.f32 %v2024, %v2098
        %v2121 = vmax.f32 %v2025, %v2097
        %v2122 = vmax.f32 %v2026, %v2096
        %v2123 = vmax.f32 %v2027, %v2095
        %v2124 = vmax.f32 %v2028, %v2094
        %v2125 = vmax.f32 %v2029, %v2093
        %v2126 = vmax.f32 %v2030, %v2092
        %v2127 = vmax.f32 %v2031, %v2091
        %v2128 = vmax.f32 %v2032, %v2090
        %v2129 = vmax.f32 %v2033, %v2089
        %v2130 = vmax.f32 %v2034, %v2088
        %v2131 = vmax.f32 %v2035, %v2087
        %v2132 = vmax.f32 %v2036, %v2086
        %v2133 = vmax.f32 %v2037, %v2085
        %v2134 = vmax.f32 %v2038, %v2084
        %v2135 = vmax.f32 %v2039, %v2083
        %v2136 = vmax.f32 %v2040, %v2082
        %v2137 = vmax.f32 %v2041, %v2081
        %v2138 = vmax.f32 %v2042, %v2080
        %v2139 = vmax.f32 %v2043, %v2079
        %v2140 = vmax.f32 %v2044, %v2078
        %v2141 = vmax.f32 %v2045, %v2109
        %v2142 = vpack.c.bf16 %v2111, %v2110
        %v2143 = vpack.c.bf16 %v2113, %v2112
        %v2144 = vpack.c.bf16 %v2115, %v2114
        %v2145 = vpack.c.bf16 %v2117, %v2116
        %v2146 = vpack.c.bf16 %v2119, %v2118
        %v2147 = vpack.c.bf16 %v2121, %v2120
        %v2148 = vpack.c.bf16 %v2123, %v2122
        %v2149 = vpack.c.bf16 %v2125, %v2124
        %v2150 = vpack.c.bf16 %v2127, %v2126
        %v2151 = vpack.c.bf16 %v2129, %v2128
        %v2152 = vpack.c.bf16 %v2131, %v2130
        %v2153 = vpack.c.bf16 %v2133, %v2132
        %v2154 = vpack.c.bf16 %v2135, %v2134
        %v2155 = vpack.c.bf16 %v2137, %v2136
        %v2156 = vpack.c.bf16 %v2139, %v2138
        %v2157 = vpack.c.bf16 %v2141, %v2140
        %v2158 = vld [vmem:[#allocation6] sm:$0xf]
        %v2159 = vld [vmem:[#allocation6 + $0x4] sm:$0xf]
        %v2160 = vld [vmem:[#allocation6 + $0x8] sm:$0xf]
        %v2161 = vld [vmem:[#allocation6 + $0xc] sm:$0xf]
        %v2162 = vld [vmem:[#allocation6 + $0x10] sm:$0xf]
        %v2163 = vld [vmem:[#allocation6 + $0x14] sm:$0xf]
        %v2164 = vld [vmem:[#allocation6 + $0x18] sm:$0xf]
        %v2165 = vld [vmem:[#allocation6 + $0x1c] sm:$0xf]
        %v2166 = vld [vmem:[#allocation6 + $0x20] sm:$0xf]
        %v2167 = vld [vmem:[#allocation6 + $0x24] sm:$0xf]
        %v2168 = vld [vmem:[#allocation6 + $0x28] sm:$0xf]
        %v2169 = vld [vmem:[#allocation6 + $0x2c] sm:$0xf]
        %v2170 = vld [vmem:[#allocation6 + $0x30] sm:$0xf]
        %v2171 = vld [vmem:[#allocation6 + $0x34] sm:$0xf]
        %v2172 = vld [vmem:[#allocation6 + $0x38] sm:$0xf]
        %v2173 = vld [vmem:[#allocation6 + $0x3c] sm:$0xf]
        %v2174 = vrot.slane %v2110, 1
        %v2175 = vrot.slane %v2111, 1
        %v2176 = vrot.slane %v2112, 1
        %v2177 = vrot.slane %v2113, 1
        %v2178 = vrot.slane %v2114, 1
        %v2179 = vrot.slane %v2115, 1
        %v2180 = vrot.slane %v2116, 1
        %v2181 = vrot.slane %v2117, 1
        %v2182 = vrot.slane %v2118, 1
        %v2183 = vrot.slane %v2119, 1
        %v2184 = vrot.slane %v2120, 1
        %v2185 = vrot.slane %v2121, 1
        %v2186 = vrot.slane %v2122, 1
        %v2187 = vrot.slane %v2123, 1
        %v2188 = vrot.slane %v2124, 1
        %v2189 = vrot.slane %v2125, 1
        %v2190 = vrot.slane %v2126, 1
        %v2191 = vrot.slane %v2127, 1
        %v2192 = vrot.slane %v2128, 1
        %v2193 = vrot.slane %v2129, 1
        %v2194 = vrot.slane %v2130, 1
        %v2195 = vrot.slane %v2131, 1
        %v2196 = vrot.slane %v2132, 1
        %v2197 = vrot.slane %v2133, 1
        %v2198 = vrot.slane %v2134, 1
        %v2199 = vrot.slane %v2135, 1
        %v2200 = vrot.slane %v2136, 1
        %v2201 = vrot.slane %v2137, 1
        %v2202 = vrot.slane %v2138, 1
        %v2203 = vrot.slane %v2139, 1
        %v2204 = vrot.slane %v2140, 1
        %v2205 = vrot.slane %v2141, 1
        %v2206 = vsel %vm474, %v2204, %v2205
        %v2207 = vsel %vm474, %v2203, %v2204
        %v2208 = vsel %vm474, %v2202, %v2203
        %v2209 = vsel %vm474, %v2201, %v2202
        %v2210 = vsel %vm474, %v2200, %v2201
        %v2211 = vsel %vm474, %v2199, %v2200
        %v2212 = vsel %vm474, %v2198, %v2199
        %v2213 = vsel %vm474, %v2197, %v2198
        %v2214 = vsel %vm474, %v2196, %v2197
        %v2215 = vsel %vm474, %v2195, %v2196
        %v2216 = vsel %vm474, %v2194, %v2195
        %v2217 = vsel %vm474, %v2193, %v2194
        %v2218 = vsel %vm474, %v2192, %v2193
        %v2219 = vsel %vm474, %v2191, %v2192
        %v2220 = vsel %vm474, %v2190, %v2191
        %v2221 = vsel %vm474, %v2189, %v2190
        %v2222 = vsel %vm474, %v2188, %v2189
        %v2223 = vsel %vm474, %v2187, %v2188
        %v2224 = vsel %vm474, %v2186, %v2187
        %v2225 = vsel %vm474, %v2185, %v2186
        %v2226 = vsel %vm474, %v2184, %v2185
        %v2227 = vsel %vm474, %v2183, %v2184
        %v2228 = vsel %vm474, %v2182, %v2183
        %v2229 = vsel %vm474, %v2181, %v2182
        %v2230 = vsel %vm474, %v2180, %v2181
        %v2231 = vsel %vm474, %v2179, %v2180
        %v2232 = vsel %vm474, %v2178, %v2179
        %v2233 = vsel %vm474, %v2177, %v2178
        %v2234 = vsel %vm474, %v2176, %v2177
        %v2235 = vsel %vm474, %v2175, %v2176
        %v2236 = vsel %vm474, %v2174, %v2175
        %v2237 = vsel %vm474, %v2205, %v2174
        %v2238 = vpack.c.bf16 %v2235, %v2236
        %v2239 = vpack.c.bf16 %v2233, %v2234
        %v2240 = vpack.c.bf16 %v2231, %v2232
        %v2241 = vpack.c.bf16 %v2229, %v2230
        %v2242 = vpack.c.bf16 %v2227, %v2228
        %v2243 = vpack.c.bf16 %v2225, %v2226
        %v2244 = vpack.c.bf16 %v2223, %v2224
        %v2245 = vpack.c.bf16 %v2221, %v2222
        %v2246 = vpack.c.bf16 %v2219, %v2220
        %v2247 = vpack.c.bf16 %v2217, %v2218
        %v2248 = vpack.c.bf16 %v2215, %v2216
        %v2249 = vpack.c.bf16 %v2213, %v2214
        %v2250 = vpack.c.bf16 %v2211, %v2212
        %v2251 = vpack.c.bf16 %v2209, %v2210
        %v2252 = vpack.c.bf16 %v2207, %v2208
        %v2253 = vpack.c.bf16 %v2237, %v2206
        %s2254 = scalar_lea.vmem [#allocation6], 64
        %v2255 = vld [vmem:[%s2254] sm:$0xf]
        %v2256 = vld [vmem:[%s2254 + $0x4] sm:$0xf]
        %v2257 = vld [vmem:[%s2254 + $0x8] sm:$0xf]
        %v2258 = vld [vmem:[%s2254 + $0xc] sm:$0xf]
        %v2259 = vld [vmem:[%s2254 + $0x10] sm:$0xf]
        %v2260 = vld [vmem:[%s2254 + $0x14] sm:$0xf]
        %v2261 = vld [vmem:[%s2254 + $0x18] sm:$0xf]
        %v2262 = vld [vmem:[%s2254 + $0x1c] sm:$0xf]
        %v2263 = vld [vmem:[%s2254 + $0x20] sm:$0xf]
        %v2264 = vld [vmem:[%s2254 + $0x24] sm:$0xf]
        %v2265 = vld [vmem:[%s2254 + $0x28] sm:$0xf]
        %v2266 = vld [vmem:[%s2254 + $0x2c] sm:$0xf]
        %v2267 = vld [vmem:[%s2254 + $0x30] sm:$0xf]
        %v2268 = vld [vmem:[%s2254 + $0x34] sm:$0xf]
        %v2269 = vld [vmem:[%s2254 + $0x38] sm:$0xf]
        %v2270 = vld [vmem:[%s2254 + $0x3c] sm:$0xf]
        %v2287 = vunpack.c.l.b16 %v2255
        %v2288 = vunpack.c.l.b16 %v2256
        %v2289 = vunpack.c.l.b16 %v2257
        %v2290 = vunpack.c.l.b16 %v2258
        %v2291 = vunpack.c.l.b16 %v2259
        %v2292 = vunpack.c.l.b16 %v2260
        %v2293 = vunpack.c.l.b16 %v2261
        %v2294 = vunpack.c.l.b16 %v2262
        %v2295 = vunpack.c.l.b16 %v2263
        %v2296 = vunpack.c.l.b16 %v2264
        %v2297 = vunpack.c.l.b16 %v2265
        %v2298 = vunpack.c.l.b16 %v2266
        %v2299 = vunpack.c.l.b16 %v2267
        %v2300 = vunpack.c.l.b16 %v2268
        %v2301 = vunpack.c.l.b16 %v2269
        %v2302 = vunpack.c.l.b16 %v2270
        %v2303 = vpack.c.b16 %v2288, %v2287
        %v2304 = vpack.c.b16 %v2290, %v2289
        %v2305 = vpack.c.b16 %v2292, %v2291
        %v2306 = vpack.c.b16 %v2294, %v2293
        %v2307 = vpack.c.b16 %v2296, %v2295
        %v2308 = vpack.c.b16 %v2298, %v2297
        %v2309 = vpack.c.b16 %v2300, %v2299
        %v2310 = vpack.c.b16 %v2302, %v2301
        %2319 = vmatpush.bf16.msra.mxu0 %v2310
        %2320 = vmatpush.bf16.msra.mxu0 %v2309
        %2321 = vmatpush.bf16.msra.mxu0 %v2308
        %2322 = vmatpush.bf16.msra.mxu0 %v2307
        %2323 = vmatpush.bf16.msra.mxu0 %v2306
        %2324 = vmatpush.bf16.msra.mxu0 %v2305
        %2325 = vmatpush.bf16.msra.mxu0 %v2304
        %2326 = vmatpush.bf16.msra.mxu0 %v2303
        %2327 = vmatmul.bf16.gmra.mxu0 %v2238
        %v2328 = vpop.f32.mrf.mxu0
        %v2329 = vadd.f32 0.0, %v2328
        %v2330 = vpop.f32.mrf.mxu0
        %v2331 = vadd.f32 0.0, %v2330
        %2332 = vmatmul.bf16.gmra.mxu0 %v2239
        %v2333 = vpop.f32.mrf.mxu0
        %v2334 = vadd.f32 0.0, %v2333
        %v2335 = vpop.f32.mrf.mxu0
        %v2336 = vadd.f32 0.0, %v2335
        %2337 = vmatmul.bf16.gmra.mxu0 %v2240
        %v2338 = vpop.f32.mrf.mxu0
        %v2339 = vadd.f32 0.0, %v2338
        %v2340 = vpop.f32.mrf.mxu0
        %v2341 = vadd.f32 0.0, %v2340
        %2342 = vmatmul.bf16.gmra.mxu0 %v2241
        %v2343 = vpop.f32.mrf.mxu0
        %v2344 = vadd.f32 0.0, %v2343
        %v2345 = vpop.f32.mrf.mxu0
        %v2346 = vadd.f32 0.0, %v2345
        %2347 = vmatmul.bf16.gmra.mxu0 %v2242
        %v2348 = vpop.f32.mrf.mxu0
        %v2349 = vadd.f32 0.0, %v2348
        %v2350 = vpop.f32.mrf.mxu0
        %v2351 = vadd.f32 0.0, %v2350
        %2352 = vmatmul.bf16.gmra.mxu0 %v2243
        %v2353 = vpop.f32.mrf.mxu0
        %v2354 = vadd.f32 0.0, %v2353
        %v2355 = vpop.f32.mrf.mxu0
        %v2356 = vadd.f32 0.0, %v2355
        %2357 = vmatmul.bf16.gmra.mxu0 %v2244
        %v2358 = vpop.f32.mrf.mxu0
        %v2359 = vadd.f32 0.0, %v2358
        %v2360 = vpop.f32.mrf.mxu0
        %v2361 = vadd.f32 0.0, %v2360
        %2362 = vmatmul.bf16.gmra.mxu0 %v2245
        %v2363 = vpop.f32.mrf.mxu0
        %v2364 = vadd.f32 0.0, %v2363
        %v2365 = vpop.f32.mrf.mxu0
        %v2366 = vadd.f32 0.0, %v2365
        %2367 = vmatmul.bf16.gmra.mxu0 %v2246
        %v2368 = vpop.f32.mrf.mxu0
        %v2369 = vadd.f32 0.0, %v2368
        %v2370 = vpop.f32.mrf.mxu0
        %v2371 = vadd.f32 0.0, %v2370
        %2372 = vmatmul.bf16.gmra.mxu0 %v2247
        %v2373 = vpop.f32.mrf.mxu0
        %v2374 = vadd.f32 0.0, %v2373
        %v2375 = vpop.f32.mrf.mxu0
        %v2376 = vadd.f32 0.0, %v2375
        %2377 = vmatmul.bf16.gmra.mxu0 %v2248
        %v2378 = vpop.f32.mrf.mxu0
        %v2379 = vadd.f32 0.0, %v2378
        %v2380 = vpop.f32.mrf.mxu0
        %v2381 = vadd.f32 0.0, %v2380
        %2382 = vmatmul.bf16.gmra.mxu0 %v2249
        %v2383 = vpop.f32.mrf.mxu0
        %v2384 = vadd.f32 0.0, %v2383
        %v2385 = vpop.f32.mrf.mxu0
        %v2386 = vadd.f32 0.0, %v2385
        %2387 = vmatmul.bf16.gmra.mxu0 %v2250
        %v2388 = vpop.f32.mrf.mxu0
        %v2389 = vadd.f32 0.0, %v2388
        %v2390 = vpop.f32.mrf.mxu0
        %v2391 = vadd.f32 0.0, %v2390
        %2392 = vmatmul.bf16.gmra.mxu0 %v2251
        %v2393 = vpop.f32.mrf.mxu0
        %v2394 = vadd.f32 0.0, %v2393
        %v2395 = vpop.f32.mrf.mxu0
        %v2396 = vadd.f32 0.0, %v2395
        %2397 = vmatmul.bf16.gmra.mxu0 %v2252
        %v2398 = vpop.f32.mrf.mxu0
        %v2399 = vadd.f32 0.0, %v2398
        %v2400 = vpop.f32.mrf.mxu0
        %v2401 = vadd.f32 0.0, %v2400
        %2402 = vmatmul.bf16.gmra.mxu0 %v2253
        %v2403 = vpop.f32.mrf.mxu0
        %v2404 = vadd.f32 0.0, %v2403
        %v2405 = vpop.f32.mrf.mxu0
        %v2406 = vadd.f32 0.0, %v2405
        %2407 = vdwg.mxu0
        %v2424 = vunpack.c.l.b16 %v2158
        %v2425 = vunpack.c.l.b16 %v2159
        %v2426 = vunpack.c.l.b16 %v2160
        %v2427 = vunpack.c.l.b16 %v2161
        %v2428 = vunpack.c.l.b16 %v2162
        %v2429 = vunpack.c.l.b16 %v2163
        %v2430 = vunpack.c.l.b16 %v2164
        %v2431 = vunpack.c.l.b16 %v2165
        %v2432 = vunpack.c.l.b16 %v2166
        %v2433 = vunpack.c.l.b16 %v2167
        %v2434 = vunpack.c.l.b16 %v2168
        %v2435 = vunpack.c.l.b16 %v2169
        %v2436 = vunpack.c.l.b16 %v2170
        %v2437 = vunpack.c.l.b16 %v2171
        %v2438 = vunpack.c.l.b16 %v2172
        %v2439 = vunpack.c.l.b16 %v2173
        %v2440 = vpack.c.b16 %v2425, %v2424
        %v2441 = vpack.c.b16 %v2427, %v2426
        %v2442 = vpack.c.b16 %v2429, %v2428
        %v2443 = vpack.c.b16 %v2431, %v2430
        %v2444 = vpack.c.b16 %v2433, %v2432
        %v2445 = vpack.c.b16 %v2435, %v2434
        %v2446 = vpack.c.b16 %v2437, %v2436
        %v2447 = vpack.c.b16 %v2439, %v2438
        %2456 = vmatpush.bf16.msra.mxu0 %v2447
        %2457 = vmatpush.bf16.msra.mxu0 %v2446
        %2458 = vmatpush.bf16.msra.mxu0 %v2445
        %2459 = vmatpush.bf16.msra.mxu0 %v2444
        %2460 = vmatpush.bf16.msra.mxu0 %v2443
        %2461 = vmatpush.bf16.msra.mxu0 %v2442
        %2462 = vmatpush.bf16.msra.mxu0 %v2441
        %2463 = vmatpush.bf16.msra.mxu0 %v2440
        %2464 = vmatmul.bf16.gmra.mxu0 %v2142
        %v2465 = vpop.f32.mrf.mxu0
        %v2466 = vadd.f32 %v2329, %v2465
        %v2467 = vpop.f32.mrf.mxu0
        %v2468 = vadd.f32 %v2331, %v2467
        %2469 = vmatmul.bf16.gmra.mxu0 %v2143
        %v2470 = vpop.f32.mrf.mxu0
        %v2471 = vadd.f32 %v2334, %v2470
        %v2472 = vpop.f32.mrf.mxu0
        %v2473 = vadd.f32 %v2336, %v2472
        %2474 = vmatmul.bf16.gmra.mxu0 %v2144
        %v2475 = vpop.f32.mrf.mxu0
        %v2476 = vadd.f32 %v2339, %v2475
        %v2477 = vpop.f32.mrf.mxu0
        %v2478 = vadd.f32 %v2341, %v2477
        %2479 = vmatmul.bf16.gmra.mxu0 %v2145
        %v2480 = vpop.f32.mrf.mxu0
        %v2481 = vadd.f32 %v2344, %v2480
        %v2482 = vpop.f32.mrf.mxu0
        %v2483 = vadd.f32 %v2346, %v2482
        %2484 = vmatmul.bf16.gmra.mxu0 %v2146
        %v2485 = vpop.f32.mrf.mxu0
        %v2486 = vadd.f32 %v2349, %v2485
        %v2487 = vpop.f32.mrf.mxu0
        %v2488 = vadd.f32 %v2351, %v2487
        %2489 = vmatmul.bf16.gmra.mxu0 %v2147
        %v2490 = vpop.f32.mrf.mxu0
        %v2491 = vadd.f32 %v2354, %v2490
        %v2492 = vpop.f32.mrf.mxu0
        %v2493 = vadd.f32 %v2356, %v2492
        %2494 = vmatmul.bf16.gmra.mxu0 %v2148
        %v2495 = vpop.f32.mrf.mxu0
        %v2496 = vadd.f32 %v2359, %v2495
        %v2497 = vpop.f32.mrf.mxu0
        %v2498 = vadd.f32 %v2361, %v2497
        %2499 = vmatmul.bf16.gmra.mxu0 %v2149
        %v2500 = vpop.f32.mrf.mxu0
        %v2501 = vadd.f32 %v2364, %v2500
        %v2502 = vpop.f32.mrf.mxu0
        %v2503 = vadd.f32 %v2366, %v2502
        %2504 = vmatmul.bf16.gmra.mxu0 %v2150
        %v2505 = vpop.f32.mrf.mxu0
        %v2506 = vadd.f32 %v2369, %v2505
        %v2507 = vpop.f32.mrf.mxu0
        %v2508 = vadd.f32 %v2371, %v2507
        %2509 = vmatmul.bf16.gmra.mxu0 %v2151
        %v2510 = vpop.f32.mrf.mxu0
        %v2511 = vadd.f32 %v2374, %v2510
        %v2512 = vpop.f32.mrf.mxu0
        %v2513 = vadd.f32 %v2376, %v2512
        %2514 = vmatmul.bf16.gmra.mxu0 %v2152
        %v2515 = vpop.f32.mrf.mxu0
        %v2516 = vadd.f32 %v2379, %v2515
        %v2517 = vpop.f32.mrf.mxu0
        %v2518 = vadd.f32 %v2381, %v2517
        %2519 = vmatmul.bf16.gmra.mxu0 %v2153
        %v2520 = vpop.f32.mrf.mxu0
        %v2521 = vadd.f32 %v2384, %v2520
        %v2522 = vpop.f32.mrf.mxu0
        %v2523 = vadd.f32 %v2386, %v2522
        %2524 = vmatmul.bf16.gmra.mxu0 %v2154
        %v2525 = vpop.f32.mrf.mxu0
        %v2526 = vadd.f32 %v2389, %v2525
        %v2527 = vpop.f32.mrf.mxu0
        %v2528 = vadd.f32 %v2391, %v2527
        %2529 = vmatmul.bf16.gmra.mxu0 %v2155
        %v2530 = vpop.f32.mrf.mxu0
        %v2531 = vadd.f32 %v2394, %v2530
        %v2532 = vpop.f32.mrf.mxu0
        %v2533 = vadd.f32 %v2396, %v2532
        %2534 = vmatmul.bf16.gmra.mxu0 %v2156
        %v2535 = vpop.f32.mrf.mxu0
        %v2536 = vadd.f32 %v2399, %v2535
        %v2537 = vpop.f32.mrf.mxu0
        %v2538 = vadd.f32 %v2401, %v2537
        %2539 = vmatmul.bf16.gmra.mxu0 %v2157
        %v2540 = vpop.f32.mrf.mxu0
        %v2541 = vadd.f32 %v2404, %v2540
        %v2542 = vpop.f32.mrf.mxu0
        %v2543 = vadd.f32 %v2406, %v2542
        %2544 = vdwg.mxu0
        %v2545 = vrot.slane %v2110, 2
        %v2546 = vrot.slane %v2111, 2
        %v2547 = vrot.slane %v2112, 2
        %v2548 = vrot.slane %v2113, 2
        %v2549 = vrot.slane %v2114, 2
        %v2550 = vrot.slane %v2115, 2
        %v2551 = vrot.slane %v2116, 2
        %v2552 = vrot.slane %v2117, 2
        %v2553 = vrot.slane %v2118, 2
        %v2554 = vrot.slane %v2119, 2
        %v2555 = vrot.slane %v2120, 2
        %v2556 = vrot.slane %v2121, 2
        %v2557 = vrot.slane %v2122, 2
        %v2558 = vrot.slane %v2123, 2
        %v2559 = vrot.slane %v2124, 2
        %v2560 = vrot.slane %v2125, 2
        %v2561 = vrot.slane %v2126, 2
        %v2562 = vrot.slane %v2127, 2
        %v2563 = vrot.slane %v2128, 2
        %v2564 = vrot.slane %v2129, 2
        %v2565 = vrot.slane %v2130, 2
        %v2566 = vrot.slane %v2131, 2
        %v2567 = vrot.slane %v2132, 2
        %v2568 = vrot.slane %v2133, 2
        %v2569 = vrot.slane %v2134, 2
        %v2570 = vrot.slane %v2135, 2
        %v2571 = vrot.slane %v2136, 2
        %v2572 = vrot.slane %v2137, 2
        %v2573 = vrot.slane %v2138, 2
        %v2574 = vrot.slane %v2139, 2
        %v2575 = vrot.slane %v2140, 2
        %v2576 = vrot.slane %v2141, 2
        %v2577 = vsel %vm846, %v2575, %v2576
        %v2578 = vsel %vm846, %v2574, %v2575
        %v2579 = vsel %vm846, %v2573, %v2574
        %v2580 = vsel %vm846, %v2572, %v2573
        %v2581 = vsel %vm846, %v2571, %v2572
        %v2582 = vsel %vm846, %v2570, %v2571
        %v2583 = vsel %vm846, %v2569, %v2570
        %v2584 = vsel %vm846, %v2568, %v2569
        %v2585 = vsel %vm846, %v2567, %v2568
        %v2586 = vsel %vm846, %v2566, %v2567
        %v2587 = vsel %vm846, %v2565, %v2566
        %v2588 = vsel %vm846, %v2564, %v2565
        %v2589 = vsel %vm846, %v2563, %v2564
        %v2590 = vsel %vm846, %v2562, %v2563
        %v2591 = vsel %vm846, %v2561, %v2562
        %v2592 = vsel %vm846, %v2560, %v2561
        %v2593 = vsel %vm846, %v2559, %v2560
        %v2594 = vsel %vm846, %v2558, %v2559
        %v2595 = vsel %vm846, %v2557, %v2558
        %v2596 = vsel %vm846, %v2556, %v2557
        %v2597 = vsel %vm846, %v2555, %v2556
        %v2598 = vsel %vm846, %v2554, %v2555
        %v2599 = vsel %vm846, %v2553, %v2554
        %v2600 = vsel %vm846, %v2552, %v2553
        %v2601 = vsel %vm846, %v2551, %v2552
        %v2602 = vsel %vm846, %v2550, %v2551
        %v2603 = vsel %vm846, %v2549, %v2550
        %v2604 = vsel %vm846, %v2548, %v2549
        %v2605 = vsel %vm846, %v2547, %v2548
        %v2606 = vsel %vm846, %v2546, %v2547
        %v2607 = vsel %vm846, %v2545, %v2546
        %v2608 = vsel %vm846, %v2576, %v2545
        %v2609 = vpack.c.bf16 %v2606, %v2607
        %v2610 = vpack.c.bf16 %v2604, %v2605
        %v2611 = vpack.c.bf16 %v2602, %v2603
        %v2612 = vpack.c.bf16 %v2600, %v2601
        %v2613 = vpack.c.bf16 %v2598, %v2599
        %v2614 = vpack.c.bf16 %v2596, %v2597
        %v2615 = vpack.c.bf16 %v2594, %v2595
        %v2616 = vpack.c.bf16 %v2592, %v2593
        %v2617 = vpack.c.bf16 %v2590, %v2591
        %v2618 = vpack.c.bf16 %v2588, %v2589
        %v2619 = vpack.c.bf16 %v2586, %v2587
        %v2620 = vpack.c.bf16 %v2584, %v2585
        %v2621 = vpack.c.bf16 %v2582, %v2583
        %v2622 = vpack.c.bf16 %v2580, %v2581
        %v2623 = vpack.c.bf16 %v2578, %v2579
        %v2624 = vpack.c.bf16 %v2608, %v2577
        %s2625 = scalar_lea.vmem [#allocation6], 128
        %v2626 = vld [vmem:[%s2625] sm:$0xf]
        %v2627 = vld [vmem:[%s2625 + $0x4] sm:$0xf]
        %v2628 = vld [vmem:[%s2625 + $0x8] sm:$0xf]
        %v2629 = vld [vmem:[%s2625 + $0xc] sm:$0xf]
        %v2630 = vld [vmem:[%s2625 + $0x10] sm:$0xf]
        %v2631 = vld [vmem:[%s2625 + $0x14] sm:$0xf]
        %v2632 = vld [vmem:[%s2625 + $0x18] sm:$0xf]
        %v2633 = vld [vmem:[%s2625 + $0x1c] sm:$0xf]
        %v2634 = vld [vmem:[%s2625 + $0x20] sm:$0xf]
        %v2635 = vld [vmem:[%s2625 + $0x24] sm:$0xf]
        %v2636 = vld [vmem:[%s2625 + $0x28] sm:$0xf]
        %v2637 = vld [vmem:[%s2625 + $0x2c] sm:$0xf]
        %v2638 = vld [vmem:[%s2625 + $0x30] sm:$0xf]
        %v2639 = vld [vmem:[%s2625 + $0x34] sm:$0xf]
        %v2640 = vld [vmem:[%s2625 + $0x38] sm:$0xf]
        %v2641 = vld [vmem:[%s2625 + $0x3c] sm:$0xf]
        %v2658 = vunpack.c.l.b16 %v2626
        %v2659 = vunpack.c.l.b16 %v2627
        %v2660 = vunpack.c.l.b16 %v2628
        %v2661 = vunpack.c.l.b16 %v2629
        %v2662 = vunpack.c.l.b16 %v2630
        %v2663 = vunpack.c.l.b16 %v2631
        %v2664 = vunpack.c.l.b16 %v2632
        %v2665 = vunpack.c.l.b16 %v2633
        %v2666 = vunpack.c.l.b16 %v2634
        %v2667 = vunpack.c.l.b16 %v2635
        %v2668 = vunpack.c.l.b16 %v2636
        %v2669 = vunpack.c.l.b16 %v2637
        %v2670 = vunpack.c.l.b16 %v2638
        %v2671 = vunpack.c.l.b16 %v2639
        %v2672 = vunpack.c.l.b16 %v2640
        %v2673 = vunpack.c.l.b16 %v2641
        %v2674 = vpack.c.b16 %v2659, %v2658
        %v2675 = vpack.c.b16 %v2661, %v2660
        %v2676 = vpack.c.b16 %v2663, %v2662
        %v2677 = vpack.c.b16 %v2665, %v2664
        %v2678 = vpack.c.b16 %v2667, %v2666
        %v2679 = vpack.c.b16 %v2669, %v2668
        %v2680 = vpack.c.b16 %v2671, %v2670
        %v2681 = vpack.c.b16 %v2673, %v2672
        %2690 = vmatpush.bf16.msra.mxu0 %v2681
        %2691 = vmatpush.bf16.msra.mxu0 %v2680
        %2692 = vmatpush.bf16.msra.mxu0 %v2679
        %2693 = vmatpush.bf16.msra.mxu0 %v2678
        %2694 = vmatpush.bf16.msra.mxu0 %v2677
        %2695 = vmatpush.bf16.msra.mxu0 %v2676
        %2696 = vmatpush.bf16.msra.mxu0 %v2675
        %2697 = vmatpush.bf16.msra.mxu0 %v2674
        %2698 = vmatmul.bf16.gmra.mxu0 %v2609
        %v2699 = vpop.f32.mrf.mxu0
        %v2700 = vadd.f32 0.0, %v2699
        %v2701 = vpop.f32.mrf.mxu0
        %v2702 = vadd.f32 0.0, %v2701
        %2703 = vmatmul.bf16.gmra.mxu0 %v2610
        %v2704 = vpop.f32.mrf.mxu0
        %v2705 = vadd.f32 0.0, %v2704
        %v2706 = vpop.f32.mrf.mxu0
        %v2707 = vadd.f32 0.0, %v2706
        %2708 = vmatmul.bf16.gmra.mxu0 %v2611
        %v2709 = vpop.f32.mrf.mxu0
        %v2710 = vadd.f32 0.0, %v2709
        %v2711 = vpop.f32.mrf.mxu0
        %v2712 = vadd.f32 0.0, %v2711
        %2713 = vmatmul.bf16.gmra.mxu0 %v2612
        %v2714 = vpop.f32.mrf.mxu0
        %v2715 = vadd.f32 0.0, %v2714
        %v2716 = vpop.f32.mrf.mxu0
        %v2717 = vadd.f32 0.0, %v2716
        %2718 = vmatmul.bf16.gmra.mxu0 %v2613
        %v2719 = vpop.f32.mrf.mxu0
        %v2720 = vadd.f32 0.0, %v2719
        %v2721 = vpop.f32.mrf.mxu0
        %v2722 = vadd.f32 0.0, %v2721
        %2723 = vmatmul.bf16.gmra.mxu0 %v2614
        %v2724 = vpop.f32.mrf.mxu0
        %v2725 = vadd.f32 0.0, %v2724
        %v2726 = vpop.f32.mrf.mxu0
        %v2727 = vadd.f32 0.0, %v2726
        %2728 = vmatmul.bf16.gmra.mxu0 %v2615
        %v2729 = vpop.f32.mrf.mxu0
        %v2730 = vadd.f32 0.0, %v2729
        %v2731 = vpop.f32.mrf.mxu0
        %v2732 = vadd.f32 0.0, %v2731
        %2733 = vmatmul.bf16.gmra.mxu0 %v2616
        %v2734 = vpop.f32.mrf.mxu0
        %v2735 = vadd.f32 0.0, %v2734
        %v2736 = vpop.f32.mrf.mxu0
        %v2737 = vadd.f32 0.0, %v2736
        %2738 = vmatmul.bf16.gmra.mxu0 %v2617
        %v2739 = vpop.f32.mrf.mxu0
        %v2740 = vadd.f32 0.0, %v2739
        %v2741 = vpop.f32.mrf.mxu0
        %v2742 = vadd.f32 0.0, %v2741
        %2743 = vmatmul.bf16.gmra.mxu0 %v2618
        %v2744 = vpop.f32.mrf.mxu0
        %v2745 = vadd.f32 0.0, %v2744
        %v2746 = vpop.f32.mrf.mxu0
        %v2747 = vadd.f32 0.0, %v2746
        %2748 = vmatmul.bf16.gmra.mxu0 %v2619
        %v2749 = vpop.f32.mrf.mxu0
        %v2750 = vadd.f32 0.0, %v2749
        %v2751 = vpop.f32.mrf.mxu0
        %v2752 = vadd.f32 0.0, %v2751
        %2753 = vmatmul.bf16.gmra.mxu0 %v2620
        %v2754 = vpop.f32.mrf.mxu0
        %v2755 = vadd.f32 0.0, %v2754
        %v2756 = vpop.f32.mrf.mxu0
        %v2757 = vadd.f32 0.0, %v2756
        %2758 = vmatmul.bf16.gmra.mxu0 %v2621
        %v2759 = vpop.f32.mrf.mxu0
        %v2760 = vadd.f32 0.0, %v2759
        %v2761 = vpop.f32.mrf.mxu0
        %v2762 = vadd.f32 0.0, %v2761
        %2763 = vmatmul.bf16.gmra.mxu0 %v2622
        %v2764 = vpop.f32.mrf.mxu0
        %v2765 = vadd.f32 0.0, %v2764
        %v2766 = vpop.f32.mrf.mxu0
        %v2767 = vadd.f32 0.0, %v2766
        %2768 = vmatmul.bf16.gmra.mxu0 %v2623
        %v2769 = vpop.f32.mrf.mxu0
        %v2770 = vadd.f32 0.0, %v2769
        %v2771 = vpop.f32.mrf.mxu0
        %v2772 = vadd.f32 0.0, %v2771
        %2773 = vmatmul.bf16.gmra.mxu0 %v2624
        %v2774 = vpop.f32.mrf.mxu0
        %v2775 = vadd.f32 0.0, %v2774
        %v2776 = vpop.f32.mrf.mxu0
        %v2777 = vadd.f32 0.0, %v2776
        %2778 = vdwg.mxu0
        %v2779 = vadd.f32 %v2466, %v2700
        %v2780 = vadd.f32 %v2468, %v2702
        %v2781 = vadd.f32 %v2471, %v2705
        %v2782 = vadd.f32 %v2473, %v2707
        %v2783 = vadd.f32 %v2476, %v2710
        %v2784 = vadd.f32 %v2478, %v2712
        %v2785 = vadd.f32 %v2481, %v2715
        %v2786 = vadd.f32 %v2483, %v2717
        %v2787 = vadd.f32 %v2486, %v2720
        %v2788 = vadd.f32 %v2488, %v2722
        %v2789 = vadd.f32 %v2491, %v2725
        %v2790 = vadd.f32 %v2493, %v2727
        %v2791 = vadd.f32 %v2496, %v2730
        %v2792 = vadd.f32 %v2498, %v2732
        %v2793 = vadd.f32 %v2501, %v2735
        %v2794 = vadd.f32 %v2503, %v2737
        %v2795 = vadd.f32 %v2506, %v2740
        %v2796 = vadd.f32 %v2508, %v2742
        %v2797 = vadd.f32 %v2511, %v2745
        %v2798 = vadd.f32 %v2513, %v2747
        %v2799 = vadd.f32 %v2516, %v2750
        %v2800 = vadd.f32 %v2518, %v2752
        %v2801 = vadd.f32 %v2521, %v2755
        %v2802 = vadd.f32 %v2523, %v2757
        %v2803 = vadd.f32 %v2526, %v2760
        %v2804 = vadd.f32 %v2528, %v2762
        %v2805 = vadd.f32 %v2531, %v2765
        %v2806 = vadd.f32 %v2533, %v2767
        %v2807 = vadd.f32 %v2536, %v2770
        %v2808 = vadd.f32 %v2538, %v2772
        %v2809 = vadd.f32 %v2541, %v2775
        %v2810 = vadd.f32 %v2543, %v2777
        %v2811 = vrot.slane %v2110, 3
        %v2812 = vrot.slane %v2111, 3
        %v2813 = vrot.slane %v2112, 3
        %v2814 = vrot.slane %v2113, 3
        %v2815 = vrot.slane %v2114, 3
        %v2816 = vrot.slane %v2115, 3
        %v2817 = vrot.slane %v2116, 3
        %v2818 = vrot.slane %v2117, 3
        %v2819 = vrot.slane %v2118, 3
        %v2820 = vrot.slane %v2119, 3
        %v2821 = vrot.slane %v2120, 3
        %v2822 = vrot.slane %v2121, 3
        %v2823 = vrot.slane %v2122, 3
        %v2824 = vrot.slane %v2123, 3
        %v2825 = vrot.slane %v2124, 3
        %v2826 = vrot.slane %v2125, 3
        %v2827 = vrot.slane %v2126, 3
        %v2828 = vrot.slane %v2127, 3
        %v2829 = vrot.slane %v2128, 3
        %v2830 = vrot.slane %v2129, 3
        %v2831 = vrot.slane %v2130, 3
        %v2832 = vrot.slane %v2131, 3
        %v2833 = vrot.slane %v2132, 3
        %v2834 = vrot.slane %v2133, 3
        %v2835 = vrot.slane %v2134, 3
        %v2836 = vrot.slane %v2135, 3
        %v2837 = vrot.slane %v2136, 3
        %v2838 = vrot.slane %v2137, 3
        %v2839 = vrot.slane %v2138, 3
        %v2840 = vrot.slane %v2139, 3
        %v2841 = vrot.slane %v2140, 3
        %v2842 = vrot.slane %v2141, 3
        %v2843 = vsel %vm1113, %v2841, %v2842
        %v2844 = vsel %vm1113, %v2840, %v2841
        %v2845 = vsel %vm1113, %v2839, %v2840
        %v2846 = vsel %vm1113, %v2838, %v2839
        %v2847 = vsel %vm1113, %v2837, %v2838
        %v2848 = vsel %vm1113, %v2836, %v2837
        %v2849 = vsel %vm1113, %v2835, %v2836
        %v2850 = vsel %vm1113, %v2834, %v2835
        %v2851 = vsel %vm1113, %v2833, %v2834
        %v2852 = vsel %vm1113, %v2832, %v2833
        %v2853 = vsel %vm1113, %v2831, %v2832
        %v2854 = vsel %vm1113, %v2830, %v2831
        %v2855 = vsel %vm1113, %v2829, %v2830
        %v2856 = vsel %vm1113, %v2828, %v2829
        %v2857 = vsel %vm1113, %v2827, %v2828
        %v2858 = vsel %vm1113, %v2826, %v2827
        %v2859 = vsel %vm1113, %v2825, %v2826
        %v2860 = vsel %vm1113, %v2824, %v2825
        %v2861 = vsel %vm1113, %v2823, %v2824
        %v2862 = vsel %vm1113, %v2822, %v2823
        %v2863 = vsel %vm1113, %v2821, %v2822
        %v2864 = vsel %vm1113, %v2820, %v2821
        %v2865 = vsel %vm1113, %v2819, %v2820
        %v2866 = vsel %vm1113, %v2818, %v2819
        %v2867 = vsel %vm1113, %v2817, %v2818
        %v2868 = vsel %vm1113, %v2816, %v2817
        %v2869 = vsel %vm1113, %v2815, %v2816
        %v2870 = vsel %vm1113, %v2814, %v2815
        %v2871 = vsel %vm1113, %v2813, %v2814
        %v2872 = vsel %vm1113, %v2812, %v2813
        %v2873 = vsel %vm1113, %v2811, %v2812
        %v2874 = vsel %vm1113, %v2842, %v2811
        %v2875 = vpack.c.bf16 %v2872, %v2873
        %v2876 = vpack.c.bf16 %v2870, %v2871
        %v2877 = vpack.c.bf16 %v2868, %v2869
        %v2878 = vpack.c.bf16 %v2866, %v2867
        %v2879 = vpack.c.bf16 %v2864, %v2865
        %v2880 = vpack.c.bf16 %v2862, %v2863
        %v2881 = vpack.c.bf16 %v2860, %v2861
        %v2882 = vpack.c.bf16 %v2858, %v2859
        %v2883 = vpack.c.bf16 %v2856, %v2857
        %v2884 = vpack.c.bf16 %v2854, %v2855
        %v2885 = vpack.c.bf16 %v2852, %v2853
        %v2886 = vpack.c.bf16 %v2850, %v2851
        %v2887 = vpack.c.bf16 %v2848, %v2849
        %v2888 = vpack.c.bf16 %v2846, %v2847
        %v2889 = vpack.c.bf16 %v2844, %v2845
        %v2890 = vpack.c.bf16 %v2874, %v2843
        %s2891 = scalar_lea.vmem [#allocation6], 192
        %v2892 = vld [vmem:[%s2891] sm:$0xf]
        %v2893 = vld [vmem:[%s2891 + $0x4] sm:$0xf]
        %v2894 = vld [vmem:[%s2891 + $0x8] sm:$0xf]
        %v2895 = vld [vmem:[%s2891 + $0xc] sm:$0xf]
        %v2896 = vld [vmem:[%s2891 + $0x10] sm:$0xf]
        %v2897 = vld [vmem:[%s2891 + $0x14] sm:$0xf]
        %v2898 = vld [vmem:[%s2891 + $0x18] sm:$0xf]
        %v2899 = vld [vmem:[%s2891 + $0x1c] sm:$0xf]
        %v2900 = vld [vmem:[%s2891 + $0x20] sm:$0xf]
        %v2901 = vld [vmem:[%s2891 + $0x24] sm:$0xf]
        %v2902 = vld [vmem:[%s2891 + $0x28] sm:$0xf]
        %v2903 = vld [vmem:[%s2891 + $0x2c] sm:$0xf]
        %v2904 = vld [vmem:[%s2891 + $0x30] sm:$0xf]
        %v2905 = vld [vmem:[%s2891 + $0x34] sm:$0xf]
        %v2906 = vld [vmem:[%s2891 + $0x38] sm:$0xf]
        %v2907 = vld [vmem:[%s2891 + $0x3c] sm:$0xf]
        %v2924 = vunpack.c.l.b16 %v2892
        %v2925 = vunpack.c.l.b16 %v2893
        %v2926 = vunpack.c.l.b16 %v2894
        %v2927 = vunpack.c.l.b16 %v2895
        %v2928 = vunpack.c.l.b16 %v2896
        %v2929 = vunpack.c.l.b16 %v2897
        %v2930 = vunpack.c.l.b16 %v2898
        %v2931 = vunpack.c.l.b16 %v2899
        %v2932 = vunpack.c.l.b16 %v2900
        %v2933 = vunpack.c.l.b16 %v2901
        %v2934 = vunpack.c.l.b16 %v2902
        %v2935 = vunpack.c.l.b16 %v2903
        %v2936 = vunpack.c.l.b16 %v2904
        %v2937 = vunpack.c.l.b16 %v2905
        %v2938 = vunpack.c.l.b16 %v2906
        %v2939 = vunpack.c.l.b16 %v2907
        %v2940 = vpack.c.b16 %v2925, %v2924
        %v2941 = vpack.c.b16 %v2927, %v2926
        %v2942 = vpack.c.b16 %v2929, %v2928
        %v2943 = vpack.c.b16 %v2931, %v2930
        %v2944 = vpack.c.b16 %v2933, %v2932
        %v2945 = vpack.c.b16 %v2935, %v2934
        %v2946 = vpack.c.b16 %v2937, %v2936
        %v2947 = vpack.c.b16 %v2939, %v2938
        %2956 = vmatpush.bf16.msra.mxu0 %v2947
        %2957 = vmatpush.bf16.msra.mxu0 %v2946
        %2958 = vmatpush.bf16.msra.mxu0 %v2945
        %2959 = vmatpush.bf16.msra.mxu0 %v2944
        %2960 = vmatpush.bf16.msra.mxu0 %v2943
        %2961 = vmatpush.bf16.msra.mxu0 %v2942
        %2962 = vmatpush.bf16.msra.mxu0 %v2941
        %2963 = vmatpush.bf16.msra.mxu0 %v2940
        %2964 = vmatmul.bf16.gmra.mxu0 %v2875
        %v2965 = vpop.f32.mrf.mxu0
        %v2966 = vadd.f32 0.0, %v2965
        %v2967 = vpop.f32.mrf.mxu0
        %v2968 = vadd.f32 0.0, %v2967
        %2969 = vmatmul.bf16.gmra.mxu0 %v2876
        %v2970 = vpop.f32.mrf.mxu0
        %v2971 = vadd.f32 0.0, %v2970
        %v2972 = vpop.f32.mrf.mxu0
        %v2973 = vadd.f32 0.0, %v2972
        %2974 = vmatmul.bf16.gmra.mxu0 %v2877
        %v2975 = vpop.f32.mrf.mxu0
        %v2976 = vadd.f32 0.0, %v2975
        %v2977 = vpop.f32.mrf.mxu0
        %v2978 = vadd.f32 0.0, %v2977
        %2979 = vmatmul.bf16.gmra.mxu0 %v2878
        %v2980 = vpop.f32.mrf.mxu0
        %v2981 = vadd.f32 0.0, %v2980
        %v2982 = vpop.f32.mrf.mxu0
        %v2983 = vadd.f32 0.0, %v2982
        %2984 = vmatmul.bf16.gmra.mxu0 %v2879
        %v2985 = vpop.f32.mrf.mxu0
        %v2986 = vadd.f32 0.0, %v2985
        %v2987 = vpop.f32.mrf.mxu0
        %v2988 = vadd.f32 0.0, %v2987
        %2989 = vmatmul.bf16.gmra.mxu0 %v2880
        %v2990 = vpop.f32.mrf.mxu0
        %v2991 = vadd.f32 0.0, %v2990
        %v2992 = vpop.f32.mrf.mxu0
        %v2993 = vadd.f32 0.0, %v2992
        %2994 = vmatmul.bf16.gmra.mxu0 %v2881
        %v2995 = vpop.f32.mrf.mxu0
        %v2996 = vadd.f32 0.0, %v2995
        %v2997 = vpop.f32.mrf.mxu0
        %v2998 = vadd.f32 0.0, %v2997
        %2999 = vmatmul.bf16.gmra.mxu0 %v2882
        %v3000 = vpop.f32.mrf.mxu0
        %v3001 = vadd.f32 0.0, %v3000
        %v3002 = vpop.f32.mrf.mxu0
        %v3003 = vadd.f32 0.0, %v3002
        %3004 = vmatmul.bf16.gmra.mxu0 %v2883
        %v3005 = vpop.f32.mrf.mxu0
        %v3006 = vadd.f32 0.0, %v3005
        %v3007 = vpop.f32.mrf.mxu0
        %v3008 = vadd.f32 0.0, %v3007
        %3009 = vmatmul.bf16.gmra.mxu0 %v2884
        %v3010 = vpop.f32.mrf.mxu0
        %v3011 = vadd.f32 0.0, %v3010
        %v3012 = vpop.f32.mrf.mxu0
        %v3013 = vadd.f32 0.0, %v3012
        %3014 = vmatmul.bf16.gmra.mxu0 %v2885
        %v3015 = vpop.f32.mrf.mxu0
        %v3016 = vadd.f32 0.0, %v3015
        %v3017 = vpop.f32.mrf.mxu0
        %v3018 = vadd.f32 0.0, %v3017
        %3019 = vmatmul.bf16.gmra.mxu0 %v2886
        %v3020 = vpop.f32.mrf.mxu0
        %v3021 = vadd.f32 0.0, %v3020
        %v3022 = vpop.f32.mrf.mxu0
        %v3023 = vadd.f32 0.0, %v3022
        %3024 = vmatmul.bf16.gmra.mxu0 %v2887
        %v3025 = vpop.f32.mrf.mxu0
        %v3026 = vadd.f32 0.0, %v3025
        %v3027 = vpop.f32.mrf.mxu0
        %v3028 = vadd.f32 0.0, %v3027
        %3029 = vmatmul.bf16.gmra.mxu0 %v2888
        %v3030 = vpop.f32.mrf.mxu0
        %v3031 = vadd.f32 0.0, %v3030
        %v3032 = vpop.f32.mrf.mxu0
        %v3033 = vadd.f32 0.0, %v3032
        %3034 = vmatmul.bf16.gmra.mxu0 %v2889
        %v3035 = vpop.f32.mrf.mxu0
        %v3036 = vadd.f32 0.0, %v3035
        %v3037 = vpop.f32.mrf.mxu0
        %v3038 = vadd.f32 0.0, %v3037
        %3039 = vmatmul.bf16.gmra.mxu0 %v2890
        %v3040 = vpop.f32.mrf.mxu0
        %v3041 = vadd.f32 0.0, %v3040
        %v3042 = vpop.f32.mrf.mxu0
        %v3043 = vadd.f32 0.0, %v3042
        %3044 = vdwg.mxu0
        %v3045 = vadd.f32 %v2779, %v2966
        %v3046 = vadd.f32 %v2780, %v2968
        %v3047 = vadd.f32 %v2781, %v2971
        %v3048 = vadd.f32 %v2782, %v2973
        %v3049 = vadd.f32 %v2783, %v2976
        %v3050 = vadd.f32 %v2784, %v2978
        %v3051 = vadd.f32 %v2785, %v2981
        %v3052 = vadd.f32 %v2786, %v2983
        %v3053 = vadd.f32 %v2787, %v2986
        %v3054 = vadd.f32 %v2788, %v2988
        %v3055 = vadd.f32 %v2789, %v2991
        %v3056 = vadd.f32 %v2790, %v2993
        %v3057 = vadd.f32 %v2791, %v2996
        %v3058 = vadd.f32 %v2792, %v2998
        %v3059 = vadd.f32 %v2793, %v3001
        %v3060 = vadd.f32 %v2794, %v3003
        %v3061 = vadd.f32 %v2795, %v3006
        %v3062 = vadd.f32 %v2796, %v3008
        %v3063 = vadd.f32 %v2797, %v3011
        %v3064 = vadd.f32 %v2798, %v3013
        %v3065 = vadd.f32 %v2799, %v3016
        %v3066 = vadd.f32 %v2800, %v3018
        %v3067 = vadd.f32 %v2801, %v3021
        %v3068 = vadd.f32 %v2802, %v3023
        %v3069 = vadd.f32 %v2803, %v3026
        %v3070 = vadd.f32 %v2804, %v3028
        %v3071 = vadd.f32 %v2805, %v3031
        %v3072 = vadd.f32 %v2806, %v3033
        %v3073 = vadd.f32 %v2807, %v3036
        %v3074 = vadd.f32 %v2808, %v3038
        %v3075 = vadd.f32 %v2809, %v3041
        %v3076 = vadd.f32 %v2810, %v3043
        %v3077 = vrot.slane %v2110, 4
        %v3078 = vrot.slane %v2111, 4
        %v3079 = vrot.slane %v2112, 4
        %v3080 = vrot.slane %v2113, 4
        %v3081 = vrot.slane %v2114, 4
        %v3082 = vrot.slane %v2115, 4
        %v3083 = vrot.slane %v2116, 4
        %v3084 = vrot.slane %v2117, 4
        %v3085 = vrot.slane %v2118, 4
        %v3086 = vrot.slane %v2119, 4
        %v3087 = vrot.slane %v2120, 4
        %v3088 = vrot.slane %v2121, 4
        %v3089 = vrot.slane %v2122, 4
        %v3090 = vrot.slane %v2123, 4
        %v3091 = vrot.slane %v2124, 4
        %v3092 = vrot.slane %v2125, 4
        %v3093 = vrot.slane %v2126, 4
        %v3094 = vrot.slane %v2127, 4
        %v3095 = vrot.slane %v2128, 4
        %v3096 = vrot.slane %v2129, 4
        %v3097 = vrot.slane %v2130, 4
        %v3098 = vrot.slane %v2131, 4
        %v3099 = vrot.slane %v2132, 4
        %v3100 = vrot.slane %v2133, 4
        %v3101 = vrot.slane %v2134, 4
        %v3102 = vrot.slane %v2135, 4
        %v3103 = vrot.slane %v2136, 4
        %v3104 = vrot.slane %v2137, 4
        %v3105 = vrot.slane %v2138, 4
        %v3106 = vrot.slane %v2139, 4
        %v3107 = vrot.slane %v2140, 4
        %v3108 = vrot.slane %v2141, 4
        %v3109 = vsel %vm1380, %v3107, %v3108
        %v3110 = vsel %vm1380, %v3106, %v3107
        %v3111 = vsel %vm1380, %v3105, %v3106
        %v3112 = vsel %vm1380, %v3104, %v3105
        %v3113 = vsel %vm1380, %v3103, %v3104
        %v3114 = vsel %vm1380, %v3102, %v3103
        %v3115 = vsel %vm1380, %v3101, %v3102
        %v3116 = vsel %vm1380, %v3100, %v3101
        %v3117 = vsel %vm1380, %v3099, %v3100
        %v3118 = vsel %vm1380, %v3098, %v3099
        %v3119 = vsel %vm1380, %v3097, %v3098
        %v3120 = vsel %vm1380, %v3096, %v3097
        %v3121 = vsel %vm1380, %v3095, %v3096
        %v3122 = vsel %vm1380, %v3094, %v3095
        %v3123 = vsel %vm1380, %v3093, %v3094
        %v3124 = vsel %vm1380, %v3092, %v3093
        %v3125 = vsel %vm1380, %v3091, %v3092
        %v3126 = vsel %vm1380, %v3090, %v3091
        %v3127 = vsel %vm1380, %v3089, %v3090
        %v3128 = vsel %vm1380, %v3088, %v3089
        %v3129 = vsel %vm1380, %v3087, %v3088
        %v3130 = vsel %vm1380, %v3086, %v3087
        %v3131 = vsel %vm1380, %v3085, %v3086
        %v3132 = vsel %vm1380, %v3084, %v3085
        %v3133 = vsel %vm1380, %v3083, %v3084
        %v3134 = vsel %vm1380, %v3082, %v3083
        %v3135 = vsel %vm1380, %v3081, %v3082
        %v3136 = vsel %vm1380, %v3080, %v3081
        %v3137 = vsel %vm1380, %v3079, %v3080
        %v3138 = vsel %vm1380, %v3078, %v3079
        %v3139 = vsel %vm1380, %v3077, %v3078
        %v3140 = vsel %vm1380, %v3108, %v3077
        %v3141 = vpack.c.bf16 %v3138, %v3139
        %v3142 = vpack.c.bf16 %v3136, %v3137
        %v3143 = vpack.c.bf16 %v3134, %v3135
        %v3144 = vpack.c.bf16 %v3132, %v3133
        %v3145 = vpack.c.bf16 %v3130, %v3131
        %v3146 = vpack.c.bf16 %v3128, %v3129
        %v3147 = vpack.c.bf16 %v3126, %v3127
        %v3148 = vpack.c.bf16 %v3124, %v3125
        %v3149 = vpack.c.bf16 %v3122, %v3123
        %v3150 = vpack.c.bf16 %v3120, %v3121
        %v3151 = vpack.c.bf16 %v3118, %v3119
        %v3152 = vpack.c.bf16 %v3116, %v3117
        %v3153 = vpack.c.bf16 %v3114, %v3115
        %v3154 = vpack.c.bf16 %v3112, %v3113
        %v3155 = vpack.c.bf16 %v3110, %v3111
        %v3156 = vpack.c.bf16 %v3140, %v3109
        %s3157 = scalar_lea.vmem [#allocation6], 256
        %v3158 = vld [vmem:[%s3157] sm:$0xf]
        %v3159 = vld [vmem:[%s3157 + $0x4] sm:$0xf]
        %v3160 = vld [vmem:[%s3157 + $0x8] sm:$0xf]
        %v3161 = vld [vmem:[%s3157 + $0xc] sm:$0xf]
        %v3162 = vld [vmem:[%s3157 + $0x10] sm:$0xf]
        %v3163 = vld [vmem:[%s3157 + $0x14] sm:$0xf]
        %v3164 = vld [vmem:[%s3157 + $0x18] sm:$0xf]
        %v3165 = vld [vmem:[%s3157 + $0x1c] sm:$0xf]
        %v3166 = vld [vmem:[%s3157 + $0x20] sm:$0xf]
        %v3167 = vld [vmem:[%s3157 + $0x24] sm:$0xf]
        %v3168 = vld [vmem:[%s3157 + $0x28] sm:$0xf]
        %v3169 = vld [vmem:[%s3157 + $0x2c] sm:$0xf]
        %v3170 = vld [vmem:[%s3157 + $0x30] sm:$0xf]
        %v3171 = vld [vmem:[%s3157 + $0x34] sm:$0xf]
        %v3172 = vld [vmem:[%s3157 + $0x38] sm:$0xf]
        %v3173 = vld [vmem:[%s3157 + $0x3c] sm:$0xf]
        %v3190 = vunpack.c.l.b16 %v3158
        %v3191 = vunpack.c.l.b16 %v3159
        %v3192 = vunpack.c.l.b16 %v3160
        %v3193 = vunpack.c.l.b16 %v3161
        %v3194 = vunpack.c.l.b16 %v3162
        %v3195 = vunpack.c.l.b16 %v3163
        %v3196 = vunpack.c.l.b16 %v3164
        %v3197 = vunpack.c.l.b16 %v3165
        %v3198 = vunpack.c.l.b16 %v3166
        %v3199 = vunpack.c.l.b16 %v3167
        %v3200 = vunpack.c.l.b16 %v3168
        %v3201 = vunpack.c.l.b16 %v3169
        %v3202 = vunpack.c.l.b16 %v3170
        %v3203 = vunpack.c.l.b16 %v3171
        %v3204 = vunpack.c.l.b16 %v3172
        %v3205 = vunpack.c.l.b16 %v3173
        %v3206 = vpack.c.b16 %v3191, %v3190
        %v3207 = vpack.c.b16 %v3193, %v3192
        %v3208 = vpack.c.b16 %v3195, %v3194
        %v3209 = vpack.c.b16 %v3197, %v3196
        %v3210 = vpack.c.b16 %v3199, %v3198
        %v3211 = vpack.c.b16 %v3201, %v3200
        %v3212 = vpack.c.b16 %v3203, %v3202
        %v3213 = vpack.c.b16 %v3205, %v3204
        %3222 = vmatpush.bf16.msra.mxu0 %v3213
        %3223 = vmatpush.bf16.msra.mxu0 %v3212
        %3224 = vmatpush.bf16.msra.mxu0 %v3211
        %3225 = vmatpush.bf16.msra.mxu0 %v3210
        %3226 = vmatpush.bf16.msra.mxu0 %v3209
        %3227 = vmatpush.bf16.msra.mxu0 %v3208
        %3228 = vmatpush.bf16.msra.mxu0 %v3207
        %3229 = vmatpush.bf16.msra.mxu0 %v3206
        %3230 = vmatmul.bf16.gmra.mxu0 %v3141
        %v3231 = vpop.f32.mrf.mxu0
        %v3232 = vadd.f32 0.0, %v3231
        %v3233 = vpop.f32.mrf.mxu0
        %v3234 = vadd.f32 0.0, %v3233
        %3235 = vmatmul.bf16.gmra.mxu0 %v3142
        %v3236 = vpop.f32.mrf.mxu0
        %v3237 = vadd.f32 0.0, %v3236
        %v3238 = vpop.f32.mrf.mxu0
        %v3239 = vadd.f32 0.0, %v3238
        %3240 = vmatmul.bf16.gmra.mxu0 %v3143
        %v3241 = vpop.f32.mrf.mxu0
        %v3242 = vadd.f32 0.0, %v3241
        %v3243 = vpop.f32.mrf.mxu0
        %v3244 = vadd.f32 0.0, %v3243
        %3245 = vmatmul.bf16.gmra.mxu0 %v3144
        %v3246 = vpop.f32.mrf.mxu0
        %v3247 = vadd.f32 0.0, %v3246
        %v3248 = vpop.f32.mrf.mxu0
        %v3249 = vadd.f32 0.0, %v3248
        %3250 = vmatmul.bf16.gmra.mxu0 %v3145
        %v3251 = vpop.f32.mrf.mxu0
        %v3252 = vadd.f32 0.0, %v3251
        %v3253 = vpop.f32.mrf.mxu0
        %v3254 = vadd.f32 0.0, %v3253
        %3255 = vmatmul.bf16.gmra.mxu0 %v3146
        %v3256 = vpop.f32.mrf.mxu0
        %v3257 = vadd.f32 0.0, %v3256
        %v3258 = vpop.f32.mrf.mxu0
        %v3259 = vadd.f32 0.0, %v3258
        %3260 = vmatmul.bf16.gmra.mxu0 %v3147
        %v3261 = vpop.f32.mrf.mxu0
        %v3262 = vadd.f32 0.0, %v3261
        %v3263 = vpop.f32.mrf.mxu0
        %v3264 = vadd.f32 0.0, %v3263
        %3265 = vmatmul.bf16.gmra.mxu0 %v3148
        %v3266 = vpop.f32.mrf.mxu0
        %v3267 = vadd.f32 0.0, %v3266
        %v3268 = vpop.f32.mrf.mxu0
        %v3269 = vadd.f32 0.0, %v3268
        %3270 = vmatmul.bf16.gmra.mxu0 %v3149
        %v3271 = vpop.f32.mrf.mxu0
        %v3272 = vadd.f32 0.0, %v3271
        %v3273 = vpop.f32.mrf.mxu0
        %v3274 = vadd.f32 0.0, %v3273
        %3275 = vmatmul.bf16.gmra.mxu0 %v3150
        %v3276 = vpop.f32.mrf.mxu0
        %v3277 = vadd.f32 0.0, %v3276
        %v3278 = vpop.f32.mrf.mxu0
        %v3279 = vadd.f32 0.0, %v3278
        %3280 = vmatmul.bf16.gmra.mxu0 %v3151
        %v3281 = vpop.f32.mrf.mxu0
        %v3282 = vadd.f32 0.0, %v3281
        %v3283 = vpop.f32.mrf.mxu0
        %v3284 = vadd.f32 0.0, %v3283
        %3285 = vmatmul.bf16.gmra.mxu0 %v3152
        %v3286 = vpop.f32.mrf.mxu0
        %v3287 = vadd.f32 0.0, %v3286
        %v3288 = vpop.f32.mrf.mxu0
        %v3289 = vadd.f32 0.0, %v3288
        %3290 = vmatmul.bf16.gmra.mxu0 %v3153
        %v3291 = vpop.f32.mrf.mxu0
        %v3292 = vadd.f32 0.0, %v3291
        %v3293 = vpop.f32.mrf.mxu0
        %v3294 = vadd.f32 0.0, %v3293
        %3295 = vmatmul.bf16.gmra.mxu0 %v3154
        %v3296 = vpop.f32.mrf.mxu0
        %v3297 = vadd.f32 0.0, %v3296
        %v3298 = vpop.f32.mrf.mxu0
        %v3299 = vadd.f32 0.0, %v3298
        %3300 = vmatmul.bf16.gmra.mxu0 %v3155
        %v3301 = vpop.f32.mrf.mxu0
        %v3302 = vadd.f32 0.0, %v3301
        %v3303 = vpop.f32.mrf.mxu0
        %v3304 = vadd.f32 0.0, %v3303
        %3305 = vmatmul.bf16.gmra.mxu0 %v3156
        %v3306 = vpop.f32.mrf.mxu0
        %v3307 = vadd.f32 0.0, %v3306
        %v3308 = vpop.f32.mrf.mxu0
        %v3309 = vadd.f32 0.0, %v3308
        %3310 = vdwg.mxu0
        %v3311 = vadd.f32 %v3045, %v3232
        %v3312 = vadd.f32 %v3046, %v3234
        %v3313 = vadd.f32 %v3047, %v3237
        %v3314 = vadd.f32 %v3048, %v3239
        %v3315 = vadd.f32 %v3049, %v3242
        %v3316 = vadd.f32 %v3050, %v3244
        %v3317 = vadd.f32 %v3051, %v3247
        %v3318 = vadd.f32 %v3052, %v3249
        %v3319 = vadd.f32 %v3053, %v3252
        %v3320 = vadd.f32 %v3054, %v3254
        %v3321 = vadd.f32 %v3055, %v3257
        %v3322 = vadd.f32 %v3056, %v3259
        %v3323 = vadd.f32 %v3057, %v3262
        %v3324 = vadd.f32 %v3058, %v3264
        %v3325 = vadd.f32 %v3059, %v3267
        %v3326 = vadd.f32 %v3060, %v3269
        %v3327 = vadd.f32 %v3061, %v3272
        %v3328 = vadd.f32 %v3062, %v3274
        %v3329 = vadd.f32 %v3063, %v3277
        %v3330 = vadd.f32 %v3064, %v3279
        %v3331 = vadd.f32 %v3065, %v3282
        %v3332 = vadd.f32 %v3066, %v3284
        %v3333 = vadd.f32 %v3067, %v3287
        %v3334 = vadd.f32 %v3068, %v3289
        %v3335 = vadd.f32 %v3069, %v3292
        %v3336 = vadd.f32 %v3070, %v3294
        %v3337 = vadd.f32 %v3071, %v3297
        %v3338 = vadd.f32 %v3072, %v3299
        %v3339 = vadd.f32 %v3073, %v3302
        %v3340 = vadd.f32 %v3074, %v3304
        %v3341 = vadd.f32 %v3075, %v3307
        %v3342 = vadd.f32 %v3076, %v3309
        %v3343 = vrot.slane %v2110, 5
        %v3344 = vrot.slane %v2111, 5
        %v3345 = vrot.slane %v2112, 5
        %v3346 = vrot.slane %v2113, 5
        %v3347 = vrot.slane %v2114, 5
        %v3348 = vrot.slane %v2115, 5
        %v3349 = vrot.slane %v2116, 5
        %v3350 = vrot.slane %v2117, 5
        %v3351 = vrot.slane %v2118, 5
        %v3352 = vrot.slane %v2119, 5
        %v3353 = vrot.slane %v2120, 5
        %v3354 = vrot.slane %v2121, 5
        %v3355 = vrot.slane %v2122, 5
        %v3356 = vrot.slane %v2123, 5
        %v3357 = vrot.slane %v2124, 5
        %v3358 = vrot.slane %v2125, 5
        %v3359 = vrot.slane %v2126, 5
        %v3360 = vrot.slane %v2127, 5
        %v3361 = vrot.slane %v2128, 5
        %v3362 = vrot.slane %v2129, 5
        %v3363 = vrot.slane %v2130, 5
        %v3364 = vrot.slane %v2131, 5
        %v3365 = vrot.slane %v2132, 5
        %v3366 = vrot.slane %v2133, 5
        %v3367 = vrot.slane %v2134, 5
        %v3368 = vrot.slane %v2135, 5
        %v3369 = vrot.slane %v2136, 5
        %v3370 = vrot.slane %v2137, 5
        %v3371 = vrot.slane %v2138, 5
        %v3372 = vrot.slane %v2139, 5
        %v3373 = vrot.slane %v2140, 5
        %v3374 = vrot.slane %v2141, 5
        %v3375 = vsel %vm1647, %v3373, %v3374
        %v3376 = vsel %vm1647, %v3372, %v3373
        %v3377 = vsel %vm1647, %v3371, %v3372
        %v3378 = vsel %vm1647, %v3370, %v3371
        %v3379 = vsel %vm1647, %v3369, %v3370
        %v3380 = vsel %vm1647, %v3368, %v3369
        %v3381 = vsel %vm1647, %v3367, %v3368
        %v3382 = vsel %vm1647, %v3366, %v3367
        %v3383 = vsel %vm1647, %v3365, %v3366
        %v3384 = vsel %vm1647, %v3364, %v3365
        %v3385 = vsel %vm1647, %v3363, %v3364
        %v3386 = vsel %vm1647, %v3362, %v3363
        %v3387 = vsel %vm1647, %v3361, %v3362
        %v3388 = vsel %vm1647, %v3360, %v3361
        %v3389 = vsel %vm1647, %v3359, %v3360
        %v3390 = vsel %vm1647, %v3358, %v3359
        %v3391 = vsel %vm1647, %v3357, %v3358
        %v3392 = vsel %vm1647, %v3356, %v3357
        %v3393 = vsel %vm1647, %v3355, %v3356
        %v3394 = vsel %vm1647, %v3354, %v3355
        %v3395 = vsel %vm1647, %v3353, %v3354
        %v3396 = vsel %vm1647, %v3352, %v3353
        %v3397 = vsel %vm1647, %v3351, %v3352
        %v3398 = vsel %vm1647, %v3350, %v3351
        %v3399 = vsel %vm1647, %v3349, %v3350
        %v3400 = vsel %vm1647, %v3348, %v3349
        %v3401 = vsel %vm1647, %v3347, %v3348
        %v3402 = vsel %vm1647, %v3346, %v3347
        %v3403 = vsel %vm1647, %v3345, %v3346
        %v3404 = vsel %vm1647, %v3344, %v3345
        %v3405 = vsel %vm1647, %v3343, %v3344
        %v3406 = vsel %vm1647, %v3374, %v3343
        %v3407 = vpack.c.bf16 %v3404, %v3405
        %v3408 = vpack.c.bf16 %v3402, %v3403
        %v3409 = vpack.c.bf16 %v3400, %v3401
        %v3410 = vpack.c.bf16 %v3398, %v3399
        %v3411 = vpack.c.bf16 %v3396, %v3397
        %v3412 = vpack.c.bf16 %v3394, %v3395
        %v3413 = vpack.c.bf16 %v3392, %v3393
        %v3414 = vpack.c.bf16 %v3390, %v3391
        %v3415 = vpack.c.bf16 %v3388, %v3389
        %v3416 = vpack.c.bf16 %v3386, %v3387
        %v3417 = vpack.c.bf16 %v3384, %v3385
        %v3418 = vpack.c.bf16 %v3382, %v3383
        %v3419 = vpack.c.bf16 %v3380, %v3381
        %v3420 = vpack.c.bf16 %v3378, %v3379
        %v3421 = vpack.c.bf16 %v3376, %v3377
        %v3422 = vpack.c.bf16 %v3406, %v3375
        %s3423 = scalar_lea.vmem [#allocation6], 320
        %v3424 = vld [vmem:[%s3423] sm:$0xf]
        %v3425 = vld [vmem:[%s3423 + $0x4] sm:$0xf]
        %v3426 = vld [vmem:[%s3423 + $0x8] sm:$0xf]
        %v3427 = vld [vmem:[%s3423 + $0xc] sm:$0xf]
        %v3428 = vld [vmem:[%s3423 + $0x10] sm:$0xf]
        %v3429 = vld [vmem:[%s3423 + $0x14] sm:$0xf]
        %v3430 = vld [vmem:[%s3423 + $0x18] sm:$0xf]
        %v3431 = vld [vmem:[%s3423 + $0x1c] sm:$0xf]
        %v3432 = vld [vmem:[%s3423 + $0x20] sm:$0xf]
        %v3433 = vld [vmem:[%s3423 + $0x24] sm:$0xf]
        %v3434 = vld [vmem:[%s3423 + $0x28] sm:$0xf]
        %v3435 = vld [vmem:[%s3423 + $0x2c] sm:$0xf]
        %v3436 = vld [vmem:[%s3423 + $0x30] sm:$0xf]
        %v3437 = vld [vmem:[%s3423 + $0x34] sm:$0xf]
        %v3438 = vld [vmem:[%s3423 + $0x38] sm:$0xf]
        %v3439 = vld [vmem:[%s3423 + $0x3c] sm:$0xf]
        %v3456 = vunpack.c.l.b16 %v3424
        %v3457 = vunpack.c.l.b16 %v3425
        %v3458 = vunpack.c.l.b16 %v3426
        %v3459 = vunpack.c.l.b16 %v3427
        %v3460 = vunpack.c.l.b16 %v3428
        %v3461 = vunpack.c.l.b16 %v3429
        %v3462 = vunpack.c.l.b16 %v3430
        %v3463 = vunpack.c.l.b16 %v3431
        %v3464 = vunpack.c.l.b16 %v3432
        %v3465 = vunpack.c.l.b16 %v3433
        %v3466 = vunpack.c.l.b16 %v3434
        %v3467 = vunpack.c.l.b16 %v3435
        %v3468 = vunpack.c.l.b16 %v3436
        %v3469 = vunpack.c.l.b16 %v3437
        %v3470 = vunpack.c.l.b16 %v3438
        %v3471 = vunpack.c.l.b16 %v3439
        %v3472 = vpack.c.b16 %v3457, %v3456
        %v3473 = vpack.c.b16 %v3459, %v3458
        %v3474 = vpack.c.b16 %v3461, %v3460
        %v3475 = vpack.c.b16 %v3463, %v3462
        %v3476 = vpack.c.b16 %v3465, %v3464
        %v3477 = vpack.c.b16 %v3467, %v3466
        %v3478 = vpack.c.b16 %v3469, %v3468
        %v3479 = vpack.c.b16 %v3471, %v3470
        %3488 = vmatpush.bf16.msra.mxu0 %v3479
        %3489 = vmatpush.bf16.msra.mxu0 %v3478
        %3490 = vmatpush.bf16.msra.mxu0 %v3477
        %3491 = vmatpush.bf16.msra.mxu0 %v3476
        %3492 = vmatpush.bf16.msra.mxu0 %v3475
        %3493 = vmatpush.bf16.msra.mxu0 %v3474
        %3494 = vmatpush.bf16.msra.mxu0 %v3473
        %3495 = vmatpush.bf16.msra.mxu0 %v3472
        %3496 = vmatmul.bf16.gmra.mxu0 %v3407
        %v3497 = vpop.f32.mrf.mxu0
        %v3498 = vadd.f32 0.0, %v3497
        %v3499 = vpop.f32.mrf.mxu0
        %v3500 = vadd.f32 0.0, %v3499
        %3501 = vmatmul.bf16.gmra.mxu0 %v3408
        %v3502 = vpop.f32.mrf.mxu0
        %v3503 = vadd.f32 0.0, %v3502
        %v3504 = vpop.f32.mrf.mxu0
        %v3505 = vadd.f32 0.0, %v3504
        %3506 = vmatmul.bf16.gmra.mxu0 %v3409
        %v3507 = vpop.f32.mrf.mxu0
        %v3508 = vadd.f32 0.0, %v3507
        %v3509 = vpop.f32.mrf.mxu0
        %v3510 = vadd.f32 0.0, %v3509
        %3511 = vmatmul.bf16.gmra.mxu0 %v3410
        %v3512 = vpop.f32.mrf.mxu0
        %v3513 = vadd.f32 0.0, %v3512
        %v3514 = vpop.f32.mrf.mxu0
        %v3515 = vadd.f32 0.0, %v3514
        %3516 = vmatmul.bf16.gmra.mxu0 %v3411
        %v3517 = vpop.f32.mrf.mxu0
        %v3518 = vadd.f32 0.0, %v3517
        %v3519 = vpop.f32.mrf.mxu0
        %v3520 = vadd.f32 0.0, %v3519
        %3521 = vmatmul.bf16.gmra.mxu0 %v3412
        %v3522 = vpop.f32.mrf.mxu0
        %v3523 = vadd.f32 0.0, %v3522
        %v3524 = vpop.f32.mrf.mxu0
        %v3525 = vadd.f32 0.0, %v3524
        %3526 = vmatmul.bf16.gmra.mxu0 %v3413
        %v3527 = vpop.f32.mrf.mxu0
        %v3528 = vadd.f32 0.0, %v3527
        %v3529 = vpop.f32.mrf.mxu0
        %v3530 = vadd.f32 0.0, %v3529
        %3531 = vmatmul.bf16.gmra.mxu0 %v3414
        %v3532 = vpop.f32.mrf.mxu0
        %v3533 = vadd.f32 0.0, %v3532
        %v3534 = vpop.f32.mrf.mxu0
        %v3535 = vadd.f32 0.0, %v3534
        %3536 = vmatmul.bf16.gmra.mxu0 %v3415
        %v3537 = vpop.f32.mrf.mxu0
        %v3538 = vadd.f32 0.0, %v3537
        %v3539 = vpop.f32.mrf.mxu0
        %v3540 = vadd.f32 0.0, %v3539
        %3541 = vmatmul.bf16.gmra.mxu0 %v3416
        %v3542 = vpop.f32.mrf.mxu0
        %v3543 = vadd.f32 0.0, %v3542
        %v3544 = vpop.f32.mrf.mxu0
        %v3545 = vadd.f32 0.0, %v3544
        %3546 = vmatmul.bf16.gmra.mxu0 %v3417
        %v3547 = vpop.f32.mrf.mxu0
        %v3548 = vadd.f32 0.0, %v3547
        %v3549 = vpop.f32.mrf.mxu0
        %v3550 = vadd.f32 0.0, %v3549
        %3551 = vmatmul.bf16.gmra.mxu0 %v3418
        %v3552 = vpop.f32.mrf.mxu0
        %v3553 = vadd.f32 0.0, %v3552
        %v3554 = vpop.f32.mrf.mxu0
        %v3555 = vadd.f32 0.0, %v3554
        %3556 = vmatmul.bf16.gmra.mxu0 %v3419
        %v3557 = vpop.f32.mrf.mxu0
        %v3558 = vadd.f32 0.0, %v3557
        %v3559 = vpop.f32.mrf.mxu0
        %v3560 = vadd.f32 0.0, %v3559
        %3561 = vmatmul.bf16.gmra.mxu0 %v3420
        %v3562 = vpop.f32.mrf.mxu0
        %v3563 = vadd.f32 0.0, %v3562
        %v3564 = vpop.f32.mrf.mxu0
        %v3565 = vadd.f32 0.0, %v3564
        %3566 = vmatmul.bf16.gmra.mxu0 %v3421
        %v3567 = vpop.f32.mrf.mxu0
        %v3568 = vadd.f32 0.0, %v3567
        %v3569 = vpop.f32.mrf.mxu0
        %v3570 = vadd.f32 0.0, %v3569
        %3571 = vmatmul.bf16.gmra.mxu0 %v3422
        %v3572 = vpop.f32.mrf.mxu0
        %v3573 = vadd.f32 0.0, %v3572
        %v3574 = vpop.f32.mrf.mxu0
        %v3575 = vadd.f32 0.0, %v3574
        %3576 = vdwg.mxu0
        %v3577 = vadd.f32 %v3311, %v3498
        %v3578 = vadd.f32 %v3312, %v3500
        %v3579 = vadd.f32 %v3313, %v3503
        %v3580 = vadd.f32 %v3314, %v3505
        %v3581 = vadd.f32 %v3315, %v3508
        %v3582 = vadd.f32 %v3316, %v3510
        %v3583 = vadd.f32 %v3317, %v3513
        %v3584 = vadd.f32 %v3318, %v3515
        %v3585 = vadd.f32 %v3319, %v3518
        %v3586 = vadd.f32 %v3320, %v3520
        %v3587 = vadd.f32 %v3321, %v3523
        %v3588 = vadd.f32 %v3322, %v3525
        %v3589 = vadd.f32 %v3323, %v3528
        %v3590 = vadd.f32 %v3324, %v3530
        %v3591 = vadd.f32 %v3325, %v3533
        %v3592 = vadd.f32 %v3326, %v3535
        %v3593 = vadd.f32 %v3327, %v3538
        %v3594 = vadd.f32 %v3328, %v3540
        %v3595 = vadd.f32 %v3329, %v3543
        %v3596 = vadd.f32 %v3330, %v3545
        %v3597 = vadd.f32 %v3331, %v3548
        %v3598 = vadd.f32 %v3332, %v3550
        %v3599 = vadd.f32 %v3333, %v3553
        %v3600 = vadd.f32 %v3334, %v3555
        %v3601 = vadd.f32 %v3335, %v3558
        %v3602 = vadd.f32 %v3336, %v3560
        %v3603 = vadd.f32 %v3337, %v3563
        %v3604 = vadd.f32 %v3338, %v3565
        %v3605 = vadd.f32 %v3339, %v3568
        %v3606 = vadd.f32 %v3340, %v3570
        %v3607 = vadd.f32 %v3341, %v3573
        %v3608 = vadd.f32 %v3342, %v3575
        %v3609 = vrot.slane %v2110, 6
        %v3610 = vrot.slane %v2111, 6
        %v3611 = vrot.slane %v2112, 6
        %v3612 = vrot.slane %v2113, 6
        %v3613 = vrot.slane %v2114, 6
        %v3614 = vrot.slane %v2115, 6
        %v3615 = vrot.slane %v2116, 6
        %v3616 = vrot.slane %v2117, 6
        %v3617 = vrot.slane %v2118, 6
        %v3618 = vrot.slane %v2119, 6
        %v3619 = vrot.slane %v2120, 6
        %v3620 = vrot.slane %v2121, 6
        %v3621 = vrot.slane %v2122, 6
        %v3622 = vrot.slane %v2123, 6
        %v3623 = vrot.slane %v2124, 6
        %v3624 = vrot.slane %v2125, 6
        %v3625 = vrot.slane %v2126, 6
        %v3626 = vrot.slane %v2127, 6
        %v3627 = vrot.slane %v2128, 6
        %v3628 = vrot.slane %v2129, 6
        %v3629 = vrot.slane %v2130, 6
        %v3630 = vrot.slane %v2131, 6
        %v3631 = vrot.slane %v2132, 6
        %v3632 = vrot.slane %v2133, 6
        %v3633 = vrot.slane %v2134, 6
        %v3634 = vrot.slane %v2135, 6
        %v3635 = vrot.slane %v2136, 6
        %v3636 = vrot.slane %v2137, 6
        %v3637 = vrot.slane %v2138, 6
        %v3638 = vrot.slane %v2139, 6
        %v3639 = vrot.slane %v2140, 6
        %v3640 = vrot.slane %v2141, 6
        %vm3641 = vcmp.lt.s32.totalorder %v473, 2
        %v3642 = vsel %vm3641, %v3639, %v3640
        %v3643 = vsel %vm3641, %v3638, %v3639
        %v3644 = vsel %vm3641, %v3637, %v3638
        %v3645 = vsel %vm3641, %v3636, %v3637
        %v3646 = vsel %vm3641, %v3635, %v3636
        %v3647 = vsel %vm3641, %v3634, %v3635
        %v3648 = vsel %vm3641, %v3633, %v3634
        %v3649 = vsel %vm3641, %v3632, %v3633
        %v3650 = vsel %vm3641, %v3631, %v3632
        %v3651 = vsel %vm3641, %v3630, %v3631
        %v3652 = vsel %vm3641, %v3629, %v3630
        %v3653 = vsel %vm3641, %v3628, %v3629
        %v3654 = vsel %vm3641, %v3627, %v3628
        %v3655 = vsel %vm3641, %v3626, %v3627
        %v3656 = vsel %vm3641, %v3625, %v3626
        %v3657 = vsel %vm3641, %v3624, %v3625
        %v3658 = vsel %vm3641, %v3623, %v3624
        %v3659 = vsel %vm3641, %v3622, %v3623
        %v3660 = vsel %vm3641, %v3621, %v3622
        %v3661 = vsel %vm3641, %v3620, %v3621
        %v3662 = vsel %vm3641, %v3619, %v3620
        %v3663 = vsel %vm3641, %v3618, %v3619
        %v3664 = vsel %vm3641, %v3617, %v3618
        %v3665 = vsel %vm3641, %v3616, %v3617
        %v3666 = vsel %vm3641, %v3615, %v3616
        %v3667 = vsel %vm3641, %v3614, %v3615
        %v3668 = vsel %vm3641, %v3613, %v3614
        %v3669 = vsel %vm3641, %v3612, %v3613
        %v3670 = vsel %vm3641, %v3611, %v3612
        %v3671 = vsel %vm3641, %v3610, %v3611
        %v3672 = vsel %vm3641, %v3609, %v3610
        %v3673 = vsel %vm3641, %v3640, %v3609
        %v3674 = vpack.c.bf16 %v3671, %v3672
        %v3675 = vpack.c.bf16 %v3669, %v3670
        %v3676 = vpack.c.bf16 %v3667, %v3668
        %v3677 = vpack.c.bf16 %v3665, %v3666
        %v3678 = vpack.c.bf16 %v3663, %v3664
        %v3679 = vpack.c.bf16 %v3661, %v3662
        %v3680 = vpack.c.bf16 %v3659, %v3660
        %v3681 = vpack.c.bf16 %v3657, %v3658
        %v3682 = vpack.c.bf16 %v3655, %v3656
        %v3683 = vpack.c.bf16 %v3653, %v3654
        %v3684 = vpack.c.bf16 %v3651, %v3652
        %v3685 = vpack.c.bf16 %v3649, %v3650
        %v3686 = vpack.c.bf16 %v3647, %v3648
        %v3687 = vpack.c.bf16 %v3645, %v3646
        %v3688 = vpack.c.bf16 %v3643, %v3644
        %v3689 = vpack.c.bf16 %v3673, %v3642
        %s3690 = scalar_lea.vmem [#allocation6], 384
        %v3691 = vld [vmem:[%s3690] sm:$0xf]
        %v3692 = vld [vmem:[%s3690 + $0x4] sm:$0xf]
        %v3693 = vld [vmem:[%s3690 + $0x8] sm:$0xf]
        %v3694 = vld [vmem:[%s3690 + $0xc] sm:$0xf]
        %v3695 = vld [vmem:[%s3690 + $0x10] sm:$0xf]
        %v3696 = vld [vmem:[%s3690 + $0x14] sm:$0xf]
        %v3697 = vld [vmem:[%s3690 + $0x18] sm:$0xf]
        %v3698 = vld [vmem:[%s3690 + $0x1c] sm:$0xf]
        %v3699 = vld [vmem:[%s3690 + $0x20] sm:$0xf]
        %v3700 = vld [vmem:[%s3690 + $0x24] sm:$0xf]
        %v3701 = vld [vmem:[%s3690 + $0x28] sm:$0xf]
        %v3702 = vld [vmem:[%s3690 + $0x2c] sm:$0xf]
        %v3703 = vld [vmem:[%s3690 + $0x30] sm:$0xf]
        %v3704 = vld [vmem:[%s3690 + $0x34] sm:$0xf]
        %v3705 = vld [vmem:[%s3690 + $0x38] sm:$0xf]
        %v3706 = vld [vmem:[%s3690 + $0x3c] sm:$0xf]
        %v3723 = vunpack.c.l.b16 %v3691
        %v3724 = vunpack.c.l.b16 %v3692
        %v3725 = vunpack.c.l.b16 %v3693
        %v3726 = vunpack.c.l.b16 %v3694
        %v3727 = vunpack.c.l.b16 %v3695
        %v3728 = vunpack.c.l.b16 %v3696
        %v3729 = vunpack.c.l.b16 %v3697
        %v3730 = vunpack.c.l.b16 %v3698
        %v3731 = vunpack.c.l.b16 %v3699
        %v3732 = vunpack.c.l.b16 %v3700
        %v3733 = vunpack.c.l.b16 %v3701
        %v3734 = vunpack.c.l.b16 %v3702
        %v3735 = vunpack.c.l.b16 %v3703
        %v3736 = vunpack.c.l.b16 %v3704
        %v3737 = vunpack.c.l.b16 %v3705
        %v3738 = vunpack.c.l.b16 %v3706
        %v3739 = vpack.c.b16 %v3724, %v3723
        %v3740 = vpack.c.b16 %v3726, %v3725
        %v3741 = vpack.c.b16 %v3728, %v3727
        %v3742 = vpack.c.b16 %v3730, %v3729
        %v3743 = vpack.c.b16 %v3732, %v3731
        %v3744 = vpack.c.b16 %v3734, %v3733
        %v3745 = vpack.c.b16 %v3736, %v3735
        %v3746 = vpack.c.b16 %v3738, %v3737
        %3755 = vmatpush.bf16.msra.mxu0 %v3746
        %3756 = vmatpush.bf16.msra.mxu0 %v3745
        %3757 = vmatpush.bf16.msra.mxu0 %v3744
        %3758 = vmatpush.bf16.msra.mxu0 %v3743
        %3759 = vmatpush.bf16.msra.mxu0 %v3742
        %3760 = vmatpush.bf16.msra.mxu0 %v3741
        %3761 = vmatpush.bf16.msra.mxu0 %v3740
        %3762 = vmatpush.bf16.msra.mxu0 %v3739
        %3763 = vmatmul.bf16.gmra.mxu0 %v3674
        %v3764 = vpop.f32.mrf.mxu0
        %v3765 = vadd.f32 0.0, %v3764
        %v3766 = vpop.f32.mrf.mxu0
        %v3767 = vadd.f32 0.0, %v3766
        %3768 = vmatmul.bf16.gmra.mxu0 %v3675
        %v3769 = vpop.f32.mrf.mxu0
        %v3770 = vadd.f32 0.0, %v3769
        %v3771 = vpop.f32.mrf.mxu0
        %v3772 = vadd.f32 0.0, %v3771
        %3773 = vmatmul.bf16.gmra.mxu0 %v3676
        %v3774 = vpop.f32.mrf.mxu0
        %v3775 = vadd.f32 0.0, %v3774
        %v3776 = vpop.f32.mrf.mxu0
        %v3777 = vadd.f32 0.0, %v3776
        %3778 = vmatmul.bf16.gmra.mxu0 %v3677
        %v3779 = vpop.f32.mrf.mxu0
        %v3780 = vadd.f32 0.0, %v3779
        %v3781 = vpop.f32.mrf.mxu0
        %v3782 = vadd.f32 0.0, %v3781
        %3783 = vmatmul.bf16.gmra.mxu0 %v3678
        %v3784 = vpop.f32.mrf.mxu0
        %v3785 = vadd.f32 0.0, %v3784
        %v3786 = vpop.f32.mrf.mxu0
        %v3787 = vadd.f32 0.0, %v3786
        %3788 = vmatmul.bf16.gmra.mxu0 %v3679
        %v3789 = vpop.f32.mrf.mxu0
        %v3790 = vadd.f32 0.0, %v3789
        %v3791 = vpop.f32.mrf.mxu0
        %v3792 = vadd.f32 0.0, %v3791
        %3793 = vmatmul.bf16.gmra.mxu0 %v3680
        %v3794 = vpop.f32.mrf.mxu0
        %v3795 = vadd.f32 0.0, %v3794
        %v3796 = vpop.f32.mrf.mxu0
        %v3797 = vadd.f32 0.0, %v3796
        %3798 = vmatmul.bf16.gmra.mxu0 %v3681
        %v3799 = vpop.f32.mrf.mxu0
        %v3800 = vadd.f32 0.0, %v3799
        %v3801 = vpop.f32.mrf.mxu0
        %v3802 = vadd.f32 0.0, %v3801
        %3803 = vmatmul.bf16.gmra.mxu0 %v3682
        %v3804 = vpop.f32.mrf.mxu0
        %v3805 = vadd.f32 0.0, %v3804
        %v3806 = vpop.f32.mrf.mxu0
        %v3807 = vadd.f32 0.0, %v3806
        %3808 = vmatmul.bf16.gmra.mxu0 %v3683
        %v3809 = vpop.f32.mrf.mxu0
        %v3810 = vadd.f32 0.0, %v3809
        %v3811 = vpop.f32.mrf.mxu0
        %v3812 = vadd.f32 0.0, %v3811
        %3813 = vmatmul.bf16.gmra.mxu0 %v3684
        %v3814 = vpop.f32.mrf.mxu0
        %v3815 = vadd.f32 0.0, %v3814
        %v3816 = vpop.f32.mrf.mxu0
        %v3817 = vadd.f32 0.0, %v3816
        %3818 = vmatmul.bf16.gmra.mxu0 %v3685
        %v3819 = vpop.f32.mrf.mxu0
        %v3820 = vadd.f32 0.0, %v3819
        %v3821 = vpop.f32.mrf.mxu0
        %v3822 = vadd.f32 0.0, %v3821
        %3823 = vmatmul.bf16.gmra.mxu0 %v3686
        %v3824 = vpop.f32.mrf.mxu0
        %v3825 = vadd.f32 0.0, %v3824
        %v3826 = vpop.f32.mrf.mxu0
        %v3827 = vadd.f32 0.0, %v3826
        %3828 = vmatmul.bf16.gmra.mxu0 %v3687
        %v3829 = vpop.f32.mrf.mxu0
        %v3830 = vadd.f32 0.0, %v3829
        %v3831 = vpop.f32.mrf.mxu0
        %v3832 = vadd.f32 0.0, %v3831
        %3833 = vmatmul.bf16.gmra.mxu0 %v3688
        %v3834 = vpop.f32.mrf.mxu0
        %v3835 = vadd.f32 0.0, %v3834
        %v3836 = vpop.f32.mrf.mxu0
        %v3837 = vadd.f32 0.0, %v3836
        %3838 = vmatmul.bf16.gmra.mxu0 %v3689
        %v3839 = vpop.f32.mrf.mxu0
        %v3840 = vadd.f32 0.0, %v3839
        %v3841 = vpop.f32.mrf.mxu0
        %v3842 = vadd.f32 0.0, %v3841
        %3843 = vdwg.mxu0
        %v3844 = vadd.f32 %v3577, %v3765
        %v3845 = vadd.f32 %v3578, %v3767
        %v3846 = vadd.f32 %v3579, %v3770
        %v3847 = vadd.f32 %v3580, %v3772
        %v3848 = vadd.f32 %v3581, %v3775
        %v3849 = vadd.f32 %v3582, %v3777
        %v3850 = vadd.f32 %v3583, %v3780
        %v3851 = vadd.f32 %v3584, %v3782
        %v3852 = vadd.f32 %v3585, %v3785
        %v3853 = vadd.f32 %v3586, %v3787
        %v3854 = vadd.f32 %v3587, %v3790
        %v3855 = vadd.f32 %v3588, %v3792
        %v3856 = vadd.f32 %v3589, %v3795
        %v3857 = vadd.f32 %v3590, %v3797
        %v3858 = vadd.f32 %v3591, %v3800
        %v3859 = vadd.f32 %v3592, %v3802
        %v3860 = vadd.f32 %v3593, %v3805
        %v3861 = vadd.f32 %v3594, %v3807
        %v3862 = vadd.f32 %v3595, %v3810
        %v3863 = vadd.f32 %v3596, %v3812
        %v3864 = vadd.f32 %v3597, %v3815
        %v3865 = vadd.f32 %v3598, %v3817
        %v3866 = vadd.f32 %v3599, %v3820
        %v3867 = vadd.f32 %v3600, %v3822
        %v3868 = vadd.f32 %v3601, %v3825
        %v3869 = vadd.f32 %v3602, %v3827
        %v3870 = vadd.f32 %v3603, %v3830
        %v3871 = vadd.f32 %v3604, %v3832
        %v3872 = vadd.f32 %v3605, %v3835
        %v3873 = vadd.f32 %v3606, %v3837
        %v3874 = vadd.f32 %v3607, %v3840
        %v3875 = vadd.f32 %v3608, %v3842
        %v3876 = vrot.slane %v2110, 7
        %v3877 = vrot.slane %v2111, 7
        %v3878 = vrot.slane %v2112, 7
        %v3879 = vrot.slane %v2113, 7
        %v3880 = vrot.slane %v2114, 7
        %v3881 = vrot.slane %v2115, 7
        %v3882 = vrot.slane %v2116, 7
        %v3883 = vrot.slane %v2117, 7
        %v3884 = vrot.slane %v2118, 7
        %v3885 = vrot.slane %v2119, 7
        %v3886 = vrot.slane %v2120, 7
        %v3887 = vrot.slane %v2121, 7
        %v3888 = vrot.slane %v2122, 7
        %v3889 = vrot.slane %v2123, 7
        %v3890 = vrot.slane %v2124, 7
        %v3891 = vrot.slane %v2125, 7
        %v3892 = vrot.slane %v2126, 7
        %v3893 = vrot.slane %v2127, 7
        %v3894 = vrot.slane %v2128, 7
        %v3895 = vrot.slane %v2129, 7
        %v3896 = vrot.slane %v2130, 7
        %v3897 = vrot.slane %v2131, 7
        %v3898 = vrot.slane %v2132, 7
        %v3899 = vrot.slane %v2133, 7
        %v3900 = vrot.slane %v2134, 7
        %v3901 = vrot.slane %v2135, 7
        %v3902 = vrot.slane %v2136, 7
        %v3903 = vrot.slane %v2137, 7
        %v3904 = vrot.slane %v2138, 7
        %v3905 = vrot.slane %v2139, 7
        %v3906 = vrot.slane %v2140, 7
        %v3907 = vrot.slane %v2141, 7
        %vm3908 = vcmp.lt.s32.totalorder %v473, 1
        %v3909 = vsel %vm3908, %v3906, %v3907
        %v3910 = vsel %vm3908, %v3905, %v3906
        %v3911 = vsel %vm3908, %v3904, %v3905
        %v3912 = vsel %vm3908, %v3903, %v3904
        %v3913 = vsel %vm3908, %v3902, %v3903
        %v3914 = vsel %vm3908, %v3901, %v3902
        %v3915 = vsel %vm3908, %v3900, %v3901
        %v3916 = vsel %vm3908, %v3899, %v3900
        %v3917 = vsel %vm3908, %v3898, %v3899
        %v3918 = vsel %vm3908, %v3897, %v3898
        %v3919 = vsel %vm3908, %v3896, %v3897
        %v3920 = vsel %vm3908, %v3895, %v3896
        %v3921 = vsel %vm3908, %v3894, %v3895
        %v3922 = vsel %vm3908, %v3893, %v3894
        %v3923 = vsel %vm3908, %v3892, %v3893
        %v3924 = vsel %vm3908, %v3891, %v3892
        %v3925 = vsel %vm3908, %v3890, %v3891
        %v3926 = vsel %vm3908, %v3889, %v3890
        %v3927 = vsel %vm3908, %v3888, %v3889
        %v3928 = vsel %vm3908, %v3887, %v3888
        %v3929 = vsel %vm3908, %v3886, %v3887
        %v3930 = vsel %vm3908, %v3885, %v3886
        %v3931 = vsel %vm3908, %v3884, %v3885
        %v3932 = vsel %vm3908, %v3883, %v3884
        %v3933 = vsel %vm3908, %v3882, %v3883
        %v3934 = vsel %vm3908, %v3881, %v3882
        %v3935 = vsel %vm3908, %v3880, %v3881
        %v3936 = vsel %vm3908, %v3879, %v3880
        %v3937 = vsel %vm3908, %v3878, %v3879
        %v3938 = vsel %vm3908, %v3877, %v3878
        %v3939 = vsel %vm3908, %v3876, %v3877
        %v3940 = vsel %vm3908, %v3907, %v3876
        %v3941 = vpack.c.bf16 %v3938, %v3939
        %v3942 = vpack.c.bf16 %v3936, %v3937
        %v3943 = vpack.c.bf16 %v3934, %v3935
        %v3944 = vpack.c.bf16 %v3932, %v3933
        %v3945 = vpack.c.bf16 %v3930, %v3931
        %v3946 = vpack.c.bf16 %v3928, %v3929
        %v3947 = vpack.c.bf16 %v3926, %v3927
        %v3948 = vpack.c.bf16 %v3924, %v3925
        %v3949 = vpack.c.bf16 %v3922, %v3923
        %v3950 = vpack.c.bf16 %v3920, %v3921
        %v3951 = vpack.c.bf16 %v3918, %v3919
        %v3952 = vpack.c.bf16 %v3916, %v3917
        %v3953 = vpack.c.bf16 %v3914, %v3915
        %v3954 = vpack.c.bf16 %v3912, %v3913
        %v3955 = vpack.c.bf16 %v3910, %v3911
        %v3956 = vpack.c.bf16 %v3940, %v3909
        %s3957 = scalar_lea.vmem [#allocation6], 448
        %v3958 = vld [vmem:[%s3957] sm:$0xf]
        %v3959 = vld [vmem:[%s3957 + $0x4] sm:$0xf]
        %v3960 = vld [vmem:[%s3957 + $0x8] sm:$0xf]
        %v3961 = vld [vmem:[%s3957 + $0xc] sm:$0xf]
        %v3962 = vld [vmem:[%s3957 + $0x10] sm:$0xf]
        %v3963 = vld [vmem:[%s3957 + $0x14] sm:$0xf]
        %v3964 = vld [vmem:[%s3957 + $0x18] sm:$0xf]
        %v3965 = vld [vmem:[%s3957 + $0x1c] sm:$0xf]
        %v3966 = vld [vmem:[%s3957 + $0x20] sm:$0xf]
        %v3967 = vld [vmem:[%s3957 + $0x24] sm:$0xf]
        %v3968 = vld [vmem:[%s3957 + $0x28] sm:$0xf]
        %v3969 = vld [vmem:[%s3957 + $0x2c] sm:$0xf]
        %v3970 = vld [vmem:[%s3957 + $0x30] sm:$0xf]
        %v3971 = vld [vmem:[%s3957 + $0x34] sm:$0xf]
        %v3972 = vld [vmem:[%s3957 + $0x38] sm:$0xf]
        %v3973 = vld [vmem:[%s3957 + $0x3c] sm:$0xf]
        %v3990 = vunpack.c.l.b16 %v3958
        %v3991 = vunpack.c.l.b16 %v3959
        %v3992 = vunpack.c.l.b16 %v3960
        %v3993 = vunpack.c.l.b16 %v3961
        %v3994 = vunpack.c.l.b16 %v3962
        %v3995 = vunpack.c.l.b16 %v3963
        %v3996 = vunpack.c.l.b16 %v3964
        %v3997 = vunpack.c.l.b16 %v3965
        %v3998 = vunpack.c.l.b16 %v3966
        %v3999 = vunpack.c.l.b16 %v3967
        %v4000 = vunpack.c.l.b16 %v3968
        %v4001 = vunpack.c.l.b16 %v3969
        %v4002 = vunpack.c.l.b16 %v3970
        %v4003 = vunpack.c.l.b16 %v3971
        %v4004 = vunpack.c.l.b16 %v3972
        %v4005 = vunpack.c.l.b16 %v3973
        %v4006 = vpack.c.b16 %v3991, %v3990
        %v4007 = vpack.c.b16 %v3993, %v3992
        %v4008 = vpack.c.b16 %v3995, %v3994
        %v4009 = vpack.c.b16 %v3997, %v3996
        %v4010 = vpack.c.b16 %v3999, %v3998
        %v4011 = vpack.c.b16 %v4001, %v4000
        %v4012 = vpack.c.b16 %v4003, %v4002
        %v4013 = vpack.c.b16 %v4005, %v4004
        %4022 = vmatpush.bf16.msra.mxu0 %v4013
        %4023 = vmatpush.bf16.msra.mxu0 %v4012
        %4024 = vmatpush.bf16.msra.mxu0 %v4011
        %4025 = vmatpush.bf16.msra.mxu0 %v4010
        %4026 = vmatpush.bf16.msra.mxu0 %v4009
        %4027 = vmatpush.bf16.msra.mxu0 %v4008
        %4028 = vmatpush.bf16.msra.mxu0 %v4007
        %4029 = vmatpush.bf16.msra.mxu0 %v4006
        %4030 = vmatmul.bf16.gmra.mxu0 %v3941
        %v4031 = vpop.f32.mrf.mxu0
        %v4032 = vadd.f32 0.0, %v4031
        %v4033 = vpop.f32.mrf.mxu0
        %v4034 = vadd.f32 0.0, %v4033
        %4035 = vmatmul.bf16.gmra.mxu0 %v3942
        %v4036 = vpop.f32.mrf.mxu0
        %v4037 = vadd.f32 0.0, %v4036
        %v4038 = vpop.f32.mrf.mxu0
        %v4039 = vadd.f32 0.0, %v4038
        %4040 = vmatmul.bf16.gmra.mxu0 %v3943
        %v4041 = vpop.f32.mrf.mxu0
        %v4042 = vadd.f32 0.0, %v4041
        %v4043 = vpop.f32.mrf.mxu0
        %v4044 = vadd.f32 0.0, %v4043
        %4045 = vmatmul.bf16.gmra.mxu0 %v3944
        %v4046 = vpop.f32.mrf.mxu0
        %v4047 = vadd.f32 0.0, %v4046
        %v4048 = vpop.f32.mrf.mxu0
        %v4049 = vadd.f32 0.0, %v4048
        %4050 = vmatmul.bf16.gmra.mxu0 %v3945
        %v4051 = vpop.f32.mrf.mxu0
        %v4052 = vadd.f32 0.0, %v4051
        %v4053 = vpop.f32.mrf.mxu0
        %v4054 = vadd.f32 0.0, %v4053
        %4055 = vmatmul.bf16.gmra.mxu0 %v3946
        %v4056 = vpop.f32.mrf.mxu0
        %v4057 = vadd.f32 0.0, %v4056
        %v4058 = vpop.f32.mrf.mxu0
        %v4059 = vadd.f32 0.0, %v4058
        %4060 = vmatmul.bf16.gmra.mxu0 %v3947
        %v4061 = vpop.f32.mrf.mxu0
        %v4062 = vadd.f32 0.0, %v4061
        %v4063 = vpop.f32.mrf.mxu0
        %v4064 = vadd.f32 0.0, %v4063
        %4065 = vmatmul.bf16.gmra.mxu0 %v3948
        %v4066 = vpop.f32.mrf.mxu0
        %v4067 = vadd.f32 0.0, %v4066
        %v4068 = vpop.f32.mrf.mxu0
        %v4069 = vadd.f32 0.0, %v4068
        %4070 = vmatmul.bf16.gmra.mxu0 %v3949
        %v4071 = vpop.f32.mrf.mxu0
        %v4072 = vadd.f32 0.0, %v4071
        %v4073 = vpop.f32.mrf.mxu0
        %v4074 = vadd.f32 0.0, %v4073
        %4075 = vmatmul.bf16.gmra.mxu0 %v3950
        %v4076 = vpop.f32.mrf.mxu0
        %v4077 = vadd.f32 0.0, %v4076
        %v4078 = vpop.f32.mrf.mxu0
        %v4079 = vadd.f32 0.0, %v4078
        %4080 = vmatmul.bf16.gmra.mxu0 %v3951
        %v4081 = vpop.f32.mrf.mxu0
        %v4082 = vadd.f32 0.0, %v4081
        %v4083 = vpop.f32.mrf.mxu0
        %v4084 = vadd.f32 0.0, %v4083
        %4085 = vmatmul.bf16.gmra.mxu0 %v3952
        %v4086 = vpop.f32.mrf.mxu0
        %v4087 = vadd.f32 0.0, %v4086
        %v4088 = vpop.f32.mrf.mxu0
        %v4089 = vadd.f32 0.0, %v4088
        %4090 = vmatmul.bf16.gmra.mxu0 %v3953
        %v4091 = vpop.f32.mrf.mxu0
        %v4092 = vadd.f32 0.0, %v4091
        %v4093 = vpop.f32.mrf.mxu0
        %v4094 = vadd.f32 0.0, %v4093
        %4095 = vmatmul.bf16.gmra.mxu0 %v3954
        %v4096 = vpop.f32.mrf.mxu0
        %v4097 = vadd.f32 0.0, %v4096
        %v4098 = vpop.f32.mrf.mxu0
        %v4099 = vadd.f32 0.0, %v4098
        %4100 = vmatmul.bf16.gmra.mxu0 %v3955
        %v4101 = vpop.f32.mrf.mxu0
        %v4102 = vadd.f32 0.0, %v4101
        %v4103 = vpop.f32.mrf.mxu0
        %v4104 = vadd.f32 0.0, %v4103
        %4105 = vmatmul.bf16.gmra.mxu0 %v3956
        %v4106 = vpop.f32.mrf.mxu0
        %v4107 = vadd.f32 0.0, %v4106
        %v4108 = vpop.f32.mrf.mxu0
        %v4109 = vadd.f32 0.0, %v4108
        %4110 = vdwg.mxu0
        %v4111 = vadd.f32 %v3844, %v4032
        %v4112 = vadd.f32 %v3845, %v4034
        %v4113 = vadd.f32 %v3846, %v4037
        %v4114 = vadd.f32 %v3847, %v4039
        %v4115 = vadd.f32 %v3848, %v4042
        %v4116 = vadd.f32 %v3849, %v4044
        %v4117 = vadd.f32 %v3850, %v4047
        %v4118 = vadd.f32 %v3851, %v4049
        %v4119 = vadd.f32 %v3852, %v4052
        %v4120 = vadd.f32 %v3853, %v4054
        %v4121 = vadd.f32 %v3854, %v4057
        %v4122 = vadd.f32 %v3855, %v4059
        %v4123 = vadd.f32 %v3856, %v4062
        %v4124 = vadd.f32 %v3857, %v4064
        %v4125 = vadd.f32 %v3858, %v4067
        %v4126 = vadd.f32 %v3859, %v4069
        %v4127 = vadd.f32 %v3860, %v4072
        %v4128 = vadd.f32 %v3861, %v4074
        %v4129 = vadd.f32 %v3862, %v4077
        %v4130 = vadd.f32 %v3863, %v4079
        %v4131 = vadd.f32 %v3864, %v4082
        %v4132 = vadd.f32 %v3865, %v4084
        %v4133 = vadd.f32 %v3866, %v4087
        %v4134 = vadd.f32 %v3867, %v4089
        %v4135 = vadd.f32 %v3868, %v4092
        %v4136 = vadd.f32 %v3869, %v4094
        %v4137 = vadd.f32 %v3870, %v4097
        %v4138 = vadd.f32 %v3871, %v4099
        %v4139 = vadd.f32 %v3872, %v4102
        %v4140 = vadd.f32 %v3873, %v4104
        %v4141 = vadd.f32 %v3874, %v4107
        %v4142 = vadd.f32 %v3875, %v4109
        %v4143 = vpack.c.bf16 %v2112, %v2111
        %v4144 = vpack.c.bf16 %v2114, %v2113
        %v4145 = vpack.c.bf16 %v2116, %v2115
        %v4146 = vpack.c.bf16 %v2118, %v2117
        %v4147 = vpack.c.bf16 %v2120, %v2119
        %v4148 = vpack.c.bf16 %v2122, %v2121
        %v4149 = vpack.c.bf16 %v2124, %v2123
        %v4150 = vpack.c.bf16 %v2126, %v2125
        %v4151 = vpack.c.bf16 %v2128, %v2127
        %v4152 = vpack.c.bf16 %v2130, %v2129
        %v4153 = vpack.c.bf16 %v2132, %v2131
        %v4154 = vpack.c.bf16 %v2134, %v2133
        %v4155 = vpack.c.bf16 %v2136, %v2135
        %v4156 = vpack.c.bf16 %v2138, %v2137
        %v4157 = vpack.c.bf16 %v2140, %v2139
        %v4158 = vpack.c.bf16 %v2110, %v2141
        %s4159 = scalar_lea.vmem [#allocation6], 512
        %v4160 = vld [vmem:[%s4159] sm:$0xf]
        %v4161 = vld [vmem:[%s4159 + $0x4] sm:$0xf]
        %v4162 = vld [vmem:[%s4159 + $0x8] sm:$0xf]
        %v4163 = vld [vmem:[%s4159 + $0xc] sm:$0xf]
        %v4164 = vld [vmem:[%s4159 + $0x10] sm:$0xf]
        %v4165 = vld [vmem:[%s4159 + $0x14] sm:$0xf]
        %v4166 = vld [vmem:[%s4159 + $0x18] sm:$0xf]
        %v4167 = vld [vmem:[%s4159 + $0x1c] sm:$0xf]
        %v4168 = vld [vmem:[%s4159 + $0x20] sm:$0xf]
        %v4169 = vld [vmem:[%s4159 + $0x24] sm:$0xf]
        %v4170 = vld [vmem:[%s4159 + $0x28] sm:$0xf]
        %v4171 = vld [vmem:[%s4159 + $0x2c] sm:$0xf]
        %v4172 = vld [vmem:[%s4159 + $0x30] sm:$0xf]
        %v4173 = vld [vmem:[%s4159 + $0x34] sm:$0xf]
        %v4174 = vld [vmem:[%s4159 + $0x38] sm:$0xf]
        %v4175 = vld [vmem:[%s4159 + $0x3c] sm:$0xf]
        %v4192 = vunpack.c.l.b16 %v4160
        %v4193 = vunpack.c.l.b16 %v4161
        %v4194 = vunpack.c.l.b16 %v4162
        %v4195 = vunpack.c.l.b16 %v4163
        %v4196 = vunpack.c.l.b16 %v4164
        %v4197 = vunpack.c.l.b16 %v4165
        %v4198 = vunpack.c.l.b16 %v4166
        %v4199 = vunpack.c.l.b16 %v4167
        %v4200 = vunpack.c.l.b16 %v4168
        %v4201 = vunpack.c.l.b16 %v4169
        %v4202 = vunpack.c.l.b16 %v4170
        %v4203 = vunpack.c.l.b16 %v4171
        %v4204 = vunpack.c.l.b16 %v4172
        %v4205 = vunpack.c.l.b16 %v4173
        %v4206 = vunpack.c.l.b16 %v4174
        %v4207 = vunpack.c.l.b16 %v4175
        %v4208 = vpack.c.b16 %v4193, %v4192
        %v4209 = vpack.c.b16 %v4195, %v4194
        %v4210 = vpack.c.b16 %v4197, %v4196
        %v4211 = vpack.c.b16 %v4199, %v4198
        %v4212 = vpack.c.b16 %v4201, %v4200
        %v4213 = vpack.c.b16 %v4203, %v4202
        %v4214 = vpack.c.b16 %v4205, %v4204
        %v4215 = vpack.c.b16 %v4207, %v4206
        %4224 = vmatpush.bf16.msra.mxu0 %v4215
        %4225 = vmatpush.bf16.msra.mxu0 %v4214
        %4226 = vmatpush.bf16.msra.mxu0 %v4213
        %4227 = vmatpush.bf16.msra.mxu0 %v4212
        %4228 = vmatpush.bf16.msra.mxu0 %v4211
        %4229 = vmatpush.bf16.msra.mxu0 %v4210
        %4230 = vmatpush.bf16.msra.mxu0 %v4209
        %4231 = vmatpush.bf16.msra.mxu0 %v4208
        %4232 = vmatmul.bf16.gmra.mxu0 %v4143
        %v4233 = vpop.f32.mrf.mxu0
        %v4234 = vadd.f32 0.0, %v4233
        %v4235 = vpop.f32.mrf.mxu0
        %v4236 = vadd.f32 0.0, %v4235
        %4237 = vmatmul.bf16.gmra.mxu0 %v4144
        %v4238 = vpop.f32.mrf.mxu0
        %v4239 = vadd.f32 0.0, %v4238
        %v4240 = vpop.f32.mrf.mxu0
        %v4241 = vadd.f32 0.0, %v4240
        %4242 = vmatmul.bf16.gmra.mxu0 %v4145
        %v4243 = vpop.f32.mrf.mxu0
        %v4244 = vadd.f32 0.0, %v4243
        %v4245 = vpop.f32.mrf.mxu0
        %v4246 = vadd.f32 0.0, %v4245
        %4247 = vmatmul.bf16.gmra.mxu0 %v4146
        %v4248 = vpop.f32.mrf.mxu0
        %v4249 = vadd.f32 0.0, %v4248
        %v4250 = vpop.f32.mrf.mxu0
        %v4251 = vadd.f32 0.0, %v4250
        %4252 = vmatmul.bf16.gmra.mxu0 %v4147
        %v4253 = vpop.f32.mrf.mxu0
        %v4254 = vadd.f32 0.0, %v4253
        %v4255 = vpop.f32.mrf.mxu0
        %v4256 = vadd.f32 0.0, %v4255
        %4257 = vmatmul.bf16.gmra.mxu0 %v4148
        %v4258 = vpop.f32.mrf.mxu0
        %v4259 = vadd.f32 0.0, %v4258
        %v4260 = vpop.f32.mrf.mxu0
        %v4261 = vadd.f32 0.0, %v4260
        %4262 = vmatmul.bf16.gmra.mxu0 %v4149
        %v4263 = vpop.f32.mrf.mxu0
        %v4264 = vadd.f32 0.0, %v4263
        %v4265 = vpop.f32.mrf.mxu0
        %v4266 = vadd.f32 0.0, %v4265
        %4267 = vmatmul.bf16.gmra.mxu0 %v4150
        %v4268 = vpop.f32.mrf.mxu0
        %v4269 = vadd.f32 0.0, %v4268
        %v4270 = vpop.f32.mrf.mxu0
        %v4271 = vadd.f32 0.0, %v4270
        %4272 = vmatmul.bf16.gmra.mxu0 %v4151
        %v4273 = vpop.f32.mrf.mxu0
        %v4274 = vadd.f32 0.0, %v4273
        %v4275 = vpop.f32.mrf.mxu0
        %v4276 = vadd.f32 0.0, %v4275
        %4277 = vmatmul.bf16.gmra.mxu0 %v4152
        %v4278 = vpop.f32.mrf.mxu0
        %v4279 = vadd.f32 0.0, %v4278
        %v4280 = vpop.f32.mrf.mxu0
        %v4281 = vadd.f32 0.0, %v4280
        %4282 = vmatmul.bf16.gmra.mxu0 %v4153
        %v4283 = vpop.f32.mrf.mxu0
        %v4284 = vadd.f32 0.0, %v4283
        %v4285 = vpop.f32.mrf.mxu0
        %v4286 = vadd.f32 0.0, %v4285
        %4287 = vmatmul.bf16.gmra.mxu0 %v4154
        %v4288 = vpop.f32.mrf.mxu0
        %v4289 = vadd.f32 0.0, %v4288
        %v4290 = vpop.f32.mrf.mxu0
        %v4291 = vadd.f32 0.0, %v4290
        %4292 = vmatmul.bf16.gmra.mxu0 %v4155
        %v4293 = vpop.f32.mrf.mxu0
        %v4294 = vadd.f32 0.0, %v4293
        %v4295 = vpop.f32.mrf.mxu0
        %v4296 = vadd.f32 0.0, %v4295
        %4297 = vmatmul.bf16.gmra.mxu0 %v4156
        %v4298 = vpop.f32.mrf.mxu0
        %v4299 = vadd.f32 0.0, %v4298
        %v4300 = vpop.f32.mrf.mxu0
        %v4301 = vadd.f32 0.0, %v4300
        %4302 = vmatmul.bf16.gmra.mxu0 %v4157
        %v4303 = vpop.f32.mrf.mxu0
        %v4304 = vadd.f32 0.0, %v4303
        %v4305 = vpop.f32.mrf.mxu0
        %v4306 = vadd.f32 0.0, %v4305
        %4307 = vmatmul.bf16.gmra.mxu0 %v4158
        %v4308 = vpop.f32.mrf.mxu0
        %v4309 = vadd.f32 0.0, %v4308
        %v4310 = vpop.f32.mrf.mxu0
        %v4311 = vadd.f32 0.0, %v4310
        %4312 = vdwg.mxu0
        %v4313 = vadd.f32 %v4111, %v4234
        %v4314 = vadd.f32 %v4112, %v4236
        %v4315 = vadd.f32 %v4113, %v4239
        %v4316 = vadd.f32 %v4114, %v4241
        %v4317 = vadd.f32 %v4115, %v4244
        %v4318 = vadd.f32 %v4116, %v4246
        %v4319 = vadd.f32 %v4117, %v4249
        %v4320 = vadd.f32 %v4118, %v4251
        %v4321 = vadd.f32 %v4119, %v4254
        %v4322 = vadd.f32 %v4120, %v4256
        %v4323 = vadd.f32 %v4121, %v4259
        %v4324 = vadd.f32 %v4122, %v4261
        %v4325 = vadd.f32 %v4123, %v4264
        %v4326 = vadd.f32 %v4124, %v4266
        %v4327 = vadd.f32 %v4125, %v4269
        %v4328 = vadd.f32 %v4126, %v4271
        %v4329 = vadd.f32 %v4127, %v4274
        %v4330 = vadd.f32 %v4128, %v4276
        %v4331 = vadd.f32 %v4129, %v4279
        %v4332 = vadd.f32 %v4130, %v4281
        %v4333 = vadd.f32 %v4131, %v4284
        %v4334 = vadd.f32 %v4132, %v4286
        %v4335 = vadd.f32 %v4133, %v4289
        %v4336 = vadd.f32 %v4134, %v4291
        %v4337 = vadd.f32 %v4135, %v4294
        %v4338 = vadd.f32 %v4136, %v4296
        %v4339 = vadd.f32 %v4137, %v4299
        %v4340 = vadd.f32 %v4138, %v4301
        %v4341 = vadd.f32 %v4139, %v4304
        %v4342 = vadd.f32 %v4140, %v4306
        %v4343 = vadd.f32 %v4141, %v4309
        %v4344 = vadd.f32 %v4142, %v4311
        %v4345 = vld [vmem:[#allocation7] sm:$0x1]
        %v4347 = vperm.slane %v4345, 0
        %v4349 = vadd.f32 %v4313, %v4347
        %v4350 = vadd.f32 %v4314, %v4347
        %v4351 = vadd.f32 %v4315, %v4347
        %v4352 = vadd.f32 %v4316, %v4347
        %v4353 = vadd.f32 %v4317, %v4347
        %v4354 = vadd.f32 %v4318, %v4347
        %v4355 = vadd.f32 %v4319, %v4347
        %v4356 = vadd.f32 %v4320, %v4347
        %v4357 = vadd.f32 %v4321, %v4347
        %v4358 = vadd.f32 %v4322, %v4347
        %v4359 = vadd.f32 %v4323, %v4347
        %v4360 = vadd.f32 %v4324, %v4347
        %v4361 = vadd.f32 %v4325, %v4347
        %v4362 = vadd.f32 %v4326, %v4347
        %v4363 = vadd.f32 %v4327, %v4347
        %v4364 = vadd.f32 %v4328, %v4347
        %v4365 = vadd.f32 %v4329, %v4347
        %v4366 = vadd.f32 %v4330, %v4347
        %v4367 = vadd.f32 %v4331, %v4347
        %v4368 = vadd.f32 %v4332, %v4347
        %v4369 = vadd.f32 %v4333, %v4347
        %v4370 = vadd.f32 %v4334, %v4347
        %v4371 = vadd.f32 %v4335, %v4347
        %v4372 = vadd.f32 %v4336, %v4347
        %v4373 = vadd.f32 %v4337, %v4347
        %v4374 = vadd.f32 %v4338, %v4347
        %v4375 = vadd.f32 %v4339, %v4347
        %v4376 = vadd.f32 %v4340, %v4347
        %v4377 = vadd.f32 %v4341, %v4347
        %v4378 = vadd.f32 %v4342, %v4347
        %v4379 = vadd.f32 %v4343, %v4347
        %v4380 = vadd.f32 %v4344, %v4347
        %v4381 = vmax.f32 %v4349, 0.0
        %v4382 = vmax.f32 %v4350, 0.0
        %v4383 = vmax.f32 %v4351, 0.0
        %v4384 = vmax.f32 %v4352, 0.0
        %v4385 = vmax.f32 %v4353, 0.0
        %v4386 = vmax.f32 %v4354, 0.0
        %v4387 = vmax.f32 %v4355, 0.0
        %v4388 = vmax.f32 %v4356, 0.0
        %v4389 = vmax.f32 %v4357, 0.0
        %v4390 = vmax.f32 %v4358, 0.0
        %v4391 = vmax.f32 %v4359, 0.0
        %v4392 = vmax.f32 %v4360, 0.0
        %v4393 = vmax.f32 %v4361, 0.0
        %v4394 = vmax.f32 %v4362, 0.0
        %v4395 = vmax.f32 %v4363, 0.0
        %v4396 = vmax.f32 %v4364, 0.0
        %v4397 = vmax.f32 %v4365, 0.0
        %v4398 = vmax.f32 %v4366, 0.0
        %v4399 = vmax.f32 %v4367, 0.0
        %v4400 = vmax.f32 %v4368, 0.0
        %v4401 = vmax.f32 %v4369, 0.0
        %v4402 = vmax.f32 %v4370, 0.0
        %v4403 = vmax.f32 %v4371, 0.0
        %v4404 = vmax.f32 %v4372, 0.0
        %v4405 = vmax.f32 %v4373, 0.0
        %v4406 = vmax.f32 %v4374, 0.0
        %v4407 = vmax.f32 %v4375, 0.0
        %v4408 = vmax.f32 %v4376, 0.0
        %v4409 = vmax.f32 %v4377, 0.0
        %v4410 = vmax.f32 %v4378, 0.0
        %v4411 = vmax.f32 %v4379, 0.0
        %v4412 = vmax.f32 %v4380, 0.0
        %v4413 = vrot.slane %v4381, 1
        %v4414 = vrot.slane %v4382, 1
        %v4415 = vrot.slane %v4383, 1
        %v4416 = vrot.slane %v4384, 1
        %v4417 = vrot.slane %v4385, 1
        %v4418 = vrot.slane %v4386, 1
        %v4419 = vrot.slane %v4387, 1
        %v4420 = vrot.slane %v4388, 1
        %v4421 = vrot.slane %v4389, 1
        %v4422 = vrot.slane %v4390, 1
        %v4423 = vrot.slane %v4391, 1
        %v4424 = vrot.slane %v4392, 1
        %v4425 = vrot.slane %v4393, 1
        %v4426 = vrot.slane %v4394, 1
        %v4427 = vrot.slane %v4395, 1
        %v4428 = vrot.slane %v4396, 1
        %v4429 = vrot.slane %v4397, 1
        %v4430 = vrot.slane %v4398, 1
        %v4431 = vrot.slane %v4399, 1
        %v4432 = vrot.slane %v4400, 1
        %v4433 = vrot.slane %v4401, 1
        %v4434 = vrot.slane %v4402, 1
        %v4435 = vrot.slane %v4403, 1
        %v4436 = vrot.slane %v4404, 1
        %v4437 = vrot.slane %v4405, 1
        %v4438 = vrot.slane %v4406, 1
        %v4439 = vrot.slane %v4407, 1
        %v4440 = vrot.slane %v4408, 1
        %v4441 = vrot.slane %v4409, 1
        %v4442 = vrot.slane %v4410, 1
        %v4443 = vrot.slane %v4411, 1
        %v4444 = vrot.slane %v4412, 1
        %v4445 = vsel %vm474, %v4443, %v4444
        %v4446 = vsel %vm474, %v4442, %v4443
        %v4447 = vsel %vm474, %v4441, %v4442
        %v4448 = vsel %vm474, %v4440, %v4441
        %v4449 = vsel %vm474, %v4439, %v4440
        %v4450 = vsel %vm474, %v4438, %v4439
        %v4451 = vsel %vm474, %v4437, %v4438
        %v4452 = vsel %vm474, %v4436, %v4437
        %v4453 = vsel %vm474, %v4435, %v4436
        %v4454 = vsel %vm474, %v4434, %v4435
        %v4455 = vsel %vm474, %v4433, %v4434
        %v4456 = vsel %vm474, %v4432, %v4433
        %v4457 = vsel %vm474, %v4431, %v4432
        %v4458 = vsel %vm474, %v4430, %v4431
        %v4459 = vsel %vm474, %v4429, %v4430
        %v4460 = vsel %vm474, %v4428, %v4429
        %v4461 = vsel %vm474, %v4427, %v4428
        %v4462 = vsel %vm474, %v4426, %v4427
        %v4463 = vsel %vm474, %v4425, %v4426
        %v4464 = vsel %vm474, %v4424, %v4425
        %v4465 = vsel %vm474, %v4423, %v4424
        %v4466 = vsel %vm474, %v4422, %v4423
        %v4467 = vsel %vm474, %v4421, %v4422
        %v4468 = vsel %vm474, %v4420, %v4421
        %v4469 = vsel %vm474, %v4419, %v4420
        %v4470 = vsel %vm474, %v4418, %v4419
        %v4471 = vsel %vm474, %v4417, %v4418
        %v4472 = vsel %vm474, %v4416, %v4417
        %v4473 = vsel %vm474, %v4415, %v4416
        %v4474 = vsel %vm474, %v4414, %v4415
        %v4475 = vsel %vm474, %v4413, %v4414
        %v4476 = vsel %vm474, %v4444, %v4413
        %v4477 = vmax.f32 %v4381, %v4475
        %v4478 = vmax.f32 %v4382, %v4474
        %v4479 = vmax.f32 %v4383, %v4473
        %v4480 = vmax.f32 %v4384, %v4472
        %v4481 = vmax.f32 %v4385, %v4471
        %v4482 = vmax.f32 %v4386, %v4470
        %v4483 = vmax.f32 %v4387, %v4469
        %v4484 = vmax.f32 %v4388, %v4468
        %v4485 = vmax.f32 %v4389, %v4467
        %v4486 = vmax.f32 %v4390, %v4466
        %v4487 = vmax.f32 %v4391, %v4465
        %v4488 = vmax.f32 %v4392, %v4464
        %v4489 = vmax.f32 %v4393, %v4463
        %v4490 = vmax.f32 %v4394, %v4462
        %v4491 = vmax.f32 %v4395, %v4461
        %v4492 = vmax.f32 %v4396, %v4460
        %v4493 = vmax.f32 %v4397, %v4459
        %v4494 = vmax.f32 %v4398, %v4458
        %v4495 = vmax.f32 %v4399, %v4457
        %v4496 = vmax.f32 %v4400, %v4456
        %v4497 = vmax.f32 %v4401, %v4455
        %v4498 = vmax.f32 %v4402, %v4454
        %v4499 = vmax.f32 %v4403, %v4453
        %v4500 = vmax.f32 %v4404, %v4452
        %v4501 = vmax.f32 %v4405, %v4451
        %v4502 = vmax.f32 %v4406, %v4450
        %v4503 = vmax.f32 %v4407, %v4449
        %v4504 = vmax.f32 %v4408, %v4448
        %v4505 = vmax.f32 %v4409, %v4447
        %v4506 = vmax.f32 %v4410, %v4446
        %v4507 = vmax.f32 %v4411, %v4445
        %v4508 = vmax.f32 %v4412, %v4476
        %v4509 = vrot.slane %v4381, 2
        %v4510 = vrot.slane %v4382, 2
        %v4511 = vrot.slane %v4383, 2
        %v4512 = vrot.slane %v4384, 2
        %v4513 = vrot.slane %v4385, 2
        %v4514 = vrot.slane %v4386, 2
        %v4515 = vrot.slane %v4387, 2
        %v4516 = vrot.slane %v4388, 2
        %v4517 = vrot.slane %v4389, 2
        %v4518 = vrot.slane %v4390, 2
        %v4519 = vrot.slane %v4391, 2
        %v4520 = vrot.slane %v4392, 2
        %v4521 = vrot.slane %v4393, 2
        %v4522 = vrot.slane %v4394, 2
        %v4523 = vrot.slane %v4395, 2
        %v4524 = vrot.slane %v4396, 2
        %v4525 = vrot.slane %v4397, 2
        %v4526 = vrot.slane %v4398, 2
        %v4527 = vrot.slane %v4399, 2
        %v4528 = vrot.slane %v4400, 2
        %v4529 = vrot.slane %v4401, 2
        %v4530 = vrot.slane %v4402, 2
        %v4531 = vrot.slane %v4403, 2
        %v4532 = vrot.slane %v4404, 2
        %v4533 = vrot.slane %v4405, 2
        %v4534 = vrot.slane %v4406, 2
        %v4535 = vrot.slane %v4407, 2
        %v4536 = vrot.slane %v4408, 2
        %v4537 = vrot.slane %v4409, 2
        %v4538 = vrot.slane %v4410, 2
        %v4539 = vrot.slane %v4411, 2
        %v4540 = vrot.slane %v4412, 2
        %v4541 = vsel %vm846, %v4539, %v4540
        %v4542 = vsel %vm846, %v4538, %v4539
        %v4543 = vsel %vm846, %v4537, %v4538
        %v4544 = vsel %vm846, %v4536, %v4537
        %v4545 = vsel %vm846, %v4535, %v4536
        %v4546 = vsel %vm846, %v4534, %v4535
        %v4547 = vsel %vm846, %v4533, %v4534
        %v4548 = vsel %vm846, %v4532, %v4533
        %v4549 = vsel %vm846, %v4531, %v4532
        %v4550 = vsel %vm846, %v4530, %v4531
        %v4551 = vsel %vm846, %v4529, %v4530
        %v4552 = vsel %vm846, %v4528, %v4529
        %v4553 = vsel %vm846, %v4527, %v4528
        %v4554 = vsel %vm846, %v4526, %v4527
        %v4555 = vsel %vm846, %v4525, %v4526
        %v4556 = vsel %vm846, %v4524, %v4525
        %v4557 = vsel %vm846, %v4523, %v4524
        %v4558 = vsel %vm846, %v4522, %v4523
        %v4559 = vsel %vm846, %v4521, %v4522
        %v4560 = vsel %vm846, %v4520, %v4521
        %v4561 = vsel %vm846, %v4519, %v4520
        %v4562 = vsel %vm846, %v4518, %v4519
        %v4563 = vsel %vm846, %v4517, %v4518
        %v4564 = vsel %vm846, %v4516, %v4517
        %v4565 = vsel %vm846, %v4515, %v4516
        %v4566 = vsel %vm846, %v4514, %v4515
        %v4567 = vsel %vm846, %v4513, %v4514
        %v4568 = vsel %vm846, %v4512, %v4513
        %v4569 = vsel %vm846, %v4511, %v4512
        %v4570 = vsel %vm846, %v4510, %v4511
        %v4571 = vsel %vm846, %v4509, %v4510
        %v4572 = vsel %vm846, %v4540, %v4509
        %v4573 = vmax.f32 %v4477, %v4571
        %v4574 = vmax.f32 %v4478, %v4570
        %v4575 = vmax.f32 %v4479, %v4569
        %v4576 = vmax.f32 %v4480, %v4568
        %v4577 = vmax.f32 %v4481, %v4567
        %v4578 = vmax.f32 %v4482, %v4566
        %v4579 = vmax.f32 %v4483, %v4565
        %v4580 = vmax.f32 %v4484, %v4564
        %v4581 = vmax.f32 %v4485, %v4563
        %v4582 = vmax.f32 %v4486, %v4562
        %v4583 = vmax.f32 %v4487, %v4561
        %v4584 = vmax.f32 %v4488, %v4560
        %v4585 = vmax.f32 %v4489, %v4559
        %v4586 = vmax.f32 %v4490, %v4558
        %v4587 = vmax.f32 %v4491, %v4557
        %v4588 = vmax.f32 %v4492, %v4556
        %v4589 = vmax.f32 %v4493, %v4555
        %v4590 = vmax.f32 %v4494, %v4554
        %v4591 = vmax.f32 %v4495, %v4553
        %v4592 = vmax.f32 %v4496, %v4552
        %v4593 = vmax.f32 %v4497, %v4551
        %v4594 = vmax.f32 %v4498, %v4550
        %v4595 = vmax.f32 %v4499, %v4549
        %v4596 = vmax.f32 %v4500, %v4548
        %v4597 = vmax.f32 %v4501, %v4547
        %v4598 = vmax.f32 %v4502, %v4546
        %v4599 = vmax.f32 %v4503, %v4545
        %v4600 = vmax.f32 %v4504, %v4544
        %v4601 = vmax.f32 %v4505, %v4543
        %v4602 = vmax.f32 %v4506, %v4542
        %v4603 = vmax.f32 %v4507, %v4541
        %v4604 = vmax.f32 %v4508, %v4572
        %v4605 = vpack.c.bf16 %v4574, %v4573
        %v4606 = vpack.c.bf16 %v4576, %v4575
        %v4607 = vpack.c.bf16 %v4578, %v4577
        %v4608 = vpack.c.bf16 %v4580, %v4579
        %v4609 = vpack.c.bf16 %v4582, %v4581
        %v4610 = vpack.c.bf16 %v4584, %v4583
        %v4611 = vpack.c.bf16 %v4586, %v4585
        %v4612 = vpack.c.bf16 %v4588, %v4587
        %v4613 = vpack.c.bf16 %v4590, %v4589
        %v4614 = vpack.c.bf16 %v4592, %v4591
        %v4615 = vpack.c.bf16 %v4594, %v4593
        %v4616 = vpack.c.bf16 %v4596, %v4595
        %v4617 = vpack.c.bf16 %v4598, %v4597
        %v4618 = vpack.c.bf16 %v4600, %v4599
        %v4619 = vpack.c.bf16 %v4602, %v4601
        %v4620 = vpack.c.bf16 %v4604, %v4603
        %v4621 = vld [vmem:[#allocation9] sm:$0xf]
        %v4622 = vld [vmem:[#allocation9 + $0x4] sm:$0xf]
        %v4623 = vld [vmem:[#allocation9 + $0x8] sm:$0xf]
        %v4624 = vld [vmem:[#allocation9 + $0xc] sm:$0xf]
        %v4625 = vld [vmem:[#allocation9 + $0x10] sm:$0xf]
        %v4626 = vld [vmem:[#allocation9 + $0x14] sm:$0xf]
        %v4627 = vld [vmem:[#allocation9 + $0x18] sm:$0xf]
        %v4628 = vld [vmem:[#allocation9 + $0x1c] sm:$0xf]
        %v4629 = vld [vmem:[#allocation9 + $0x20] sm:$0xf]
        %v4630 = vld [vmem:[#allocation9 + $0x24] sm:$0xf]
        %v4631 = vld [vmem:[#allocation9 + $0x28] sm:$0xf]
        %v4632 = vld [vmem:[#allocation9 + $0x2c] sm:$0xf]
        %v4633 = vld [vmem:[#allocation9 + $0x30] sm:$0xf]
        %v4634 = vld [vmem:[#allocation9 + $0x34] sm:$0xf]
        %v4635 = vld [vmem:[#allocation9 + $0x38] sm:$0xf]
        %v4636 = vld [vmem:[#allocation9 + $0x3c] sm:$0xf]
        %v4637 = vrot.slane %v4573, 1
        %v4638 = vrot.slane %v4574, 1
        %v4639 = vrot.slane %v4575, 1
        %v4640 = vrot.slane %v4576, 1
        %v4641 = vrot.slane %v4577, 1
        %v4642 = vrot.slane %v4578, 1
        %v4643 = vrot.slane %v4579, 1
        %v4644 = vrot.slane %v4580, 1
        %v4645 = vrot.slane %v4581, 1
        %v4646 = vrot.slane %v4582, 1
        %v4647 = vrot.slane %v4583, 1
        %v4648 = vrot.slane %v4584, 1
        %v4649 = vrot.slane %v4585, 1
        %v4650 = vrot.slane %v4586, 1
        %v4651 = vrot.slane %v4587, 1
        %v4652 = vrot.slane %v4588, 1
        %v4653 = vrot.slane %v4589, 1
        %v4654 = vrot.slane %v4590, 1
        %v4655 = vrot.slane %v4591, 1
        %v4656 = vrot.slane %v4592, 1
        %v4657 = vrot.slane %v4593, 1
        %v4658 = vrot.slane %v4594, 1
        %v4659 = vrot.slane %v4595, 1
        %v4660 = vrot.slane %v4596, 1
        %v4661 = vrot.slane %v4597, 1
        %v4662 = vrot.slane %v4598, 1
        %v4663 = vrot.slane %v4599, 1
        %v4664 = vrot.slane %v4600, 1
        %v4665 = vrot.slane %v4601, 1
        %v4666 = vrot.slane %v4602, 1
        %v4667 = vrot.slane %v4603, 1
        %v4668 = vrot.slane %v4604, 1
        %v4669 = vsel %vm474, %v4667, %v4668
        %v4670 = vsel %vm474, %v4666, %v4667
        %v4671 = vsel %vm474, %v4665, %v4666
        %v4672 = vsel %vm474, %v4664, %v4665
        %v4673 = vsel %vm474, %v4663, %v4664
        %v4674 = vsel %vm474, %v4662, %v4663
        %v4675 = vsel %vm474, %v4661, %v4662
        %v4676 = vsel %vm474, %v4660, %v4661
        %v4677 = vsel %vm474, %v4659, %v4660
        %v4678 = vsel %vm474, %v4658, %v4659
        %v4679 = vsel %vm474, %v4657, %v4658
        %v4680 = vsel %vm474, %v4656, %v4657
        %v4681 = vsel %vm474, %v4655, %v4656
        %v4682 = vsel %vm474, %v4654, %v4655
        %v4683 = vsel %vm474, %v4653, %v4654
        %v4684 = vsel %vm474, %v4652, %v4653
        %v4685 = vsel %vm474, %v4651, %v4652
        %v4686 = vsel %vm474, %v4650, %v4651
        %v4687 = vsel %vm474, %v4649, %v4650
        %v4688 = vsel %vm474, %v4648, %v4649
        %v4689 = vsel %vm474, %v4647, %v4648
        %v4690 = vsel %vm474, %v4646, %v4647
        %v4691 = vsel %vm474, %v4645, %v4646
        %v4692 = vsel %vm474, %v4644, %v4645
        %v4693 = vsel %vm474, %v4643, %v4644
        %v4694 = vsel %vm474, %v4642, %v4643
        %v4695 = vsel %vm474, %v4641, %v4642
        %v4696 = vsel %vm474, %v4640, %v4641
        %v4697 = vsel %vm474, %v4639, %v4640
        %v4698 = vsel %vm474, %v4638, %v4639
        %v4699 = vsel %vm474, %v4637, %v4638
        %v4700 = vsel %vm474, %v4668, %v4637
        %v4701 = vpack.c.bf16 %v4698, %v4699
        %v4702 = vpack.c.bf16 %v4696, %v4697
        %v4703 = vpack.c.bf16 %v4694, %v4695
        %v4704 = vpack.c.bf16 %v4692, %v4693
        %v4705 = vpack.c.bf16 %v4690, %v4691
        %v4706 = vpack.c.bf16 %v4688, %v4689
        %v4707 = vpack.c.bf16 %v4686, %v4687
        %v4708 = vpack.c.bf16 %v4684, %v4685
        %v4709 = vpack.c.bf16 %v4682, %v4683
        %v4710 = vpack.c.bf16 %v4680, %v4681
        %v4711 = vpack.c.bf16 %v4678, %v4679
        %v4712 = vpack.c.bf16 %v4676, %v4677
        %v4713 = vpack.c.bf16 %v4674, %v4675
        %v4714 = vpack.c.bf16 %v4672, %v4673
        %v4715 = vpack.c.bf16 %v4670, %v4671
        %v4716 = vpack.c.bf16 %v4700, %v4669
        %s4717 = scalar_lea.vmem [#allocation9], 64
        %v4718 = vld [vmem:[%s4717] sm:$0xf]
        %v4719 = vld [vmem:[%s4717 + $0x4] sm:$0xf]
        %v4720 = vld [vmem:[%s4717 + $0x8] sm:$0xf]
        %v4721 = vld [vmem:[%s4717 + $0xc] sm:$0xf]
        %v4722 = vld [vmem:[%s4717 + $0x10] sm:$0xf]
        %v4723 = vld [vmem:[%s4717 + $0x14] sm:$0xf]
        %v4724 = vld [vmem:[%s4717 + $0x18] sm:$0xf]
        %v4725 = vld [vmem:[%s4717 + $0x1c] sm:$0xf]
        %v4726 = vld [vmem:[%s4717 + $0x20] sm:$0xf]
        %v4727 = vld [vmem:[%s4717 + $0x24] sm:$0xf]
        %v4728 = vld [vmem:[%s4717 + $0x28] sm:$0xf]
        %v4729 = vld [vmem:[%s4717 + $0x2c] sm:$0xf]
        %v4730 = vld [vmem:[%s4717 + $0x30] sm:$0xf]
        %v4731 = vld [vmem:[%s4717 + $0x34] sm:$0xf]
        %v4732 = vld [vmem:[%s4717 + $0x38] sm:$0xf]
        %v4733 = vld [vmem:[%s4717 + $0x3c] sm:$0xf]
        %v4750 = vunpack.c.l.b16 %v4718
        %v4751 = vunpack.c.l.b16 %v4719
        %v4752 = vunpack.c.l.b16 %v4720
        %v4753 = vunpack.c.l.b16 %v4721
        %v4754 = vunpack.c.l.b16 %v4722
        %v4755 = vunpack.c.l.b16 %v4723
        %v4756 = vunpack.c.l.b16 %v4724
        %v4757 = vunpack.c.l.b16 %v4725
        %v4758 = vunpack.c.l.b16 %v4726
        %v4759 = vunpack.c.l.b16 %v4727
        %v4760 = vunpack.c.l.b16 %v4728
        %v4761 = vunpack.c.l.b16 %v4729
        %v4762 = vunpack.c.l.b16 %v4730
        %v4763 = vunpack.c.l.b16 %v4731
        %v4764 = vunpack.c.l.b16 %v4732
        %v4765 = vunpack.c.l.b16 %v4733
        %v4766 = vpack.c.b16 %v4751, %v4750
        %v4767 = vpack.c.b16 %v4753, %v4752
        %v4768 = vpack.c.b16 %v4755, %v4754
        %v4769 = vpack.c.b16 %v4757, %v4756
        %v4770 = vpack.c.b16 %v4759, %v4758
        %v4771 = vpack.c.b16 %v4761, %v4760
        %v4772 = vpack.c.b16 %v4763, %v4762
        %v4773 = vpack.c.b16 %v4765, %v4764
        %4782 = vmatpush.bf16.msra.mxu0 %v4773
        %4783 = vmatpush.bf16.msra.mxu0 %v4772
        %4784 = vmatpush.bf16.msra.mxu0 %v4771
        %4785 = vmatpush.bf16.msra.mxu0 %v4770
        %4786 = vmatpush.bf16.msra.mxu0 %v4769
        %4787 = vmatpush.bf16.msra.mxu0 %v4768
        %4788 = vmatpush.bf16.msra.mxu0 %v4767
        %4789 = vmatpush.bf16.msra.mxu0 %v4766
        %4790 = vmatmul.bf16.gmra.mxu0 %v4701
        %v4791 = vpop.f32.mrf.mxu0
        %v4792 = vadd.f32 0.0, %v4791
        %v4793 = vpop.f32.mrf.mxu0
        %v4794 = vadd.f32 0.0, %v4793
        %4795 = vmatmul.bf16.gmra.mxu0 %v4702
        %v4796 = vpop.f32.mrf.mxu0
        %v4797 = vadd.f32 0.0, %v4796
        %v4798 = vpop.f32.mrf.mxu0
        %v4799 = vadd.f32 0.0, %v4798
        %4800 = vmatmul.bf16.gmra.mxu0 %v4703
        %v4801 = vpop.f32.mrf.mxu0
        %v4802 = vadd.f32 0.0, %v4801
        %v4803 = vpop.f32.mrf.mxu0
        %v4804 = vadd.f32 0.0, %v4803
        %4805 = vmatmul.bf16.gmra.mxu0 %v4704
        %v4806 = vpop.f32.mrf.mxu0
        %v4807 = vpop.f32.mrf.mxu0
        %4808 = vmatmul.bf16.gmra.mxu0 %v4705
        %v4809 = vpop.f32.mrf.mxu0
        %v4810 = vadd.f32 0.0, %v4809
        %v4811 = vpop.f32.mrf.mxu0
        %v4812 = vadd.f32 0.0, %v4811
        %4813 = vmatmul.bf16.gmra.mxu0 %v4706
        %v4814 = vpop.f32.mrf.mxu0
        %v4815 = vadd.f32 0.0, %v4814
        %v4816 = vpop.f32.mrf.mxu0
        %v4817 = vadd.f32 0.0, %v4816
        %4818 = vmatmul.bf16.gmra.mxu0 %v4707
        %v4819 = vpop.f32.mrf.mxu0
        %v4820 = vadd.f32 0.0, %v4819
        %v4821 = vpop.f32.mrf.mxu0
        %v4822 = vadd.f32 0.0, %v4821
        %4823 = vmatmul.bf16.gmra.mxu0 %v4708
        %v4824 = vpop.f32.mrf.mxu0
        %v4825 = vpop.f32.mrf.mxu0
        %4826 = vmatmul.bf16.gmra.mxu0 %v4709
        %v4827 = vpop.f32.mrf.mxu0
        %v4828 = vadd.f32 0.0, %v4827
        %v4829 = vpop.f32.mrf.mxu0
        %v4830 = vadd.f32 0.0, %v4829
        %4831 = vmatmul.bf16.gmra.mxu0 %v4710
        %v4832 = vpop.f32.mrf.mxu0
        %v4833 = vadd.f32 0.0, %v4832
        %v4834 = vpop.f32.mrf.mxu0
        %v4835 = vadd.f32 0.0, %v4834
        %4836 = vmatmul.bf16.gmra.mxu0 %v4711
        %v4837 = vpop.f32.mrf.mxu0
        %v4838 = vadd.f32 0.0, %v4837
        %v4839 = vpop.f32.mrf.mxu0
        %v4840 = vadd.f32 0.0, %v4839
        %4841 = vmatmul.bf16.gmra.mxu0 %v4712
        %v4842 = vpop.f32.mrf.mxu0
        %v4843 = vpop.f32.mrf.mxu0
        %4844 = vmatmul.bf16.gmra.mxu0 %v4713
        %v4845 = vpop.f32.mrf.mxu0
        %v4846 = vadd.f32 0.0, %v4845
        %v4847 = vpop.f32.mrf.mxu0
        %v4848 = vadd.f32 0.0, %v4847
        %4849 = vmatmul.bf16.gmra.mxu0 %v4714
        %v4850 = vpop.f32.mrf.mxu0
        %v4851 = vadd.f32 0.0, %v4850
        %v4852 = vpop.f32.mrf.mxu0
        %v4853 = vadd.f32 0.0, %v4852
        %4854 = vmatmul.bf16.gmra.mxu0 %v4715
        %v4855 = vpop.f32.mrf.mxu0
        %v4856 = vadd.f32 0.0, %v4855
        %v4857 = vpop.f32.mrf.mxu0
        %v4858 = vadd.f32 0.0, %v4857
        %4859 = vmatmul.bf16.gmra.mxu0 %v4716
        %v4860 = vpop.f32.mrf.mxu0
        %v4861 = vpop.f32.mrf.mxu0
        %4862 = vdwg.mxu0
        %v4879 = vunpack.c.l.b16 %v4621
        %v4880 = vunpack.c.l.b16 %v4622
        %v4881 = vunpack.c.l.b16 %v4623
        %v4882 = vunpack.c.l.b16 %v4624
        %v4883 = vunpack.c.l.b16 %v4625
        %v4884 = vunpack.c.l.b16 %v4626
        %v4885 = vunpack.c.l.b16 %v4627
        %v4886 = vunpack.c.l.b16 %v4628
        %v4887 = vunpack.c.l.b16 %v4629
        %v4888 = vunpack.c.l.b16 %v4630
        %v4889 = vunpack.c.l.b16 %v4631
        %v4890 = vunpack.c.l.b16 %v4632
        %v4891 = vunpack.c.l.b16 %v4633
        %v4892 = vunpack.c.l.b16 %v4634
        %v4893 = vunpack.c.l.b16 %v4635
        %v4894 = vunpack.c.l.b16 %v4636
        %v4895 = vpack.c.b16 %v4880, %v4879
        %v4896 = vpack.c.b16 %v4882, %v4881
        %v4897 = vpack.c.b16 %v4884, %v4883
        %v4898 = vpack.c.b16 %v4886, %v4885
        %v4899 = vpack.c.b16 %v4888, %v4887
        %v4900 = vpack.c.b16 %v4890, %v4889
        %v4901 = vpack.c.b16 %v4892, %v4891
        %v4902 = vpack.c.b16 %v4894, %v4893
        %4911 = vmatpush.bf16.msra.mxu0 %v4902
        %4912 = vmatpush.bf16.msra.mxu0 %v4901
        %4913 = vmatpush.bf16.msra.mxu0 %v4900
        %4914 = vmatpush.bf16.msra.mxu0 %v4899
        %4915 = vmatpush.bf16.msra.mxu0 %v4898
        %4916 = vmatpush.bf16.msra.mxu0 %v4897
        %4917 = vmatpush.bf16.msra.mxu0 %v4896
        %4918 = vmatpush.bf16.msra.mxu0 %v4895
        %4919 = vmatmul.bf16.gmra.mxu0 %v4605
        %v4920 = vpop.f32.mrf.mxu0
        %v4921 = vadd.f32 %v4792, %v4920
        %v4922 = vpop.f32.mrf.mxu0
        %v4923 = vadd.f32 %v4794, %v4922
        %4924 = vmatmul.bf16.gmra.mxu0 %v4606
        %v4925 = vpop.f32.mrf.mxu0
        %v4926 = vadd.f32 %v4797, %v4925
        %v4927 = vpop.f32.mrf.mxu0
        %v4928 = vadd.f32 %v4799, %v4927
        %4929 = vmatmul.bf16.gmra.mxu0 %v4607
        %v4930 = vpop.f32.mrf.mxu0
        %v4931 = vadd.f32 %v4802, %v4930
        %v4932 = vpop.f32.mrf.mxu0
        %v4933 = vadd.f32 %v4804, %v4932
        %4934 = vmatmul.bf16.gmra.mxu0 %v4608
        %v4935 = vpop.f32.mrf.mxu0
        %v4936 = vpop.f32.mrf.mxu0
        %4937 = vmatmul.bf16.gmra.mxu0 %v4609
        %v4938 = vpop.f32.mrf.mxu0
        %v4939 = vadd.f32 %v4810, %v4938
        %v4940 = vpop.f32.mrf.mxu0
        %v4941 = vadd.f32 %v4812, %v4940
        %4942 = vmatmul.bf16.gmra.mxu0 %v4610
        %v4943 = vpop.f32.mrf.mxu0
        %v4944 = vadd.f32 %v4815, %v4943
        %v4945 = vpop.f32.mrf.mxu0
        %v4946 = vadd.f32 %v4817, %v4945
        %4947 = vmatmul.bf16.gmra.mxu0 %v4611
        %v4948 = vpop.f32.mrf.mxu0
        %v4949 = vadd.f32 %v4820, %v4948
        %v4950 = vpop.f32.mrf.mxu0
        %v4951 = vadd.f32 %v4822, %v4950
        %4952 = vmatmul.bf16.gmra.mxu0 %v4612
        %v4953 = vpop.f32.mrf.mxu0
        %v4954 = vpop.f32.mrf.mxu0
        %4955 = vmatmul.bf16.gmra.mxu0 %v4613
        %v4956 = vpop.f32.mrf.mxu0
        %v4957 = vadd.f32 %v4828, %v4956
        %v4958 = vpop.f32.mrf.mxu0
        %v4959 = vadd.f32 %v4830, %v4958
        %4960 = vmatmul.bf16.gmra.mxu0 %v4614
        %v4961 = vpop.f32.mrf.mxu0
        %v4962 = vadd.f32 %v4833, %v4961
        %v4963 = vpop.f32.mrf.mxu0
        %v4964 = vadd.f32 %v4835, %v4963
        %4965 = vmatmul.bf16.gmra.mxu0 %v4615
        %v4966 = vpop.f32.mrf.mxu0
        %v4967 = vadd.f32 %v4838, %v4966
        %v4968 = vpop.f32.mrf.mxu0
        %v4969 = vadd.f32 %v4840, %v4968
        %4970 = vmatmul.bf16.gmra.mxu0 %v4616
        %v4971 = vpop.f32.mrf.mxu0
        %v4972 = vpop.f32.mrf.mxu0
        %4973 = vmatmul.bf16.gmra.mxu0 %v4617
        %v4974 = vpop.f32.mrf.mxu0
        %v4975 = vadd.f32 %v4846, %v4974
        %v4976 = vpop.f32.mrf.mxu0
        %v4977 = vadd.f32 %v4848, %v4976
        %4978 = vmatmul.bf16.gmra.mxu0 %v4618
        %v4979 = vpop.f32.mrf.mxu0
        %v4980 = vadd.f32 %v4851, %v4979
        %v4981 = vpop.f32.mrf.mxu0
        %v4982 = vadd.f32 %v4853, %v4981
        %4983 = vmatmul.bf16.gmra.mxu0 %v4619
        %v4984 = vpop.f32.mrf.mxu0
        %v4985 = vadd.f32 %v4856, %v4984
        %v4986 = vpop.f32.mrf.mxu0
        %v4987 = vadd.f32 %v4858, %v4986
        %4988 = vmatmul.bf16.gmra.mxu0 %v4620
        %v4989 = vpop.f32.mrf.mxu0
        %v4990 = vpop.f32.mrf.mxu0
        %4991 = vdwg.mxu0
        %v4992 = vrot.slane %v4573, 2
        %v4993 = vrot.slane %v4574, 2
        %v4994 = vrot.slane %v4575, 2
        %v4995 = vrot.slane %v4576, 2
        %v4996 = vrot.slane %v4577, 2
        %v4997 = vrot.slane %v4578, 2
        %v4998 = vrot.slane %v4579, 2
        %v4999 = vrot.slane %v4580, 2
        %v5000 = vrot.slane %v4581, 2
        %v5001 = vrot.slane %v4582, 2
        %v5002 = vrot.slane %v4583, 2
        %v5003 = vrot.slane %v4584, 2
        %v5004 = vrot.slane %v4585, 2
        %v5005 = vrot.slane %v4586, 2
        %v5006 = vrot.slane %v4587, 2
        %v5007 = vrot.slane %v4588, 2
        %v5008 = vrot.slane %v4589, 2
        %v5009 = vrot.slane %v4590, 2
        %v5010 = vrot.slane %v4591, 2
        %v5011 = vrot.slane %v4592, 2
        %v5012 = vrot.slane %v4593, 2
        %v5013 = vrot.slane %v4594, 2
        %v5014 = vrot.slane %v4595, 2
        %v5015 = vrot.slane %v4596, 2
        %v5016 = vrot.slane %v4597, 2
        %v5017 = vrot.slane %v4598, 2
        %v5018 = vrot.slane %v4599, 2
        %v5019 = vrot.slane %v4600, 2
        %v5020 = vrot.slane %v4601, 2
        %v5021 = vrot.slane %v4602, 2
        %v5022 = vrot.slane %v4603, 2
        %v5023 = vrot.slane %v4604, 2
        %v5024 = vsel %vm846, %v5022, %v5023
        %v5025 = vsel %vm846, %v5021, %v5022
        %v5026 = vsel %vm846, %v5020, %v5021
        %v5027 = vsel %vm846, %v5019, %v5020
        %v5028 = vsel %vm846, %v5018, %v5019
        %v5029 = vsel %vm846, %v5017, %v5018
        %v5030 = vsel %vm846, %v5016, %v5017
        %v5031 = vsel %vm846, %v5015, %v5016
        %v5032 = vsel %vm846, %v5014, %v5015
        %v5033 = vsel %vm846, %v5013, %v5014
        %v5034 = vsel %vm846, %v5012, %v5013
        %v5035 = vsel %vm846, %v5011, %v5012
        %v5036 = vsel %vm846, %v5010, %v5011
        %v5037 = vsel %vm846, %v5009, %v5010
        %v5038 = vsel %vm846, %v5008, %v5009
        %v5039 = vsel %vm846, %v5007, %v5008
        %v5040 = vsel %vm846, %v5006, %v5007
        %v5041 = vsel %vm846, %v5005, %v5006
        %v5042 = vsel %vm846, %v5004, %v5005
        %v5043 = vsel %vm846, %v5003, %v5004
        %v5044 = vsel %vm846, %v5002, %v5003
        %v5045 = vsel %vm846, %v5001, %v5002
        %v5046 = vsel %vm846, %v5000, %v5001
        %v5047 = vsel %vm846, %v4999, %v5000
        %v5048 = vsel %vm846, %v4998, %v4999
        %v5049 = vsel %vm846, %v4997, %v4998
        %v5050 = vsel %vm846, %v4996, %v4997
        %v5051 = vsel %vm846, %v4995, %v4996
        %v5052 = vsel %vm846, %v4994, %v4995
        %v5053 = vsel %vm846, %v4993, %v4994
        %v5054 = vsel %vm846, %v4992, %v4993
        %v5055 = vsel %vm846, %v5023, %v4992
        %v5056 = vpack.c.bf16 %v5053, %v5054
        %v5057 = vpack.c.bf16 %v5051, %v5052
        %v5058 = vpack.c.bf16 %v5049, %v5050
        %v5059 = vpack.c.bf16 %v5047, %v5048
        %v5060 = vpack.c.bf16 %v5045, %v5046
        %v5061 = vpack.c.bf16 %v5043, %v5044
        %v5062 = vpack.c.bf16 %v5041, %v5042
        %v5063 = vpack.c.bf16 %v5039, %v5040
        %v5064 = vpack.c.bf16 %v5037, %v5038
        %v5065 = vpack.c.bf16 %v5035, %v5036
        %v5066 = vpack.c.bf16 %v5033, %v5034
        %v5067 = vpack.c.bf16 %v5031, %v5032
        %v5068 = vpack.c.bf16 %v5029, %v5030
        %v5069 = vpack.c.bf16 %v5027, %v5028
        %v5070 = vpack.c.bf16 %v5025, %v5026
        %v5071 = vpack.c.bf16 %v5055, %v5024
        %s5072 = scalar_lea.vmem [#allocation9], 128
        %v5073 = vld [vmem:[%s5072] sm:$0xf]
        %v5074 = vld [vmem:[%s5072 + $0x4] sm:$0xf]
        %v5075 = vld [vmem:[%s5072 + $0x8] sm:$0xf]
        %v5076 = vld [vmem:[%s5072 + $0xc] sm:$0xf]
        %v5077 = vld [vmem:[%s5072 + $0x10] sm:$0xf]
        %v5078 = vld [vmem:[%s5072 + $0x14] sm:$0xf]
        %v5079 = vld [vmem:[%s5072 + $0x18] sm:$0xf]
        %v5080 = vld [vmem:[%s5072 + $0x1c] sm:$0xf]
        %v5081 = vld [vmem:[%s5072 + $0x20] sm:$0xf]
        %v5082 = vld [vmem:[%s5072 + $0x24] sm:$0xf]
        %v5083 = vld [vmem:[%s5072 + $0x28] sm:$0xf]
        %v5084 = vld [vmem:[%s5072 + $0x2c] sm:$0xf]
        %v5085 = vld [vmem:[%s5072 + $0x30] sm:$0xf]
        %v5086 = vld [vmem:[%s5072 + $0x34] sm:$0xf]
        %v5087 = vld [vmem:[%s5072 + $0x38] sm:$0xf]
        %v5088 = vld [vmem:[%s5072 + $0x3c] sm:$0xf]
        %v5105 = vunpack.c.l.b16 %v5073
        %v5106 = vunpack.c.l.b16 %v5074
        %v5107 = vunpack.c.l.b16 %v5075
        %v5108 = vunpack.c.l.b16 %v5076
        %v5109 = vunpack.c.l.b16 %v5077
        %v5110 = vunpack.c.l.b16 %v5078
        %v5111 = vunpack.c.l.b16 %v5079
        %v5112 = vunpack.c.l.b16 %v5080
        %v5113 = vunpack.c.l.b16 %v5081
        %v5114 = vunpack.c.l.b16 %v5082
        %v5115 = vunpack.c.l.b16 %v5083
        %v5116 = vunpack.c.l.b16 %v5084
        %v5117 = vunpack.c.l.b16 %v5085
        %v5118 = vunpack.c.l.b16 %v5086
        %v5119 = vunpack.c.l.b16 %v5087
        %v5120 = vunpack.c.l.b16 %v5088
        %v5121 = vpack.c.b16 %v5106, %v5105
        %v5122 = vpack.c.b16 %v5108, %v5107
        %v5123 = vpack.c.b16 %v5110, %v5109
        %v5124 = vpack.c.b16 %v5112, %v5111
        %v5125 = vpack.c.b16 %v5114, %v5113
        %v5126 = vpack.c.b16 %v5116, %v5115
        %v5127 = vpack.c.b16 %v5118, %v5117
        %v5128 = vpack.c.b16 %v5120, %v5119
        %5137 = vmatpush.bf16.msra.mxu0 %v5128
        %5138 = vmatpush.bf16.msra.mxu0 %v5127
        %5139 = vmatpush.bf16.msra.mxu0 %v5126
        %5140 = vmatpush.bf16.msra.mxu0 %v5125
        %5141 = vmatpush.bf16.msra.mxu0 %v5124
        %5142 = vmatpush.bf16.msra.mxu0 %v5123
        %5143 = vmatpush.bf16.msra.mxu0 %v5122
        %5144 = vmatpush.bf16.msra.mxu0 %v5121
        %5145 = vmatmul.bf16.gmra.mxu0 %v5056
        %v5146 = vpop.f32.mrf.mxu0
        %v5147 = vadd.f32 0.0, %v5146
        %v5148 = vpop.f32.mrf.mxu0
        %v5149 = vadd.f32 0.0, %v5148
        %5150 = vmatmul.bf16.gmra.mxu0 %v5057
        %v5151 = vpop.f32.mrf.mxu0
        %v5152 = vadd.f32 0.0, %v5151
        %v5153 = vpop.f32.mrf.mxu0
        %v5154 = vadd.f32 0.0, %v5153
        %5155 = vmatmul.bf16.gmra.mxu0 %v5058
        %v5156 = vpop.f32.mrf.mxu0
        %v5157 = vadd.f32 0.0, %v5156
        %v5158 = vpop.f32.mrf.mxu0
        %v5159 = vadd.f32 0.0, %v5158
        %5160 = vmatmul.bf16.gmra.mxu0 %v5059
        %v5161 = vpop.f32.mrf.mxu0
        %v5162 = vpop.f32.mrf.mxu0
        %5163 = vmatmul.bf16.gmra.mxu0 %v5060
        %v5164 = vpop.f32.mrf.mxu0
        %v5165 = vadd.f32 0.0, %v5164
        %v5166 = vpop.f32.mrf.mxu0
        %v5167 = vadd.f32 0.0, %v5166
        %5168 = vmatmul.bf16.gmra.mxu0 %v5061
        %v5169 = vpop.f32.mrf.mxu0
        %v5170 = vadd.f32 0.0, %v5169
        %v5171 = vpop.f32.mrf.mxu0
        %v5172 = vadd.f32 0.0, %v5171
        %5173 = vmatmul.bf16.gmra.mxu0 %v5062
        %v5174 = vpop.f32.mrf.mxu0
        %v5175 = vadd.f32 0.0, %v5174
        %v5176 = vpop.f32.mrf.mxu0
        %v5177 = vadd.f32 0.0, %v5176
        %5178 = vmatmul.bf16.gmra.mxu0 %v5063
        %v5179 = vpop.f32.mrf.mxu0
        %v5180 = vpop.f32.mrf.mxu0
        %5181 = vmatmul.bf16.gmra.mxu0 %v5064
        %v5182 = vpop.f32.mrf.mxu0
        %v5183 = vadd.f32 0.0, %v5182
        %v5184 = vpop.f32.mrf.mxu0
        %v5185 = vadd.f32 0.0, %v5184
        %5186 = vmatmul.bf16.gmra.mxu0 %v5065
        %v5187 = vpop.f32.mrf.mxu0
        %v5188 = vadd.f32 0.0, %v5187
        %v5189 = vpop.f32.mrf.mxu0
        %v5190 = vadd.f32 0.0, %v5189
        %5191 = vmatmul.bf16.gmra.mxu0 %v5066
        %v5192 = vpop.f32.mrf.mxu0
        %v5193 = vadd.f32 0.0, %v5192
        %v5194 = vpop.f32.mrf.mxu0
        %v5195 = vadd.f32 0.0, %v5194
        %5196 = vmatmul.bf16.gmra.mxu0 %v5067
        %v5197 = vpop.f32.mrf.mxu0
        %v5198 = vpop.f32.mrf.mxu0
        %5199 = vmatmul.bf16.gmra.mxu0 %v5068
        %v5200 = vpop.f32.mrf.mxu0
        %v5201 = vadd.f32 0.0, %v5200
        %v5202 = vpop.f32.mrf.mxu0
        %v5203 = vadd.f32 0.0, %v5202
        %5204 = vmatmul.bf16.gmra.mxu0 %v5069
        %v5205 = vpop.f32.mrf.mxu0
        %v5206 = vadd.f32 0.0, %v5205
        %v5207 = vpop.f32.mrf.mxu0
        %v5208 = vadd.f32 0.0, %v5207
        %5209 = vmatmul.bf16.gmra.mxu0 %v5070
        %v5210 = vpop.f32.mrf.mxu0
        %v5211 = vadd.f32 0.0, %v5210
        %v5212 = vpop.f32.mrf.mxu0
        %v5213 = vadd.f32 0.0, %v5212
        %5214 = vmatmul.bf16.gmra.mxu0 %v5071
        %v5215 = vpop.f32.mrf.mxu0
        %v5216 = vpop.f32.mrf.mxu0
        %5217 = vdwg.mxu0
        %v5218 = vadd.f32 %v4921, %v5147
        %v5219 = vadd.f32 %v4923, %v5149
        %v5220 = vadd.f32 %v4926, %v5152
        %v5221 = vadd.f32 %v4928, %v5154
        %v5222 = vadd.f32 %v4931, %v5157
        %v5223 = vadd.f32 %v4933, %v5159
        %v5224 = vadd.f32 %v4939, %v5165
        %v5225 = vadd.f32 %v4941, %v5167
        %v5226 = vadd.f32 %v4944, %v5170
        %v5227 = vadd.f32 %v4946, %v5172
        %v5228 = vadd.f32 %v4949, %v5175
        %v5229 = vadd.f32 %v4951, %v5177
        %v5230 = vadd.f32 %v4957, %v5183
        %v5231 = vadd.f32 %v4959, %v5185
        %v5232 = vadd.f32 %v4962, %v5188
        %v5233 = vadd.f32 %v4964, %v5190
        %v5234 = vadd.f32 %v4967, %v5193
        %v5235 = vadd.f32 %v4969, %v5195
        %v5236 = vadd.f32 %v4975, %v5201
        %v5237 = vadd.f32 %v4977, %v5203
        %v5238 = vadd.f32 %v4980, %v5206
        %v5239 = vadd.f32 %v4982, %v5208
        %v5240 = vadd.f32 %v4985, %v5211
        %v5241 = vadd.f32 %v4987, %v5213
        %v5242 = vrot.slane %v4573, 3
        %v5243 = vrot.slane %v4574, 3
        %v5244 = vrot.slane %v4575, 3
        %v5245 = vrot.slane %v4576, 3
        %v5246 = vrot.slane %v4577, 3
        %v5247 = vrot.slane %v4578, 3
        %v5248 = vrot.slane %v4579, 3
        %v5249 = vrot.slane %v4580, 3
        %v5250 = vrot.slane %v4581, 3
        %v5251 = vrot.slane %v4582, 3
        %v5252 = vrot.slane %v4583, 3
        %v5253 = vrot.slane %v4584, 3
        %v5254 = vrot.slane %v4585, 3
        %v5255 = vrot.slane %v4586, 3
        %v5256 = vrot.slane %v4587, 3
        %v5257 = vrot.slane %v4588, 3
        %v5258 = vrot.slane %v4589, 3
        %v5259 = vrot.slane %v4590, 3
        %v5260 = vrot.slane %v4591, 3
        %v5261 = vrot.slane %v4592, 3
        %v5262 = vrot.slane %v4593, 3
        %v5263 = vrot.slane %v4594, 3
        %v5264 = vrot.slane %v4595, 3
        %v5265 = vrot.slane %v4596, 3
        %v5266 = vrot.slane %v4597, 3
        %v5267 = vrot.slane %v4598, 3
        %v5268 = vrot.slane %v4599, 3
        %v5269 = vrot.slane %v4600, 3
        %v5270 = vrot.slane %v4601, 3
        %v5271 = vrot.slane %v4602, 3
        %v5272 = vrot.slane %v4603, 3
        %v5273 = vrot.slane %v4604, 3
        %v5274 = vsel %vm1113, %v5272, %v5273
        %v5275 = vsel %vm1113, %v5271, %v5272
        %v5276 = vsel %vm1113, %v5270, %v5271
        %v5277 = vsel %vm1113, %v5269, %v5270
        %v5278 = vsel %vm1113, %v5268, %v5269
        %v5279 = vsel %vm1113, %v5267, %v5268
        %v5280 = vsel %vm1113, %v5266, %v5267
        %v5281 = vsel %vm1113, %v5265, %v5266
        %v5282 = vsel %vm1113, %v5264, %v5265
        %v5283 = vsel %vm1113, %v5263, %v5264
        %v5284 = vsel %vm1113, %v5262, %v5263
        %v5285 = vsel %vm1113, %v5261, %v5262
        %v5286 = vsel %vm1113, %v5260, %v5261
        %v5287 = vsel %vm1113, %v5259, %v5260
        %v5288 = vsel %vm1113, %v5258, %v5259
        %v5289 = vsel %vm1113, %v5257, %v5258
        %v5290 = vsel %vm1113, %v5256, %v5257
        %v5291 = vsel %vm1113, %v5255, %v5256
        %v5292 = vsel %vm1113, %v5254, %v5255
        %v5293 = vsel %vm1113, %v5253, %v5254
        %v5294 = vsel %vm1113, %v5252, %v5253
        %v5295 = vsel %vm1113, %v5251, %v5252
        %v5296 = vsel %vm1113, %v5250, %v5251
        %v5297 = vsel %vm1113, %v5249, %v5250
        %v5298 = vsel %vm1113, %v5248, %v5249
        %v5299 = vsel %vm1113, %v5247, %v5248
        %v5300 = vsel %vm1113, %v5246, %v5247
        %v5301 = vsel %vm1113, %v5245, %v5246
        %v5302 = vsel %vm1113, %v5244, %v5245
        %v5303 = vsel %vm1113, %v5243, %v5244
        %v5304 = vsel %vm1113, %v5242, %v5243
        %v5305 = vsel %vm1113, %v5273, %v5242
        %v5306 = vpack.c.bf16 %v5303, %v5304
        %v5307 = vpack.c.bf16 %v5301, %v5302
        %v5308 = vpack.c.bf16 %v5299, %v5300
        %v5309 = vpack.c.bf16 %v5297, %v5298
        %v5310 = vpack.c.bf16 %v5295, %v5296
        %v5311 = vpack.c.bf16 %v5293, %v5294
        %v5312 = vpack.c.bf16 %v5291, %v5292
        %v5313 = vpack.c.bf16 %v5289, %v5290
        %v5314 = vpack.c.bf16 %v5287, %v5288
        %v5315 = vpack.c.bf16 %v5285, %v5286
        %v5316 = vpack.c.bf16 %v5283, %v5284
        %v5317 = vpack.c.bf16 %v5281, %v5282
        %v5318 = vpack.c.bf16 %v5279, %v5280
        %v5319 = vpack.c.bf16 %v5277, %v5278
        %v5320 = vpack.c.bf16 %v5275, %v5276
        %v5321 = vpack.c.bf16 %v5305, %v5274
        %s5322 = scalar_lea.vmem [#allocation9], 192
        %v5323 = vld [vmem:[%s5322] sm:$0xf]
        %v5324 = vld [vmem:[%s5322 + $0x4] sm:$0xf]
        %v5325 = vld [vmem:[%s5322 + $0x8] sm:$0xf]
        %v5326 = vld [vmem:[%s5322 + $0xc] sm:$0xf]
        %v5327 = vld [vmem:[%s5322 + $0x10] sm:$0xf]
        %v5328 = vld [vmem:[%s5322 + $0x14] sm:$0xf]
        %v5329 = vld [vmem:[%s5322 + $0x18] sm:$0xf]
        %v5330 = vld [vmem:[%s5322 + $0x1c] sm:$0xf]
        %v5331 = vld [vmem:[%s5322 + $0x20] sm:$0xf]
        %v5332 = vld [vmem:[%s5322 + $0x24] sm:$0xf]
        %v5333 = vld [vmem:[%s5322 + $0x28] sm:$0xf]
        %v5334 = vld [vmem:[%s5322 + $0x2c] sm:$0xf]
        %v5335 = vld [vmem:[%s5322 + $0x30] sm:$0xf]
        %v5336 = vld [vmem:[%s5322 + $0x34] sm:$0xf]
        %v5337 = vld [vmem:[%s5322 + $0x38] sm:$0xf]
        %v5338 = vld [vmem:[%s5322 + $0x3c] sm:$0xf]
        %v5355 = vunpack.c.l.b16 %v5323
        %v5356 = vunpack.c.l.b16 %v5324
        %v5357 = vunpack.c.l.b16 %v5325
        %v5358 = vunpack.c.l.b16 %v5326
        %v5359 = vunpack.c.l.b16 %v5327
        %v5360 = vunpack.c.l.b16 %v5328
        %v5361 = vunpack.c.l.b16 %v5329
        %v5362 = vunpack.c.l.b16 %v5330
        %v5363 = vunpack.c.l.b16 %v5331
        %v5364 = vunpack.c.l.b16 %v5332
        %v5365 = vunpack.c.l.b16 %v5333
        %v5366 = vunpack.c.l.b16 %v5334
        %v5367 = vunpack.c.l.b16 %v5335
        %v5368 = vunpack.c.l.b16 %v5336
        %v5369 = vunpack.c.l.b16 %v5337
        %v5370 = vunpack.c.l.b16 %v5338
        %v5371 = vpack.c.b16 %v5356, %v5355
        %v5372 = vpack.c.b16 %v5358, %v5357
        %v5373 = vpack.c.b16 %v5360, %v5359
        %v5374 = vpack.c.b16 %v5362, %v5361
        %v5375 = vpack.c.b16 %v5364, %v5363
        %v5376 = vpack.c.b16 %v5366, %v5365
        %v5377 = vpack.c.b16 %v5368, %v5367
        %v5378 = vpack.c.b16 %v5370, %v5369
        %5387 = vmatpush.bf16.msra.mxu0 %v5378
        %5388 = vmatpush.bf16.msra.mxu0 %v5377
        %5389 = vmatpush.bf16.msra.mxu0 %v5376
        %5390 = vmatpush.bf16.msra.mxu0 %v5375
        %5391 = vmatpush.bf16.msra.mxu0 %v5374
        %5392 = vmatpush.bf16.msra.mxu0 %v5373
        %5393 = vmatpush.bf16.msra.mxu0 %v5372
        %5394 = vmatpush.bf16.msra.mxu0 %v5371
        %5395 = vmatmul.bf16.gmra.mxu0 %v5306
        %v5396 = vpop.f32.mrf.mxu0
        %v5397 = vadd.f32 0.0, %v5396
        %v5398 = vpop.f32.mrf.mxu0
        %v5399 = vadd.f32 0.0, %v5398
        %5400 = vmatmul.bf16.gmra.mxu0 %v5307
        %v5401 = vpop.f32.mrf.mxu0
        %v5402 = vadd.f32 0.0, %v5401
        %v5403 = vpop.f32.mrf.mxu0
        %v5404 = vadd.f32 0.0, %v5403
        %5405 = vmatmul.bf16.gmra.mxu0 %v5308
        %v5406 = vpop.f32.mrf.mxu0
        %v5407 = vadd.f32 0.0, %v5406
        %v5408 = vpop.f32.mrf.mxu0
        %v5409 = vadd.f32 0.0, %v5408
        %5410 = vmatmul.bf16.gmra.mxu0 %v5309
        %v5411 = vpop.f32.mrf.mxu0
        %v5412 = vpop.f32.mrf.mxu0
        %5413 = vmatmul.bf16.gmra.mxu0 %v5310
        %v5414 = vpop.f32.mrf.mxu0
        %v5415 = vadd.f32 0.0, %v5414
        %v5416 = vpop.f32.mrf.mxu0
        %v5417 = vadd.f32 0.0, %v5416
        %5418 = vmatmul.bf16.gmra.mxu0 %v5311
        %v5419 = vpop.f32.mrf.mxu0
        %v5420 = vadd.f32 0.0, %v5419
        %v5421 = vpop.f32.mrf.mxu0
        %v5422 = vadd.f32 0.0, %v5421
        %5423 = vmatmul.bf16.gmra.mxu0 %v5312
        %v5424 = vpop.f32.mrf.mxu0
        %v5425 = vadd.f32 0.0, %v5424
        %v5426 = vpop.f32.mrf.mxu0
        %v5427 = vadd.f32 0.0, %v5426
        %5428 = vmatmul.bf16.gmra.mxu0 %v5313
        %v5429 = vpop.f32.mrf.mxu0
        %v5430 = vpop.f32.mrf.mxu0
        %5431 = vmatmul.bf16.gmra.mxu0 %v5314
        %v5432 = vpop.f32.mrf.mxu0
        %v5433 = vadd.f32 0.0, %v5432
        %v5434 = vpop.f32.mrf.mxu0
        %v5435 = vadd.f32 0.0, %v5434
        %5436 = vmatmul.bf16.gmra.mxu0 %v5315
        %v5437 = vpop.f32.mrf.mxu0
        %v5438 = vadd.f32 0.0, %v5437
        %v5439 = vpop.f32.mrf.mxu0
        %v5440 = vadd.f32 0.0, %v5439
        %5441 = vmatmul.bf16.gmra.mxu0 %v5316
        %v5442 = vpop.f32.mrf.mxu0
        %v5443 = vadd.f32 0.0, %v5442
        %v5444 = vpop.f32.mrf.mxu0
        %v5445 = vadd.f32 0.0, %v5444
        %5446 = vmatmul.bf16.gmra.mxu0 %v5317
        %v5447 = vpop.f32.mrf.mxu0
        %v5448 = vpop.f32.mrf.mxu0
        %5449 = vmatmul.bf16.gmra.mxu0 %v5318
        %v5450 = vpop.f32.mrf.mxu0
        %v5451 = vadd.f32 0.0, %v5450
        %v5452 = vpop.f32.mrf.mxu0
        %v5453 = vadd.f32 0.0, %v5452
        %5454 = vmatmul.bf16.gmra.mxu0 %v5319
        %v5455 = vpop.f32.mrf.mxu0
        %v5456 = vadd.f32 0.0, %v5455
        %v5457 = vpop.f32.mrf.mxu0
        %v5458 = vadd.f32 0.0, %v5457
        %5459 = vmatmul.bf16.gmra.mxu0 %v5320
        %v5460 = vpop.f32.mrf.mxu0
        %v5461 = vadd.f32 0.0, %v5460
        %v5462 = vpop.f32.mrf.mxu0
        %v5463 = vadd.f32 0.0, %v5462
        %5464 = vmatmul.bf16.gmra.mxu0 %v5321
        %v5465 = vpop.f32.mrf.mxu0
        %v5466 = vpop.f32.mrf.mxu0
        %5467 = vdwg.mxu0
        %v5468 = vadd.f32 %v5218, %v5397
        %v5469 = vadd.f32 %v5219, %v5399
        %v5470 = vadd.f32 %v5220, %v5402
        %v5471 = vadd.f32 %v5221, %v5404
        %v5472 = vadd.f32 %v5222, %v5407
        %v5473 = vadd.f32 %v5223, %v5409
        %v5474 = vadd.f32 %v5224, %v5415
        %v5475 = vadd.f32 %v5225, %v5417
        %v5476 = vadd.f32 %v5226, %v5420
        %v5477 = vadd.f32 %v5227, %v5422
        %v5478 = vadd.f32 %v5228, %v5425
        %v5479 = vadd.f32 %v5229, %v5427
        %v5480 = vadd.f32 %v5230, %v5433
        %v5481 = vadd.f32 %v5231, %v5435
        %v5482 = vadd.f32 %v5232, %v5438
        %v5483 = vadd.f32 %v5233, %v5440
        %v5484 = vadd.f32 %v5234, %v5443
        %v5485 = vadd.f32 %v5235, %v5445
        %v5486 = vadd.f32 %v5236, %v5451
        %v5487 = vadd.f32 %v5237, %v5453
        %v5488 = vadd.f32 %v5238, %v5456
        %v5489 = vadd.f32 %v5239, %v5458
        %v5490 = vadd.f32 %v5240, %v5461
        %v5491 = vadd.f32 %v5241, %v5463
        %v5492 = vrot.slane %v4573, 4
        %v5493 = vrot.slane %v4574, 4
        %v5494 = vrot.slane %v4575, 4
        %v5495 = vrot.slane %v4576, 4
        %v5496 = vrot.slane %v4577, 4
        %v5497 = vrot.slane %v4578, 4
        %v5498 = vrot.slane %v4579, 4
        %v5499 = vrot.slane %v4580, 4
        %v5500 = vrot.slane %v4581, 4
        %v5501 = vrot.slane %v4582, 4
        %v5502 = vrot.slane %v4583, 4
        %v5503 = vrot.slane %v4584, 4
        %v5504 = vrot.slane %v4585, 4
        %v5505 = vrot.slane %v4586, 4
        %v5506 = vrot.slane %v4587, 4
        %v5507 = vrot.slane %v4588, 4
        %v5508 = vrot.slane %v4589, 4
        %v5509 = vrot.slane %v4590, 4
        %v5510 = vrot.slane %v4591, 4
        %v5511 = vrot.slane %v4592, 4
        %v5512 = vrot.slane %v4593, 4
        %v5513 = vrot.slane %v4594, 4
        %v5514 = vrot.slane %v4595, 4
        %v5515 = vrot.slane %v4596, 4
        %v5516 = vrot.slane %v4597, 4
        %v5517 = vrot.slane %v4598, 4
        %v5518 = vrot.slane %v4599, 4
        %v5519 = vrot.slane %v4600, 4
        %v5520 = vrot.slane %v4601, 4
        %v5521 = vrot.slane %v4602, 4
        %v5522 = vrot.slane %v4603, 4
        %v5523 = vrot.slane %v4604, 4
        %v5524 = vsel %vm1380, %v5522, %v5523
        %v5525 = vsel %vm1380, %v5521, %v5522
        %v5526 = vsel %vm1380, %v5520, %v5521
        %v5527 = vsel %vm1380, %v5519, %v5520
        %v5528 = vsel %vm1380, %v5518, %v5519
        %v5529 = vsel %vm1380, %v5517, %v5518
        %v5530 = vsel %vm1380, %v5516, %v5517
        %v5531 = vsel %vm1380, %v5515, %v5516
        %v5532 = vsel %vm1380, %v5514, %v5515
        %v5533 = vsel %vm1380, %v5513, %v5514
        %v5534 = vsel %vm1380, %v5512, %v5513
        %v5535 = vsel %vm1380, %v5511, %v5512
        %v5536 = vsel %vm1380, %v5510, %v5511
        %v5537 = vsel %vm1380, %v5509, %v5510
        %v5538 = vsel %vm1380, %v5508, %v5509
        %v5539 = vsel %vm1380, %v5507, %v5508
        %v5540 = vsel %vm1380, %v5506, %v5507
        %v5541 = vsel %vm1380, %v5505, %v5506
        %v5542 = vsel %vm1380, %v5504, %v5505
        %v5543 = vsel %vm1380, %v5503, %v5504
        %v5544 = vsel %vm1380, %v5502, %v5503
        %v5545 = vsel %vm1380, %v5501, %v5502
        %v5546 = vsel %vm1380, %v5500, %v5501
        %v5547 = vsel %vm1380, %v5499, %v5500
        %v5548 = vsel %vm1380, %v5498, %v5499
        %v5549 = vsel %vm1380, %v5497, %v5498
        %v5550 = vsel %vm1380, %v5496, %v5497
        %v5551 = vsel %vm1380, %v5495, %v5496
        %v5552 = vsel %vm1380, %v5494, %v5495
        %v5553 = vsel %vm1380, %v5493, %v5494
        %v5554 = vsel %vm1380, %v5492, %v5493
        %v5555 = vsel %vm1380, %v5523, %v5492
        %v5556 = vpack.c.bf16 %v5553, %v5554
        %v5557 = vpack.c.bf16 %v5551, %v5552
        %v5558 = vpack.c.bf16 %v5549, %v5550
        %v5559 = vpack.c.bf16 %v5547, %v5548
        %v5560 = vpack.c.bf16 %v5545, %v5546
        %v5561 = vpack.c.bf16 %v5543, %v5544
        %v5562 = vpack.c.bf16 %v5541, %v5542
        %v5563 = vpack.c.bf16 %v5539, %v5540
        %v5564 = vpack.c.bf16 %v5537, %v5538
        %v5565 = vpack.c.bf16 %v5535, %v5536
        %v5566 = vpack.c.bf16 %v5533, %v5534
        %v5567 = vpack.c.bf16 %v5531, %v5532
        %v5568 = vpack.c.bf16 %v5529, %v5530
        %v5569 = vpack.c.bf16 %v5527, %v5528
        %v5570 = vpack.c.bf16 %v5525, %v5526
        %v5571 = vpack.c.bf16 %v5555, %v5524
        %s5572 = scalar_lea.vmem [#allocation9], 256
        %v5573 = vld [vmem:[%s5572] sm:$0xf]
        %v5574 = vld [vmem:[%s5572 + $0x4] sm:$0xf]
        %v5575 = vld [vmem:[%s5572 + $0x8] sm:$0xf]
        %v5576 = vld [vmem:[%s5572 + $0xc] sm:$0xf]
        %v5577 = vld [vmem:[%s5572 + $0x10] sm:$0xf]
        %v5578 = vld [vmem:[%s5572 + $0x14] sm:$0xf]
        %v5579 = vld [vmem:[%s5572 + $0x18] sm:$0xf]
        %v5580 = vld [vmem:[%s5572 + $0x1c] sm:$0xf]
        %v5581 = vld [vmem:[%s5572 + $0x20] sm:$0xf]
        %v5582 = vld [vmem:[%s5572 + $0x24] sm:$0xf]
        %v5583 = vld [vmem:[%s5572 + $0x28] sm:$0xf]
        %v5584 = vld [vmem:[%s5572 + $0x2c] sm:$0xf]
        %v5585 = vld [vmem:[%s5572 + $0x30] sm:$0xf]
        %v5586 = vld [vmem:[%s5572 + $0x34] sm:$0xf]
        %v5587 = vld [vmem:[%s5572 + $0x38] sm:$0xf]
        %v5588 = vld [vmem:[%s5572 + $0x3c] sm:$0xf]
        %v5605 = vunpack.c.l.b16 %v5573
        %v5606 = vunpack.c.l.b16 %v5574
        %v5607 = vunpack.c.l.b16 %v5575
        %v5608 = vunpack.c.l.b16 %v5576
        %v5609 = vunpack.c.l.b16 %v5577
        %v5610 = vunpack.c.l.b16 %v5578
        %v5611 = vunpack.c.l.b16 %v5579
        %v5612 = vunpack.c.l.b16 %v5580
        %v5613 = vunpack.c.l.b16 %v5581
        %v5614 = vunpack.c.l.b16 %v5582
        %v5615 = vunpack.c.l.b16 %v5583
        %v5616 = vunpack.c.l.b16 %v5584
        %v5617 = vunpack.c.l.b16 %v5585
        %v5618 = vunpack.c.l.b16 %v5586
        %v5619 = vunpack.c.l.b16 %v5587
        %v5620 = vunpack.c.l.b16 %v5588
        %v5621 = vpack.c.b16 %v5606, %v5605
        %v5622 = vpack.c.b16 %v5608, %v5607
        %v5623 = vpack.c.b16 %v5610, %v5609
        %v5624 = vpack.c.b16 %v5612, %v5611
        %v5625 = vpack.c.b16 %v5614, %v5613
        %v5626 = vpack.c.b16 %v5616, %v5615
        %v5627 = vpack.c.b16 %v5618, %v5617
        %v5628 = vpack.c.b16 %v5620, %v5619
        %5637 = vmatpush.bf16.msra.mxu0 %v5628
        %5638 = vmatpush.bf16.msra.mxu0 %v5627
        %5639 = vmatpush.bf16.msra.mxu0 %v5626
        %5640 = vmatpush.bf16.msra.mxu0 %v5625
        %5641 = vmatpush.bf16.msra.mxu0 %v5624
        %5642 = vmatpush.bf16.msra.mxu0 %v5623
        %5643 = vmatpush.bf16.msra.mxu0 %v5622
        %5644 = vmatpush.bf16.msra.mxu0 %v5621
        %5645 = vmatmul.bf16.gmra.mxu0 %v5556
        %v5646 = vpop.f32.mrf.mxu0
        %v5647 = vadd.f32 0.0, %v5646
        %v5648 = vpop.f32.mrf.mxu0
        %v5649 = vadd.f32 0.0, %v5648
        %5650 = vmatmul.bf16.gmra.mxu0 %v5557
        %v5651 = vpop.f32.mrf.mxu0
        %v5652 = vadd.f32 0.0, %v5651
        %v5653 = vpop.f32.mrf.mxu0
        %v5654 = vadd.f32 0.0, %v5653
        %5655 = vmatmul.bf16.gmra.mxu0 %v5558
        %v5656 = vpop.f32.mrf.mxu0
        %v5657 = vadd.f32 0.0, %v5656
        %v5658 = vpop.f32.mrf.mxu0
        %v5659 = vadd.f32 0.0, %v5658
        %5660 = vmatmul.bf16.gmra.mxu0 %v5559
        %v5661 = vpop.f32.mrf.mxu0
        %v5662 = vpop.f32.mrf.mxu0
        %5663 = vmatmul.bf16.gmra.mxu0 %v5560
        %v5664 = vpop.f32.mrf.mxu0
        %v5665 = vadd.f32 0.0, %v5664
        %v5666 = vpop.f32.mrf.mxu0
        %v5667 = vadd.f32 0.0, %v5666
        %5668 = vmatmul.bf16.gmra.mxu0 %v5561
        %v5669 = vpop.f32.mrf.mxu0
        %v5670 = vadd.f32 0.0, %v5669
        %v5671 = vpop.f32.mrf.mxu0
        %v5672 = vadd.f32 0.0, %v5671
        %5673 = vmatmul.bf16.gmra.mxu0 %v5562
        %v5674 = vpop.f32.mrf.mxu0
        %v5675 = vadd.f32 0.0, %v5674
        %v5676 = vpop.f32.mrf.mxu0
        %v5677 = vadd.f32 0.0, %v5676
        %5678 = vmatmul.bf16.gmra.mxu0 %v5563
        %v5679 = vpop.f32.mrf.mxu0
        %v5680 = vpop.f32.mrf.mxu0
        %5681 = vmatmul.bf16.gmra.mxu0 %v5564
        %v5682 = vpop.f32.mrf.mxu0
        %v5683 = vadd.f32 0.0, %v5682
        %v5684 = vpop.f32.mrf.mxu0
        %v5685 = vadd.f32 0.0, %v5684
        %5686 = vmatmul.bf16.gmra.mxu0 %v5565
        %v5687 = vpop.f32.mrf.mxu0
        %v5688 = vadd.f32 0.0, %v5687
        %v5689 = vpop.f32.mrf.mxu0
        %v5690 = vadd.f32 0.0, %v5689
        %5691 = vmatmul.bf16.gmra.mxu0 %v5566
        %v5692 = vpop.f32.mrf.mxu0
        %v5693 = vadd.f32 0.0, %v5692
        %v5694 = vpop.f32.mrf.mxu0
        %v5695 = vadd.f32 0.0, %v5694
        %5696 = vmatmul.bf16.gmra.mxu0 %v5567
        %v5697 = vpop.f32.mrf.mxu0
        %v5698 = vpop.f32.mrf.mxu0
        %5699 = vmatmul.bf16.gmra.mxu0 %v5568
        %v5700 = vpop.f32.mrf.mxu0
        %v5701 = vadd.f32 0.0, %v5700
        %v5702 = vpop.f32.mrf.mxu0
        %v5703 = vadd.f32 0.0, %v5702
        %5704 = vmatmul.bf16.gmra.mxu0 %v5569
        %v5705 = vpop.f32.mrf.mxu0
        %v5706 = vadd.f32 0.0, %v5705
        %v5707 = vpop.f32.mrf.mxu0
        %v5708 = vadd.f32 0.0, %v5707
        %5709 = vmatmul.bf16.gmra.mxu0 %v5570
        %v5710 = vpop.f32.mrf.mxu0
        %v5711 = vadd.f32 0.0, %v5710
        %v5712 = vpop.f32.mrf.mxu0
        %v5713 = vadd.f32 0.0, %v5712
        %5714 = vmatmul.bf16.gmra.mxu0 %v5571
        %v5715 = vpop.f32.mrf.mxu0
        %v5716 = vpop.f32.mrf.mxu0
        %5717 = vdwg.mxu0
        %v5718 = vadd.f32 %v5468, %v5647
        %v5719 = vadd.f32 %v5469, %v5649
        %v5720 = vadd.f32 %v5470, %v5652
        %v5721 = vadd.f32 %v5471, %v5654
        %v5722 = vadd.f32 %v5472, %v5657
        %v5723 = vadd.f32 %v5473, %v5659
        %v5724 = vadd.f32 %v5474, %v5665
        %v5725 = vadd.f32 %v5475, %v5667
        %v5726 = vadd.f32 %v5476, %v5670
        %v5727 = vadd.f32 %v5477, %v5672
        %v5728 = vadd.f32 %v5478, %v5675
        %v5729 = vadd.f32 %v5479, %v5677
        %v5730 = vadd.f32 %v5480, %v5683
        %v5731 = vadd.f32 %v5481, %v5685
        %v5732 = vadd.f32 %v5482, %v5688
        %v5733 = vadd.f32 %v5483, %v5690
        %v5734 = vadd.f32 %v5484, %v5693
        %v5735 = vadd.f32 %v5485, %v5695
        %v5736 = vadd.f32 %v5486, %v5701
        %v5737 = vadd.f32 %v5487, %v5703
        %v5738 = vadd.f32 %v5488, %v5706
        %v5739 = vadd.f32 %v5489, %v5708
        %v5740 = vadd.f32 %v5490, %v5711
        %v5741 = vadd.f32 %v5491, %v5713
        %v5742 = vrot.slane %v4573, 5
        %v5743 = vrot.slane %v4574, 5
        %v5744 = vrot.slane %v4575, 5
        %v5745 = vrot.slane %v4576, 5
        %v5746 = vrot.slane %v4577, 5
        %v5747 = vrot.slane %v4578, 5
        %v5748 = vrot.slane %v4579, 5
        %v5749 = vrot.slane %v4580, 5
        %v5750 = vrot.slane %v4581, 5
        %v5751 = vrot.slane %v4582, 5
        %v5752 = vrot.slane %v4583, 5
        %v5753 = vrot.slane %v4584, 5
        %v5754 = vrot.slane %v4585, 5
        %v5755 = vrot.slane %v4586, 5
        %v5756 = vrot.slane %v4587, 5
        %v5757 = vrot.slane %v4588, 5
        %v5758 = vrot.slane %v4589, 5
        %v5759 = vrot.slane %v4590, 5
        %v5760 = vrot.slane %v4591, 5
        %v5761 = vrot.slane %v4592, 5
        %v5762 = vrot.slane %v4593, 5
        %v5763 = vrot.slane %v4594, 5
        %v5764 = vrot.slane %v4595, 5
        %v5765 = vrot.slane %v4596, 5
        %v5766 = vrot.slane %v4597, 5
        %v5767 = vrot.slane %v4598, 5
        %v5768 = vrot.slane %v4599, 5
        %v5769 = vrot.slane %v4600, 5
        %v5770 = vrot.slane %v4601, 5
        %v5771 = vrot.slane %v4602, 5
        %v5772 = vrot.slane %v4603, 5
        %v5773 = vrot.slane %v4604, 5
        %v5774 = vsel %vm1647, %v5772, %v5773
        %v5775 = vsel %vm1647, %v5771, %v5772
        %v5776 = vsel %vm1647, %v5770, %v5771
        %v5777 = vsel %vm1647, %v5769, %v5770
        %v5778 = vsel %vm1647, %v5768, %v5769
        %v5779 = vsel %vm1647, %v5767, %v5768
        %v5780 = vsel %vm1647, %v5766, %v5767
        %v5781 = vsel %vm1647, %v5765, %v5766
        %v5782 = vsel %vm1647, %v5764, %v5765
        %v5783 = vsel %vm1647, %v5763, %v5764
        %v5784 = vsel %vm1647, %v5762, %v5763
        %v5785 = vsel %vm1647, %v5761, %v5762
        %v5786 = vsel %vm1647, %v5760, %v5761
        %v5787 = vsel %vm1647, %v5759, %v5760
        %v5788 = vsel %vm1647, %v5758, %v5759
        %v5789 = vsel %vm1647, %v5757, %v5758
        %v5790 = vsel %vm1647, %v5756, %v5757
        %v5791 = vsel %vm1647, %v5755, %v5756
        %v5792 = vsel %vm1647, %v5754, %v5755
        %v5793 = vsel %vm1647, %v5753, %v5754
        %v5794 = vsel %vm1647, %v5752, %v5753
        %v5795 = vsel %vm1647, %v5751, %v5752
        %v5796 = vsel %vm1647, %v5750, %v5751
        %v5797 = vsel %vm1647, %v5749, %v5750
        %v5798 = vsel %vm1647, %v5748, %v5749
        %v5799 = vsel %vm1647, %v5747, %v5748
        %v5800 = vsel %vm1647, %v5746, %v5747
        %v5801 = vsel %vm1647, %v5745, %v5746
        %v5802 = vsel %vm1647, %v5744, %v5745
        %v5803 = vsel %vm1647, %v5743, %v5744
        %v5804 = vsel %vm1647, %v5742, %v5743
        %v5805 = vsel %vm1647, %v5773, %v5742
        %v5806 = vpack.c.bf16 %v5803, %v5804
        %v5807 = vpack.c.bf16 %v5801, %v5802
        %v5808 = vpack.c.bf16 %v5799, %v5800
        %v5809 = vpack.c.bf16 %v5797, %v5798
        %v5810 = vpack.c.bf16 %v5795, %v5796
        %v5811 = vpack.c.bf16 %v5793, %v5794
        %v5812 = vpack.c.bf16 %v5791, %v5792
        %v5813 = vpack.c.bf16 %v5789, %v5790
        %v5814 = vpack.c.bf16 %v5787, %v5788
        %v5815 = vpack.c.bf16 %v5785, %v5786
        %v5816 = vpack.c.bf16 %v5783, %v5784
        %v5817 = vpack.c.bf16 %v5781, %v5782
        %v5818 = vpack.c.bf16 %v5779, %v5780
        %v5819 = vpack.c.bf16 %v5777, %v5778
        %v5820 = vpack.c.bf16 %v5775, %v5776
        %v5821 = vpack.c.bf16 %v5805, %v5774
        %s5822 = scalar_lea.vmem [#allocation9], 320
        %v5823 = vld [vmem:[%s5822] sm:$0xf]
        %v5824 = vld [vmem:[%s5822 + $0x4] sm:$0xf]
        %v5825 = vld [vmem:[%s5822 + $0x8] sm:$0xf]
        %v5826 = vld [vmem:[%s5822 + $0xc] sm:$0xf]
        %v5827 = vld [vmem:[%s5822 + $0x10] sm:$0xf]
        %v5828 = vld [vmem:[%s5822 + $0x14] sm:$0xf]
        %v5829 = vld [vmem:[%s5822 + $0x18] sm:$0xf]
        %v5830 = vld [vmem:[%s5822 + $0x1c] sm:$0xf]
        %v5831 = vld [vmem:[%s5822 + $0x20] sm:$0xf]
        %v5832 = vld [vmem:[%s5822 + $0x24] sm:$0xf]
        %v5833 = vld [vmem:[%s5822 + $0x28] sm:$0xf]
        %v5834 = vld [vmem:[%s5822 + $0x2c] sm:$0xf]
        %v5835 = vld [vmem:[%s5822 + $0x30] sm:$0xf]
        %v5836 = vld [vmem:[%s5822 + $0x34] sm:$0xf]
        %v5837 = vld [vmem:[%s5822 + $0x38] sm:$0xf]
        %v5838 = vld [vmem:[%s5822 + $0x3c] sm:$0xf]
        %v5855 = vunpack.c.l.b16 %v5823
        %v5856 = vunpack.c.l.b16 %v5824
        %v5857 = vunpack.c.l.b16 %v5825
        %v5858 = vunpack.c.l.b16 %v5826
        %v5859 = vunpack.c.l.b16 %v5827
        %v5860 = vunpack.c.l.b16 %v5828
        %v5861 = vunpack.c.l.b16 %v5829
        %v5862 = vunpack.c.l.b16 %v5830
        %v5863 = vunpack.c.l.b16 %v5831
        %v5864 = vunpack.c.l.b16 %v5832
        %v5865 = vunpack.c.l.b16 %v5833
        %v5866 = vunpack.c.l.b16 %v5834
        %v5867 = vunpack.c.l.b16 %v5835
        %v5868 = vunpack.c.l.b16 %v5836
        %v5869 = vunpack.c.l.b16 %v5837
        %v5870 = vunpack.c.l.b16 %v5838
        %v5871 = vpack.c.b16 %v5856, %v5855
        %v5872 = vpack.c.b16 %v5858, %v5857
        %v5873 = vpack.c.b16 %v5860, %v5859
        %v5874 = vpack.c.b16 %v5862, %v5861
        %v5875 = vpack.c.b16 %v5864, %v5863
        %v5876 = vpack.c.b16 %v5866, %v5865
        %v5877 = vpack.c.b16 %v5868, %v5867
        %v5878 = vpack.c.b16 %v5870, %v5869
        %5887 = vmatpush.bf16.msra.mxu0 %v5878
        %5888 = vmatpush.bf16.msra.mxu0 %v5877
        %5889 = vmatpush.bf16.msra.mxu0 %v5876
        %5890 = vmatpush.bf16.msra.mxu0 %v5875
        %5891 = vmatpush.bf16.msra.mxu0 %v5874
        %5892 = vmatpush.bf16.msra.mxu0 %v5873
        %5893 = vmatpush.bf16.msra.mxu0 %v5872
        %5894 = vmatpush.bf16.msra.mxu0 %v5871
        %5895 = vmatmul.bf16.gmra.mxu0 %v5806
        %v5896 = vpop.f32.mrf.mxu0
        %v5897 = vadd.f32 0.0, %v5896
        %v5898 = vpop.f32.mrf.mxu0
        %v5899 = vadd.f32 0.0, %v5898
        %5900 = vmatmul.bf16.gmra.mxu0 %v5807
        %v5901 = vpop.f32.mrf.mxu0
        %v5902 = vadd.f32 0.0, %v5901
        %v5903 = vpop.f32.mrf.mxu0
        %v5904 = vadd.f32 0.0, %v5903
        %5905 = vmatmul.bf16.gmra.mxu0 %v5808
        %v5906 = vpop.f32.mrf.mxu0
        %v5907 = vadd.f32 0.0, %v5906
        %v5908 = vpop.f32.mrf.mxu0
        %v5909 = vadd.f32 0.0, %v5908
        %5910 = vmatmul.bf16.gmra.mxu0 %v5809
        %v5911 = vpop.f32.mrf.mxu0
        %v5912 = vpop.f32.mrf.mxu0
        %5913 = vmatmul.bf16.gmra.mxu0 %v5810
        %v5914 = vpop.f32.mrf.mxu0
        %v5915 = vadd.f32 0.0, %v5914
        %v5916 = vpop.f32.mrf.mxu0
        %v5917 = vadd.f32 0.0, %v5916
        %5918 = vmatmul.bf16.gmra.mxu0 %v5811
        %v5919 = vpop.f32.mrf.mxu0
        %v5920 = vadd.f32 0.0, %v5919
        %v5921 = vpop.f32.mrf.mxu0
        %v5922 = vadd.f32 0.0, %v5921
        %5923 = vmatmul.bf16.gmra.mxu0 %v5812
        %v5924 = vpop.f32.mrf.mxu0
        %v5925 = vadd.f32 0.0, %v5924
        %v5926 = vpop.f32.mrf.mxu0
        %v5927 = vadd.f32 0.0, %v5926
        %5928 = vmatmul.bf16.gmra.mxu0 %v5813
        %v5929 = vpop.f32.mrf.mxu0
        %v5930 = vpop.f32.mrf.mxu0
        %5931 = vmatmul.bf16.gmra.mxu0 %v5814
        %v5932 = vpop.f32.mrf.mxu0
        %v5933 = vadd.f32 0.0, %v5932
        %v5934 = vpop.f32.mrf.mxu0
        %v5935 = vadd.f32 0.0, %v5934
        %5936 = vmatmul.bf16.gmra.mxu0 %v5815
        %v5937 = vpop.f32.mrf.mxu0
        %v5938 = vadd.f32 0.0, %v5937
        %v5939 = vpop.f32.mrf.mxu0
        %v5940 = vadd.f32 0.0, %v5939
        %5941 = vmatmul.bf16.gmra.mxu0 %v5816
        %v5942 = vpop.f32.mrf.mxu0
        %v5943 = vadd.f32 0.0, %v5942
        %v5944 = vpop.f32.mrf.mxu0
        %v5945 = vadd.f32 0.0, %v5944
        %5946 = vmatmul.bf16.gmra.mxu0 %v5817
        %v5947 = vpop.f32.mrf.mxu0
        %v5948 = vpop.f32.mrf.mxu0
        %5949 = vmatmul.bf16.gmra.mxu0 %v5818
        %v5950 = vpop.f32.mrf.mxu0
        %v5951 = vadd.f32 0.0, %v5950
        %v5952 = vpop.f32.mrf.mxu0
        %v5953 = vadd.f32 0.0, %v5952
        %5954 = vmatmul.bf16.gmra.mxu0 %v5819
        %v5955 = vpop.f32.mrf.mxu0
        %v5956 = vadd.f32 0.0, %v5955
        %v5957 = vpop.f32.mrf.mxu0
        %v5958 = vadd.f32 0.0, %v5957
        %5959 = vmatmul.bf16.gmra.mxu0 %v5820
        %v5960 = vpop.f32.mrf.mxu0
        %v5961 = vadd.f32 0.0, %v5960
        %v5962 = vpop.f32.mrf.mxu0
        %v5963 = vadd.f32 0.0, %v5962
        %5964 = vmatmul.bf16.gmra.mxu0 %v5821
        %v5965 = vpop.f32.mrf.mxu0
        %v5966 = vpop.f32.mrf.mxu0
        %5967 = vdwg.mxu0
        %v5968 = vadd.f32 %v5718, %v5897
        %v5969 = vadd.f32 %v5719, %v5899
        %v5970 = vadd.f32 %v5720, %v5902
        %v5971 = vadd.f32 %v5721, %v5904
        %v5972 = vadd.f32 %v5722, %v5907
        %v5973 = vadd.f32 %v5723, %v5909
        %v5974 = vadd.f32 %v5724, %v5915
        %v5975 = vadd.f32 %v5725, %v5917
        %v5976 = vadd.f32 %v5726, %v5920
        %v5977 = vadd.f32 %v5727, %v5922
        %v5978 = vadd.f32 %v5728, %v5925
        %v5979 = vadd.f32 %v5729, %v5927
        %v5980 = vadd.f32 %v5730, %v5933
        %v5981 = vadd.f32 %v5731, %v5935
        %v5982 = vadd.f32 %v5732, %v5938
        %v5983 = vadd.f32 %v5733, %v5940
        %v5984 = vadd.f32 %v5734, %v5943
        %v5985 = vadd.f32 %v5735, %v5945
        %v5986 = vadd.f32 %v5736, %v5951
        %v5987 = vadd.f32 %v5737, %v5953
        %v5988 = vadd.f32 %v5738, %v5956
        %v5989 = vadd.f32 %v5739, %v5958
        %v5990 = vadd.f32 %v5740, %v5961
        %v5991 = vadd.f32 %v5741, %v5963
        %v5992 = vrot.slane %v4573, 6
        %v5993 = vrot.slane %v4574, 6
        %v5994 = vrot.slane %v4575, 6
        %v5995 = vrot.slane %v4576, 6
        %v5996 = vrot.slane %v4577, 6
        %v5997 = vrot.slane %v4578, 6
        %v5998 = vrot.slane %v4579, 6
        %v5999 = vrot.slane %v4580, 6
        %v6000 = vrot.slane %v4581, 6
        %v6001 = vrot.slane %v4582, 6
        %v6002 = vrot.slane %v4583, 6
        %v6003 = vrot.slane %v4584, 6
        %v6004 = vrot.slane %v4585, 6
        %v6005 = vrot.slane %v4586, 6
        %v6006 = vrot.slane %v4587, 6
        %v6007 = vrot.slane %v4588, 6
        %v6008 = vrot.slane %v4589, 6
        %v6009 = vrot.slane %v4590, 6
        %v6010 = vrot.slane %v4591, 6
        %v6011 = vrot.slane %v4592, 6
        %v6012 = vrot.slane %v4593, 6
        %v6013 = vrot.slane %v4594, 6
        %v6014 = vrot.slane %v4595, 6
        %v6015 = vrot.slane %v4596, 6
        %v6016 = vrot.slane %v4597, 6
        %v6017 = vrot.slane %v4598, 6
        %v6018 = vrot.slane %v4599, 6
        %v6019 = vrot.slane %v4600, 6
        %v6020 = vrot.slane %v4601, 6
        %v6021 = vrot.slane %v4602, 6
        %v6022 = vrot.slane %v4603, 6
        %v6023 = vrot.slane %v4604, 6
        %v6024 = vsel %vm3641, %v6022, %v6023
        %v6025 = vsel %vm3641, %v6021, %v6022
        %v6026 = vsel %vm3641, %v6020, %v6021
        %v6027 = vsel %vm3641, %v6019, %v6020
        %v6028 = vsel %vm3641, %v6018, %v6019
        %v6029 = vsel %vm3641, %v6017, %v6018
        %v6030 = vsel %vm3641, %v6016, %v6017
        %v6031 = vsel %vm3641, %v6015, %v6016
        %v6032 = vsel %vm3641, %v6014, %v6015
        %v6033 = vsel %vm3641, %v6013, %v6014
        %v6034 = vsel %vm3641, %v6012, %v6013
        %v6035 = vsel %vm3641, %v6011, %v6012
        %v6036 = vsel %vm3641, %v6010, %v6011
        %v6037 = vsel %vm3641, %v6009, %v6010
        %v6038 = vsel %vm3641, %v6008, %v6009
        %v6039 = vsel %vm3641, %v6007, %v6008
        %v6040 = vsel %vm3641, %v6006, %v6007
        %v6041 = vsel %vm3641, %v6005, %v6006
        %v6042 = vsel %vm3641, %v6004, %v6005
        %v6043 = vsel %vm3641, %v6003, %v6004
        %v6044 = vsel %vm3641, %v6002, %v6003
        %v6045 = vsel %vm3641, %v6001, %v6002
        %v6046 = vsel %vm3641, %v6000, %v6001
        %v6047 = vsel %vm3641, %v5999, %v6000
        %v6048 = vsel %vm3641, %v5998, %v5999
        %v6049 = vsel %vm3641, %v5997, %v5998
        %v6050 = vsel %vm3641, %v5996, %v5997
        %v6051 = vsel %vm3641, %v5995, %v5996
        %v6052 = vsel %vm3641, %v5994, %v5995
        %v6053 = vsel %vm3641, %v5993, %v5994
        %v6054 = vsel %vm3641, %v5992, %v5993
        %v6055 = vsel %vm3641, %v6023, %v5992
        %v6056 = vpack.c.bf16 %v6053, %v6054
        %v6057 = vpack.c.bf16 %v6051, %v6052
        %v6058 = vpack.c.bf16 %v6049, %v6050
        %v6059 = vpack.c.bf16 %v6047, %v6048
        %v6060 = vpack.c.bf16 %v6045, %v6046
        %v6061 = vpack.c.bf16 %v6043, %v6044
        %v6062 = vpack.c.bf16 %v6041, %v6042
        %v6063 = vpack.c.bf16 %v6039, %v6040
        %v6064 = vpack.c.bf16 %v6037, %v6038
        %v6065 = vpack.c.bf16 %v6035, %v6036
        %v6066 = vpack.c.bf16 %v6033, %v6034
        %v6067 = vpack.c.bf16 %v6031, %v6032
        %v6068 = vpack.c.bf16 %v6029, %v6030
        %v6069 = vpack.c.bf16 %v6027, %v6028
        %v6070 = vpack.c.bf16 %v6025, %v6026
        %v6071 = vpack.c.bf16 %v6055, %v6024
        %s6072 = scalar_lea.vmem [#allocation9], 384
        %v6073 = vld [vmem:[%s6072] sm:$0xf]
        %v6074 = vld [vmem:[%s6072 + $0x4] sm:$0xf]
        %v6075 = vld [vmem:[%s6072 + $0x8] sm:$0xf]
        %v6076 = vld [vmem:[%s6072 + $0xc] sm:$0xf]
        %v6077 = vld [vmem:[%s6072 + $0x10] sm:$0xf]
        %v6078 = vld [vmem:[%s6072 + $0x14] sm:$0xf]
        %v6079 = vld [vmem:[%s6072 + $0x18] sm:$0xf]
        %v6080 = vld [vmem:[%s6072 + $0x1c] sm:$0xf]
        %v6081 = vld [vmem:[%s6072 + $0x20] sm:$0xf]
        %v6082 = vld [vmem:[%s6072 + $0x24] sm:$0xf]
        %v6083 = vld [vmem:[%s6072 + $0x28] sm:$0xf]
        %v6084 = vld [vmem:[%s6072 + $0x2c] sm:$0xf]
        %v6085 = vld [vmem:[%s6072 + $0x30] sm:$0xf]
        %v6086 = vld [vmem:[%s6072 + $0x34] sm:$0xf]
        %v6087 = vld [vmem:[%s6072 + $0x38] sm:$0xf]
        %v6088 = vld [vmem:[%s6072 + $0x3c] sm:$0xf]
        %v6105 = vunpack.c.l.b16 %v6073
        %v6106 = vunpack.c.l.b16 %v6074
        %v6107 = vunpack.c.l.b16 %v6075
        %v6108 = vunpack.c.l.b16 %v6076
        %v6109 = vunpack.c.l.b16 %v6077
        %v6110 = vunpack.c.l.b16 %v6078
        %v6111 = vunpack.c.l.b16 %v6079
        %v6112 = vunpack.c.l.b16 %v6080
        %v6113 = vunpack.c.l.b16 %v6081
        %v6114 = vunpack.c.l.b16 %v6082
        %v6115 = vunpack.c.l.b16 %v6083
        %v6116 = vunpack.c.l.b16 %v6084
        %v6117 = vunpack.c.l.b16 %v6085
        %v6118 = vunpack.c.l.b16 %v6086
        %v6119 = vunpack.c.l.b16 %v6087
        %v6120 = vunpack.c.l.b16 %v6088
        %v6121 = vpack.c.b16 %v6106, %v6105
        %v6122 = vpack.c.b16 %v6108, %v6107
        %v6123 = vpack.c.b16 %v6110, %v6109
        %v6124 = vpack.c.b16 %v6112, %v6111
        %v6125 = vpack.c.b16 %v6114, %v6113
        %v6126 = vpack.c.b16 %v6116, %v6115
        %v6127 = vpack.c.b16 %v6118, %v6117
        %v6128 = vpack.c.b16 %v6120, %v6119
        %6137 = vmatpush.bf16.msra.mxu0 %v6128
        %6138 = vmatpush.bf16.msra.mxu0 %v6127
        %6139 = vmatpush.bf16.msra.mxu0 %v6126
        %6140 = vmatpush.bf16.msra.mxu0 %v6125
        %6141 = vmatpush.bf16.msra.mxu0 %v6124
        %6142 = vmatpush.bf16.msra.mxu0 %v6123
        %6143 = vmatpush.bf16.msra.mxu0 %v6122
        %6144 = vmatpush.bf16.msra.mxu0 %v6121
        %6145 = vmatmul.bf16.gmra.mxu0 %v6056
        %v6146 = vpop.f32.mrf.mxu0
        %v6147 = vadd.f32 0.0, %v6146
        %v6148 = vpop.f32.mrf.mxu0
        %v6149 = vadd.f32 0.0, %v6148
        %6150 = vmatmul.bf16.gmra.mxu0 %v6057
        %v6151 = vpop.f32.mrf.mxu0
        %v6152 = vadd.f32 0.0, %v6151
        %v6153 = vpop.f32.mrf.mxu0
        %v6154 = vadd.f32 0.0, %v6153
        %6155 = vmatmul.bf16.gmra.mxu0 %v6058
        %v6156 = vpop.f32.mrf.mxu0
        %v6157 = vadd.f32 0.0, %v6156
        %v6158 = vpop.f32.mrf.mxu0
        %v6159 = vadd.f32 0.0, %v6158
        %6160 = vmatmul.bf16.gmra.mxu0 %v6059
        %v6161 = vpop.f32.mrf.mxu0
        %v6162 = vpop.f32.mrf.mxu0
        %6163 = vmatmul.bf16.gmra.mxu0 %v6060
        %v6164 = vpop.f32.mrf.mxu0
        %v6165 = vadd.f32 0.0, %v6164
        %v6166 = vpop.f32.mrf.mxu0
        %v6167 = vadd.f32 0.0, %v6166
        %6168 = vmatmul.bf16.gmra.mxu0 %v6061
        %v6169 = vpop.f32.mrf.mxu0
        %v6170 = vadd.f32 0.0, %v6169
        %v6171 = vpop.f32.mrf.mxu0
        %v6172 = vadd.f32 0.0, %v6171
        %6173 = vmatmul.bf16.gmra.mxu0 %v6062
        %v6174 = vpop.f32.mrf.mxu0
        %v6175 = vadd.f32 0.0, %v6174
        %v6176 = vpop.f32.mrf.mxu0
        %v6177 = vadd.f32 0.0, %v6176
        %6178 = vmatmul.bf16.gmra.mxu0 %v6063
        %v6179 = vpop.f32.mrf.mxu0
        %v6180 = vpop.f32.mrf.mxu0
        %6181 = vmatmul.bf16.gmra.mxu0 %v6064
        %v6182 = vpop.f32.mrf.mxu0
        %v6183 = vadd.f32 0.0, %v6182
        %v6184 = vpop.f32.mrf.mxu0
        %v6185 = vadd.f32 0.0, %v6184
        %6186 = vmatmul.bf16.gmra.mxu0 %v6065
        %v6187 = vpop.f32.mrf.mxu0
        %v6188 = vadd.f32 0.0, %v6187
        %v6189 = vpop.f32.mrf.mxu0
        %v6190 = vadd.f32 0.0, %v6189
        %6191 = vmatmul.bf16.gmra.mxu0 %v6066
        %v6192 = vpop.f32.mrf.mxu0
        %v6193 = vadd.f32 0.0, %v6192
        %v6194 = vpop.f32.mrf.mxu0
        %v6195 = vadd.f32 0.0, %v6194
        %6196 = vmatmul.bf16.gmra.mxu0 %v6067
        %v6197 = vpop.f32.mrf.mxu0
        %v6198 = vpop.f32.mrf.mxu0
        %6199 = vmatmul.bf16.gmra.mxu0 %v6068
        %v6200 = vpop.f32.mrf.mxu0
        %v6201 = vadd.f32 0.0, %v6200
        %v6202 = vpop.f32.mrf.mxu0
        %v6203 = vadd.f32 0.0, %v6202
        %6204 = vmatmul.bf16.gmra.mxu0 %v6069
        %v6205 = vpop.f32.mrf.mxu0
        %v6206 = vadd.f32 0.0, %v6205
        %v6207 = vpop.f32.mrf.mxu0
        %v6208 = vadd.f32 0.0, %v6207
        %6209 = vmatmul.bf16.gmra.mxu0 %v6070
        %v6210 = vpop.f32.mrf.mxu0
        %v6211 = vadd.f32 0.0, %v6210
        %v6212 = vpop.f32.mrf.mxu0
        %v6213 = vadd.f32 0.0, %v6212
        %6214 = vmatmul.bf16.gmra.mxu0 %v6071
        %v6215 = vpop.f32.mrf.mxu0
        %v6216 = vpop.f32.mrf.mxu0
        %6217 = vdwg.mxu0
        %v6218 = vadd.f32 %v5968, %v6147
        %v6219 = vadd.f32 %v5969, %v6149
        %v6220 = vadd.f32 %v5970, %v6152
        %v6221 = vadd.f32 %v5971, %v6154
        %v6222 = vadd.f32 %v5972, %v6157
        %v6223 = vadd.f32 %v5973, %v6159
        %v6224 = vadd.f32 %v5974, %v6165
        %v6225 = vadd.f32 %v5975, %v6167
        %v6226 = vadd.f32 %v5976, %v6170
        %v6227 = vadd.f32 %v5977, %v6172
        %v6228 = vadd.f32 %v5978, %v6175
        %v6229 = vadd.f32 %v5979, %v6177
        %v6230 = vadd.f32 %v5980, %v6183
        %v6231 = vadd.f32 %v5981, %v6185
        %v6232 = vadd.f32 %v5982, %v6188
        %v6233 = vadd.f32 %v5983, %v6190
        %v6234 = vadd.f32 %v5984, %v6193
        %v6235 = vadd.f32 %v5985, %v6195
        %v6236 = vadd.f32 %v5986, %v6201
        %v6237 = vadd.f32 %v5987, %v6203
        %v6238 = vadd.f32 %v5988, %v6206
        %v6239 = vadd.f32 %v5989, %v6208
        %v6240 = vadd.f32 %v5990, %v6211
        %v6241 = vadd.f32 %v5991, %v6213
        %v6242 = vrot.slane %v4573, 7
        %v6243 = vrot.slane %v4574, 7
        %v6244 = vrot.slane %v4575, 7
        %v6245 = vrot.slane %v4576, 7
        %v6246 = vrot.slane %v4577, 7
        %v6247 = vrot.slane %v4578, 7
        %v6248 = vrot.slane %v4579, 7
        %v6249 = vrot.slane %v4580, 7
        %v6250 = vrot.slane %v4581, 7
        %v6251 = vrot.slane %v4582, 7
        %v6252 = vrot.slane %v4583, 7
        %v6253 = vrot.slane %v4584, 7
        %v6254 = vrot.slane %v4585, 7
        %v6255 = vrot.slane %v4586, 7
        %v6256 = vrot.slane %v4587, 7
        %v6257 = vrot.slane %v4588, 7
        %v6258 = vrot.slane %v4589, 7
        %v6259 = vrot.slane %v4590, 7
        %v6260 = vrot.slane %v4591, 7
        %v6261 = vrot.slane %v4592, 7
        %v6262 = vrot.slane %v4593, 7
        %v6263 = vrot.slane %v4594, 7
        %v6264 = vrot.slane %v4595, 7
        %v6265 = vrot.slane %v4596, 7
        %v6266 = vrot.slane %v4597, 7
        %v6267 = vrot.slane %v4598, 7
        %v6268 = vrot.slane %v4599, 7
        %v6269 = vrot.slane %v4600, 7
        %v6270 = vrot.slane %v4601, 7
        %v6271 = vrot.slane %v4602, 7
        %v6272 = vrot.slane %v4603, 7
        %v6273 = vrot.slane %v4604, 7
        %v6274 = vsel %vm3908, %v6272, %v6273
        %v6275 = vsel %vm3908, %v6271, %v6272
        %v6276 = vsel %vm3908, %v6270, %v6271
        %v6277 = vsel %vm3908, %v6269, %v6270
        %v6278 = vsel %vm3908, %v6268, %v6269
        %v6279 = vsel %vm3908, %v6267, %v6268
        %v6280 = vsel %vm3908, %v6266, %v6267
        %v6281 = vsel %vm3908, %v6265, %v6266
        %v6282 = vsel %vm3908, %v6264, %v6265
        %v6283 = vsel %vm3908, %v6263, %v6264
        %v6284 = vsel %vm3908, %v6262, %v6263
        %v6285 = vsel %vm3908, %v6261, %v6262
        %v6286 = vsel %vm3908, %v6260, %v6261
        %v6287 = vsel %vm3908, %v6259, %v6260
        %v6288 = vsel %vm3908, %v6258, %v6259
        %v6289 = vsel %vm3908, %v6257, %v6258
        %v6290 = vsel %vm3908, %v6256, %v6257
        %v6291 = vsel %vm3908, %v6255, %v6256
        %v6292 = vsel %vm3908, %v6254, %v6255
        %v6293 = vsel %vm3908, %v6253, %v6254
        %v6294 = vsel %vm3908, %v6252, %v6253
        %v6295 = vsel %vm3908, %v6251, %v6252
        %v6296 = vsel %vm3908, %v6250, %v6251
        %v6297 = vsel %vm3908, %v6249, %v6250
        %v6298 = vsel %vm3908, %v6248, %v6249
        %v6299 = vsel %vm3908, %v6247, %v6248
        %v6300 = vsel %vm3908, %v6246, %v6247
        %v6301 = vsel %vm3908, %v6245, %v6246
        %v6302 = vsel %vm3908, %v6244, %v6245
        %v6303 = vsel %vm3908, %v6243, %v6244
        %v6304 = vsel %vm3908, %v6242, %v6243
        %v6305 = vsel %vm3908, %v6273, %v6242
        %v6306 = vpack.c.bf16 %v6303, %v6304
        %v6307 = vpack.c.bf16 %v6301, %v6302
        %v6308 = vpack.c.bf16 %v6299, %v6300
        %v6309 = vpack.c.bf16 %v6297, %v6298
        %v6310 = vpack.c.bf16 %v6295, %v6296
        %v6311 = vpack.c.bf16 %v6293, %v6294
        %v6312 = vpack.c.bf16 %v6291, %v6292
        %v6313 = vpack.c.bf16 %v6289, %v6290
        %v6314 = vpack.c.bf16 %v6287, %v6288
        %v6315 = vpack.c.bf16 %v6285, %v6286
        %v6316 = vpack.c.bf16 %v6283, %v6284
        %v6317 = vpack.c.bf16 %v6281, %v6282
        %v6318 = vpack.c.bf16 %v6279, %v6280
        %v6319 = vpack.c.bf16 %v6277, %v6278
        %v6320 = vpack.c.bf16 %v6275, %v6276
        %v6321 = vpack.c.bf16 %v6305, %v6274
        %s6322 = scalar_lea.vmem [#allocation9], 448
        %v6323 = vld [vmem:[%s6322] sm:$0xf]
        %v6324 = vld [vmem:[%s6322 + $0x4] sm:$0xf]
        %v6325 = vld [vmem:[%s6322 + $0x8] sm:$0xf]
        %v6326 = vld [vmem:[%s6322 + $0xc] sm:$0xf]
        %v6327 = vld [vmem:[%s6322 + $0x10] sm:$0xf]
        %v6328 = vld [vmem:[%s6322 + $0x14] sm:$0xf]
        %v6329 = vld [vmem:[%s6322 + $0x18] sm:$0xf]
        %v6330 = vld [vmem:[%s6322 + $0x1c] sm:$0xf]
        %v6331 = vld [vmem:[%s6322 + $0x20] sm:$0xf]
        %v6332 = vld [vmem:[%s6322 + $0x24] sm:$0xf]
        %v6333 = vld [vmem:[%s6322 + $0x28] sm:$0xf]
        %v6334 = vld [vmem:[%s6322 + $0x2c] sm:$0xf]
        %v6335 = vld [vmem:[%s6322 + $0x30] sm:$0xf]
        %v6336 = vld [vmem:[%s6322 + $0x34] sm:$0xf]
        %v6337 = vld [vmem:[%s6322 + $0x38] sm:$0xf]
        %v6338 = vld [vmem:[%s6322 + $0x3c] sm:$0xf]
        %v6355 = vunpack.c.l.b16 %v6323
        %v6356 = vunpack.c.l.b16 %v6324
        %v6357 = vunpack.c.l.b16 %v6325
        %v6358 = vunpack.c.l.b16 %v6326
        %v6359 = vunpack.c.l.b16 %v6327
        %v6360 = vunpack.c.l.b16 %v6328
        %v6361 = vunpack.c.l.b16 %v6329
        %v6362 = vunpack.c.l.b16 %v6330
        %v6363 = vunpack.c.l.b16 %v6331
        %v6364 = vunpack.c.l.b16 %v6332
        %v6365 = vunpack.c.l.b16 %v6333
        %v6366 = vunpack.c.l.b16 %v6334
        %v6367 = vunpack.c.l.b16 %v6335
        %v6368 = vunpack.c.l.b16 %v6336
        %v6369 = vunpack.c.l.b16 %v6337
        %v6370 = vunpack.c.l.b16 %v6338
        %v6371 = vpack.c.b16 %v6356, %v6355
        %v6372 = vpack.c.b16 %v6358, %v6357
        %v6373 = vpack.c.b16 %v6360, %v6359
        %v6374 = vpack.c.b16 %v6362, %v6361
        %v6375 = vpack.c.b16 %v6364, %v6363
        %v6376 = vpack.c.b16 %v6366, %v6365
        %v6377 = vpack.c.b16 %v6368, %v6367
        %v6378 = vpack.c.b16 %v6370, %v6369
        %6387 = vmatpush.bf16.msra.mxu0 %v6378
        %6388 = vmatpush.bf16.msra.mxu0 %v6377
        %6389 = vmatpush.bf16.msra.mxu0 %v6376
        %6390 = vmatpush.bf16.msra.mxu0 %v6375
        %6391 = vmatpush.bf16.msra.mxu0 %v6374
        %6392 = vmatpush.bf16.msra.mxu0 %v6373
        %6393 = vmatpush.bf16.msra.mxu0 %v6372
        %6394 = vmatpush.bf16.msra.mxu0 %v6371
        %6395 = vmatmul.bf16.gmra.mxu0 %v6306
        %v6396 = vpop.f32.mrf.mxu0
        %v6397 = vadd.f32 0.0, %v6396
        %v6398 = vpop.f32.mrf.mxu0
        %v6399 = vadd.f32 0.0, %v6398
        %6400 = vmatmul.bf16.gmra.mxu0 %v6307
        %v6401 = vpop.f32.mrf.mxu0
        %v6402 = vadd.f32 0.0, %v6401
        %v6403 = vpop.f32.mrf.mxu0
        %v6404 = vadd.f32 0.0, %v6403
        %6405 = vmatmul.bf16.gmra.mxu0 %v6308
        %v6406 = vpop.f32.mrf.mxu0
        %v6407 = vadd.f32 0.0, %v6406
        %v6408 = vpop.f32.mrf.mxu0
        %v6409 = vadd.f32 0.0, %v6408
        %6410 = vmatmul.bf16.gmra.mxu0 %v6309
        %v6411 = vpop.f32.mrf.mxu0
        %v6412 = vpop.f32.mrf.mxu0
        %6413 = vmatmul.bf16.gmra.mxu0 %v6310
        %v6414 = vpop.f32.mrf.mxu0
        %v6415 = vadd.f32 0.0, %v6414
        %v6416 = vpop.f32.mrf.mxu0
        %v6417 = vadd.f32 0.0, %v6416
        %6418 = vmatmul.bf16.gmra.mxu0 %v6311
        %v6419 = vpop.f32.mrf.mxu0
        %v6420 = vadd.f32 0.0, %v6419
        %v6421 = vpop.f32.mrf.mxu0
        %v6422 = vadd.f32 0.0, %v6421
        %6423 = vmatmul.bf16.gmra.mxu0 %v6312
        %v6424 = vpop.f32.mrf.mxu0
        %v6425 = vadd.f32 0.0, %v6424
        %v6426 = vpop.f32.mrf.mxu0
        %v6427 = vadd.f32 0.0, %v6426
        %6428 = vmatmul.bf16.gmra.mxu0 %v6313
        %v6429 = vpop.f32.mrf.mxu0
        %v6430 = vpop.f32.mrf.mxu0
        %6431 = vmatmul.bf16.gmra.mxu0 %v6314
        %v6432 = vpop.f32.mrf.mxu0
        %v6433 = vadd.f32 0.0, %v6432
        %v6434 = vpop.f32.mrf.mxu0
        %v6435 = vadd.f32 0.0, %v6434
        %6436 = vmatmul.bf16.gmra.mxu0 %v6315
        %v6437 = vpop.f32.mrf.mxu0
        %v6438 = vadd.f32 0.0, %v6437
        %v6439 = vpop.f32.mrf.mxu0
        %v6440 = vadd.f32 0.0, %v6439
        %6441 = vmatmul.bf16.gmra.mxu0 %v6316
        %v6442 = vpop.f32.mrf.mxu0
        %v6443 = vadd.f32 0.0, %v6442
        %v6444 = vpop.f32.mrf.mxu0
        %v6445 = vadd.f32 0.0, %v6444
        %6446 = vmatmul.bf16.gmra.mxu0 %v6317
        %v6447 = vpop.f32.mrf.mxu0
        %v6448 = vpop.f32.mrf.mxu0
        %6449 = vmatmul.bf16.gmra.mxu0 %v6318
        %v6450 = vpop.f32.mrf.mxu0
        %v6451 = vadd.f32 0.0, %v6450
        %v6452 = vpop.f32.mrf.mxu0
        %v6453 = vadd.f32 0.0, %v6452
        %6454 = vmatmul.bf16.gmra.mxu0 %v6319
        %v6455 = vpop.f32.mrf.mxu0
        %v6456 = vadd.f32 0.0, %v6455
        %v6457 = vpop.f32.mrf.mxu0
        %v6458 = vadd.f32 0.0, %v6457
        %6459 = vmatmul.bf16.gmra.mxu0 %v6320
        %v6460 = vpop.f32.mrf.mxu0
        %v6461 = vadd.f32 0.0, %v6460
        %v6462 = vpop.f32.mrf.mxu0
        %v6463 = vadd.f32 0.0, %v6462
        %6464 = vmatmul.bf16.gmra.mxu0 %v6321
        %v6465 = vpop.f32.mrf.mxu0
        %v6466 = vpop.f32.mrf.mxu0
        %6467 = vdwg.mxu0
        %v6468 = vadd.f32 %v6218, %v6397
        %v6469 = vadd.f32 %v6219, %v6399
        %v6470 = vadd.f32 %v6220, %v6402
        %v6471 = vadd.f32 %v6221, %v6404
        %v6472 = vadd.f32 %v6222, %v6407
        %v6473 = vadd.f32 %v6223, %v6409
        %v6474 = vadd.f32 %v6224, %v6415
        %v6475 = vadd.f32 %v6225, %v6417
        %v6476 = vadd.f32 %v6226, %v6420
        %v6477 = vadd.f32 %v6227, %v6422
        %v6478 = vadd.f32 %v6228, %v6425
        %v6479 = vadd.f32 %v6229, %v6427
        %v6480 = vadd.f32 %v6230, %v6433
        %v6481 = vadd.f32 %v6231, %v6435
        %v6482 = vadd.f32 %v6232, %v6438
        %v6483 = vadd.f32 %v6233, %v6440
        %v6484 = vadd.f32 %v6234, %v6443
        %v6485 = vadd.f32 %v6235, %v6445
        %v6486 = vadd.f32 %v6236, %v6451
        %v6487 = vadd.f32 %v6237, %v6453
        %v6488 = vadd.f32 %v6238, %v6456
        %v6489 = vadd.f32 %v6239, %v6458
        %v6490 = vadd.f32 %v6240, %v6461
        %v6491 = vadd.f32 %v6241, %v6463
        %v6492 = vpack.c.bf16 %v4575, %v4574
        %v6493 = vpack.c.bf16 %v4577, %v4576
        %v6494 = vpack.c.bf16 %v4579, %v4578
        %v6495 = vpack.c.bf16 %v4581, %v4580
        %v6496 = vpack.c.bf16 %v4583, %v4582
        %v6497 = vpack.c.bf16 %v4585, %v4584
        %v6498 = vpack.c.bf16 %v4587, %v4586
        %v6499 = vpack.c.bf16 %v4589, %v4588
        %v6500 = vpack.c.bf16 %v4591, %v4590
        %v6501 = vpack.c.bf16 %v4593, %v4592
        %v6502 = vpack.c.bf16 %v4595, %v4594
        %v6503 = vpack.c.bf16 %v4597, %v4596
        %v6504 = vpack.c.bf16 %v4599, %v4598
        %v6505 = vpack.c.bf16 %v4601, %v4600
        %v6506 = vpack.c.bf16 %v4603, %v4602
        %v6507 = vpack.c.bf16 %v4573, %v4604
        %s6508 = scalar_lea.vmem [#allocation9], 512
        %v6509 = vld [vmem:[%s6508] sm:$0xf]
        %v6510 = vld [vmem:[%s6508 + $0x4] sm:$0xf]
        %v6511 = vld [vmem:[%s6508 + $0x8] sm:$0xf]
        %v6512 = vld [vmem:[%s6508 + $0xc] sm:$0xf]
        %v6513 = vld [vmem:[%s6508 + $0x10] sm:$0xf]
        %v6514 = vld [vmem:[%s6508 + $0x14] sm:$0xf]
        %v6515 = vld [vmem:[%s6508 + $0x18] sm:$0xf]
        %v6516 = vld [vmem:[%s6508 + $0x1c] sm:$0xf]
        %v6517 = vld [vmem:[%s6508 + $0x20] sm:$0xf]
        %v6518 = vld [vmem:[%s6508 + $0x24] sm:$0xf]
        %v6519 = vld [vmem:[%s6508 + $0x28] sm:$0xf]
        %v6520 = vld [vmem:[%s6508 + $0x2c] sm:$0xf]
        %v6521 = vld [vmem:[%s6508 + $0x30] sm:$0xf]
        %v6522 = vld [vmem:[%s6508 + $0x34] sm:$0xf]
        %v6523 = vld [vmem:[%s6508 + $0x38] sm:$0xf]
        %v6524 = vld [vmem:[%s6508 + $0x3c] sm:$0xf]
        %v6541 = vunpack.c.l.b16 %v6509
        %v6542 = vunpack.c.l.b16 %v6510
        %v6543 = vunpack.c.l.b16 %v6511
        %v6544 = vunpack.c.l.b16 %v6512
        %v6545 = vunpack.c.l.b16 %v6513
        %v6546 = vunpack.c.l.b16 %v6514
        %v6547 = vunpack.c.l.b16 %v6515
        %v6548 = vunpack.c.l.b16 %v6516
        %v6549 = vunpack.c.l.b16 %v6517
        %v6550 = vunpack.c.l.b16 %v6518
        %v6551 = vunpack.c.l.b16 %v6519
        %v6552 = vunpack.c.l.b16 %v6520
        %v6553 = vunpack.c.l.b16 %v6521
        %v6554 = vunpack.c.l.b16 %v6522
        %v6555 = vunpack.c.l.b16 %v6523
        %v6556 = vunpack.c.l.b16 %v6524
        %v6557 = vpack.c.b16 %v6542, %v6541
        %v6558 = vpack.c.b16 %v6544, %v6543
        %v6559 = vpack.c.b16 %v6546, %v6545
        %v6560 = vpack.c.b16 %v6548, %v6547
        %v6561 = vpack.c.b16 %v6550, %v6549
        %v6562 = vpack.c.b16 %v6552, %v6551
        %v6563 = vpack.c.b16 %v6554, %v6553
        %v6564 = vpack.c.b16 %v6556, %v6555
        %6573 = vmatpush.bf16.msra.mxu0 %v6564
        %6574 = vmatpush.bf16.msra.mxu0 %v6563
        %6575 = vmatpush.bf16.msra.mxu0 %v6562
        %6576 = vmatpush.bf16.msra.mxu0 %v6561
        %6577 = vmatpush.bf16.msra.mxu0 %v6560
        %6578 = vmatpush.bf16.msra.mxu0 %v6559
        %6579 = vmatpush.bf16.msra.mxu0 %v6558
        %6580 = vmatpush.bf16.msra.mxu0 %v6557
        %6581 = vmatmul.bf16.gmra.mxu0 %v6492
        %v6582 = vpop.f32.mrf.mxu0
        %v6583 = vadd.f32 0.0, %v6582
        %v6584 = vpop.f32.mrf.mxu0
        %v6585 = vadd.f32 0.0, %v6584
        %6586 = vmatmul.bf16.gmra.mxu0 %v6493
        %v6587 = vpop.f32.mrf.mxu0
        %v6588 = vadd.f32 0.0, %v6587
        %v6589 = vpop.f32.mrf.mxu0
        %v6590 = vadd.f32 0.0, %v6589
        %6591 = vmatmul.bf16.gmra.mxu0 %v6494
        %v6592 = vpop.f32.mrf.mxu0
        %v6593 = vadd.f32 0.0, %v6592
        %v6594 = vpop.f32.mrf.mxu0
        %v6595 = vadd.f32 0.0, %v6594
        %6596 = vmatmul.bf16.gmra.mxu0 %v6495
        %v6597 = vpop.f32.mrf.mxu0
        %v6598 = vpop.f32.mrf.mxu0
        %6599 = vmatmul.bf16.gmra.mxu0 %v6496
        %v6600 = vpop.f32.mrf.mxu0
        %v6601 = vadd.f32 0.0, %v6600
        %v6602 = vpop.f32.mrf.mxu0
        %v6603 = vadd.f32 0.0, %v6602
        %6604 = vmatmul.bf16.gmra.mxu0 %v6497
        %v6605 = vpop.f32.mrf.mxu0
        %v6606 = vadd.f32 0.0, %v6605
        %v6607 = vpop.f32.mrf.mxu0
        %v6608 = vadd.f32 0.0, %v6607
        %6609 = vmatmul.bf16.gmra.mxu0 %v6498
        %v6610 = vpop.f32.mrf.mxu0
        %v6611 = vadd.f32 0.0, %v6610
        %v6612 = vpop.f32.mrf.mxu0
        %v6613 = vadd.f32 0.0, %v6612
        %6614 = vmatmul.bf16.gmra.mxu0 %v6499
        %v6615 = vpop.f32.mrf.mxu0
        %v6616 = vpop.f32.mrf.mxu0
        %6617 = vmatmul.bf16.gmra.mxu0 %v6500
        %v6618 = vpop.f32.mrf.mxu0
        %v6619 = vadd.f32 0.0, %v6618
        %v6620 = vpop.f32.mrf.mxu0
        %v6621 = vadd.f32 0.0, %v6620
        %6622 = vmatmul.bf16.gmra.mxu0 %v6501
        %v6623 = vpop.f32.mrf.mxu0
        %v6624 = vadd.f32 0.0, %v6623
        %v6625 = vpop.f32.mrf.mxu0
        %v6626 = vadd.f32 0.0, %v6625
        %6627 = vmatmul.bf16.gmra.mxu0 %v6502
        %v6628 = vpop.f32.mrf.mxu0
        %v6629 = vadd.f32 0.0, %v6628
        %v6630 = vpop.f32.mrf.mxu0
        %v6631 = vadd.f32 0.0, %v6630
        %6632 = vmatmul.bf16.gmra.mxu0 %v6503
        %v6633 = vpop.f32.mrf.mxu0
        %v6634 = vpop.f32.mrf.mxu0
        %6635 = vmatmul.bf16.gmra.mxu0 %v6504
        %v6636 = vpop.f32.mrf.mxu0
        %v6637 = vadd.f32 0.0, %v6636
        %v6638 = vpop.f32.mrf.mxu0
        %v6639 = vadd.f32 0.0, %v6638
        %6640 = vmatmul.bf16.gmra.mxu0 %v6505
        %v6641 = vpop.f32.mrf.mxu0
        %v6642 = vadd.f32 0.0, %v6641
        %v6643 = vpop.f32.mrf.mxu0
        %v6644 = vadd.f32 0.0, %v6643
        %6645 = vmatmul.bf16.gmra.mxu0 %v6506
        %v6646 = vpop.f32.mrf.mxu0
        %v6647 = vadd.f32 0.0, %v6646
        %v6648 = vpop.f32.mrf.mxu0
        %v6649 = vadd.f32 0.0, %v6648
        %6650 = vmatmul.bf16.gmra.mxu0 %v6507
        %v6651 = vpop.f32.mrf.mxu0
        %v6652 = vpop.f32.mrf.mxu0
        %6653 = vdwg.mxu0
        %v6654 = vadd.f32 %v6468, %v6583
        %v6655 = vadd.f32 %v6469, %v6585
        %v6656 = vadd.f32 %v6470, %v6588
        %v6657 = vadd.f32 %v6471, %v6590
        %v6658 = vadd.f32 %v6472, %v6593
        %v6659 = vadd.f32 %v6473, %v6595
        %v6660 = vadd.f32 %v6474, %v6601
        %v6661 = vadd.f32 %v6475, %v6603
        %v6662 = vadd.f32 %v6476, %v6606
        %v6663 = vadd.f32 %v6477, %v6608
        %v6664 = vadd.f32 %v6478, %v6611
        %v6665 = vadd.f32 %v6479, %v6613
        %v6666 = vadd.f32 %v6480, %v6619
        %v6667 = vadd.f32 %v6481, %v6621
        %v6668 = vadd.f32 %v6482, %v6624
        %v6669 = vadd.f32 %v6483, %v6626
        %v6670 = vadd.f32 %v6484, %v6629
        %v6671 = vadd.f32 %v6485, %v6631
        %v6672 = vadd.f32 %v6486, %v6637
        %v6673 = vadd.f32 %v6487, %v6639
        %v6674 = vadd.f32 %v6488, %v6642
        %v6675 = vadd.f32 %v6489, %v6644
        %v6676 = vadd.f32 %v6490, %v6647
        %v6677 = vadd.f32 %v6491, %v6649
        %v6678 = vpack.c.bf16 %v4697, %v4698
        %v6679 = vpack.c.bf16 %v4695, %v4696
        %v6680 = vpack.c.bf16 %v4693, %v4694
        %v6681 = vpack.c.bf16 %v4691, %v4692
        %v6682 = vpack.c.bf16 %v4689, %v4690
        %v6683 = vpack.c.bf16 %v4687, %v4688
        %v6684 = vpack.c.bf16 %v4685, %v4686
        %v6685 = vpack.c.bf16 %v4683, %v4684
        %v6686 = vpack.c.bf16 %v4681, %v4682
        %v6687 = vpack.c.bf16 %v4679, %v4680
        %v6688 = vpack.c.bf16 %v4677, %v4678
        %v6689 = vpack.c.bf16 %v4675, %v4676
        %v6690 = vpack.c.bf16 %v4673, %v4674
        %v6691 = vpack.c.bf16 %v4671, %v4672
        %v6692 = vpack.c.bf16 %v4669, %v4670
        %v6693 = vpack.c.bf16 %v4699, %v4700
        %s6694 = scalar_lea.vmem [#allocation9], 576
        %v6695 = vld [vmem:[%s6694] sm:$0xf]
        %v6696 = vld [vmem:[%s6694 + $0x4] sm:$0xf]
        %v6697 = vld [vmem:[%s6694 + $0x8] sm:$0xf]
        %v6698 = vld [vmem:[%s6694 + $0xc] sm:$0xf]
        %v6699 = vld [vmem:[%s6694 + $0x10] sm:$0xf]
        %v6700 = vld [vmem:[%s6694 + $0x14] sm:$0xf]
        %v6701 = vld [vmem:[%s6694 + $0x18] sm:$0xf]
        %v6702 = vld [vmem:[%s6694 + $0x1c] sm:$0xf]
        %v6703 = vld [vmem:[%s6694 + $0x20] sm:$0xf]
        %v6704 = vld [vmem:[%s6694 + $0x24] sm:$0xf]
        %v6705 = vld [vmem:[%s6694 + $0x28] sm:$0xf]
        %v6706 = vld [vmem:[%s6694 + $0x2c] sm:$0xf]
        %v6707 = vld [vmem:[%s6694 + $0x30] sm:$0xf]
        %v6708 = vld [vmem:[%s6694 + $0x34] sm:$0xf]
        %v6709 = vld [vmem:[%s6694 + $0x38] sm:$0xf]
        %v6710 = vld [vmem:[%s6694 + $0x3c] sm:$0xf]
        %v6727 = vunpack.c.l.b16 %v6695
        %v6728 = vunpack.c.l.b16 %v6696
        %v6729 = vunpack.c.l.b16 %v6697
        %v6730 = vunpack.c.l.b16 %v6698
        %v6731 = vunpack.c.l.b16 %v6699
        %v6732 = vunpack.c.l.b16 %v6700
        %v6733 = vunpack.c.l.b16 %v6701
        %v6734 = vunpack.c.l.b16 %v6702
        %v6735 = vunpack.c.l.b16 %v6703
        %v6736 = vunpack.c.l.b16 %v6704
        %v6737 = vunpack.c.l.b16 %v6705
        %v6738 = vunpack.c.l.b16 %v6706
        %v6739 = vunpack.c.l.b16 %v6707
        %v6740 = vunpack.c.l.b16 %v6708
        %v6741 = vunpack.c.l.b16 %v6709
        %v6742 = vunpack.c.l.b16 %v6710
        %v6743 = vpack.c.b16 %v6728, %v6727
        %v6744 = vpack.c.b16 %v6730, %v6729
        %v6745 = vpack.c.b16 %v6732, %v6731
        %v6746 = vpack.c.b16 %v6734, %v6733
        %v6747 = vpack.c.b16 %v6736, %v6735
        %v6748 = vpack.c.b16 %v6738, %v6737
        %v6749 = vpack.c.b16 %v6740, %v6739
        %v6750 = vpack.c.b16 %v6742, %v6741
        %6759 = vmatpush.bf16.msra.mxu0 %v6750
        %6760 = vmatpush.bf16.msra.mxu0 %v6749
        %6761 = vmatpush.bf16.msra.mxu0 %v6748
        %6762 = vmatpush.bf16.msra.mxu0 %v6747
        %6763 = vmatpush.bf16.msra.mxu0 %v6746
        %6764 = vmatpush.bf16.msra.mxu0 %v6745
        %6765 = vmatpush.bf16.msra.mxu0 %v6744
        %6766 = vmatpush.bf16.msra.mxu0 %v6743
        %6767 = vmatmul.bf16.gmra.mxu0 %v6678
        %v6768 = vpop.f32.mrf.mxu0
        %v6769 = vadd.f32 0.0, %v6768
        %v6770 = vpop.f32.mrf.mxu0
        %v6771 = vadd.f32 0.0, %v6770
        %6772 = vmatmul.bf16.gmra.mxu0 %v6679
        %v6773 = vpop.f32.mrf.mxu0
        %v6774 = vadd.f32 0.0, %v6773
        %v6775 = vpop.f32.mrf.mxu0
        %v6776 = vadd.f32 0.0, %v6775
        %6777 = vmatmul.bf16.gmra.mxu0 %v6680
        %v6778 = vpop.f32.mrf.mxu0
        %v6779 = vadd.f32 0.0, %v6778
        %v6780 = vpop.f32.mrf.mxu0
        %v6781 = vadd.f32 0.0, %v6780
        %6782 = vmatmul.bf16.gmra.mxu0 %v6681
        %v6783 = vpop.f32.mrf.mxu0
        %v6784 = vpop.f32.mrf.mxu0
        %6785 = vmatmul.bf16.gmra.mxu0 %v6682
        %v6786 = vpop.f32.mrf.mxu0
        %v6787 = vadd.f32 0.0, %v6786
        %v6788 = vpop.f32.mrf.mxu0
        %v6789 = vadd.f32 0.0, %v6788
        %6790 = vmatmul.bf16.gmra.mxu0 %v6683
        %v6791 = vpop.f32.mrf.mxu0
        %v6792 = vadd.f32 0.0, %v6791
        %v6793 = vpop.f32.mrf.mxu0
        %v6794 = vadd.f32 0.0, %v6793
        %6795 = vmatmul.bf16.gmra.mxu0 %v6684
        %v6796 = vpop.f32.mrf.mxu0
        %v6797 = vadd.f32 0.0, %v6796
        %v6798 = vpop.f32.mrf.mxu0
        %v6799 = vadd.f32 0.0, %v6798
        %6800 = vmatmul.bf16.gmra.mxu0 %v6685
        %v6801 = vpop.f32.mrf.mxu0
        %v6802 = vpop.f32.mrf.mxu0
        %6803 = vmatmul.bf16.gmra.mxu0 %v6686
        %v6804 = vpop.f32.mrf.mxu0
        %v6805 = vadd.f32 0.0, %v6804
        %v6806 = vpop.f32.mrf.mxu0
        %v6807 = vadd.f32 0.0, %v6806
        %6808 = vmatmul.bf16.gmra.mxu0 %v6687
        %v6809 = vpop.f32.mrf.mxu0
        %v6810 = vadd.f32 0.0, %v6809
        %v6811 = vpop.f32.mrf.mxu0
        %v6812 = vadd.f32 0.0, %v6811
        %6813 = vmatmul.bf16.gmra.mxu0 %v6688
        %v6814 = vpop.f32.mrf.mxu0
        %v6815 = vadd.f32 0.0, %v6814
        %v6816 = vpop.f32.mrf.mxu0
        %v6817 = vadd.f32 0.0, %v6816
        %6818 = vmatmul.bf16.gmra.mxu0 %v6689
        %v6819 = vpop.f32.mrf.mxu0
        %v6820 = vpop.f32.mrf.mxu0
        %6821 = vmatmul.bf16.gmra.mxu0 %v6690
        %v6822 = vpop.f32.mrf.mxu0
        %v6823 = vadd.f32 0.0, %v6822
        %v6824 = vpop.f32.mrf.mxu0
        %v6825 = vadd.f32 0.0, %v6824
        %6826 = vmatmul.bf16.gmra.mxu0 %v6691
        %v6827 = vpop.f32.mrf.mxu0
        %v6828 = vadd.f32 0.0, %v6827
        %v6829 = vpop.f32.mrf.mxu0
        %v6830 = vadd.f32 0.0, %v6829
        %6831 = vmatmul.bf16.gmra.mxu0 %v6692
        %v6832 = vpop.f32.mrf.mxu0
        %v6833 = vadd.f32 0.0, %v6832
        %v6834 = vpop.f32.mrf.mxu0
        %v6835 = vadd.f32 0.0, %v6834
        %6836 = vmatmul.bf16.gmra.mxu0 %v6693
        %v6837 = vpop.f32.mrf.mxu0
        %v6838 = vpop.f32.mrf.mxu0
        %6839 = vdwg.mxu0
        %v6840 = vadd.f32 %v6654, %v6769
        %v6841 = vadd.f32 %v6655, %v6771
        %v6842 = vadd.f32 %v6656, %v6774
        %v6843 = vadd.f32 %v6657, %v6776
        %v6844 = vadd.f32 %v6658, %v6779
        %v6845 = vadd.f32 %v6659, %v6781
        %v6846 = vadd.f32 %v6660, %v6787
        %v6847 = vadd.f32 %v6661, %v6789
        %v6848 = vadd.f32 %v6662, %v6792
        %v6849 = vadd.f32 %v6663, %v6794
        %v6850 = vadd.f32 %v6664, %v6797
        %v6851 = vadd.f32 %v6665, %v6799
        %v6852 = vadd.f32 %v6666, %v6805
        %v6853 = vadd.f32 %v6667, %v6807
        %v6854 = vadd.f32 %v6668, %v6810
        %v6855 = vadd.f32 %v6669, %v6812
        %v6856 = vadd.f32 %v6670, %v6815
        %v6857 = vadd.f32 %v6671, %v6817
        %v6858 = vadd.f32 %v6672, %v6823
        %v6859 = vadd.f32 %v6673, %v6825
        %v6860 = vadd.f32 %v6674, %v6828
        %v6861 = vadd.f32 %v6675, %v6830
        %v6862 = vadd.f32 %v6676, %v6833
        %v6863 = vadd.f32 %v6677, %v6835
        %v6864 = vpack.c.bf16 %v5052, %v5053
        %v6865 = vpack.c.bf16 %v5050, %v5051
        %v6866 = vpack.c.bf16 %v5048, %v5049
        %v6867 = vpack.c.bf16 %v5046, %v5047
        %v6868 = vpack.c.bf16 %v5044, %v5045
        %v6869 = vpack.c.bf16 %v5042, %v5043
        %v6870 = vpack.c.bf16 %v5040, %v5041
        %v6871 = vpack.c.bf16 %v5038, %v5039
        %v6872 = vpack.c.bf16 %v5036, %v5037
        %v6873 = vpack.c.bf16 %v5034, %v5035
        %v6874 = vpack.c.bf16 %v5032, %v5033
        %v6875 = vpack.c.bf16 %v5030, %v5031
        %v6876 = vpack.c.bf16 %v5028, %v5029
        %v6877 = vpack.c.bf16 %v5026, %v5027
        %v6878 = vpack.c.bf16 %v5024, %v5025
        %v6879 = vpack.c.bf16 %v5054, %v5055
        %s6880 = scalar_lea.vmem [#allocation9], 640
        %v6881 = vld [vmem:[%s6880] sm:$0xf]
        %v6882 = vld [vmem:[%s6880 + $0x4] sm:$0xf]
        %v6883 = vld [vmem:[%s6880 + $0x8] sm:$0xf]
        %v6884 = vld [vmem:[%s6880 + $0xc] sm:$0xf]
        %v6885 = vld [vmem:[%s6880 + $0x10] sm:$0xf]
        %v6886 = vld [vmem:[%s6880 + $0x14] sm:$0xf]
        %v6887 = vld [vmem:[%s6880 + $0x18] sm:$0xf]
        %v6888 = vld [vmem:[%s6880 + $0x1c] sm:$0xf]
        %v6889 = vld [vmem:[%s6880 + $0x20] sm:$0xf]
        %v6890 = vld [vmem:[%s6880 + $0x24] sm:$0xf]
        %v6891 = vld [vmem:[%s6880 + $0x28] sm:$0xf]
        %v6892 = vld [vmem:[%s6880 + $0x2c] sm:$0xf]
        %v6893 = vld [vmem:[%s6880 + $0x30] sm:$0xf]
        %v6894 = vld [vmem:[%s6880 + $0x34] sm:$0xf]
        %v6895 = vld [vmem:[%s6880 + $0x38] sm:$0xf]
        %v6896 = vld [vmem:[%s6880 + $0x3c] sm:$0xf]
        %v6913 = vunpack.c.l.b16 %v6881
        %v6914 = vunpack.c.l.b16 %v6882
        %v6915 = vunpack.c.l.b16 %v6883
        %v6916 = vunpack.c.l.b16 %v6884
        %v6917 = vunpack.c.l.b16 %v6885
        %v6918 = vunpack.c.l.b16 %v6886
        %v6919 = vunpack.c.l.b16 %v6887
        %v6920 = vunpack.c.l.b16 %v6888
        %v6921 = vunpack.c.l.b16 %v6889
        %v6922 = vunpack.c.l.b16 %v6890
        %v6923 = vunpack.c.l.b16 %v6891
        %v6924 = vunpack.c.l.b16 %v6892
        %v6925 = vunpack.c.l.b16 %v6893
        %v6926 = vunpack.c.l.b16 %v6894
        %v6927 = vunpack.c.l.b16 %v6895
        %v6928 = vunpack.c.l.b16 %v6896
        %v6929 = vpack.c.b16 %v6914, %v6913
        %v6930 = vpack.c.b16 %v6916, %v6915
        %v6931 = vpack.c.b16 %v6918, %v6917
        %v6932 = vpack.c.b16 %v6920, %v6919
        %v6933 = vpack.c.b16 %v6922, %v6921
        %v6934 = vpack.c.b16 %v6924, %v6923
        %v6935 = vpack.c.b16 %v6926, %v6925
        %v6936 = vpack.c.b16 %v6928, %v6927
        %6945 = vmatpush.bf16.msra.mxu0 %v6936
        %6946 = vmatpush.bf16.msra.mxu0 %v6935
        %6947 = vmatpush.bf16.msra.mxu0 %v6934
        %6948 = vmatpush.bf16.msra.mxu0 %v6933
        %6949 = vmatpush.bf16.msra.mxu0 %v6932
        %6950 = vmatpush.bf16.msra.mxu0 %v6931
        %6951 = vmatpush.bf16.msra.mxu0 %v6930
        %6952 = vmatpush.bf16.msra.mxu0 %v6929
        %6953 = vmatmul.bf16.gmra.mxu0 %v6864
        %v6954 = vpop.f32.mrf.mxu0
        %v6955 = vadd.f32 0.0, %v6954
        %v6956 = vpop.f32.mrf.mxu0
        %v6957 = vadd.f32 0.0, %v6956
        %6958 = vmatmul.bf16.gmra.mxu0 %v6865
        %v6959 = vpop.f32.mrf.mxu0
        %v6960 = vadd.f32 0.0, %v6959
        %v6961 = vpop.f32.mrf.mxu0
        %v6962 = vadd.f32 0.0, %v6961
        %6963 = vmatmul.bf16.gmra.mxu0 %v6866
        %v6964 = vpop.f32.mrf.mxu0
        %v6965 = vadd.f32 0.0, %v6964
        %v6966 = vpop.f32.mrf.mxu0
        %v6967 = vadd.f32 0.0, %v6966
        %6968 = vmatmul.bf16.gmra.mxu0 %v6867
        %v6969 = vpop.f32.mrf.mxu0
        %v6970 = vpop.f32.mrf.mxu0
        %6971 = vmatmul.bf16.gmra.mxu0 %v6868
        %v6972 = vpop.f32.mrf.mxu0
        %v6973 = vadd.f32 0.0, %v6972
        %v6974 = vpop.f32.mrf.mxu0
        %v6975 = vadd.f32 0.0, %v6974
        %6976 = vmatmul.bf16.gmra.mxu0 %v6869
        %v6977 = vpop.f32.mrf.mxu0
        %v6978 = vadd.f32 0.0, %v6977
        %v6979 = vpop.f32.mrf.mxu0
        %v6980 = vadd.f32 0.0, %v6979
        %6981 = vmatmul.bf16.gmra.mxu0 %v6870
        %v6982 = vpop.f32.mrf.mxu0
        %v6983 = vadd.f32 0.0, %v6982
        %v6984 = vpop.f32.mrf.mxu0
        %v6985 = vadd.f32 0.0, %v6984
        %6986 = vmatmul.bf16.gmra.mxu0 %v6871
        %v6987 = vpop.f32.mrf.mxu0
        %v6988 = vpop.f32.mrf.mxu0
        %6989 = vmatmul.bf16.gmra.mxu0 %v6872
        %v6990 = vpop.f32.mrf.mxu0
        %v6991 = vadd.f32 0.0, %v6990
        %v6992 = vpop.f32.mrf.mxu0
        %v6993 = vadd.f32 0.0, %v6992
        %6994 = vmatmul.bf16.gmra.mxu0 %v6873
        %v6995 = vpop.f32.mrf.mxu0
        %v6996 = vadd.f32 0.0, %v6995
        %v6997 = vpop.f32.mrf.mxu0
        %v6998 = vadd.f32 0.0, %v6997
        %6999 = vmatmul.bf16.gmra.mxu0 %v6874
        %v7000 = vpop.f32.mrf.mxu0
        %v7001 = vadd.f32 0.0, %v7000
        %v7002 = vpop.f32.mrf.mxu0
        %v7003 = vadd.f32 0.0, %v7002
        %7004 = vmatmul.bf16.gmra.mxu0 %v6875
        %v7005 = vpop.f32.mrf.mxu0
        %v7006 = vpop.f32.mrf.mxu0
        %7007 = vmatmul.bf16.gmra.mxu0 %v6876
        %v7008 = vpop.f32.mrf.mxu0
        %v7009 = vadd.f32 0.0, %v7008
        %v7010 = vpop.f32.mrf.mxu0
        %v7011 = vadd.f32 0.0, %v7010
        %7012 = vmatmul.bf16.gmra.mxu0 %v6877
        %v7013 = vpop.f32.mrf.mxu0
        %v7014 = vadd.f32 0.0, %v7013
        %v7015 = vpop.f32.mrf.mxu0
        %v7016 = vadd.f32 0.0, %v7015
        %7017 = vmatmul.bf16.gmra.mxu0 %v6878
        %v7018 = vpop.f32.mrf.mxu0
        %v7019 = vadd.f32 0.0, %v7018
        %v7020 = vpop.f32.mrf.mxu0
        %v7021 = vadd.f32 0.0, %v7020
        %7022 = vmatmul.bf16.gmra.mxu0 %v6879
        %v7023 = vpop.f32.mrf.mxu0
        %v7024 = vpop.f32.mrf.mxu0
        %7025 = vdwg.mxu0
        %v7026 = vadd.f32 %v6840, %v6955
        %v7027 = vadd.f32 %v6841, %v6957
        %v7028 = vadd.f32 %v6842, %v6960
        %v7029 = vadd.f32 %v6843, %v6962
        %v7030 = vadd.f32 %v6844, %v6965
        %v7031 = vadd.f32 %v6845, %v6967
        %v7032 = vadd.f32 %v6846, %v6973
        %v7033 = vadd.f32 %v6847, %v6975
        %v7034 = vadd.f32 %v6848, %v6978
        %v7035 = vadd.f32 %v6849, %v6980
        %v7036 = vadd.f32 %v6850, %v6983
        %v7037 = vadd.f32 %v6851, %v6985
        %v7038 = vadd.f32 %v6852, %v6991
        %v7039 = vadd.f32 %v6853, %v6993
        %v7040 = vadd.f32 %v6854, %v6996
        %v7041 = vadd.f32 %v6855, %v6998
        %v7042 = vadd.f32 %v6856, %v7001
        %v7043 = vadd.f32 %v6857, %v7003
        %v7044 = vadd.f32 %v6858, %v7009
        %v7045 = vadd.f32 %v6859, %v7011
        %v7046 = vadd.f32 %v6860, %v7014
        %v7047 = vadd.f32 %v6861, %v7016
        %v7048 = vadd.f32 %v6862, %v7019
        %v7049 = vadd.f32 %v6863, %v7021
        %v7050 = vpack.c.bf16 %v5302, %v5303
        %v7051 = vpack.c.bf16 %v5300, %v5301
        %v7052 = vpack.c.bf16 %v5298, %v5299
        %v7053 = vpack.c.bf16 %v5296, %v5297
        %v7054 = vpack.c.bf16 %v5294, %v5295
        %v7055 = vpack.c.bf16 %v5292, %v5293
        %v7056 = vpack.c.bf16 %v5290, %v5291
        %v7057 = vpack.c.bf16 %v5288, %v5289
        %v7058 = vpack.c.bf16 %v5286, %v5287
        %v7059 = vpack.c.bf16 %v5284, %v5285
        %v7060 = vpack.c.bf16 %v5282, %v5283
        %v7061 = vpack.c.bf16 %v5280, %v5281
        %v7062 = vpack.c.bf16 %v5278, %v5279
        %v7063 = vpack.c.bf16 %v5276, %v5277
        %v7064 = vpack.c.bf16 %v5274, %v5275
        %v7065 = vpack.c.bf16 %v5304, %v5305
        %s7066 = scalar_lea.vmem [#allocation9], 704
        %v7067 = vld [vmem:[%s7066] sm:$0xf]
        %v7068 = vld [vmem:[%s7066 + $0x4] sm:$0xf]
        %v7069 = vld [vmem:[%s7066 + $0x8] sm:$0xf]
        %v7070 = vld [vmem:[%s7066 + $0xc] sm:$0xf]
        %v7071 = vld [vmem:[%s7066 + $0x10] sm:$0xf]
        %v7072 = vld [vmem:[%s7066 + $0x14] sm:$0xf]
        %v7073 = vld [vmem:[%s7066 + $0x18] sm:$0xf]
        %v7074 = vld [vmem:[%s7066 + $0x1c] sm:$0xf]
        %v7075 = vld [vmem:[%s7066 + $0x20] sm:$0xf]
        %v7076 = vld [vmem:[%s7066 + $0x24] sm:$0xf]
        %v7077 = vld [vmem:[%s7066 + $0x28] sm:$0xf]
        %v7078 = vld [vmem:[%s7066 + $0x2c] sm:$0xf]
        %v7079 = vld [vmem:[%s7066 + $0x30] sm:$0xf]
        %v7080 = vld [vmem:[%s7066 + $0x34] sm:$0xf]
        %v7081 = vld [vmem:[%s7066 + $0x38] sm:$0xf]
        %v7082 = vld [vmem:[%s7066 + $0x3c] sm:$0xf]
        %v7099 = vunpack.c.l.b16 %v7067
        %v7100 = vunpack.c.l.b16 %v7068
        %v7101 = vunpack.c.l.b16 %v7069
        %v7102 = vunpack.c.l.b16 %v7070
        %v7103 = vunpack.c.l.b16 %v7071
        %v7104 = vunpack.c.l.b16 %v7072
        %v7105 = vunpack.c.l.b16 %v7073
        %v7106 = vunpack.c.l.b16 %v7074
        %v7107 = vunpack.c.l.b16 %v7075
        %v7108 = vunpack.c.l.b16 %v7076
        %v7109 = vunpack.c.l.b16 %v7077
        %v7110 = vunpack.c.l.b16 %v7078
        %v7111 = vunpack.c.l.b16 %v7079
        %v7112 = vunpack.c.l.b16 %v7080
        %v7113 = vunpack.c.l.b16 %v7081
        %v7114 = vunpack.c.l.b16 %v7082
        %v7115 = vpack.c.b16 %v7100, %v7099
        %v7116 = vpack.c.b16 %v7102, %v7101
        %v7117 = vpack.c.b16 %v7104, %v7103
        %v7118 = vpack.c.b16 %v7106, %v7105
        %v7119 = vpack.c.b16 %v7108, %v7107
        %v7120 = vpack.c.b16 %v7110, %v7109
        %v7121 = vpack.c.b16 %v7112, %v7111
        %v7122 = vpack.c.b16 %v7114, %v7113
        %7131 = vmatpush.bf16.msra.mxu0 %v7122
        %7132 = vmatpush.bf16.msra.mxu0 %v7121
        %7133 = vmatpush.bf16.msra.mxu0 %v7120
        %7134 = vmatpush.bf16.msra.mxu0 %v7119
        %7135 = vmatpush.bf16.msra.mxu0 %v7118
        %7136 = vmatpush.bf16.msra.mxu0 %v7117
        %7137 = vmatpush.bf16.msra.mxu0 %v7116
        %7138 = vmatpush.bf16.msra.mxu0 %v7115
        %7139 = vmatmul.bf16.gmra.mxu0 %v7050
        %v7140 = vpop.f32.mrf.mxu0
        %v7141 = vadd.f32 0.0, %v7140
        %v7142 = vpop.f32.mrf.mxu0
        %v7143 = vadd.f32 0.0, %v7142
        %7144 = vmatmul.bf16.gmra.mxu0 %v7051
        %v7145 = vpop.f32.mrf.mxu0
        %v7146 = vadd.f32 0.0, %v7145
        %v7147 = vpop.f32.mrf.mxu0
        %v7148 = vadd.f32 0.0, %v7147
        %7149 = vmatmul.bf16.gmra.mxu0 %v7052
        %v7150 = vpop.f32.mrf.mxu0
        %v7151 = vadd.f32 0.0, %v7150
        %v7152 = vpop.f32.mrf.mxu0
        %v7153 = vadd.f32 0.0, %v7152
        %7154 = vmatmul.bf16.gmra.mxu0 %v7053
        %v7155 = vpop.f32.mrf.mxu0
        %v7156 = vpop.f32.mrf.mxu0
        %7157 = vmatmul.bf16.gmra.mxu0 %v7054
        %v7158 = vpop.f32.mrf.mxu0
        %v7159 = vadd.f32 0.0, %v7158
        %v7160 = vpop.f32.mrf.mxu0
        %v7161 = vadd.f32 0.0, %v7160
        %7162 = vmatmul.bf16.gmra.mxu0 %v7055
        %v7163 = vpop.f32.mrf.mxu0
        %v7164 = vadd.f32 0.0, %v7163
        %v7165 = vpop.f32.mrf.mxu0
        %v7166 = vadd.f32 0.0, %v7165
        %7167 = vmatmul.bf16.gmra.mxu0 %v7056
        %v7168 = vpop.f32.mrf.mxu0
        %v7169 = vadd.f32 0.0, %v7168
        %v7170 = vpop.f32.mrf.mxu0
        %v7171 = vadd.f32 0.0, %v7170
        %7172 = vmatmul.bf16.gmra.mxu0 %v7057
        %v7173 = vpop.f32.mrf.mxu0
        %v7174 = vpop.f32.mrf.mxu0
        %7175 = vmatmul.bf16.gmra.mxu0 %v7058
        %v7176 = vpop.f32.mrf.mxu0
        %v7177 = vadd.f32 0.0, %v7176
        %v7178 = vpop.f32.mrf.mxu0
        %v7179 = vadd.f32 0.0, %v7178
        %7180 = vmatmul.bf16.gmra.mxu0 %v7059
        %v7181 = vpop.f32.mrf.mxu0
        %v7182 = vadd.f32 0.0, %v7181
        %v7183 = vpop.f32.mrf.mxu0
        %v7184 = vadd.f32 0.0, %v7183
        %7185 = vmatmul.bf16.gmra.mxu0 %v7060
        %v7186 = vpop.f32.mrf.mxu0
        %v7187 = vadd.f32 0.0, %v7186
        %v7188 = vpop.f32.mrf.mxu0
        %v7189 = vadd.f32 0.0, %v7188
        %7190 = vmatmul.bf16.gmra.mxu0 %v7061
        %v7191 = vpop.f32.mrf.mxu0
        %v7192 = vpop.f32.mrf.mxu0
        %7193 = vmatmul.bf16.gmra.mxu0 %v7062
        %v7194 = vpop.f32.mrf.mxu0
        %v7195 = vadd.f32 0.0, %v7194
        %v7196 = vpop.f32.mrf.mxu0
        %v7197 = vadd.f32 0.0, %v7196
        %7198 = vmatmul.bf16.gmra.mxu0 %v7063
        %v7199 = vpop.f32.mrf.mxu0
        %v7200 = vadd.f32 0.0, %v7199
        %v7201 = vpop.f32.mrf.mxu0
        %v7202 = vadd.f32 0.0, %v7201
        %7203 = vmatmul.bf16.gmra.mxu0 %v7064
        %v7204 = vpop.f32.mrf.mxu0
        %v7205 = vadd.f32 0.0, %v7204
        %v7206 = vpop.f32.mrf.mxu0
        %v7207 = vadd.f32 0.0, %v7206
        %7208 = vmatmul.bf16.gmra.mxu0 %v7065
        %v7209 = vpop.f32.mrf.mxu0
        %v7210 = vpop.f32.mrf.mxu0
        %7211 = vdwg.mxu0
        %v7212 = vadd.f32 %v7026, %v7141
        %v7213 = vadd.f32 %v7027, %v7143
        %v7214 = vadd.f32 %v7028, %v7146
        %v7215 = vadd.f32 %v7029, %v7148
        %v7216 = vadd.f32 %v7030, %v7151
        %v7217 = vadd.f32 %v7031, %v7153
        %v7218 = vadd.f32 %v7032, %v7159
        %v7219 = vadd.f32 %v7033, %v7161
        %v7220 = vadd.f32 %v7034, %v7164
        %v7221 = vadd.f32 %v7035, %v7166
        %v7222 = vadd.f32 %v7036, %v7169
        %v7223 = vadd.f32 %v7037, %v7171
        %v7224 = vadd.f32 %v7038, %v7177
        %v7225 = vadd.f32 %v7039, %v7179
        %v7226 = vadd.f32 %v7040, %v7182
        %v7227 = vadd.f32 %v7041, %v7184
        %v7228 = vadd.f32 %v7042, %v7187
        %v7229 = vadd.f32 %v7043, %v7189
        %v7230 = vadd.f32 %v7044, %v7195
        %v7231 = vadd.f32 %v7045, %v7197
        %v7232 = vadd.f32 %v7046, %v7200
        %v7233 = vadd.f32 %v7047, %v7202
        %v7234 = vadd.f32 %v7048, %v7205
        %v7235 = vadd.f32 %v7049, %v7207
        %v7236 = vld [vmem:[#allocation10] sm:$0x1]
        %v7238 = vperm.slane %v7236, 0
        %v7240 = vadd.f32 %v7212, %v7238
        %v7241 = vadd.f32 %v7213, %v7238
        %v7242 = vadd.f32 %v7214, %v7238
        %v7243 = vadd.f32 %v7215, %v7238
        %v7244 = vadd.f32 %v7216, %v7238
        %v7245 = vadd.f32 %v7217, %v7238
        %v7246 = vadd.f32 %v7218, %v7238
        %v7247 = vadd.f32 %v7219, %v7238
        %v7248 = vadd.f32 %v7220, %v7238
        %v7249 = vadd.f32 %v7221, %v7238
        %v7250 = vadd.f32 %v7222, %v7238
        %v7251 = vadd.f32 %v7223, %v7238
        %v7252 = vadd.f32 %v7224, %v7238
        %v7253 = vadd.f32 %v7225, %v7238
        %v7254 = vadd.f32 %v7226, %v7238
        %v7255 = vadd.f32 %v7227, %v7238
        %v7256 = vadd.f32 %v7228, %v7238
        %v7257 = vadd.f32 %v7229, %v7238
        %v7258 = vadd.f32 %v7230, %v7238
        %v7259 = vadd.f32 %v7231, %v7238
        %v7260 = vadd.f32 %v7232, %v7238
        %v7261 = vadd.f32 %v7233, %v7238
        %v7262 = vadd.f32 %v7234, %v7238
        %v7263 = vadd.f32 %v7235, %v7238
        %v7264 = vmax.f32 %v7240, 0.0
        %v7265 = vmax.f32 %v7241, 0.0
        %v7266 = vmax.f32 %v7242, 0.0
        %v7267 = vmax.f32 %v7243, 0.0
        %v7268 = vmax.f32 %v7244, 0.0
        %v7269 = vmax.f32 %v7245, 0.0
        %v7270 = vmax.f32 %v7246, 0.0
        %v7271 = vmax.f32 %v7247, 0.0
        %v7272 = vmax.f32 %v7248, 0.0
        %v7273 = vmax.f32 %v7249, 0.0
        %v7274 = vmax.f32 %v7250, 0.0
        %v7275 = vmax.f32 %v7251, 0.0
        %v7276 = vmax.f32 %v7252, 0.0
        %v7277 = vmax.f32 %v7253, 0.0
        %v7278 = vmax.f32 %v7254, 0.0
        %v7279 = vmax.f32 %v7255, 0.0
        %v7280 = vmax.f32 %v7256, 0.0
        %v7281 = vmax.f32 %v7257, 0.0
        %v7282 = vmax.f32 %v7258, 0.0
        %v7283 = vmax.f32 %v7259, 0.0
        %v7284 = vmax.f32 %v7260, 0.0
        %v7285 = vmax.f32 %v7261, 0.0
        %v7286 = vmax.f32 %v7262, 0.0
        %v7287 = vmax.f32 %v7263, 0.0
        %v7288 = vrot.slane %v7264, 1
        %v7289 = vrot.slane %v7265, 1
        %v7290 = vrot.slane %v7266, 1
        %v7291 = vrot.slane %v7267, 1
        %v7292 = vrot.slane %v7268, 1
        %v7293 = vrot.slane %v7269, 1
        %v7294 = vrot.slane %v7270, 1
        %v7295 = vrot.slane %v7271, 1
        %v7296 = vrot.slane %v7272, 1
        %v7297 = vrot.slane %v7273, 1
        %v7298 = vrot.slane %v7274, 1
        %v7299 = vrot.slane %v7275, 1
        %v7300 = vrot.slane %v7276, 1
        %v7301 = vrot.slane %v7277, 1
        %v7302 = vrot.slane %v7278, 1
        %v7303 = vrot.slane %v7279, 1
        %v7304 = vrot.slane %v7280, 1
        %v7305 = vrot.slane %v7281, 1
        %v7306 = vrot.slane %v7282, 1
        %v7307 = vrot.slane %v7283, 1
        %v7308 = vrot.slane %v7284, 1
        %v7309 = vrot.slane %v7285, 1
        %v7310 = vrot.slane %v7286, 1
        %v7311 = vrot.slane %v7287, 1
        %v7312 = vsel %vm474, %v7310, %v7311
        %v7313 = vsel %vm474, %v7309, %v7310
        %v7314 = vsel %vm474, %v7308, %v7309
        %v7315 = vsel %vm474, %v7307, %v7308
        %v7316 = vsel %vm474, %v7306, %v7307
        %v7317 = vsel %vm474, %v7304, %v7305
        %v7318 = vsel %vm474, %v7303, %v7304
        %v7319 = vsel %vm474, %v7302, %v7303
        %v7320 = vsel %vm474, %v7301, %v7302
        %v7321 = vsel %vm474, %v7300, %v7301
        %v7322 = vsel %vm474, %v7298, %v7299
        %v7323 = vsel %vm474, %v7297, %v7298
        %v7324 = vsel %vm474, %v7296, %v7297
        %v7325 = vsel %vm474, %v7295, %v7296
        %v7326 = vsel %vm474, %v7294, %v7295
        %v7327 = vsel %vm474, %v7292, %v7293
        %v7328 = vsel %vm474, %v7291, %v7292
        %v7329 = vsel %vm474, %v7290, %v7291
        %v7330 = vsel %vm474, %v7289, %v7290
        %v7331 = vsel %vm474, %v7288, %v7289
        %v7332 = vmax.f32 %v7264, %v7331
        %v7333 = vmax.f32 %v7265, %v7330
        %v7334 = vmax.f32 %v7266, %v7329
        %v7335 = vmax.f32 %v7267, %v7328
        %v7336 = vmax.f32 %v7268, %v7327
        %v7337 = vmax.f32 %v7270, %v7326
        %v7338 = vmax.f32 %v7271, %v7325
        %v7339 = vmax.f32 %v7272, %v7324
        %v7340 = vmax.f32 %v7273, %v7323
        %v7341 = vmax.f32 %v7274, %v7322
        %v7342 = vmax.f32 %v7276, %v7321
        %v7343 = vmax.f32 %v7277, %v7320
        %v7344 = vmax.f32 %v7278, %v7319
        %v7345 = vmax.f32 %v7279, %v7318
        %v7346 = vmax.f32 %v7280, %v7317
        %v7347 = vmax.f32 %v7282, %v7316
        %v7348 = vmax.f32 %v7283, %v7315
        %v7349 = vmax.f32 %v7284, %v7314
        %v7350 = vmax.f32 %v7285, %v7313
        %v7351 = vmax.f32 %v7286, %v7312
        %v7352 = vrot.slane %v7264, 2
        %v7353 = vrot.slane %v7265, 2
        %v7354 = vrot.slane %v7266, 2
        %v7355 = vrot.slane %v7267, 2
        %v7356 = vrot.slane %v7268, 2
        %v7357 = vrot.slane %v7269, 2
        %v7358 = vrot.slane %v7270, 2
        %v7359 = vrot.slane %v7271, 2
        %v7360 = vrot.slane %v7272, 2
        %v7361 = vrot.slane %v7273, 2
        %v7362 = vrot.slane %v7274, 2
        %v7363 = vrot.slane %v7275, 2
        %v7364 = vrot.slane %v7276, 2
        %v7365 = vrot.slane %v7277, 2
        %v7366 = vrot.slane %v7278, 2
        %v7367 = vrot.slane %v7279, 2
        %v7368 = vrot.slane %v7280, 2
        %v7369 = vrot.slane %v7281, 2
        %v7370 = vrot.slane %v7282, 2
        %v7371 = vrot.slane %v7283, 2
        %v7372 = vrot.slane %v7284, 2
        %v7373 = vrot.slane %v7285, 2
        %v7374 = vrot.slane %v7286, 2
        %v7375 = vrot.slane %v7287, 2
        %v7376 = vsel %vm846, %v7374, %v7375
        %v7377 = vsel %vm846, %v7373, %v7374
        %v7378 = vsel %vm846, %v7372, %v7373
        %v7379 = vsel %vm846, %v7371, %v7372
        %v7380 = vsel %vm846, %v7370, %v7371
        %v7381 = vsel %vm846, %v7368, %v7369
        %v7382 = vsel %vm846, %v7367, %v7368
        %v7383 = vsel %vm846, %v7366, %v7367
        %v7384 = vsel %vm846, %v7365, %v7366
        %v7385 = vsel %vm846, %v7364, %v7365
        %v7386 = vsel %vm846, %v7362, %v7363
        %v7387 = vsel %vm846, %v7361, %v7362
        %v7388 = vsel %vm846, %v7360, %v7361
        %v7389 = vsel %vm846, %v7359, %v7360
        %v7390 = vsel %vm846, %v7358, %v7359
        %v7391 = vsel %vm846, %v7356, %v7357
        %v7392 = vsel %vm846, %v7355, %v7356
        %v7393 = vsel %vm846, %v7354, %v7355
        %v7394 = vsel %vm846, %v7353, %v7354
        %v7395 = vsel %vm846, %v7352, %v7353
        %v7396 = vmax.f32 %v7332, %v7395
        %v7397 = vmax.f32 %v7333, %v7394
        %v7398 = vmax.f32 %v7334, %v7393
        %v7399 = vmax.f32 %v7335, %v7392
        %v7400 = vmax.f32 %v7336, %v7391
        %v7401 = vmax.f32 %v7337, %v7390
        %v7402 = vmax.f32 %v7338, %v7389
        %v7403 = vmax.f32 %v7339, %v7388
        %v7404 = vmax.f32 %v7340, %v7387
        %v7405 = vmax.f32 %v7341, %v7386
        %v7406 = vmax.f32 %v7342, %v7385
        %v7407 = vmax.f32 %v7343, %v7384
        %v7408 = vmax.f32 %v7344, %v7383
        %v7409 = vmax.f32 %v7345, %v7382
        %v7410 = vmax.f32 %v7346, %v7381
        %v7411 = vmax.f32 %v7347, %v7380
        %v7412 = vmax.f32 %v7348, %v7379
        %v7413 = vmax.f32 %v7349, %v7378
        %v7414 = vmax.f32 %v7350, %v7377
        %v7415 = vmax.f32 %v7351, %v7376
        %v7416 = vadd.s32 %v473, 8
        %v7417 = vadd.s32 %v473, 16
        %v7418 = vadd.s32 %v473, 24
        %v7419 = vadd.s32 %v473, 32
        %v7420 = vadd.s32 %v473, 64
        %v7421 = vadd.s32 %v473, 72
        %v7422 = vadd.s32 %v473, 80
        %v7423 = vadd.s32 %v473, 88
        %v7424 = vadd.s32 %v473, 96
        %v7425 = vadd.s32 %v473, 128
        %v7426 = vadd.s32 %v473, 136
        %v7427 = vadd.s32 %v473, 144
        %v7428 = vadd.s32 %v473, 152
        %v7429 = vadd.s32 %v473, 160
        %v7430 = vadd.s32 %v473, 192
        %v7431 = vadd.s32 %v473, 200
        %v7432 = vadd.s32 %v473, 208
        %v7433 = vadd.s32 %v473, 216
        %v7434 = vadd.s32 %v473, 224
        %vm7435 = vcmp.lt.s32.totalorder %v473, 0
        %v7436 = vsub.s32 0, %v473
        %v7437 = vsel %vm7435, %v7436, %v473
        %v7438 = vshrl.u32 %v7437, 6
        %v7439 = vand.u32 %v7437, 63
        %v7440 = vsub.s32 0, %v7439
        %v7441 = vsel %vm7435, %v7440, %v7439
        %vm7442 = vcmp.lt.s32.totalorder %v7416, 0
        %v7443 = vsub.s32 0, %v7416
        %v7444 = vsel %vm7442, %v7443, %v7416
        %v7445 = vshrl.u32 %v7444, 6
        %v7446 = vand.u32 %v7444, 63
        %v7447 = vsub.s32 0, %v7446
        %v7448 = vsel %vm7442, %v7447, %v7446
        %vm7449 = vcmp.lt.s32.totalorder %v7417, 0
        %v7450 = vsub.s32 0, %v7417
        %v7451 = vsel %vm7449, %v7450, %v7417
        %v7452 = vshrl.u32 %v7451, 6
        %v7453 = vand.u32 %v7451, 63
        %v7454 = vsub.s32 0, %v7453
        %v7455 = vsel %vm7449, %v7454, %v7453
        %vm7456 = vcmp.lt.s32.totalorder %v7418, 0
        %v7457 = vsub.s32 0, %v7418
        %v7458 = vsel %vm7456, %v7457, %v7418
        %v7459 = vshrl.u32 %v7458, 6
        %v7460 = vand.u32 %v7458, 63
        %v7461 = vsub.s32 0, %v7460
        %v7462 = vsel %vm7456, %v7461, %v7460
        %vm7463 = vcmp.lt.s32.totalorder %v7419, 0
        %v7464 = vsub.s32 0, %v7419
        %v7465 = vsel %vm7463, %v7464, %v7419
        %v7466 = vshrl.u32 %v7465, 6
        %v7467 = vand.u32 %v7465, 63
        %v7468 = vsub.s32 0, %v7467
        %v7469 = vsel %vm7463, %v7468, %v7467
        %vm7470 = vcmp.lt.s32.totalorder %v7420, 0
        %v7471 = vsub.s32 0, %v7420
        %v7472 = vsel %vm7470, %v7471, %v7420
        %v7473 = vshrl.u32 %v7472, 6
        %v7474 = vand.u32 %v7472, 63
        %v7475 = vsub.s32 0, %v7474
        %v7476 = vsel %vm7470, %v7475, %v7474
        %vm7477 = vcmp.lt.s32.totalorder %v7421, 0
        %v7478 = vsub.s32 0, %v7421
        %v7479 = vsel %vm7477, %v7478, %v7421
        %v7480 = vshrl.u32 %v7479, 6
        %v7481 = vand.u32 %v7479, 63
        %v7482 = vsub.s32 0, %v7481
        %v7483 = vsel %vm7477, %v7482, %v7481
        %vm7484 = vcmp.lt.s32.totalorder %v7422, 0
        %v7485 = vsub.s32 0, %v7422
        %v7486 = vsel %vm7484, %v7485, %v7422
        %v7487 = vshrl.u32 %v7486, 6
        %v7488 = vand.u32 %v7486, 63
        %v7489 = vsub.s32 0, %v7488
        %v7490 = vsel %vm7484, %v7489, %v7488
        %vm7491 = vcmp.lt.s32.totalorder %v7423, 0
        %v7492 = vsub.s32 0, %v7423
        %v7493 = vsel %vm7491, %v7492, %v7423
        %v7494 = vshrl.u32 %v7493, 6
        %v7495 = vand.u32 %v7493, 63
        %v7496 = vsub.s32 0, %v7495
        %v7497 = vsel %vm7491, %v7496, %v7495
        %vm7498 = vcmp.lt.s32.totalorder %v7424, 0
        %v7499 = vsub.s32 0, %v7424
        %v7500 = vsel %vm7498, %v7499, %v7424
        %v7501 = vshrl.u32 %v7500, 6
        %v7502 = vand.u32 %v7500, 63
        %v7503 = vsub.s32 0, %v7502
        %v7504 = vsel %vm7498, %v7503, %v7502
        %vm7505 = vcmp.lt.s32.totalorder %v7425, 0
        %v7506 = vsub.s32 0, %v7425
        %v7507 = vsel %vm7505, %v7506, %v7425
        %v7508 = vshrl.u32 %v7507, 6
        %v7509 = vand.u32 %v7507, 63
        %v7510 = vsub.s32 0, %v7509
        %v7511 = vsel %vm7505, %v7510, %v7509
        %vm7512 = vcmp.lt.s32.totalorder %v7426, 0
        %v7513 = vsub.s32 0, %v7426
        %v7514 = vsel %vm7512, %v7513, %v7426
        %v7515 = vshrl.u32 %v7514, 6
        %v7516 = vand.u32 %v7514, 63
        %v7517 = vsub.s32 0, %v7516
        %v7518 = vsel %vm7512, %v7517, %v7516
        %vm7519 = vcmp.lt.s32.totalorder %v7427, 0
        %v7520 = vsub.s32 0, %v7427
        %v7521 = vsel %vm7519, %v7520, %v7427
        %v7522 = vshrl.u32 %v7521, 6
        %v7523 = vand.u32 %v7521, 63
        %v7524 = vsub.s32 0, %v7523
        %v7525 = vsel %vm7519, %v7524, %v7523
        %vm7526 = vcmp.lt.s32.totalorder %v7428, 0
        %v7527 = vsub.s32 0, %v7428
        %v7528 = vsel %vm7526, %v7527, %v7428
        %v7529 = vshrl.u32 %v7528, 6
        %v7530 = vand.u32 %v7528, 63
        %v7531 = vsub.s32 0, %v7530
        %v7532 = vsel %vm7526, %v7531, %v7530
        %vm7533 = vcmp.lt.s32.totalorder %v7429, 0
        %v7534 = vsub.s32 0, %v7429
        %v7535 = vsel %vm7533, %v7534, %v7429
        %v7536 = vshrl.u32 %v7535, 6
        %v7537 = vand.u32 %v7535, 63
        %v7538 = vsub.s32 0, %v7537
        %v7539 = vsel %vm7533, %v7538, %v7537
        %vm7540 = vcmp.lt.s32.totalorder %v7430, 0
        %v7541 = vsub.s32 0, %v7430
        %v7542 = vsel %vm7540, %v7541, %v7430
        %v7543 = vshrl.u32 %v7542, 6
        %v7544 = vand.u32 %v7542, 63
        %v7545 = vsub.s32 0, %v7544
        %v7546 = vsel %vm7540, %v7545, %v7544
        %vm7547 = vcmp.lt.s32.totalorder %v7431, 0
        %v7548 = vsub.s32 0, %v7431
        %v7549 = vsel %vm7547, %v7548, %v7431
        %v7550 = vshrl.u32 %v7549, 6
        %v7551 = vand.u32 %v7549, 63
        %v7552 = vsub.s32 0, %v7551
        %v7553 = vsel %vm7547, %v7552, %v7551
        %vm7554 = vcmp.lt.s32.totalorder %v7432, 0
        %v7555 = vsub.s32 0, %v7432
        %v7556 = vsel %vm7554, %v7555, %v7432
        %v7557 = vshrl.u32 %v7556, 6
        %v7558 = vand.u32 %v7556, 63
        %v7559 = vsub.s32 0, %v7558
        %v7560 = vsel %vm7554, %v7559, %v7558
        %vm7561 = vcmp.lt.s32.totalorder %v7433, 0
        %v7562 = vsub.s32 0, %v7433
        %v7563 = vsel %vm7561, %v7562, %v7433
        %v7564 = vshrl.u32 %v7563, 6
        %v7565 = vand.u32 %v7563, 63
        %v7566 = vsub.s32 0, %v7565
        %v7567 = vsel %vm7561, %v7566, %v7565
        %vm7568 = vcmp.lt.s32.totalorder %v7434, 0
        %v7569 = vsub.s32 0, %v7434
        %v7570 = vsel %vm7568, %v7569, %v7434
        %v7571 = vshrl.u32 %v7570, 6
        %v7572 = vand.u32 %v7570, 63
        %v7573 = vsub.s32 0, %v7572
        %v7574 = vsel %vm7568, %v7573, %v7572
        %vm7575 = vcmp.ne.s32.totalorder %v7441, 0
        %vm7576 = vcmp.ne.s32.totalorder %v7448, 0
        %vm7577 = vcmp.ne.s32.totalorder %v7455, 0
        %vm7578 = vcmp.ne.s32.totalorder %v7462, 0
        %vm7579 = vcmp.ne.s32.totalorder %v7469, 0
        %vm7580 = vcmp.ne.s32.totalorder %v7476, 0
        %vm7581 = vcmp.ne.s32.totalorder %v7483, 0
        %vm7582 = vcmp.ne.s32.totalorder %v7490, 0
        %vm7583 = vcmp.ne.s32.totalorder %v7497, 0
        %vm7584 = vcmp.ne.s32.totalorder %v7504, 0
        %vm7585 = vcmp.ne.s32.totalorder %v7511, 0
        %vm7586 = vcmp.ne.s32.totalorder %v7518, 0
        %vm7587 = vcmp.ne.s32.totalorder %v7525, 0
        %vm7588 = vcmp.ne.s32.totalorder %v7532, 0
        %vm7589 = vcmp.ne.s32.totalorder %v7539, 0
        %vm7590 = vcmp.ne.s32.totalorder %v7546, 0
        %vm7591 = vcmp.ne.s32.totalorder %v7553, 0
        %vm7592 = vcmp.ne.s32.totalorder %v7560, 0
        %vm7593 = vcmp.ne.s32.totalorder %v7567, 0
        %vm7594 = vcmp.ne.s32.totalorder %v7574, 0
        %vm7595 = vcmp.lt.s32.totalorder %v7441, 0
        %vm7596 = vcmp.lt.s32.totalorder %v7448, 0
        %vm7597 = vcmp.lt.s32.totalorder %v7455, 0
        %vm7598 = vcmp.lt.s32.totalorder %v7462, 0
        %vm7599 = vcmp.lt.s32.totalorder %v7469, 0
        %vm7600 = vcmp.lt.s32.totalorder %v7476, 0
        %vm7601 = vcmp.lt.s32.totalorder %v7483, 0
        %vm7602 = vcmp.lt.s32.totalorder %v7490, 0
        %vm7603 = vcmp.lt.s32.totalorder %v7497, 0
        %vm7604 = vcmp.lt.s32.totalorder %v7504, 0
        %vm7605 = vcmp.lt.s32.totalorder %v7511, 0
        %vm7606 = vcmp.lt.s32.totalorder %v7518, 0
        %vm7607 = vcmp.lt.s32.totalorder %v7525, 0
        %vm7608 = vcmp.lt.s32.totalorder %v7532, 0
        %vm7609 = vcmp.lt.s32.totalorder %v7539, 0
        %vm7610 = vcmp.lt.s32.totalorder %v7546, 0
        %vm7611 = vcmp.lt.s32.totalorder %v7553, 0
        %vm7612 = vcmp.lt.s32.totalorder %v7560, 0
        %vm7613 = vcmp.lt.s32.totalorder %v7567, 0
        %vm7614 = vcmp.lt.s32.totalorder %v7574, 0
        %vm7615 = vmand %vm7595, %vm7575
        %vm7616 = vmand %vm7596, %vm7576
        %vm7617 = vmand %vm7597, %vm7577
        %vm7618 = vmand %vm7598, %vm7578
        %vm7619 = vmand %vm7599, %vm7579
        %vm7620 = vmand %vm7600, %vm7580
        %vm7621 = vmand %vm7601, %vm7581
        %vm7622 = vmand %vm7602, %vm7582
        %vm7623 = vmand %vm7603, %vm7583
        %vm7624 = vmand %vm7604, %vm7584
        %vm7625 = vmand %vm7605, %vm7585
        %vm7626 = vmand %vm7606, %vm7586
        %vm7627 = vmand %vm7607, %vm7587
        %vm7628 = vmand %vm7608, %vm7588
        %vm7629 = vmand %vm7609, %vm7589
        %vm7630 = vmand %vm7610, %vm7590
        %vm7631 = vmand %vm7611, %vm7591
        %vm7632 = vmand %vm7612, %vm7592
        %vm7633 = vmand %vm7613, %vm7593
        %vm7634 = vmand %vm7614, %vm7594
        %v7635 = vadd.s32 %v7441, 64
        %v7636 = vadd.s32 %v7448, 64
        %v7637 = vadd.s32 %v7455, 64
        %v7638 = vadd.s32 %v7462, 64
        %v7639 = vadd.s32 %v7469, 64
        %v7640 = vadd.s32 %v7476, 64
        %v7641 = vadd.s32 %v7483, 64
        %v7642 = vadd.s32 %v7490, 64
        %v7643 = vadd.s32 %v7497, 64
        %v7644 = vadd.s32 %v7504, 64
        %v7645 = vadd.s32 %v7511, 64
        %v7646 = vadd.s32 %v7518, 64
        %v7647 = vadd.s32 %v7525, 64
        %v7648 = vadd.s32 %v7532, 64
        %v7649 = vadd.s32 %v7539, 64
        %v7650 = vadd.s32 %v7546, 64
        %v7651 = vadd.s32 %v7553, 64
        %v7652 = vadd.s32 %v7560, 64
        %v7653 = vadd.s32 %v7567, 64
        %v7654 = vadd.s32 %v7574, 64
        %v7655 = vsel %vm7615, %v7635, %v7441
        %v7656 = vsel %vm7616, %v7636, %v7448
        %v7657 = vsel %vm7617, %v7637, %v7455
        %v7658 = vsel %vm7618, %v7638, %v7462
        %v7659 = vsel %vm7619, %v7639, %v7469
        %v7660 = vsel %vm7620, %v7640, %v7476
        %v7661 = vsel %vm7621, %v7641, %v7483
        %v7662 = vsel %vm7622, %v7642, %v7490
        %v7663 = vsel %vm7623, %v7643, %v7497
        %v7664 = vsel %vm7624, %v7644, %v7504
        %v7665 = vsel %vm7625, %v7645, %v7511
        %v7666 = vsel %vm7626, %v7646, %v7518
        %v7667 = vsel %vm7627, %v7647, %v7525
        %v7668 = vsel %vm7628, %v7648, %v7532
        %v7669 = vsel %vm7629, %v7649, %v7539
        %v7670 = vsel %vm7630, %v7650, %v7546
        %v7671 = vsel %vm7631, %v7651, %v7553
        %v7672 = vsel %vm7632, %v7652, %v7560
        %v7673 = vsel %vm7633, %v7653, %v7567
        %v7674 = vsel %vm7634, %v7654, %v7574
        %vm7675 = vcmp.lt.s32.totalorder %v7655, 34
        %vm7676 = vcmp.lt.s32.totalorder %v7656, 34
        %vm7677 = vcmp.lt.s32.totalorder %v7657, 34
        %vm7678 = vcmp.lt.s32.totalorder %v7658, 34
        %vm7679 = vcmp.lt.s32.totalorder %v7659, 34
        %vm7680 = vcmp.lt.s32.totalorder %v7660, 34
        %vm7681 = vcmp.lt.s32.totalorder %v7661, 34
        %vm7682 = vcmp.lt.s32.totalorder %v7662, 34
        %vm7683 = vcmp.lt.s32.totalorder %v7663, 34
        %vm7684 = vcmp.lt.s32.totalorder %v7664, 34
        %vm7685 = vcmp.lt.s32.totalorder %v7665, 34
        %vm7686 = vcmp.lt.s32.totalorder %v7666, 34
        %vm7687 = vcmp.lt.s32.totalorder %v7667, 34
        %vm7688 = vcmp.lt.s32.totalorder %v7668, 34
        %vm7689 = vcmp.lt.s32.totalorder %v7669, 34
        %vm7690 = vcmp.lt.s32.totalorder %v7670, 34
        %vm7691 = vcmp.lt.s32.totalorder %v7671, 34
        %vm7692 = vcmp.lt.s32.totalorder %v7672, 34
        %vm7693 = vcmp.lt.s32.totalorder %v7673, 34
        %vm7694 = vcmp.lt.s32.totalorder %v7674, 34
        %v7695 = vsel %vm7675, 1, 0
        %v7696 = vsel %vm7676, 1, 0
        %v7697 = vsel %vm7677, 1, 0
        %v7698 = vsel %vm7678, 1, 0
        %v7699 = vsel %vm7679, 1, 0
        %v7700 = vsel %vm7680, 1, 0
        %v7701 = vsel %vm7681, 1, 0
        %v7702 = vsel %vm7682, 1, 0
        %v7703 = vsel %vm7683, 1, 0
        %v7704 = vsel %vm7684, 1, 0
        %v7705 = vsel %vm7685, 1, 0
        %v7706 = vsel %vm7686, 1, 0
        %v7707 = vsel %vm7687, 1, 0
        %v7708 = vsel %vm7688, 1, 0
        %v7709 = vsel %vm7689, 1, 0
        %v7710 = vsel %vm7690, 1, 0
        %v7711 = vsel %vm7691, 1, 0
        %v7712 = vsel %vm7692, 1, 0
        %v7713 = vsel %vm7693, 1, 0
        %v7714 = vsel %vm7694, 1, 0
        %vm7715 = vcmp.eq.s32.totalorder %v7695, 1
        %vm7716 = vcmp.eq.s32.totalorder %v7696, 1
        %vm7717 = vcmp.eq.s32.totalorder %v7697, 1
        %vm7718 = vcmp.eq.s32.totalorder %v7698, 1
        %vm7719 = vcmp.eq.s32.totalorder %v7699, 1
        %vm7720 = vcmp.eq.s32.totalorder %v7700, 1
        %vm7721 = vcmp.eq.s32.totalorder %v7701, 1
        %vm7722 = vcmp.eq.s32.totalorder %v7702, 1
        %vm7723 = vcmp.eq.s32.totalorder %v7703, 1
        %vm7724 = vcmp.eq.s32.totalorder %v7704, 1
        %vm7725 = vcmp.eq.s32.totalorder %v7705, 1
        %vm7726 = vcmp.eq.s32.totalorder %v7706, 1
        %vm7727 = vcmp.eq.s32.totalorder %v7707, 1
        %vm7728 = vcmp.eq.s32.totalorder %v7708, 1
        %vm7729 = vcmp.eq.s32.totalorder %v7709, 1
        %vm7730 = vcmp.eq.s32.totalorder %v7710, 1
        %vm7731 = vcmp.eq.s32.totalorder %v7711, 1
        %vm7732 = vcmp.eq.s32.totalorder %v7712, 1
        %vm7733 = vcmp.eq.s32.totalorder %v7713, 1
        %vm7734 = vcmp.eq.s32.totalorder %v7714, 1
        %v7735 = vsel %vm7715, %v7396, 0.0
        %v7736 = vsel %vm7716, %v7397, 0.0
        %v7737 = vsel %vm7717, %v7398, 0.0
        %v7738 = vsel %vm7718, %v7399, 0.0
        %v7739 = vsel %vm7719, %v7400, 0.0
        %v7740 = vsel %vm7720, %v7401, 0.0
        %v7741 = vsel %vm7721, %v7402, 0.0
        %v7742 = vsel %vm7722, %v7403, 0.0
        %v7743 = vsel %vm7723, %v7404, 0.0
        %v7744 = vsel %vm7724, %v7405, 0.0
        %v7745 = vsel %vm7725, %v7406, 0.0
        %v7746 = vsel %vm7726, %v7407, 0.0
        %v7747 = vsel %vm7727, %v7408, 0.0
        %v7748 = vsel %vm7728, %v7409, 0.0
        %v7749 = vsel %vm7729, %v7410, 0.0
        %v7750 = vsel %vm7730, %v7411, 0.0
        %v7751 = vsel %vm7731, %v7412, 0.0
        %v7752 = vsel %vm7732, %v7413, 0.0
        %v7753 = vsel %vm7733, %v7414, 0.0
        %v7754 = vsel %vm7734, %v7415, 0.0
        %v7755 = vpack.c.bf16 %v7735, %v7735
        %v7756 = vpack.c.bf16 %v7736, %v7736
        %v7757 = vpack.c.bf16 %v7737, %v7737
        %v7758 = vpack.c.bf16 %v7738, %v7738
        %v7759 = vpack.c.bf16 %v7739, %v7739
        %v7760 = vpack.c.bf16 %v7740, %v7740
        %v7761 = vpack.c.bf16 %v7741, %v7741
        %v7762 = vpack.c.bf16 %v7742, %v7742
        %v7763 = vpack.c.bf16 %v7743, %v7743
        %v7764 = vpack.c.bf16 %v7744, %v7744
        %v7765 = vpack.c.bf16 %v7745, %v7745
        %v7766 = vpack.c.bf16 %v7746, %v7746
        %v7767 = vpack.c.bf16 %v7747, %v7747
        %v7768 = vpack.c.bf16 %v7748, %v7748
        %v7769 = vpack.c.bf16 %v7749, %v7749
        %v7770 = vpack.c.bf16 %v7750, %v7750
        %v7771 = vpack.c.bf16 %v7751, %v7751
        %v7772 = vpack.c.bf16 %v7752, %v7752
        %v7773 = vpack.c.bf16 %v7753, %v7753
        %v7774 = vpack.c.bf16 %v7754, %v7754
        %7775 = vst [vmem:[%s374] sm:$0xf] %v7755
        %7776 = vst [vmem:[%s374 + $0x4] sm:$0xf] %v7756
        %7777 = vst [vmem:[%s374 + $0x8] sm:$0xf] %v7757
        %7778 = vst [vmem:[%s374 + $0xc] sm:$0xf] %v7758
        %7779 = vst [vmem:[%s374 + $0x10] sm:$0xf] %v7759
        %7780 = vst [vmem:[%s374 + $0x14] sm:$0xf] %v7760
        %7781 = vst [vmem:[%s374 + $0x18] sm:$0xf] %v7761
        %7782 = vst [vmem:[%s374 + $0x1c] sm:$0xf] %v7762
        %7783 = vst [vmem:[%s374 + $0x20] sm:$0xf] %v7763
        %7784 = vst [vmem:[%s374 + $0x24] sm:$0xf] %v7764
        %7785 = vst [vmem:[%s374 + $0x28] sm:$0xf] %v7765
        %7786 = vst [vmem:[%s374 + $0x2c] sm:$0xf] %v7766
        %7787 = vst [vmem:[%s374 + $0x30] sm:$0xf] %v7767
        %7788 = vst [vmem:[%s374 + $0x34] sm:$0xf] %v7768
        %7789 = vst [vmem:[%s374 + $0x38] sm:$0xf] %v7769
        %7790 = vst [vmem:[%s374 + $0x3c] sm:$0xf] %v7770
        %7791 = vst [vmem:[%s374 + $0x40] sm:$0xf] %v7771
        %7792 = vst [vmem:[%s374 + $0x44] sm:$0xf] %v7772
        %7793 = vst [vmem:[%s374 + $0x48] sm:$0xf] %v7773
        %7794 = vst [vmem:[%s374 + $0x4c] sm:$0xf] %v7774
        %s7795 = smul.u32 20, %s22
        %p7796 = scmp.lt.s32.totalorder %s7795, 39
        %s7797 = scalar_select %p7796, %s7795, 39
        %s7798 = smul.addr %s7797, 4
        %s7799 = scalar_lea.vmem %s7, %s7798
        // Predicated region
        $region73: #{_lambda_.2} parent=47 // pred_check
          %p7800 = pneg %p192
        $region74: #{_lambda_.2} parent=47 // pred_check_branch
          %7802 = sbr.rel (%p7800) target = $region76
        $region75: #{_lambda_.2} parent=47 // pred_region
          %s7803 = smul.u32 20, %s22
        $region76: #{_lambda_.2} parent=47 // pred_fallthru
          _
      $region48: #{_lambda_.2} parent=5 // pred_fallthru
        _
      %p7804 = scmp.le.s32.totalorder 2, %s17
      // Predicated region
      $region77: #{_lambda_.2} parent=5 // pred_check
        %p7805 = pneg %p7804
      $region78: #{_lambda_.2} parent=5 // pred_check_branch
        %7807 = sbr.rel (%p7805) target = $region80
      $region79: #{_lambda_.2} parent=5 // pred_region
        %s7808 = ssub.s32 %s17, 2
        // Predicated region
        $region81: #{_lambda_.2} parent=79 // pred_check
          %p7809 = pneg %p198
        $region82: #{_lambda_.2} parent=79 // pred_check_branch
          %7811 = sbr.rel (%p7809) target = $region84
        $region83: #{_lambda_.2} parent=79 // pred_region
          %s7812 = smul.u32 20, %s23
          %p7813 = scmp.lt.s32.totalorder %s7812, 39
          %s7814 = scalar_select %p7813, %s7812, 39
          %s7815 = smul.addr %s7814, 4
          %s7816 = scalar_lea.vmem %s7, %s7815
        $region84: #{_lambda_.2} parent=79 // pred_fallthru
          _
      $region80: #{_lambda_.2} parent=5 // pred_fallthru
        _
    $region6: #{_lambda_.2} parent=1 // loop_footer
      %s21 = sadd.s32 1, %s17
    $region7: #{_lambda_.2} parent=1 // loop_footer_branch
      %16 = sbr.rel target = $region3
    $region8: #{_lambda_.2} parent=1 // loop_exit
      _
    %7817 = vsyncpa [#allocation3], 1
    %s7818 = scalar_lea.sflag [#allocation3], 1
    %7819 = vsyncpa %s7818, 1
    %7820 = vsyncpa [#allocation5], 1
    %7821 = vsyncpa [#allocation8], 1
    %7822 = vsyncpa [#allocation11], 1

</llo_original>
